<compile_context>
chip_gen: v7x
topology: tpu7x:2x2x1
jax: 0.10.0
libtpu: 0.0.40
codegen_flags: <defaults>
</compile_context>

<pallas_src>
from functools import partial

import jax
import jax.numpy as jnp
from jax.experimental import pallas as pl
from jax.experimental.pallas import tpu as pltpu


# ----------------------------------------------------------------------------
# Pallas kernels
# ----------------------------------------------------------------------------
def _bn_affine_from_stats(y, mask, g, b, count, eps):
    """Training-mode BN affine computed from in-VMEM batch stats (two-pass var)."""
    inv_n = 1.0 / count
    mean = jnp.sum(y * mask, axis=1, keepdims=True) * inv_n          # (C,1)
    d = (y - mean) * mask
    var = jnp.sum(d * d, axis=1, keepdims=True) * inv_n              # (C,1)
    scale = g * jax.lax.rsqrt(var + eps)
    shift = b - mean * scale
    return scale, shift


def _res1_res3_kernel(phases_ref, w1_ref, w3_ref, g1_ref, b1_ref, g3_ref, b3_ref,
                      mask_ref, z1_ref, z3_ref, *, f_len, phase_w, count, eps):
    """Fused res1 (3x3 stride-2 conv + BN + ReLU) and res3 (1x1 stride-2
    projection conv + BN). Both convs read the same phase-decomposed input slab.

    phases_ref: (4, Cin, n_flat)  stride-2 phase grids of the padded input,
                flat index = n*PH*PW + row*PW + col  (channel-major, lane-dense)
    w1_ref:     (9, Cout, Cin)    3x3 taps, tap index = kh*3 + kw
    w3_ref:     (Cout, Cin)       1x1 projection weight
    """
    cout = w1_ref.shape[1]

    # 3x3 stride-2 conv as 9 accumulated matmuls over contiguous lane slices.
    y1 = jnp.zeros((cout, f_len), jnp.float32)
    for kh in range(3):
        for kw in range(3):
            p = (kh % 2) * 2 + (kw % 2)                  # phase (row-, col-parity)
            off = (kh // 2) * phase_w + (kw // 2)        # flat shift inside phase
            xs = phases_ref[p, :, off:off + f_len]       # (Cin, F) contiguous
            y1 = y1 + jnp.dot(w1_ref[kh * 3 + kw], xs,
                              preferred_element_type=jnp.float32)

    # 1x1 stride-2 conv == centre tap of the 3x3 == phase (1,1) at offset 0.
    y3 = jnp.dot(w3_ref[...], phases_ref[3, :, 0:f_len],
                 preferred_element_type=jnp.float32)

    mask = mask_ref[...]                                 # (1, F) 1.0 on valid pixels

    s1, h1 = _bn_affine_from_stats(y1, mask, g1_ref[...], b1_ref[...], count, eps)
    z1_ref[...] = jnp.maximum(y1 * s1 + h1, 0.0)         # res1: BN + ReLU

    s3, h3 = _bn_affine_from_stats(y3, mask, g3_ref[...], b3_ref[...], count, eps)
    z3_ref[...] = y3 * s3 + h3                           # res3: BN + Identity


def _res2_residual_kernel(z1p_ref, w2_ref, res_ref, g2_ref, b2_ref, mask_ref,
                          out_ref, *, f_len, pad_w, count, eps):
    """Fused res2 (3x3 stride-1 conv + BN) + residual add + final ReLU.

    z1p_ref: (Cout, n_flat) spatially zero-padded res1 output, flat index
             = n*PH*PW + row*PW + col with PW = pad_w (contiguous tap slices).
    res_ref: (Cout, F) res3 output laid out on the same flat output grid.
    """
    cout = w2_ref.shape[1]
    y2 = jnp.zeros((cout, f_len), jnp.float32)
    for kh in range(3):
        for kw in range(3):
            off = kh * pad_w + kw
            y2 = y2 + jnp.dot(w2_ref[kh * 3 + kw], z1p_ref[:, off:off + f_len],
                              preferred_element_type=jnp.float32)

    mask = mask_ref[...]
    s2, h2 = _bn_affine_from_stats(y2, mask, g2_ref[...], b2_ref[...], count, eps)
    out_ref[...] = jnp.maximum(y2 * s2 + h2 + res_ref[...], 0.0)


_VMEM_SPEC = pl.BlockSpec(memory_space=pltpu.MemorySpace.VMEM)


# ----------------------------------------------------------------------------
# JAX glue: module padding math, phase decomposition, flat-layout helpers.
# ----------------------------------------------------------------------------
def _module_pad(kernel_size, strides, H=32, W=32):
    """Reproduces resnet_block.__init__ padding; returns ZeroPad2d-style
    (left, right, top, bottom)."""
    p0 = strides * (W - 1) + kernel_size - W
    if p0 % 2 == 0:
        p0 //= 2
        p2 = p0
    else:
        p2 = (p0 + 1) // 2
        p0 = (p0 - 1) // 2
    p1 = strides * (H - 1) + kernel_size - H
    if p1 % 2 == 0:
        p1 //= 2
        p3 = p1
    else:
        p3 = (p1 + 1) // 2
        p1 = (p1 - 1) // 2
    return (int(p0), int(p1), int(p2), int(p3))


def _flat_phase_decompose(x, pad_lrtb):
    """Zero-pad NCHW input and split into the four stride-2 phase grids,
    channel-major + flattened: (4, Cin, N*PH*PW)."""
    n, c, _, _ = x.shape
    xp = jnp.pad(x, ((0, 0), (0, 0),
                     (pad_lrtb[2], pad_lrtb[3]), (pad_lrtb[0], pad_lrtb[1])))
    phases = jnp.stack([xp[:, :, a::2, b::2] for a in (0, 1) for b in (0, 1)], 0)
    _, _, _, ph, pw = phases.shape
    phases = phases.transpose(0, 2, 1, 3, 4).reshape(4, c, n * ph * pw)
    return phases, ph, pw


def _valid_mask(ph, pw, h_out, w_out, f_len):
    idx = jnp.arange(f_len, dtype=jnp.int32)
    rem = idx % (ph * pw)
    m = ((rem % pw) < w_out) & ((rem // pw) < h_out)
    return m.astype(jnp.float32).reshape(1, f_len)


def _unflatten_valid(zf, n, ph, pw, h_out, w_out):
    """(C, F) flat slab (pitch pw, with junk tail/cols) -> (C, N, h_out, w_out)."""
    c, f = zf.shape
    zf = jnp.pad(zf, ((0, 0), (0, n * ph * pw - f)))
    return zf.reshape(c, n, ph, pw)[:, :, :h_out, :w_out]


# ----------------------------------------------------------------------------
# stacked_resnet_block forward (stack=1, res_block=0, BatchNorm2d + ReLU)
# ----------------------------------------------------------------------------
def stacked_resnet_block_forward(x, params, eps=1e-5):
    n, cin, h, w = x.shape
    cout = params["w1"].shape[0]

    pad1 = _module_pad(3, 2, h, w)   # res1: 3x3 stride 2
    pad2 = _module_pad(3, 1, h, w)   # res2: 3x3 stride 1 (module hard-codes 32x32)
    # res3 (1x1 stride 2) needs no separate padding/patches: its sample point is
    # exactly res1's centre tap, i.e. phase (1,1) offset 0 of res1's decomposition.

    # ---- kernel 1 inputs ----------------------------------------------------
    phases, ph, pw = _flat_phase_decompose(x, pad1)            # (4, cin, n*ph*pw)
    h1 = (h + pad1[2] + pad1[3] - 3) // 2 + 1
    w1o = (w + pad1[0] + pad1[1] - 3) // 2 + 1
    f1 = n * ph * pw - (pw + 1)                                # max tap offset
    assert f1 >= (n - 1) * ph * pw + (h1 - 1) * pw + w1o       # covers all outputs
    mask1 = _valid_mask(ph, pw, h1, w1o, f1)
    cnt1 = float(n * h1 * w1o)

    w1_t = params["w1"].transpose(2, 3, 0, 1).reshape(9, cout, cin)
    w3_t = params["w3"].reshape(cout, cin)
    w2_t = params["w2"].transpose(2, 3, 0, 1).reshape(9, cout, cout)
    g1 = params["g1"].reshape(cout, 1); be1 = params["be1"].reshape(cout, 1)
    g2 = params["g2"].reshape(cout, 1); be2 = params["be2"].reshape(cout, 1)
    g3 = params["g3"].reshape(cout, 1); be3 = params["be3"].reshape(cout, 1)
    # NOTE: conv biases b1/b2/b3 are intentionally not used (BN cancels them).

    k1 = partial(_res1_res3_kernel, f_len=f1, phase_w=pw, count=cnt1, eps=eps)
    z1f, z3f = pl.pallas_call(
        k1,
        out_shape=(jax.ShapeDtypeStruct((cout, f1), jnp.float32),
                   jax.ShapeDtypeStruct((cout, f1), jnp.float32)),
        in_specs=[_VMEM_SPEC] * 8,
        out_specs=(_VMEM_SPEC, _VMEM_SPEC),
    )(phases, w1_t, w3_t, g1, be1, g3, be3, mask1)

    # ---- glue between kernels (tiny reshapes / zero-pads, ~70 KB) ------------
    z1 = _unflatten_valid(z1f, n, ph, pw, h1, w1o)             # (cout, n, h1, w1o)
    z3 = _unflatten_valid(z3f, n, ph, pw, h1, w1o)
    p2h = h1 + pad2[2] + pad2[3]
    p2w = w1o + pad2[0] + pad2[1]
    z1p = jnp.pad(z1, ((0, 0), (0, 0), (pad2[2], pad2[3]),
                       (pad2[0], pad2[1]))).reshape(cout, n * p2h * p2w)
    f2 = n * p2h * p2w - 2 * (p2w + 1)                         # max tap offset
    h2 = p2h - 3 + 1
    w2o = p2w - 3 + 1
    assert f2 >= (n - 1) * p2h * p2w + (h2 - 1) * p2w + w2o
    z3a = jnp.pad(z3, ((0, 0), (0, 0), (0, p2h - h1), (0, p2w - w1o))
                  ).reshape(cout, n * p2h * p2w)[:, :f2]
    mask2 = _valid_mask(p2h, p2w, h2, w2o, f2)
    cnt2 = float(n * h2 * w2o)

    k2 = partial(_res2_residual_kernel, f_len=f2, pad_w=p2w, count=cnt2, eps=eps)
    outf = pl.pallas_call(
        k2,
        out_shape=jax.ShapeDtypeStruct((cout, f2), jnp.float32),
        in_specs=[_VMEM_SPEC] * 6,
        out_specs=_VMEM_SPEC,
    )(z1p, w2_t, z3a, g2, be2, mask2)

    out = _unflatten_valid(outf, n, p2h, p2w, h2, w2o)         # (cout, n, h2, w2o)
    return out.transpose(1, 0, 2, 3)                           # NCHW


# ----------------------------------------------------------------------------
# Pure-JAX reference (matches the PyTorch module, including conv biases)
# ----------------------------------------------------------------------------
def _ref_conv(x, w, b, stride, pad):
    xp = jnp.pad(x, ((0, 0), (0, 0), (pad[2], pad[3]), (pad[0], pad[1])))
    y = jax.lax.conv_general_dilated(
        xp, w, (stride, stride), "VALID",
        dimension_numbers=("NCHW", "OIHW", "NCHW"))
    return y + b.reshape(1, -1, 1, 1)


def _ref_bn(y, gamma, beta, eps=1e-5):
    mean = y.mean(axis=(0, 2, 3), keepdims=True)
    var = y.var(axis=(0, 2, 3), keepdims=True)
    return ((y - mean) / jnp.sqrt(var + eps)) * gamma.reshape(1, -1, 1, 1) \
        + beta.reshape(1, -1, 1, 1)


def reference_forward(x, p):
    pad1 = _module_pad(3, 2)
    pad2 = _module_pad(3, 1)
    pad3 = _module_pad(1, 2)
    y1 = jnp.maximum(_ref_bn(_ref_conv(x, p["w1"], p["b1"], 2, pad1),
                             p["g1"], p["be1"]), 0.0)
    y2 = _ref_bn(_ref_conv(y1, p["w2"], p["b2"], 1, pad2), p["g2"], p["be2"])
    x3 = _ref_bn(_ref_conv(x, p["w3"], p["b3"], 2, pad3), p["g3"], p["be3"])
    return jnp.maximum(x3 + y2, 0.0)


# ----------------------------------------------------------------------------
if __name__ == "__main__":
    key = jax.random.PRNGKey(0)
    k_x, k1, k2, k3, kb1, kb2, kb3 = jax.random.split(key, 7)

    batch, cin, cout = 2, 4, 8
    x = jax.random.normal(k_x, (batch, cin, 32, 32), dtype=jnp.float32)

    params = {
        "w1": 0.1 * jax.random.normal(k1, (cout, cin, 3, 3), jnp.float32),
        "b1": 0.1 * jax.random.normal(kb1, (cout,), jnp.float32),
        "g1": jnp.ones((cout,), jnp.float32),
        "be1": jnp.zeros((cout,), jnp.float32),
        "w2": 0.1 * jax.random.normal(k2, (cout, cout, 3, 3), jnp.float32),
        "b2": 0.1 * jax.random.normal(kb2, (cout,), jnp.float32),
        "g2": jnp.ones((cout,), jnp.float32),
        "be2": jnp.zeros((cout,), jnp.float32),
        "w3": 0.1 * jax.random.normal(k3, (cout, cin, 1, 1), jnp.float32),
        "b3": 0.1 * jax.random.normal(kb3, (cout,), jnp.float32),
        "g3": jnp.ones((cout,), jnp.float32),
        "be3": jnp.zeros((cout,), jnp.float32),
    }

    out = jax.block_until_ready(stacked_resnet_block_forward(x, params))
    ref = jax.block_until_ready(reference_forward(x, params))

    assert out.shape == ref.shape, (out.shape, ref.shape)
    err = float(jnp.max(jnp.abs(out - ref)))
    assert err < 1e-3, err

    print("KERNEL_OK")
</pallas_src>

<mosaic_0001>
module attributes {stable_mosaic.version = 11 : i64} {
  func.func @_res1_res3_kernel(%arg0: memref<4x4x2112xf32, #tpu.memory_space<vmem>>, %arg1: memref<9x8x4xf32, #tpu.memory_space<vmem>>, %arg2: memref<8x4xf32, #tpu.memory_space<vmem>>, %arg3: memref<8x1xf32, #tpu.memory_space<vmem>>, %arg4: memref<8x1xf32, #tpu.memory_space<vmem>>, %arg5: memref<8x1xf32, #tpu.memory_space<vmem>>, %arg6: memref<8x1xf32, #tpu.memory_space<vmem>>, %arg7: memref<1x2079xf32, #tpu.memory_space<vmem>>, %arg8: memref<8x2079xf32, #tpu.memory_space<vmem>>, %arg9: memref<8x2079xf32, #tpu.memory_space<vmem>>) attributes {dimension_semantics = [], scalar_prefetch = 0 : i64, scratch_operands = 0 : i64, tpu.core_type = #tpu.core_type<tc>} {
    %cst = arith.constant 0.000000e+00 : f32
    %0 = vector.broadcast %cst : f32 to vector<8x2079xf32>
    %c0 = arith.constant 0 : index
    %c0_0 = arith.constant 0 : index
    %c0_1 = arith.constant 0 : index
    %1 = vector.load %arg0[%c0, %c0_0, %c0_1] : memref<4x4x2112xf32, #tpu.memory_space<vmem>>, vector<1x4x2079xf32>
    %2 = vector.shape_cast %1 : vector<1x4x2079xf32> to vector<4x2079xf32>
    %c0_2 = arith.constant 0 : index
    %c0_3 = arith.constant 0 : index
    %c0_4 = arith.constant 0 : index
    %3 = vector.load %arg1[%c0_2, %c0_3, %c0_4] : memref<9x8x4xf32, #tpu.memory_space<vmem>>, vector<1x8x4xf32>
    %4 = vector.shape_cast %3 : vector<1x8x4xf32> to vector<8x4xf32>
    %cst_5 = arith.constant dense<0.000000e+00> : vector<8x2079xf32>
    %5 = tpu.matmul %4, %2, %cst_5 {dimension_numbers = #tpu.dot_dimension_numbers<[1], [0], [0], [1], [0, 0, 1, 1], [], []>} : vector<8x4xf32>, vector<4x2079xf32>, vector<8x2079xf32> -> vector<8x2079xf32>
    %6 = arith.addf %0, %5 : vector<8x2079xf32>
    %c1 = arith.constant 1 : index
    %c0_6 = arith.constant 0 : index
    %c0_7 = arith.constant 0 : index
    %7 = vector.load %arg0[%c1, %c0_6, %c0_7] : memref<4x4x2112xf32, #tpu.memory_space<vmem>>, vector<1x4x2079xf32>
    %8 = vector.shape_cast %7 : vector<1x4x2079xf32> to vector<4x2079xf32>
    %c1_8 = arith.constant 1 : index
    %c0_9 = arith.constant 0 : index
    %c0_10 = arith.constant 0 : index
    %9 = vector.load %arg1[%c1_8, %c0_9, %c0_10] : memref<9x8x4xf32, #tpu.memory_space<vmem>>, vector<1x8x4xf32>
    %10 = vector.shape_cast %9 : vector<1x8x4xf32> to vector<8x4xf32>
    %cst_11 = arith.constant dense<0.000000e+00> : vector<8x2079xf32>
    %11 = tpu.matmul %10, %8, %cst_11 {dimension_numbers = #tpu.dot_dimension_numbers<[1], [0], [0], [1], [0, 0, 1, 1], [], []>} : vector<8x4xf32>, vector<4x2079xf32>, vector<8x2079xf32> -> vector<8x2079xf32>
    %12 = arith.addf %6, %11 : vector<8x2079xf32>
    %c0_12 = arith.constant 0 : index
    %c0_13 = arith.constant 0 : index
    %c1_14 = arith.constant 1 : index
    %13 = vector.load %arg0[%c0_12, %c0_13, %c1_14] : memref<4x4x2112xf32, #tpu.memory_space<vmem>>, vector<1x4x2079xf32>
    %14 = vector.shape_cast %13 : vector<1x4x2079xf32> to vector<4x2079xf32>
    %c2 = arith.constant 2 : index
    %c0_15 = arith.constant 0 : index
    %c0_16 = arith.constant 0 : index
    %15 = vector.load %arg1[%c2, %c0_15, %c0_16] : memref<9x8x4xf32, #tpu.memory_space<vmem>>, vector<1x8x4xf32>
    %16 = vector.shape_cast %15 : vector<1x8x4xf32> to vector<8x4xf32>
    %cst_17 = arith.constant dense<0.000000e+00> : vector<8x2079xf32>
    %17 = tpu.matmul %16, %14, %cst_17 {dimension_numbers = #tpu.dot_dimension_numbers<[1], [0], [0], [1], [0, 0, 1, 1], [], []>} : vector<8x4xf32>, vector<4x2079xf32>, vector<8x2079xf32> -> vector<8x2079xf32>
    %18 = arith.addf %12, %17 : vector<8x2079xf32>
    %c2_18 = arith.constant 2 : index
    %c0_19 = arith.constant 0 : index
    %c0_20 = arith.constant 0 : index
    %19 = vector.load %arg0[%c2_18, %c0_19, %c0_20] : memref<4x4x2112xf32, #tpu.memory_space<vmem>>, vector<1x4x2079xf32>
    %20 = vector.shape_cast %19 : vector<1x4x2079xf32> to vector<4x2079xf32>
    %c3 = arith.constant 3 : index
    %c0_21 = arith.constant 0 : index
    %c0_22 = arith.constant 0 : index
    %21 = vector.load %arg1[%c3, %c0_21, %c0_22] : memref<9x8x4xf32, #tpu.memory_space<vmem>>, vector<1x8x4xf32>
    %22 = vector.shape_cast %21 : vector<1x8x4xf32> to vector<8x4xf32>
    %cst_23 = arith.constant dense<0.000000e+00> : vector<8x2079xf32>
    %23 = tpu.matmul %22, %20, %cst_23 {dimension_numbers = #tpu.dot_dimension_numbers<[1], [0], [0], [1], [0, 0, 1, 1], [], []>} : vector<8x4xf32>, vector<4x2079xf32>, vector<8x2079xf32> -> vector<8x2079xf32>
    %24 = arith.addf %18, %23 : vector<8x2079xf32>
    %c3_24 = arith.constant 3 : index
    %c0_25 = arith.constant 0 : index
    %c0_26 = arith.constant 0 : index
    %25 = vector.load %arg0[%c3_24, %c0_25, %c0_26] : memref<4x4x2112xf32, #tpu.memory_space<vmem>>, vector<1x4x2079xf32>
    %26 = vector.shape_cast %25 : vector<1x4x2079xf32> to vector<4x2079xf32>
    %c4 = arith.constant 4 : index
    %c0_27 = arith.constant 0 : index
    %c0_28 = arith.constant 0 : index
    %27 = vector.load %arg1[%c4, %c0_27, %c0_28] : memref<9x8x4xf32, #tpu.memory_space<vmem>>, vector<1x8x4xf32>
    %28 = vector.shape_cast %27 : vector<1x8x4xf32> to vector<8x4xf32>
    %cst_29 = arith.constant dense<0.000000e+00> : vector<8x2079xf32>
    %29 = tpu.matmul %28, %26, %cst_29 {dimension_numbers = #tpu.dot_dimension_numbers<[1], [0], [0], [1], [0, 0, 1, 1], [], []>} : vector<8x4xf32>, vector<4x2079xf32>, vector<8x2079xf32> -> vector<8x2079xf32>
    %30 = arith.addf %24, %29 : vector<8x2079xf32>
    %c2_30 = arith.constant 2 : index
    %c0_31 = arith.constant 0 : index
    %c1_32 = arith.constant 1 : index
    %31 = vector.load %arg0[%c2_30, %c0_31, %c1_32] : memref<4x4x2112xf32, #tpu.memory_space<vmem>>, vector<1x4x2079xf32>
    %32 = vector.shape_cast %31 : vector<1x4x2079xf32> to vector<4x2079xf32>
    %c5 = arith.constant 5 : index
    %c0_33 = arith.constant 0 : index
    %c0_34 = arith.constant 0 : index
    %33 = vector.load %arg1[%c5, %c0_33, %c0_34] : memref<9x8x4xf32, #tpu.memory_space<vmem>>, vector<1x8x4xf32>
    %34 = vector.shape_cast %33 : vector<1x8x4xf32> to vector<8x4xf32>
    %cst_35 = arith.constant dense<0.000000e+00> : vector<8x2079xf32>
    %35 = tpu.matmul %34, %32, %cst_35 {dimension_numbers = #tpu.dot_dimension_numbers<[1], [0], [0], [1], [0, 0, 1, 1], [], []>} : vector<8x4xf32>, vector<4x2079xf32>, vector<8x2079xf32> -> vector<8x2079xf32>
    %36 = arith.addf %30, %35 : vector<8x2079xf32>
    %c0_36 = arith.constant 0 : index
    %c0_37 = arith.constant 0 : index
    %c32 = arith.constant 32 : index
    %37 = vector.load %arg0[%c0_36, %c0_37, %c32] : memref<4x4x2112xf32, #tpu.memory_space<vmem>>, vector<1x4x2079xf32>
    %38 = vector.shape_cast %37 : vector<1x4x2079xf32> to vector<4x2079xf32>
    %c6 = arith.constant 6 : index
    %c0_38 = arith.constant 0 : index
    %c0_39 = arith.constant 0 : index
    %39 = vector.load %arg1[%c6, %c0_38, %c0_39] : memref<9x8x4xf32, #tpu.memory_space<vmem>>, vector<1x8x4xf32>
    %40 = vector.shape_cast %39 : vector<1x8x4xf32> to vector<8x4xf32>
    %cst_40 = arith.constant dense<0.000000e+00> : vector<8x2079xf32>
    %41 = tpu.matmul %40, %38, %cst_40 {dimension_numbers = #tpu.dot_dimension_numbers<[1], [0], [0], [1], [0, 0, 1, 1], [], []>} : vector<8x4xf32>, vector<4x2079xf32>, vector<8x2079xf32> -> vector<8x2079xf32>
    %42 = arith.addf %36, %41 : vector<8x2079xf32>
    %c1_41 = arith.constant 1 : index
    %c0_42 = arith.constant 0 : index
    %c32_43 = arith.constant 32 : index
    %43 = vector.load %arg0[%c1_41, %c0_42, %c32_43] : memref<4x4x2112xf32, #tpu.memory_space<vmem>>, vector<1x4x2079xf32>
    %44 = vector.shape_cast %43 : vector<1x4x2079xf32> to vector<4x2079xf32>
    %c7 = arith.constant 7 : index
    %c0_44 = arith.constant 0 : index
    %c0_45 = arith.constant 0 : index
    %45 = vector.load %arg1[%c7, %c0_44, %c0_45] : memref<9x8x4xf32, #tpu.memory_space<vmem>>, vector<1x8x4xf32>
    %46 = vector.shape_cast %45 : vector<1x8x4xf32> to vector<8x4xf32>
    %cst_46 = arith.constant dense<0.000000e+00> : vector<8x2079xf32>
    %47 = tpu.matmul %46, %44, %cst_46 {dimension_numbers = #tpu.dot_dimension_numbers<[1], [0], [0], [1], [0, 0, 1, 1], [], []>} : vector<8x4xf32>, vector<4x2079xf32>, vector<8x2079xf32> -> vector<8x2079xf32>
    %48 = arith.addf %42, %47 : vector<8x2079xf32>
    %c0_47 = arith.constant 0 : index
    %c0_48 = arith.constant 0 : index
    %c33 = arith.constant 33 : index
    %49 = vector.load %arg0[%c0_47, %c0_48, %c33] : memref<4x4x2112xf32, #tpu.memory_space<vmem>>, vector<1x4x2079xf32>
    %50 = vector.shape_cast %49 : vector<1x4x2079xf32> to vector<4x2079xf32>
    %c8 = arith.constant 8 : index
    %c0_49 = arith.constant 0 : index
    %c0_50 = arith.constant 0 : index
    %51 = vector.load %arg1[%c8, %c0_49, %c0_50] : memref<9x8x4xf32, #tpu.memory_space<vmem>>, vector<1x8x4xf32>
    %52 = vector.shape_cast %51 : vector<1x8x4xf32> to vector<8x4xf32>
    %cst_51 = arith.constant dense<0.000000e+00> : vector<8x2079xf32>
    %53 = tpu.matmul %52, %50, %cst_51 {dimension_numbers = #tpu.dot_dimension_numbers<[1], [0], [0], [1], [0, 0, 1, 1], [], []>} : vector<8x4xf32>, vector<4x2079xf32>, vector<8x2079xf32> -> vector<8x2079xf32>
    %54 = arith.addf %48, %53 : vector<8x2079xf32>
    %c0_52 = arith.constant 0 : index
    %c0_53 = arith.constant 0 : index
    %55 = vector.load %arg2[%c0_52, %c0_53] : memref<8x4xf32, #tpu.memory_space<vmem>>, vector<8x4xf32>
    %c3_54 = arith.constant 3 : index
    %c0_55 = arith.constant 0 : index
    %c0_56 = arith.constant 0 : index
    %56 = vector.load %arg0[%c3_54, %c0_55, %c0_56] : memref<4x4x2112xf32, #tpu.memory_space<vmem>>, vector<1x4x2079xf32>
    %57 = vector.shape_cast %56 : vector<1x4x2079xf32> to vector<4x2079xf32>
    %cst_57 = arith.constant dense<0.000000e+00> : vector<8x2079xf32>
    %58 = tpu.matmul %55, %57, %cst_57 {dimension_numbers = #tpu.dot_dimension_numbers<[1], [0], [0], [1], [0, 0, 1, 1], [], []>} : vector<8x4xf32>, vector<4x2079xf32>, vector<8x2079xf32> -> vector<8x2079xf32>
    %c0_58 = arith.constant 0 : index
    %c0_59 = arith.constant 0 : index
    %59 = vector.load %arg7[%c0_58, %c0_59] : memref<1x2079xf32, #tpu.memory_space<vmem>>, vector<1x2079xf32>
    %c0_60 = arith.constant 0 : index
    %c0_61 = arith.constant 0 : index
    %60 = vector.load %arg3[%c0_60, %c0_61] : memref<8x1xf32, #tpu.memory_space<vmem>>, vector<8x1xf32>
    %c0_62 = arith.constant 0 : index
    %c0_63 = arith.constant 0 : index
    %61 = vector.load %arg4[%c0_62, %c0_63] : memref<8x1xf32, #tpu.memory_space<vmem>>, vector<8x1xf32>
    %62 = vector.broadcast %59 : vector<1x2079xf32> to vector<8x2079xf32>
    %63 = arith.mulf %54, %62 : vector<8x2079xf32>
    %cst_64 = arith.constant dense<0.000000e+00> : vector<8xf32>
    %64 = vector.multi_reduction <add>, %63, %cst_64 [1] : vector<8x2079xf32> to vector<8xf32>
    %65 = vector.shape_cast %64 : vector<8xf32> to vector<8x1xf32>
    %cst_65 = arith.constant 5.04032243E-4 : f32
    %66 = vector.broadcast %cst_65 : f32 to vector<8x1xf32>
    %67 = arith.mulf %65, %66 : vector<8x1xf32>
    %68 = vector.broadcast %67 : vector<8x1xf32> to vector<8x2079xf32>
    %69 = arith.subf %54, %68 : vector<8x2079xf32>
    %70 = vector.broadcast %59 : vector<1x2079xf32> to vector<8x2079xf32>
    %71 = arith.mulf %69, %70 : vector<8x2079xf32>
    %72 = arith.mulf %71, %71 : vector<8x2079xf32>
    %cst_66 = arith.constant dense<0.000000e+00> : vector<8xf32>
    %73 = vector.multi_reduction <add>, %72, %cst_66 [1] : vector<8x2079xf32> to vector<8xf32>
    %74 = vector.shape_cast %73 : vector<8xf32> to vector<8x1xf32>
    %cst_67 = arith.constant 5.04032243E-4 : f32
    %75 = vector.broadcast %cst_67 : f32 to vector<8x1xf32>
    %76 = arith.mulf %74, %75 : vector<8x1xf32>
    %cst_68 = arith.constant 9.99999974E-6 : f32
    %77 = vector.broadcast %cst_68 : f32 to vector<8x1xf32>
    %78 = arith.addf %76, %77 : vector<8x1xf32>
    %79 = math.rsqrt %78 : vector<8x1xf32>
    %80 = arith.mulf %60, %79 : vector<8x1xf32>
    %81 = arith.mulf %67, %80 : vector<8x1xf32>
    %82 = arith.subf %61, %81 : vector<8x1xf32>
    %83 = vector.broadcast %80 : vector<8x1xf32> to vector<8x2079xf32>
    %84 = arith.mulf %54, %83 : vector<8x2079xf32>
    %85 = vector.broadcast %82 : vector<8x1xf32> to vector<8x2079xf32>
    %86 = arith.addf %84, %85 : vector<8x2079xf32>
    %cst_69 = arith.constant 0.000000e+00 : f32
    %87 = vector.broadcast %cst_69 : f32 to vector<8x2079xf32>
    %88 = arith.maximumf %86, %87 : vector<8x2079xf32>
    %c0_70 = arith.constant 0 : index
    %c0_71 = arith.constant 0 : index
    %89 = vector.load %arg8[%c0_70, %c0_71] : memref<8x2079xf32, #tpu.memory_space<vmem>>, vector<8x2079xf32>
    tpu.vector_store %arg8[%c0_70, %c0_71], %88 {strides = array<i32>} : memref<8x2079xf32, #tpu.memory_space<vmem>>, vector<8x2079xf32>,
    %c0_72 = arith.constant 0 : index
    %c0_73 = arith.constant 0 : index
    %90 = vector.load %arg5[%c0_72, %c0_73] : memref<8x1xf32, #tpu.memory_space<vmem>>, vector<8x1xf32>
    %c0_74 = arith.constant 0 : index
    %c0_75 = arith.constant 0 : index
    %91 = vector.load %arg6[%c0_74, %c0_75] : memref<8x1xf32, #tpu.memory_space<vmem>>, vector<8x1xf32>
    %92 = vector.broadcast %59 : vector<1x2079xf32> to vector<8x2079xf32>
    %93 = arith.mulf %58, %92 : vector<8x2079xf32>
    %cst_76 = arith.constant dense<0.000000e+00> : vector<8xf32>
    %94 = vector.multi_reduction <add>, %93, %cst_76 [1] : vector<8x2079xf32> to vector<8xf32>
    %95 = vector.shape_cast %94 : vector<8xf32> to vector<8x1xf32>
    %cst_77 = arith.constant 5.04032243E-4 : f32
    %96 = vector.broadcast %cst_77 : f32 to vector<8x1xf32>
    %97 = arith.mulf %95, %96 : vector<8x1xf32>
    %98 = vector.broadcast %97 : vector<8x1xf32> to vector<8x2079xf32>
    %99 = arith.subf %58, %98 : vector<8x2079xf32>
    %100 = vector.broadcast %59 : vector<1x2079xf32> to vector<8x2079xf32>
    %101 = arith.mulf %99, %100 : vector<8x2079xf32>
    %102 = arith.mulf %101, %101 : vector<8x2079xf32>
    %cst_78 = arith.constant dense<0.000000e+00> : vector<8xf32>
    %103 = vector.multi_reduction <add>, %102, %cst_78 [1] : vector<8x2079xf32> to vector<8xf32>
    %104 = vector.shape_cast %103 : vector<8xf32> to vector<8x1xf32>
    %cst_79 = arith.constant 5.04032243E-4 : f32
    %105 = vector.broadcast %cst_79 : f32 to vector<8x1xf32>
    %106 = arith.mulf %104, %105 : vector<8x1xf32>
    %cst_80 = arith.constant 9.99999974E-6 : f32
    %107 = vector.broadcast %cst_80 : f32 to vector<8x1xf32>
    %108 = arith.addf %106, %107 : vector<8x1xf32>
    %109 = math.rsqrt %108 : vector<8x1xf32>
    %110 = arith.mulf %90, %109 : vector<8x1xf32>
    %111 = arith.mulf %97, %110 : vector<8x1xf32>
    %112 = arith.subf %91, %111 : vector<8x1xf32>
    %113 = vector.broadcast %110 : vector<8x1xf32> to vector<8x2079xf32>
    %114 = arith.mulf %58, %113 : vector<8x2079xf32>
    %115 = vector.broadcast %112 : vector<8x1xf32> to vector<8x2079xf32>
    %116 = arith.addf %114, %115 : vector<8x2079xf32>
    %c0_81 = arith.constant 0 : index
    %c0_82 = arith.constant 0 : index
    %117 = vector.load %arg9[%c0_81, %c0_82] : memref<8x2079xf32, #tpu.memory_space<vmem>>, vector<8x2079xf32>
    tpu.vector_store %arg9[%c0_81, %c0_82], %116 {strides = array<i32>} : memref<8x2079xf32, #tpu.memory_space<vmem>>, vector<8x2079xf32>,
    return
  }
}

</mosaic_0001>

<llo_original>
// kernel: tpu_custom_call.1
$region0: #{tpu_custom_call.1}
  #allocation0 [shape = 'u32[]', space=smem, size = 0x4, offset = 0x4, fixed_abs, tag = 'smem constant byte address 0x4 - core index']
  #allocation1 [shape = 'u32[144,128]{1,0:T(1,128)}', space=vmem, size = 0x12000, scoped, tag = 'internal scratch']
  %s0 = inlined_call_operand.hbm [shape: f32[4,4,2112], index: 0, kind: input, shape index: {}]
  %s1 = inlined_call_operand.vmem [shape: f32[9,8,4], index: 1, kind: input, shape index: {}]
  %s2 = inlined_call_operand.vmem [shape: f32[8,4], index: 2, kind: input, shape index: {}]
  %s3 = inlined_call_operand.vmem [shape: f32[8,1], index: 3, kind: input, shape index: {}]
  %s4 = inlined_call_operand.vmem [shape: f32[8,1], index: 4, kind: input, shape index: {}]
  %s5 = inlined_call_operand.vmem [shape: f32[8,1], index: 5, kind: input, shape index: {}]
  %s6 = inlined_call_operand.vmem [shape: f32[8,1], index: 6, kind: input, shape index: {}]
  %s7 = inlined_call_operand.vmem [shape: f32[1,2079], index: 7, kind: input, shape index: {}]
  %s8 = inlined_call_operand.hbm [shape: f32[8,2079], index: 8, kind: output, shape index: {0}]
  %s9 = inlined_call_operand.hbm [shape: f32[8,2079], index: 9, kind: output, shape index: {1}]
  %10 = xla_tuple %s8, %s9
  %s11 = sld [smem:[#allocation0]]
  $region54: #{tpu_custom_call.1} parent=0
    _
  %s13 = ssub.s32 1, %s11
  %s14 = scalar_select 0, %s13, %s11
  $region1: #{tpu_custom_call.1} parent=0
    #allocation2 [shape = 'u8[139264]{0}', space=vmem, size = 0x22000, scoped, tag = 'input window, operand 0, single buffered']
    #allocation3 [shape = 's32[1]{0}', space=sflag, size = 0x4, scoped, tag = 'scoped memory for tpu_custom_call.1']
    #allocation4 [shape = 's32[1]{0}', space=sflag, size = 0x4, scoped, tag = 'scoped memory for tpu_custom_call.1']
    #allocation5 [shape = 'u8[69632]{0}', space=vmem, size = 0x11000, scoped, tag = 'output window, operand 0, single buffered']
    #allocation6 [shape = 'u8[69632]{0}', space=vmem, size = 0x11000, scoped, tag = 'output window, operand 1, single buffered']
    #allocation7 [shape = 's32[1]{0}', space=sflag, size = 0x4, scoped, tag = 'scoped memory for tpu_custom_call.1']
    %15 = vsyncpa [#allocation3], 0
    %16 = vsyncpa [#allocation4], 0
    %17 = vsyncpa [#allocation7], 0
    // Predicated region
    $region2: #{tpu_custom_call.1} parent=1 // pred_check
      _
    $region3: #{tpu_custom_call.1} parent=1 // pred_check_branch
      %19 = sbr.rel (0) target = $region5
    $region4: #{tpu_custom_call.1} parent=1 // pred_region
      %s21 = ssub.s32 4352, 4352
      %22 = vsyncadd [#allocation3], %s21
      %s23 = sshll.u32 [#allocation2], 4
      %s24 = int_to_ptr.vmem [resolvable:$true] %s23
      %29 = dma.hbm_to_vmem [thread:$0]  %s0, 4352, %s24, [#allocation3], 1088, 1088, 68
    $region5: #{tpu_custom_call.1} parent=1 // pred_fallthru
      _
    // Predicated region
    $region6: #{tpu_custom_call.1} parent=1 // pred_check
      _
    $region7: #{tpu_custom_call.1} parent=1 // pred_check_branch
      %31 = sbr.rel (0) target = $region9
    $region8: #{tpu_custom_call.1} parent=1 // pred_region
      _
    $region9: #{tpu_custom_call.1} parent=1 // pred_fallthru
      _
    // Predicated region
    $region10: #{tpu_custom_call.1} parent=1 // pred_check
      _
    $region11: #{tpu_custom_call.1} parent=1 // pred_check_branch
      %33 = sbr.rel (0) target = $region13
    $region12: #{tpu_custom_call.1} parent=1 // pred_region
      _
    $region13: #{tpu_custom_call.1} parent=1 // pred_fallthru
      _
    // Predicated region
    $region14: #{tpu_custom_call.1} parent=1 // pred_check
      _
    $region15: #{tpu_custom_call.1} parent=1 // pred_check_branch
      %35 = sbr.rel (0) target = $region17
    $region16: #{tpu_custom_call.1} parent=1 // pred_region
      _
    $region17: #{tpu_custom_call.1} parent=1 // pred_fallthru
      _
    // Predicated region
    $region18: #{tpu_custom_call.1} parent=1 // pred_check
      _
    $region19: #{tpu_custom_call.1} parent=1 // pred_check_branch
      %37 = sbr.rel (0) target = $region21
    $region20: #{tpu_custom_call.1} parent=1 // pred_region
      _
    $region21: #{tpu_custom_call.1} parent=1 // pred_fallthru
      _
    // Predicated region
    $region22: #{tpu_custom_call.1} parent=1 // pred_check
      _
    $region23: #{tpu_custom_call.1} parent=1 // pred_check_branch
      %39 = sbr.rel (0) target = $region25
    $region24: #{tpu_custom_call.1} parent=1 // pred_region
      _
    $region25: #{tpu_custom_call.1} parent=1 // pred_fallthru
      _
    // Predicated region
    $region26: #{tpu_custom_call.1} parent=1 // pred_check
      _
    $region27: #{tpu_custom_call.1} parent=1 // pred_check_branch
      %41 = sbr.rel (0) target = $region29
    $region28: #{tpu_custom_call.1} parent=1 // pred_region
      _
    $region29: #{tpu_custom_call.1} parent=1 // pred_fallthru
      _
    // Predicated region
    $region30: #{tpu_custom_call.1} parent=1 // pred_check
      _
    $region31: #{tpu_custom_call.1} parent=1 // pred_check_branch
      %43 = sbr.rel (0) target = $region33
    $region32: #{tpu_custom_call.1} parent=1 // pred_region
      _
    $region33: #{tpu_custom_call.1} parent=1 // pred_fallthru
      _
    // Predicated region
    $region34: #{tpu_custom_call.1} parent=1 // pred_check
      _
    $region35: #{tpu_custom_call.1} parent=1 // pred_check_branch
      %45 = sbr.rel (0) target = $region37
    $region36: #{tpu_custom_call.1} parent=1 // pred_region
      %46 = dma.done [#allocation3], 4352
    $region37: #{tpu_custom_call.1} parent=1 // pred_fallthru
      _
    %v47 = vld [vmem:[#allocation2] sm:$0xff]
    %v48 = vld [vmem:[#allocation2 + $0x8] sm:$0xff]
    %v49 = vld [vmem:[#allocation2 + $0x10] sm:$0xff]
    %v50 = vld [vmem:[#allocation2 + $0x18] sm:$0xff]
    %v51 = vld [vmem:[#allocation2 + $0x20] sm:$0xff]
    %v52 = vld [vmem:[#allocation2 + $0x28] sm:$0xff]
    %v53 = vld [vmem:[#allocation2 + $0x30] sm:$0xff]
    %v54 = vld [vmem:[#allocation2 + $0x38] sm:$0xff]
    %v55 = vld [vmem:[#allocation2 + $0x40] sm:$0xf]
    %v56 = vld [vmem:[%s1] sm:$0xff]
    %s57 = scalar_lea.vmem [#allocation2], 68
    %v58 = vld [vmem:[%s57] sm:$0xff]
    %v59 = vld [vmem:[%s57 + $0x8] sm:$0xff]
    %v60 = vld [vmem:[%s57 + $0x10] sm:$0xff]
    %v61 = vld [vmem:[%s57 + $0x18] sm:$0xff]
    %v62 = vld [vmem:[%s57 + $0x20] sm:$0xff]
    %v63 = vld [vmem:[%s57 + $0x28] sm:$0xff]
    %v64 = vld [vmem:[%s57 + $0x30] sm:$0xff]
    %v65 = vld [vmem:[%s57 + $0x38] sm:$0xff]
    %v66 = vld [vmem:[%s57 + $0x40] sm:$0xf]
    %s67 = scalar_lea.vmem %s1, 8
    %v68 = vld [vmem:[%s67] sm:$0xff]
    %v78 = vcombine.high %v58, %v58
    %v79 = vcombine.high %v59, %v59
    %v80 = vcombine.high %v60, %v60
    %v81 = vcombine.high %v61, %v61
    %v82 = vcombine.high %v62, %v62
    %v83 = vcombine.high %v63, %v63
    %v84 = vcombine.high %v64, %v64
    %v85 = vcombine.high %v65, %v65
    %vm86 = vcmask 31744
    %v88 = vsel %vm86, %v68, 0
    %vm90 = vcmask 1043456
    %v91 = vsel %vm90, %v58, 0
    %v93 = vsel %vm90, %v78, 0
    %v95 = vsel %vm90, %v59, 0
    %v97 = vsel %vm90, %v79, 0
    %v99 = vsel %vm90, %v60, 0
    %v101 = vsel %vm90, %v80, 0
    %v103 = vsel %vm90, %v61, 0
    %v105 = vsel %vm90, %v81, 0
    %v107 = vsel %vm90, %v62, 0
    %v109 = vsel %vm90, %v82, 0
    %v111 = vsel %vm90, %v63, 0
    %v113 = vsel %vm90, %v83, 0
    %v115 = vsel %vm90, %v64, 0
    %v117 = vsel %vm90, %v84, 0
    %v119 = vsel %vm90, %v65, 0
    %v121 = vsel %vm90, %v85, 0
    %v123 = vsel %vm90, %v66, 0
    %125 = vmatprep.subr.mxu0 %v93
    %126 = vmatpush1.msra.mxu0 %v91
    %127 = vmatprep.subr.mxu0 0.0
    %128 = vmatpush1.msra.mxu0 0.0
    %129 = vmatprep.subr.mxu0 0.0
    %130 = vmatpush1.msra.mxu0 0.0
    %131 = vmatprep.subr.mxu0 0.0
    %132 = vmatpush1.msra.mxu0 0.0
    %133 = vmatprep.subr.mxu0 0.0
    %134 = vmatpush1.msra.mxu0 0.0
    %135 = vmatprep.subr.mxu0 0.0
    %136 = vmatpush1.msra.mxu0 0.0
    %137 = vmatprep.subr.mxu0 0.0
    %138 = vmatpush1.msra.mxu0 0.0
    %139 = vmatprep.subr.mxu0 0.0
    %140 = vmatpush1.msra.mxu0 0.0
    %141 = vmatprep.subr.mxu0 0.0
    %142 = vmatpush1.msra.mxu0 0.0
    %143 = vmatprep.subr.mxu0 0.0
    %144 = vmatpush1.msra.mxu0 0.0
    %145 = vmatprep.subr.mxu0 0.0
    %146 = vmatpush1.msra.mxu0 0.0
    %147 = vmatprep.subr.mxu0 0.0
    %148 = vmatpush1.msra.mxu0 0.0
    %149 = vmatprep.subr.mxu0 0.0
    %150 = vmatpush1.msra.mxu0 0.0
    %151 = vmatprep.subr.mxu0 0.0
    %152 = vmatpush1.msra.mxu0 0.0
    %153 = vmatprep.subr.mxu0 0.0
    %154 = vmatpush1.msra.mxu0 0.0
    %155 = vmatprep.subr.mxu0 0.0
    %156 = vmatpush1.msra.mxu0 0.0
    %157 = vmatprep.subr.mxu0 0.0
    %158 = vmatpush1.msra.mxu0 0.0
    %159 = vmatprep.subr.mxu0 0.0
    %160 = vmatpush1.msra.mxu0 0.0
    %161 = vmatprep.subr.mxu0 0.0
    %162 = vmatpush1.msra.mxu0 0.0
    %163 = vmatprep.subr.mxu0 0.0
    %164 = vmatpush1.msra.mxu0 0.0
    %165 = vmatprep.subr.mxu0 0.0
    %166 = vmatpush1.msra.mxu0 0.0
    %167 = vmatprep.subr.mxu0 0.0
    %168 = vmatpush1.msra.mxu0 0.0
    %169 = vmatprep.subr.mxu0 0.0
    %170 = vmatpush1.msra.mxu0 0.0
    %171 = vmatprep.subr.mxu0 0.0
    %172 = vmatpush1.msra.mxu0 0.0
    %173 = vmatprep.subr.mxu0 0.0
    %174 = vmatpush1.msra.mxu0 0.0
    %175 = vmatprep.subr.mxu0 0.0
    %176 = vmatpush1.msra.mxu0 0.0
    %177 = vmatprep.subr.mxu0 0.0
    %178 = vmatpush1.msra.mxu0 0.0
    %179 = vmatprep.subr.mxu0 0.0
    %180 = vmatpush1.msra.mxu0 0.0
    %181 = vmatprep.subr.mxu0 0.0
    %182 = vmatpush1.msra.mxu0 0.0
    %183 = vmatprep.subr.mxu0 0.0
    %184 = vmatpush1.msra.mxu0 0.0
    %185 = vmatprep.subr.mxu0 0.0
    %186 = vmatpush1.msra.mxu0 0.0
    %187 = vmatprep.subr.mxu0 0.0
    %188 = vmatpush1.msra.mxu0 0.0
    %189 = vmatprep.mubr.f32.mxu0 0.0
    %190 = vmatmul.mubr.f32.gmra.mrb[0].mxu0 %v88
    %v191 = vpop.f32.mrb[0].mxu0
    %v192 = vadd.f32 0.0, %v191
    %v193 = vpop.f32.mrb[0].mxu0
    %v194 = vadd.f32 0.0, %v193
    %195 = vdwg.mxu0
    %196 = vmatprep.subr.mxu0 %v97
    %197 = vmatpush1.msra.mxu0 %v95
    %198 = vmatprep.subr.mxu0 0.0
    %199 = vmatpush1.msra.mxu0 0.0
    %200 = vmatprep.subr.mxu0 0.0
    %201 = vmatpush1.msra.mxu0 0.0
    %202 = vmatprep.subr.mxu0 0.0
    %203 = vmatpush1.msra.mxu0 0.0
    %204 = vmatprep.subr.mxu0 0.0
    %205 = vmatpush1.msra.mxu0 0.0
    %206 = vmatprep.subr.mxu0 0.0
    %207 = vmatpush1.msra.mxu0 0.0
    %208 = vmatprep.subr.mxu0 0.0
    %209 = vmatpush1.msra.mxu0 0.0
    %210 = vmatprep.subr.mxu0 0.0
    %211 = vmatpush1.msra.mxu0 0.0
    %212 = vmatprep.subr.mxu0 0.0
    %213 = vmatpush1.msra.mxu0 0.0
    %214 = vmatprep.subr.mxu0 0.0
    %215 = vmatpush1.msra.mxu0 0.0
    %216 = vmatprep.subr.mxu0 0.0
    %217 = vmatpush1.msra.mxu0 0.0
    %218 = vmatprep.subr.mxu0 0.0
    %219 = vmatpush1.msra.mxu0 0.0
    %220 = vmatprep.subr.mxu0 0.0
    %221 = vmatpush1.msra.mxu0 0.0
    %222 = vmatprep.subr.mxu0 0.0
    %223 = vmatpush1.msra.mxu0 0.0
    %224 = vmatprep.subr.mxu0 0.0
    %225 = vmatpush1.msra.mxu0 0.0
    %226 = vmatprep.subr.mxu0 0.0
    %227 = vmatpush1.msra.mxu0 0.0
    %228 = vmatprep.subr.mxu0 0.0
    %229 = vmatpush1.msra.mxu0 0.0
    %230 = vmatprep.subr.mxu0 0.0
    %231 = vmatpush1.msra.mxu0 0.0
    %232 = vmatprep.subr.mxu0 0.0
    %233 = vmatpush1.msra.mxu0 0.0
    %234 = vmatprep.subr.mxu0 0.0
    %235 = vmatpush1.msra.mxu0 0.0
    %236 = vmatprep.subr.mxu0 0.0
    %237 = vmatpush1.msra.mxu0 0.0
    %238 = vmatprep.subr.mxu0 0.0
    %239 = vmatpush1.msra.mxu0 0.0
    %240 = vmatprep.subr.mxu0 0.0
    %241 = vmatpush1.msra.mxu0 0.0
    %242 = vmatprep.subr.mxu0 0.0
    %243 = vmatpush1.msra.mxu0 0.0
    %244 = vmatprep.subr.mxu0 0.0
    %245 = vmatpush1.msra.mxu0 0.0
    %246 = vmatprep.subr.mxu0 0.0
    %247 = vmatpush1.msra.mxu0 0.0
    %248 = vmatprep.subr.mxu0 0.0
    %249 = vmatpush1.msra.mxu0 0.0
    %250 = vmatprep.subr.mxu0 0.0
    %251 = vmatpush1.msra.mxu0 0.0
    %252 = vmatprep.subr.mxu0 0.0
    %253 = vmatpush1.msra.mxu0 0.0
    %254 = vmatprep.subr.mxu0 0.0
    %255 = vmatpush1.msra.mxu0 0.0
    %256 = vmatprep.subr.mxu0 0.0
    %257 = vmatpush1.msra.mxu0 0.0
    %258 = vmatprep.subr.mxu0 0.0
    %259 = vmatpush1.msra.mxu0 0.0
    %260 = vmatprep.mubr.f32.mxu0 0.0
    %261 = vmatmul.mubr.f32.gmra.mrb[0].mxu0 %v88
    %v262 = vpop.f32.mrb[0].mxu0
    %v263 = vadd.f32 0.0, %v262
    %v264 = vpop.f32.mrb[0].mxu0
    %v265 = vadd.f32 0.0, %v264
    %266 = vdwg.mxu0
    %267 = vmatprep.subr.mxu0 %v101
    %268 = vmatpush1.msra.mxu0 %v99
    %269 = vmatprep.subr.mxu0 0.0
    %270 = vmatpush1.msra.mxu0 0.0
    %271 = vmatprep.subr.mxu0 0.0
    %272 = vmatpush1.msra.mxu0 0.0
    %273 = vmatprep.subr.mxu0 0.0
    %274 = vmatpush1.msra.mxu0 0.0
    %275 = vmatprep.subr.mxu0 0.0
    %276 = vmatpush1.msra.mxu0 0.0
    %277 = vmatprep.subr.mxu0 0.0
    %278 = vmatpush1.msra.mxu0 0.0
    %279 = vmatprep.subr.mxu0 0.0
    %280 = vmatpush1.msra.mxu0 0.0
    %281 = vmatprep.subr.mxu0 0.0
    %282 = vmatpush1.msra.mxu0 0.0
    %283 = vmatprep.subr.mxu0 0.0
    %284 = vmatpush1.msra.mxu0 0.0
    %285 = vmatprep.subr.mxu0 0.0
    %286 = vmatpush1.msra.mxu0 0.0
    %287 = vmatprep.subr.mxu0 0.0
    %288 = vmatpush1.msra.mxu0 0.0
    %289 = vmatprep.subr.mxu0 0.0
    %290 = vmatpush1.msra.mxu0 0.0
    %291 = vmatprep.subr.mxu0 0.0
    %292 = vmatpush1.msra.mxu0 0.0
    %293 = vmatprep.subr.mxu0 0.0
    %294 = vmatpush1.msra.mxu0 0.0
    %295 = vmatprep.subr.mxu0 0.0
    %296 = vmatpush1.msra.mxu0 0.0
    %297 = vmatprep.subr.mxu0 0.0
    %298 = vmatpush1.msra.mxu0 0.0
    %299 = vmatprep.subr.mxu0 0.0
    %300 = vmatpush1.msra.mxu0 0.0
    %301 = vmatprep.subr.mxu0 0.0
    %302 = vmatpush1.msra.mxu0 0.0
    %303 = vmatprep.subr.mxu0 0.0
    %304 = vmatpush1.msra.mxu0 0.0
    %305 = vmatprep.subr.mxu0 0.0
    %306 = vmatpush1.msra.mxu0 0.0
    %307 = vmatprep.subr.mxu0 0.0
    %308 = vmatpush1.msra.mxu0 0.0
    %309 = vmatprep.subr.mxu0 0.0
    %310 = vmatpush1.msra.mxu0 0.0
    %311 = vmatprep.subr.mxu0 0.0
    %312 = vmatpush1.msra.mxu0 0.0
    %313 = vmatprep.subr.mxu0 0.0
    %314 = vmatpush1.msra.mxu0 0.0
    %315 = vmatprep.subr.mxu0 0.0
    %316 = vmatpush1.msra.mxu0 0.0
    %317 = vmatprep.subr.mxu0 0.0
    %318 = vmatpush1.msra.mxu0 0.0
    %319 = vmatprep.subr.mxu0 0.0
    %320 = vmatpush1.msra.mxu0 0.0
    %321 = vmatprep.subr.mxu0 0.0
    %322 = vmatpush1.msra.mxu0 0.0
    %323 = vmatprep.subr.mxu0 0.0
    %324 = vmatpush1.msra.mxu0 0.0
    %325 = vmatprep.subr.mxu0 0.0
    %326 = vmatpush1.msra.mxu0 0.0
    %327 = vmatprep.subr.mxu0 0.0
    %328 = vmatpush1.msra.mxu0 0.0
    %329 = vmatprep.subr.mxu0 0.0
    %330 = vmatpush1.msra.mxu0 0.0
    %331 = vmatprep.mubr.f32.mxu0 0.0
    %332 = vmatmul.mubr.f32.gmra.mrb[0].mxu0 %v88
    %v333 = vpop.f32.mrb[0].mxu0
    %v334 = vadd.f32 0.0, %v333
    %v335 = vpop.f32.mrb[0].mxu0
    %v336 = vadd.f32 0.0, %v335
    %337 = vdwg.mxu0
    %338 = vmatprep.subr.mxu0 %v105
    %339 = vmatpush1.msra.mxu0 %v103
    %340 = vmatprep.subr.mxu0 0.0
    %341 = vmatpush1.msra.mxu0 0.0
    %342 = vmatprep.subr.mxu0 0.0
    %343 = vmatpush1.msra.mxu0 0.0
    %344 = vmatprep.subr.mxu0 0.0
    %345 = vmatpush1.msra.mxu0 0.0
    %346 = vmatprep.subr.mxu0 0.0
    %347 = vmatpush1.msra.mxu0 0.0
    %348 = vmatprep.subr.mxu0 0.0
    %349 = vmatpush1.msra.mxu0 0.0
    %350 = vmatprep.subr.mxu0 0.0
    %351 = vmatpush1.msra.mxu0 0.0
    %352 = vmatprep.subr.mxu0 0.0
    %353 = vmatpush1.msra.mxu0 0.0
    %354 = vmatprep.subr.mxu0 0.0
    %355 = vmatpush1.msra.mxu0 0.0
    %356 = vmatprep.subr.mxu0 0.0
    %357 = vmatpush1.msra.mxu0 0.0
    %358 = vmatprep.subr.mxu0 0.0
    %359 = vmatpush1.msra.mxu0 0.0
    %360 = vmatprep.subr.mxu0 0.0
    %361 = vmatpush1.msra.mxu0 0.0
    %362 = vmatprep.subr.mxu0 0.0
    %363 = vmatpush1.msra.mxu0 0.0
    %364 = vmatprep.subr.mxu0 0.0
    %365 = vmatpush1.msra.mxu0 0.0
    %366 = vmatprep.subr.mxu0 0.0
    %367 = vmatpush1.msra.mxu0 0.0
    %368 = vmatprep.subr.mxu0 0.0
    %369 = vmatpush1.msra.mxu0 0.0
    %370 = vmatprep.subr.mxu0 0.0
    %371 = vmatpush1.msra.mxu0 0.0
    %372 = vmatprep.subr.mxu0 0.0
    %373 = vmatpush1.msra.mxu0 0.0
    %374 = vmatprep.subr.mxu0 0.0
    %375 = vmatpush1.msra.mxu0 0.0
    %376 = vmatprep.subr.mxu0 0.0
    %377 = vmatpush1.msra.mxu0 0.0
    %378 = vmatprep.subr.mxu0 0.0
    %379 = vmatpush1.msra.mxu0 0.0
    %380 = vmatprep.subr.mxu0 0.0
    %381 = vmatpush1.msra.mxu0 0.0
    %382 = vmatprep.subr.mxu0 0.0
    %383 = vmatpush1.msra.mxu0 0.0
    %384 = vmatprep.subr.mxu0 0.0
    %385 = vmatpush1.msra.mxu0 0.0
    %386 = vmatprep.subr.mxu0 0.0
    %387 = vmatpush1.msra.mxu0 0.0
    %388 = vmatprep.subr.mxu0 0.0
    %389 = vmatpush1.msra.mxu0 0.0
    %390 = vmatprep.subr.mxu0 0.0
    %391 = vmatpush1.msra.mxu0 0.0
    %392 = vmatprep.subr.mxu0 0.0
    %393 = vmatpush1.msra.mxu0 0.0
    %394 = vmatprep.subr.mxu0 0.0
    %395 = vmatpush1.msra.mxu0 0.0
    %396 = vmatprep.subr.mxu0 0.0
    %397 = vmatpush1.msra.mxu0 0.0
    %398 = vmatprep.subr.mxu0 0.0
    %399 = vmatpush1.msra.mxu0 0.0
    %400 = vmatprep.subr.mxu0 0.0
    %401 = vmatpush1.msra.mxu0 0.0
    %402 = vmatprep.mubr.f32.mxu0 0.0
    %403 = vmatmul.mubr.f32.gmra.mrb[0].mxu0 %v88
    %v404 = vpop.f32.mrb[0].mxu0
    %v405 = vadd.f32 0.0, %v404
    %v406 = vpop.f32.mrb[0].mxu0
    %v407 = vadd.f32 0.0, %v406
    %408 = vdwg.mxu0
    %409 = vmatprep.subr.mxu0 %v109
    %410 = vmatpush1.msra.mxu0 %v107
    %411 = vmatprep.subr.mxu0 0.0
    %412 = vmatpush1.msra.mxu0 0.0
    %413 = vmatprep.subr.mxu0 0.0
    %414 = vmatpush1.msra.mxu0 0.0
    %415 = vmatprep.subr.mxu0 0.0
    %416 = vmatpush1.msra.mxu0 0.0
    %417 = vmatprep.subr.mxu0 0.0
    %418 = vmatpush1.msra.mxu0 0.0
    %419 = vmatprep.subr.mxu0 0.0
    %420 = vmatpush1.msra.mxu0 0.0
    %421 = vmatprep.subr.mxu0 0.0
    %422 = vmatpush1.msra.mxu0 0.0
    %423 = vmatprep.subr.mxu0 0.0
    %424 = vmatpush1.msra.mxu0 0.0
    %425 = vmatprep.subr.mxu0 0.0
    %426 = vmatpush1.msra.mxu0 0.0
    %427 = vmatprep.subr.mxu0 0.0
    %428 = vmatpush1.msra.mxu0 0.0
    %429 = vmatprep.subr.mxu0 0.0
    %430 = vmatpush1.msra.mxu0 0.0
    %431 = vmatprep.subr.mxu0 0.0
    %432 = vmatpush1.msra.mxu0 0.0
    %433 = vmatprep.subr.mxu0 0.0
    %434 = vmatpush1.msra.mxu0 0.0
    %435 = vmatprep.subr.mxu0 0.0
    %436 = vmatpush1.msra.mxu0 0.0
    %437 = vmatprep.subr.mxu0 0.0
    %438 = vmatpush1.msra.mxu0 0.0
    %439 = vmatprep.subr.mxu0 0.0
    %440 = vmatpush1.msra.mxu0 0.0
    %441 = vmatprep.subr.mxu0 0.0
    %442 = vmatpush1.msra.mxu0 0.0
    %443 = vmatprep.subr.mxu0 0.0
    %444 = vmatpush1.msra.mxu0 0.0
    %445 = vmatprep.subr.mxu0 0.0
    %446 = vmatpush1.msra.mxu0 0.0
    %447 = vmatprep.subr.mxu0 0.0
    %448 = vmatpush1.msra.mxu0 0.0
    %449 = vmatprep.subr.mxu0 0.0
    %450 = vmatpush1.msra.mxu0 0.0
    %451 = vmatprep.subr.mxu0 0.0
    %452 = vmatpush1.msra.mxu0 0.0
    %453 = vmatprep.subr.mxu0 0.0
    %454 = vmatpush1.msra.mxu0 0.0
    %455 = vmatprep.subr.mxu0 0.0
    %456 = vmatpush1.msra.mxu0 0.0
    %457 = vmatprep.subr.mxu0 0.0
    %458 = vmatpush1.msra.mxu0 0.0
    %459 = vmatprep.subr.mxu0 0.0
    %460 = vmatpush1.msra.mxu0 0.0
    %461 = vmatprep.subr.mxu0 0.0
    %462 = vmatpush1.msra.mxu0 0.0
    %463 = vmatprep.subr.mxu0 0.0
    %464 = vmatpush1.msra.mxu0 0.0
    %465 = vmatprep.subr.mxu0 0.0
    %466 = vmatpush1.msra.mxu0 0.0
    %467 = vmatprep.subr.mxu0 0.0
    %468 = vmatpush1.msra.mxu0 0.0
    %469 = vmatprep.subr.mxu0 0.0
    %470 = vmatpush1.msra.mxu0 0.0
    %471 = vmatprep.subr.mxu0 0.0
    %472 = vmatpush1.msra.mxu0 0.0
    %473 = vmatprep.mubr.f32.mxu0 0.0
    %474 = vmatmul.mubr.f32.gmra.mrb[0].mxu0 %v88
    %v475 = vpop.f32.mrb[0].mxu0
    %v476 = vadd.f32 0.0, %v475
    %v477 = vpop.f32.mrb[0].mxu0
    %v478 = vadd.f32 0.0, %v477
    %479 = vdwg.mxu0
    %480 = vmatprep.subr.mxu0 %v113
    %481 = vmatpush1.msra.mxu0 %v111
    %482 = vmatprep.subr.mxu0 0.0
    %483 = vmatpush1.msra.mxu0 0.0
    %484 = vmatprep.subr.mxu0 0.0
    %485 = vmatpush1.msra.mxu0 0.0
    %486 = vmatprep.subr.mxu0 0.0
    %487 = vmatpush1.msra.mxu0 0.0
    %488 = vmatprep.subr.mxu0 0.0
    %489 = vmatpush1.msra.mxu0 0.0
    %490 = vmatprep.subr.mxu0 0.0
    %491 = vmatpush1.msra.mxu0 0.0
    %492 = vmatprep.subr.mxu0 0.0
    %493 = vmatpush1.msra.mxu0 0.0
    %494 = vmatprep.subr.mxu0 0.0
    %495 = vmatpush1.msra.mxu0 0.0
    %496 = vmatprep.subr.mxu0 0.0
    %497 = vmatpush1.msra.mxu0 0.0
    %498 = vmatprep.subr.mxu0 0.0
    %499 = vmatpush1.msra.mxu0 0.0
    %500 = vmatprep.subr.mxu0 0.0
    %501 = vmatpush1.msra.mxu0 0.0
    %502 = vmatprep.subr.mxu0 0.0
    %503 = vmatpush1.msra.mxu0 0.0
    %504 = vmatprep.subr.mxu0 0.0
    %505 = vmatpush1.msra.mxu0 0.0
    %506 = vmatprep.subr.mxu0 0.0
    %507 = vmatpush1.msra.mxu0 0.0
    %508 = vmatprep.subr.mxu0 0.0
    %509 = vmatpush1.msra.mxu0 0.0
    %510 = vmatprep.subr.mxu0 0.0
    %511 = vmatpush1.msra.mxu0 0.0
    %512 = vmatprep.subr.mxu0 0.0
    %513 = vmatpush1.msra.mxu0 0.0
    %514 = vmatprep.subr.mxu0 0.0
    %515 = vmatpush1.msra.mxu0 0.0
    %516 = vmatprep.subr.mxu0 0.0
    %517 = vmatpush1.msra.mxu0 0.0
    %518 = vmatprep.subr.mxu0 0.0
    %519 = vmatpush1.msra.mxu0 0.0
    %520 = vmatprep.subr.mxu0 0.0
    %521 = vmatpush1.msra.mxu0 0.0
    %522 = vmatprep.subr.mxu0 0.0
    %523 = vmatpush1.msra.mxu0 0.0
    %524 = vmatprep.subr.mxu0 0.0
    %525 = vmatpush1.msra.mxu0 0.0
    %526 = vmatprep.subr.mxu0 0.0
    %527 = vmatpush1.msra.mxu0 0.0
    %528 = vmatprep.subr.mxu0 0.0
    %529 = vmatpush1.msra.mxu0 0.0
    %530 = vmatprep.subr.mxu0 0.0
    %531 = vmatpush1.msra.mxu0 0.0
    %532 = vmatprep.subr.mxu0 0.0
    %533 = vmatpush1.msra.mxu0 0.0
    %534 = vmatprep.subr.mxu0 0.0
    %535 = vmatpush1.msra.mxu0 0.0
    %536 = vmatprep.subr.mxu0 0.0
    %537 = vmatpush1.msra.mxu0 0.0
    %538 = vmatprep.subr.mxu0 0.0
    %539 = vmatpush1.msra.mxu0 0.0
    %540 = vmatprep.subr.mxu0 0.0
    %541 = vmatpush1.msra.mxu0 0.0
    %542 = vmatprep.subr.mxu0 0.0
    %543 = vmatpush1.msra.mxu0 0.0
    %544 = vmatprep.mubr.f32.mxu0 0.0
    %545 = vmatmul.mubr.f32.gmra.mrb[0].mxu0 %v88
    %v546 = vpop.f32.mrb[0].mxu0
    %v547 = vadd.f32 0.0, %v546
    %v548 = vpop.f32.mrb[0].mxu0
    %v549 = vadd.f32 0.0, %v548
    %550 = vdwg.mxu0
    %551 = vmatprep.subr.mxu0 %v117
    %552 = vmatpush1.msra.mxu0 %v115
    %553 = vmatprep.subr.mxu0 0.0
    %554 = vmatpush1.msra.mxu0 0.0
    %555 = vmatprep.subr.mxu0 0.0
    %556 = vmatpush1.msra.mxu0 0.0
    %557 = vmatprep.subr.mxu0 0.0
    %558 = vmatpush1.msra.mxu0 0.0
    %559 = vmatprep.subr.mxu0 0.0
    %560 = vmatpush1.msra.mxu0 0.0
    %561 = vmatprep.subr.mxu0 0.0
    %562 = vmatpush1.msra.mxu0 0.0
    %563 = vmatprep.subr.mxu0 0.0
    %564 = vmatpush1.msra.mxu0 0.0
    %565 = vmatprep.subr.mxu0 0.0
    %566 = vmatpush1.msra.mxu0 0.0
    %567 = vmatprep.subr.mxu0 0.0
    %568 = vmatpush1.msra.mxu0 0.0
    %569 = vmatprep.subr.mxu0 0.0
    %570 = vmatpush1.msra.mxu0 0.0
    %571 = vmatprep.subr.mxu0 0.0
    %572 = vmatpush1.msra.mxu0 0.0
    %573 = vmatprep.subr.mxu0 0.0
    %574 = vmatpush1.msra.mxu0 0.0
    %575 = vmatprep.subr.mxu0 0.0
    %576 = vmatpush1.msra.mxu0 0.0
    %577 = vmatprep.subr.mxu0 0.0
    %578 = vmatpush1.msra.mxu0 0.0
    %579 = vmatprep.subr.mxu0 0.0
    %580 = vmatpush1.msra.mxu0 0.0
    %581 = vmatprep.subr.mxu0 0.0
    %582 = vmatpush1.msra.mxu0 0.0
    %583 = vmatprep.subr.mxu0 0.0
    %584 = vmatpush1.msra.mxu0 0.0
    %585 = vmatprep.subr.mxu0 0.0
    %586 = vmatpush1.msra.mxu0 0.0
    %587 = vmatprep.subr.mxu0 0.0
    %588 = vmatpush1.msra.mxu0 0.0
    %589 = vmatprep.subr.mxu0 0.0
    %590 = vmatpush1.msra.mxu0 0.0
    %591 = vmatprep.subr.mxu0 0.0
    %592 = vmatpush1.msra.mxu0 0.0
    %593 = vmatprep.subr.mxu0 0.0
    %594 = vmatpush1.msra.mxu0 0.0
    %595 = vmatprep.subr.mxu0 0.0
    %596 = vmatpush1.msra.mxu0 0.0
    %597 = vmatprep.subr.mxu0 0.0
    %598 = vmatpush1.msra.mxu0 0.0
    %599 = vmatprep.subr.mxu0 0.0
    %600 = vmatpush1.msra.mxu0 0.0
    %601 = vmatprep.subr.mxu0 0.0
    %602 = vmatpush1.msra.mxu0 0.0
    %603 = vmatprep.subr.mxu0 0.0
    %604 = vmatpush1.msra.mxu0 0.0
    %605 = vmatprep.subr.mxu0 0.0
    %606 = vmatpush1.msra.mxu0 0.0
    %607 = vmatprep.subr.mxu0 0.0
    %608 = vmatpush1.msra.mxu0 0.0
    %609 = vmatprep.subr.mxu0 0.0
    %610 = vmatpush1.msra.mxu0 0.0
    %611 = vmatprep.subr.mxu0 0.0
    %612 = vmatpush1.msra.mxu0 0.0
    %613 = vmatprep.subr.mxu0 0.0
    %614 = vmatpush1.msra.mxu0 0.0
    %615 = vmatprep.mubr.f32.mxu0 0.0
    %616 = vmatmul.mubr.f32.gmra.mrb[0].mxu0 %v88
    %v617 = vpop.f32.mrb[0].mxu0
    %v618 = vadd.f32 0.0, %v617
    %v619 = vpop.f32.mrb[0].mxu0
    %v620 = vadd.f32 0.0, %v619
    %621 = vdwg.mxu0
    %622 = vmatprep.subr.mxu0 %v121
    %623 = vmatpush1.msra.mxu0 %v119
    %624 = vmatprep.subr.mxu0 0.0
    %625 = vmatpush1.msra.mxu0 0.0
    %626 = vmatprep.subr.mxu0 0.0
    %627 = vmatpush1.msra.mxu0 0.0
    %628 = vmatprep.subr.mxu0 0.0
    %629 = vmatpush1.msra.mxu0 0.0
    %630 = vmatprep.subr.mxu0 0.0
    %631 = vmatpush1.msra.mxu0 0.0
    %632 = vmatprep.subr.mxu0 0.0
    %633 = vmatpush1.msra.mxu0 0.0
    %634 = vmatprep.subr.mxu0 0.0
    %635 = vmatpush1.msra.mxu0 0.0
    %636 = vmatprep.subr.mxu0 0.0
    %637 = vmatpush1.msra.mxu0 0.0
    %638 = vmatprep.subr.mxu0 0.0
    %639 = vmatpush1.msra.mxu0 0.0
    %640 = vmatprep.subr.mxu0 0.0
    %641 = vmatpush1.msra.mxu0 0.0
    %642 = vmatprep.subr.mxu0 0.0
    %643 = vmatpush1.msra.mxu0 0.0
    %644 = vmatprep.subr.mxu0 0.0
    %645 = vmatpush1.msra.mxu0 0.0
    %646 = vmatprep.subr.mxu0 0.0
    %647 = vmatpush1.msra.mxu0 0.0
    %648 = vmatprep.subr.mxu0 0.0
    %649 = vmatpush1.msra.mxu0 0.0
    %650 = vmatprep.subr.mxu0 0.0
    %651 = vmatpush1.msra.mxu0 0.0
    %652 = vmatprep.subr.mxu0 0.0
    %653 = vmatpush1.msra.mxu0 0.0
    %654 = vmatprep.subr.mxu0 0.0
    %655 = vmatpush1.msra.mxu0 0.0
    %656 = vmatprep.subr.mxu0 0.0
    %657 = vmatpush1.msra.mxu0 0.0
    %658 = vmatprep.subr.mxu0 0.0
    %659 = vmatpush1.msra.mxu0 0.0
    %660 = vmatprep.subr.mxu0 0.0
    %661 = vmatpush1.msra.mxu0 0.0
    %662 = vmatprep.subr.mxu0 0.0
    %663 = vmatpush1.msra.mxu0 0.0
    %664 = vmatprep.subr.mxu0 0.0
    %665 = vmatpush1.msra.mxu0 0.0
    %666 = vmatprep.subr.mxu0 0.0
    %667 = vmatpush1.msra.mxu0 0.0
    %668 = vmatprep.subr.mxu0 0.0
    %669 = vmatpush1.msra.mxu0 0.0
    %670 = vmatprep.subr.mxu0 0.0
    %671 = vmatpush1.msra.mxu0 0.0
    %672 = vmatprep.subr.mxu0 0.0
    %673 = vmatpush1.msra.mxu0 0.0
    %674 = vmatprep.subr.mxu0 0.0
    %675 = vmatpush1.msra.mxu0 0.0
    %676 = vmatprep.subr.mxu0 0.0
    %677 = vmatpush1.msra.mxu0 0.0
    %678 = vmatprep.subr.mxu0 0.0
    %679 = vmatpush1.msra.mxu0 0.0
    %680 = vmatprep.subr.mxu0 0.0
    %681 = vmatpush1.msra.mxu0 0.0
    %682 = vmatprep.subr.mxu0 0.0
    %683 = vmatpush1.msra.mxu0 0.0
    %684 = vmatprep.subr.mxu0 0.0
    %685 = vmatpush1.msra.mxu0 0.0
    %686 = vmatprep.mubr.f32.mxu0 0.0
    %687 = vmatmul.mubr.f32.gmra.mrb[0].mxu0 %v88
    %v688 = vpop.f32.mrb[0].mxu0
    %v689 = vadd.f32 0.0, %v688
    %v690 = vpop.f32.mrb[0].mxu0
    %v691 = vadd.f32 0.0, %v690
    %692 = vdwg.mxu0
    %693 = vmatprep.subr.mxu0 0.0
    %694 = vmatpush1.msra.mxu0 %v123
    %695 = vmatprep.subr.mxu0 0.0
    %696 = vmatpush1.msra.mxu0 0.0
    %697 = vmatprep.subr.mxu0 0.0
    %698 = vmatpush1.msra.mxu0 0.0
    %699 = vmatprep.subr.mxu0 0.0
    %700 = vmatpush1.msra.mxu0 0.0
    %701 = vmatprep.subr.mxu0 0.0
    %702 = vmatpush1.msra.mxu0 0.0
    %703 = vmatprep.subr.mxu0 0.0
    %704 = vmatpush1.msra.mxu0 0.0
    %705 = vmatprep.subr.mxu0 0.0
    %706 = vmatpush1.msra.mxu0 0.0
    %707 = vmatprep.subr.mxu0 0.0
    %708 = vmatpush1.msra.mxu0 0.0
    %709 = vmatprep.subr.mxu0 0.0
    %710 = vmatpush1.msra.mxu0 0.0
    %711 = vmatprep.subr.mxu0 0.0
    %712 = vmatpush1.msra.mxu0 0.0
    %713 = vmatprep.subr.mxu0 0.0
    %714 = vmatpush1.msra.mxu0 0.0
    %715 = vmatprep.subr.mxu0 0.0
    %716 = vmatpush1.msra.mxu0 0.0
    %717 = vmatprep.subr.mxu0 0.0
    %718 = vmatpush1.msra.mxu0 0.0
    %719 = vmatprep.subr.mxu0 0.0
    %720 = vmatpush1.msra.mxu0 0.0
    %721 = vmatprep.subr.mxu0 0.0
    %722 = vmatpush1.msra.mxu0 0.0
    %723 = vmatprep.subr.mxu0 0.0
    %724 = vmatpush1.msra.mxu0 0.0
    %725 = vmatprep.subr.mxu0 0.0
    %726 = vmatpush1.msra.mxu0 0.0
    %727 = vmatprep.subr.mxu0 0.0
    %728 = vmatpush1.msra.mxu0 0.0
    %729 = vmatprep.subr.mxu0 0.0
    %730 = vmatpush1.msra.mxu0 0.0
    %731 = vmatprep.subr.mxu0 0.0
    %732 = vmatpush1.msra.mxu0 0.0
    %733 = vmatprep.subr.mxu0 0.0
    %734 = vmatpush1.msra.mxu0 0.0
    %735 = vmatprep.subr.mxu0 0.0
    %736 = vmatpush1.msra.mxu0 0.0
    %737 = vmatprep.subr.mxu0 0.0
    %738 = vmatpush1.msra.mxu0 0.0
    %739 = vmatprep.subr.mxu0 0.0
    %740 = vmatpush1.msra.mxu0 0.0
    %741 = vmatprep.subr.mxu0 0.0
    %742 = vmatpush1.msra.mxu0 0.0
    %743 = vmatprep.subr.mxu0 0.0
    %744 = vmatpush1.msra.mxu0 0.0
    %745 = vmatprep.subr.mxu0 0.0
    %746 = vmatpush1.msra.mxu0 0.0
    %747 = vmatprep.subr.mxu0 0.0
    %748 = vmatpush1.msra.mxu0 0.0
    %749 = vmatprep.subr.mxu0 0.0
    %750 = vmatpush1.msra.mxu0 0.0
    %751 = vmatprep.subr.mxu0 0.0
    %752 = vmatpush1.msra.mxu0 0.0
    %753 = vmatprep.subr.mxu0 0.0
    %754 = vmatpush1.msra.mxu0 0.0
    %755 = vmatprep.subr.mxu0 0.0
    %756 = vmatpush1.msra.mxu0 0.0
    %757 = vmatprep.mubr.f32.mxu0 0.0
    %758 = vmatmul.mubr.f32.gmra.mrb[0].mxu0 %v88
    %v759 = vpop.f32.mrb[0].mxu0
    %v760 = vadd.f32 0.0, %v759
    %v761 = vpop.f32.mrb[0].mxu0
    %762 = vdwg.mxu0
    %v772 = vcombine.high %v47, %v47
    %v773 = vcombine.high %v48, %v48
    %v774 = vcombine.high %v49, %v49
    %v775 = vcombine.high %v50, %v50
    %v776 = vcombine.high %v51, %v51
    %v777 = vcombine.high %v52, %v52
    %v778 = vcombine.high %v53, %v53
    %v779 = vcombine.high %v54, %v54
    %v781 = vsel %vm86, %v56, 0
    %v783 = vsel %vm90, %v47, 0
    %v785 = vsel %vm90, %v772, 0
    %v787 = vsel %vm90, %v48, 0
    %v789 = vsel %vm90, %v773, 0
    %v791 = vsel %vm90, %v49, 0
    %v793 = vsel %vm90, %v774, 0
    %v795 = vsel %vm90, %v50, 0
    %v797 = vsel %vm90, %v775, 0
    %v799 = vsel %vm90, %v51, 0
    %v801 = vsel %vm90, %v776, 0
    %v803 = vsel %vm90, %v52, 0
    %v805 = vsel %vm90, %v777, 0
    %v807 = vsel %vm90, %v53, 0
    %v809 = vsel %vm90, %v778, 0
    %v811 = vsel %vm90, %v54, 0
    %v813 = vsel %vm90, %v779, 0
    %v815 = vsel %vm90, %v55, 0
    %817 = vmatprep.subr.mxu0 %v785
    %818 = vmatpush1.msra.mxu0 %v783
    %819 = vmatprep.subr.mxu0 0.0
    %820 = vmatpush1.msra.mxu0 0.0
    %821 = vmatprep.subr.mxu0 0.0
    %822 = vmatpush1.msra.mxu0 0.0
    %823 = vmatprep.subr.mxu0 0.0
    %824 = vmatpush1.msra.mxu0 0.0
    %825 = vmatprep.subr.mxu0 0.0
    %826 = vmatpush1.msra.mxu0 0.0
    %827 = vmatprep.subr.mxu0 0.0
    %828 = vmatpush1.msra.mxu0 0.0
    %829 = vmatprep.subr.mxu0 0.0
    %830 = vmatpush1.msra.mxu0 0.0
    %831 = vmatprep.subr.mxu0 0.0
    %832 = vmatpush1.msra.mxu0 0.0
    %833 = vmatprep.subr.mxu0 0.0
    %834 = vmatpush1.msra.mxu0 0.0
    %835 = vmatprep.subr.mxu0 0.0
    %836 = vmatpush1.msra.mxu0 0.0
    %837 = vmatprep.subr.mxu0 0.0
    %838 = vmatpush1.msra.mxu0 0.0
    %839 = vmatprep.subr.mxu0 0.0
    %840 = vmatpush1.msra.mxu0 0.0
    %841 = vmatprep.subr.mxu0 0.0
    %842 = vmatpush1.msra.mxu0 0.0
    %843 = vmatprep.subr.mxu0 0.0
    %844 = vmatpush1.msra.mxu0 0.0
    %845 = vmatprep.subr.mxu0 0.0
    %846 = vmatpush1.msra.mxu0 0.0
    %847 = vmatprep.subr.mxu0 0.0
    %848 = vmatpush1.msra.mxu0 0.0
    %849 = vmatprep.subr.mxu0 0.0
    %850 = vmatpush1.msra.mxu0 0.0
    %851 = vmatprep.subr.mxu0 0.0
    %852 = vmatpush1.msra.mxu0 0.0
    %853 = vmatprep.subr.mxu0 0.0
    %854 = vmatpush1.msra.mxu0 0.0
    %855 = vmatprep.subr.mxu0 0.0
    %856 = vmatpush1.msra.mxu0 0.0
    %857 = vmatprep.subr.mxu0 0.0
    %858 = vmatpush1.msra.mxu0 0.0
    %859 = vmatprep.subr.mxu0 0.0
    %860 = vmatpush1.msra.mxu0 0.0
    %861 = vmatprep.subr.mxu0 0.0
    %862 = vmatpush1.msra.mxu0 0.0
    %863 = vmatprep.subr.mxu0 0.0
    %864 = vmatpush1.msra.mxu0 0.0
    %865 = vmatprep.subr.mxu0 0.0
    %866 = vmatpush1.msra.mxu0 0.0
    %867 = vmatprep.subr.mxu0 0.0
    %868 = vmatpush1.msra.mxu0 0.0
    %869 = vmatprep.subr.mxu0 0.0
    %870 = vmatpush1.msra.mxu0 0.0
    %871 = vmatprep.subr.mxu0 0.0
    %872 = vmatpush1.msra.mxu0 0.0
    %873 = vmatprep.subr.mxu0 0.0
    %874 = vmatpush1.msra.mxu0 0.0
    %875 = vmatprep.subr.mxu0 0.0
    %876 = vmatpush1.msra.mxu0 0.0
    %877 = vmatprep.subr.mxu0 0.0
    %878 = vmatpush1.msra.mxu0 0.0
    %879 = vmatprep.subr.mxu0 0.0
    %880 = vmatpush1.msra.mxu0 0.0
    %881 = vmatprep.mubr.f32.mxu0 0.0
    %882 = vmatmul.mubr.f32.gmra.mrb[0].mxu0 %v781
    %v883 = vpop.f32.mrb[0].mxu0
    %v884 = vadd.f32 %v192, %v883
    %v885 = vpop.f32.mrb[0].mxu0
    %v886 = vadd.f32 %v194, %v885
    %887 = vdwg.mxu0
    %888 = vmatprep.subr.mxu0 %v789
    %889 = vmatpush1.msra.mxu0 %v787
    %890 = vmatprep.subr.mxu0 0.0
    %891 = vmatpush1.msra.mxu0 0.0
    %892 = vmatprep.subr.mxu0 0.0
    %893 = vmatpush1.msra.mxu0 0.0
    %894 = vmatprep.subr.mxu0 0.0
    %895 = vmatpush1.msra.mxu0 0.0
    %896 = vmatprep.subr.mxu0 0.0
    %897 = vmatpush1.msra.mxu0 0.0
    %898 = vmatprep.subr.mxu0 0.0
    %899 = vmatpush1.msra.mxu0 0.0
    %900 = vmatprep.subr.mxu0 0.0
    %901 = vmatpush1.msra.mxu0 0.0
    %902 = vmatprep.subr.mxu0 0.0
    %903 = vmatpush1.msra.mxu0 0.0
    %904 = vmatprep.subr.mxu0 0.0
    %905 = vmatpush1.msra.mxu0 0.0
    %906 = vmatprep.subr.mxu0 0.0
    %907 = vmatpush1.msra.mxu0 0.0
    %908 = vmatprep.subr.mxu0 0.0
    %909 = vmatpush1.msra.mxu0 0.0
    %910 = vmatprep.subr.mxu0 0.0
    %911 = vmatpush1.msra.mxu0 0.0
    %912 = vmatprep.subr.mxu0 0.0
    %913 = vmatpush1.msra.mxu0 0.0
    %914 = vmatprep.subr.mxu0 0.0
    %915 = vmatpush1.msra.mxu0 0.0
    %916 = vmatprep.subr.mxu0 0.0
    %917 = vmatpush1.msra.mxu0 0.0
    %918 = vmatprep.subr.mxu0 0.0
    %919 = vmatpush1.msra.mxu0 0.0
    %920 = vmatprep.subr.mxu0 0.0
    %921 = vmatpush1.msra.mxu0 0.0
    %922 = vmatprep.subr.mxu0 0.0
    %923 = vmatpush1.msra.mxu0 0.0
    %924 = vmatprep.subr.mxu0 0.0
    %925 = vmatpush1.msra.mxu0 0.0
    %926 = vmatprep.subr.mxu0 0.0
    %927 = vmatpush1.msra.mxu0 0.0
    %928 = vmatprep.subr.mxu0 0.0
    %929 = vmatpush1.msra.mxu0 0.0
    %930 = vmatprep.subr.mxu0 0.0
    %931 = vmatpush1.msra.mxu0 0.0
    %932 = vmatprep.subr.mxu0 0.0
    %933 = vmatpush1.msra.mxu0 0.0
    %934 = vmatprep.subr.mxu0 0.0
    %935 = vmatpush1.msra.mxu0 0.0
    %936 = vmatprep.subr.mxu0 0.0
    %937 = vmatpush1.msra.mxu0 0.0
    %938 = vmatprep.subr.mxu0 0.0
    %939 = vmatpush1.msra.mxu0 0.0
    %940 = vmatprep.subr.mxu0 0.0
    %941 = vmatpush1.msra.mxu0 0.0
    %942 = vmatprep.subr.mxu0 0.0
    %943 = vmatpush1.msra.mxu0 0.0
    %944 = vmatprep.subr.mxu0 0.0
    %945 = vmatpush1.msra.mxu0 0.0
    %946 = vmatprep.subr.mxu0 0.0
    %947 = vmatpush1.msra.mxu0 0.0
    %948 = vmatprep.subr.mxu0 0.0
    %949 = vmatpush1.msra.mxu0 0.0
    %950 = vmatprep.subr.mxu0 0.0
    %951 = vmatpush1.msra.mxu0 0.0
    %952 = vmatprep.mubr.f32.mxu0 0.0
    %953 = vmatmul.mubr.f32.gmra.mrb[0].mxu0 %v781
    %v954 = vpop.f32.mrb[0].mxu0
    %v955 = vadd.f32 %v263, %v954
    %v956 = vpop.f32.mrb[0].mxu0
    %v957 = vadd.f32 %v265, %v956
    %958 = vdwg.mxu0
    %959 = vmatprep.subr.mxu0 %v793
    %960 = vmatpush1.msra.mxu0 %v791
    %961 = vmatprep.subr.mxu0 0.0
    %962 = vmatpush1.msra.mxu0 0.0
    %963 = vmatprep.subr.mxu0 0.0
    %964 = vmatpush1.msra.mxu0 0.0
    %965 = vmatprep.subr.mxu0 0.0
    %966 = vmatpush1.msra.mxu0 0.0
    %967 = vmatprep.subr.mxu0 0.0
    %968 = vmatpush1.msra.mxu0 0.0
    %969 = vmatprep.subr.mxu0 0.0
    %970 = vmatpush1.msra.mxu0 0.0
    %971 = vmatprep.subr.mxu0 0.0
    %972 = vmatpush1.msra.mxu0 0.0
    %973 = vmatprep.subr.mxu0 0.0
    %974 = vmatpush1.msra.mxu0 0.0
    %975 = vmatprep.subr.mxu0 0.0
    %976 = vmatpush1.msra.mxu0 0.0
    %977 = vmatprep.subr.mxu0 0.0
    %978 = vmatpush1.msra.mxu0 0.0
    %979 = vmatprep.subr.mxu0 0.0
    %980 = vmatpush1.msra.mxu0 0.0
    %981 = vmatprep.subr.mxu0 0.0
    %982 = vmatpush1.msra.mxu0 0.0
    %983 = vmatprep.subr.mxu0 0.0
    %984 = vmatpush1.msra.mxu0 0.0
    %985 = vmatprep.subr.mxu0 0.0
    %986 = vmatpush1.msra.mxu0 0.0
    %987 = vmatprep.subr.mxu0 0.0
    %988 = vmatpush1.msra.mxu0 0.0
    %989 = vmatprep.subr.mxu0 0.0
    %990 = vmatpush1.msra.mxu0 0.0
    %991 = vmatprep.subr.mxu0 0.0
    %992 = vmatpush1.msra.mxu0 0.0
    %993 = vmatprep.subr.mxu0 0.0
    %994 = vmatpush1.msra.mxu0 0.0
    %995 = vmatprep.subr.mxu0 0.0
    %996 = vmatpush1.msra.mxu0 0.0
    %997 = vmatprep.subr.mxu0 0.0
    %998 = vmatpush1.msra.mxu0 0.0
    %999 = vmatprep.subr.mxu0 0.0
    %1000 = vmatpush1.msra.mxu0 0.0
    %1001 = vmatprep.subr.mxu0 0.0
    %1002 = vmatpush1.msra.mxu0 0.0
    %1003 = vmatprep.subr.mxu0 0.0
    %1004 = vmatpush1.msra.mxu0 0.0
    %1005 = vmatprep.subr.mxu0 0.0
    %1006 = vmatpush1.msra.mxu0 0.0
    %1007 = vmatprep.subr.mxu0 0.0
    %1008 = vmatpush1.msra.mxu0 0.0
    %1009 = vmatprep.subr.mxu0 0.0
    %1010 = vmatpush1.msra.mxu0 0.0
    %1011 = vmatprep.subr.mxu0 0.0
    %1012 = vmatpush1.msra.mxu0 0.0
    %1013 = vmatprep.subr.mxu0 0.0
    %1014 = vmatpush1.msra.mxu0 0.0
    %1015 = vmatprep.subr.mxu0 0.0
    %1016 = vmatpush1.msra.mxu0 0.0
    %1017 = vmatprep.subr.mxu0 0.0
    %1018 = vmatpush1.msra.mxu0 0.0
    %1019 = vmatprep.subr.mxu0 0.0
    %1020 = vmatpush1.msra.mxu0 0.0
    %1021 = vmatprep.subr.mxu0 0.0
    %1022 = vmatpush1.msra.mxu0 0.0
    %1023 = vmatprep.mubr.f32.mxu0 0.0
    %1024 = vmatmul.mubr.f32.gmra.mrb[0].mxu0 %v781
    %v1025 = vpop.f32.mrb[0].mxu0
    %v1026 = vadd.f32 %v334, %v1025
    %v1027 = vpop.f32.mrb[0].mxu0
    %v1028 = vadd.f32 %v336, %v1027
    %1029 = vdwg.mxu0
    %1030 = vmatprep.subr.mxu0 %v797
    %1031 = vmatpush1.msra.mxu0 %v795
    %1032 = vmatprep.subr.mxu0 0.0
    %1033 = vmatpush1.msra.mxu0 0.0
    %1034 = vmatprep.subr.mxu0 0.0
    %1035 = vmatpush1.msra.mxu0 0.0
    %1036 = vmatprep.subr.mxu0 0.0
    %1037 = vmatpush1.msra.mxu0 0.0
    %1038 = vmatprep.subr.mxu0 0.0
    %1039 = vmatpush1.msra.mxu0 0.0
    %1040 = vmatprep.subr.mxu0 0.0
    %1041 = vmatpush1.msra.mxu0 0.0
    %1042 = vmatprep.subr.mxu0 0.0
    %1043 = vmatpush1.msra.mxu0 0.0
    %1044 = vmatprep.subr.mxu0 0.0
    %1045 = vmatpush1.msra.mxu0 0.0
    %1046 = vmatprep.subr.mxu0 0.0
    %1047 = vmatpush1.msra.mxu0 0.0
    %1048 = vmatprep.subr.mxu0 0.0
    %1049 = vmatpush1.msra.mxu0 0.0
    %1050 = vmatprep.subr.mxu0 0.0
    %1051 = vmatpush1.msra.mxu0 0.0
    %1052 = vmatprep.subr.mxu0 0.0
    %1053 = vmatpush1.msra.mxu0 0.0
    %1054 = vmatprep.subr.mxu0 0.0
    %1055 = vmatpush1.msra.mxu0 0.0
    %1056 = vmatprep.subr.mxu0 0.0
    %1057 = vmatpush1.msra.mxu0 0.0
    %1058 = vmatprep.subr.mxu0 0.0
    %1059 = vmatpush1.msra.mxu0 0.0
    %1060 = vmatprep.subr.mxu0 0.0
    %1061 = vmatpush1.msra.mxu0 0.0
    %1062 = vmatprep.subr.mxu0 0.0
    %1063 = vmatpush1.msra.mxu0 0.0
    %1064 = vmatprep.subr.mxu0 0.0
    %1065 = vmatpush1.msra.mxu0 0.0
    %1066 = vmatprep.subr.mxu0 0.0
    %1067 = vmatpush1.msra.mxu0 0.0
    %1068 = vmatprep.subr.mxu0 0.0
    %1069 = vmatpush1.msra.mxu0 0.0
    %1070 = vmatprep.subr.mxu0 0.0
    %1071 = vmatpush1.msra.mxu0 0.0
    %1072 = vmatprep.subr.mxu0 0.0
    %1073 = vmatpush1.msra.mxu0 0.0
    %1074 = vmatprep.subr.mxu0 0.0
    %1075 = vmatpush1.msra.mxu0 0.0
    %1076 = vmatprep.subr.mxu0 0.0
    %1077 = vmatpush1.msra.mxu0 0.0
    %1078 = vmatprep.subr.mxu0 0.0
    %1079 = vmatpush1.msra.mxu0 0.0
    %1080 = vmatprep.subr.mxu0 0.0
    %1081 = vmatpush1.msra.mxu0 0.0
    %1082 = vmatprep.subr.mxu0 0.0
    %1083 = vmatpush1.msra.mxu0 0.0
    %1084 = vmatprep.subr.mxu0 0.0
    %1085 = vmatpush1.msra.mxu0 0.0
    %1086 = vmatprep.subr.mxu0 0.0
    %1087 = vmatpush1.msra.mxu0 0.0
    %1088 = vmatprep.subr.mxu0 0.0
    %1089 = vmatpush1.msra.mxu0 0.0
    %1090 = vmatprep.subr.mxu0 0.0
    %1091 = vmatpush1.msra.mxu0 0.0
    %1092 = vmatprep.subr.mxu0 0.0
    %1093 = vmatpush1.msra.mxu0 0.0
    %1094 = vmatprep.mubr.f32.mxu0 0.0
    %1095 = vmatmul.mubr.f32.gmra.mrb[0].mxu0 %v781
    %v1096 = vpop.f32.mrb[0].mxu0
    %v1097 = vadd.f32 %v405, %v1096
    %v1098 = vpop.f32.mrb[0].mxu0
    %v1099 = vadd.f32 %v407, %v1098
    %1100 = vdwg.mxu0
    %1101 = vmatprep.subr.mxu0 %v801
    %1102 = vmatpush1.msra.mxu0 %v799
    %1103 = vmatprep.subr.mxu0 0.0
    %1104 = vmatpush1.msra.mxu0 0.0
    %1105 = vmatprep.subr.mxu0 0.0
    %1106 = vmatpush1.msra.mxu0 0.0
    %1107 = vmatprep.subr.mxu0 0.0
    %1108 = vmatpush1.msra.mxu0 0.0
    %1109 = vmatprep.subr.mxu0 0.0
    %1110 = vmatpush1.msra.mxu0 0.0
    %1111 = vmatprep.subr.mxu0 0.0
    %1112 = vmatpush1.msra.mxu0 0.0
    %1113 = vmatprep.subr.mxu0 0.0
    %1114 = vmatpush1.msra.mxu0 0.0
    %1115 = vmatprep.subr.mxu0 0.0
    %1116 = vmatpush1.msra.mxu0 0.0
    %1117 = vmatprep.subr.mxu0 0.0
    %1118 = vmatpush1.msra.mxu0 0.0
    %1119 = vmatprep.subr.mxu0 0.0
    %1120 = vmatpush1.msra.mxu0 0.0
    %1121 = vmatprep.subr.mxu0 0.0
    %1122 = vmatpush1.msra.mxu0 0.0
    %1123 = vmatprep.subr.mxu0 0.0
    %1124 = vmatpush1.msra.mxu0 0.0
    %1125 = vmatprep.subr.mxu0 0.0
    %1126 = vmatpush1.msra.mxu0 0.0
    %1127 = vmatprep.subr.mxu0 0.0
    %1128 = vmatpush1.msra.mxu0 0.0
    %1129 = vmatprep.subr.mxu0 0.0
    %1130 = vmatpush1.msra.mxu0 0.0
    %1131 = vmatprep.subr.mxu0 0.0
    %1132 = vmatpush1.msra.mxu0 0.0
    %1133 = vmatprep.subr.mxu0 0.0
    %1134 = vmatpush1.msra.mxu0 0.0
    %1135 = vmatprep.subr.mxu0 0.0
    %1136 = vmatpush1.msra.mxu0 0.0
    %1137 = vmatprep.subr.mxu0 0.0
    %1138 = vmatpush1.msra.mxu0 0.0
    %1139 = vmatprep.subr.mxu0 0.0
    %1140 = vmatpush1.msra.mxu0 0.0
    %1141 = vmatprep.subr.mxu0 0.0
    %1142 = vmatpush1.msra.mxu0 0.0
    %1143 = vmatprep.subr.mxu0 0.0
    %1144 = vmatpush1.msra.mxu0 0.0
    %1145 = vmatprep.subr.mxu0 0.0
    %1146 = vmatpush1.msra.mxu0 0.0
    %1147 = vmatprep.subr.mxu0 0.0
    %1148 = vmatpush1.msra.mxu0 0.0
    %1149 = vmatprep.subr.mxu0 0.0
    %1150 = vmatpush1.msra.mxu0 0.0
    %1151 = vmatprep.subr.mxu0 0.0
    %1152 = vmatpush1.msra.mxu0 0.0
    %1153 = vmatprep.subr.mxu0 0.0
    %1154 = vmatpush1.msra.mxu0 0.0
    %1155 = vmatprep.subr.mxu0 0.0
    %1156 = vmatpush1.msra.mxu0 0.0
    %1157 = vmatprep.subr.mxu0 0.0
    %1158 = vmatpush1.msra.mxu0 0.0
    %1159 = vmatprep.subr.mxu0 0.0
    %1160 = vmatpush1.msra.mxu0 0.0
    %1161 = vmatprep.subr.mxu0 0.0
    %1162 = vmatpush1.msra.mxu0 0.0
    %1163 = vmatprep.subr.mxu0 0.0
    %1164 = vmatpush1.msra.mxu0 0.0
    %1165 = vmatprep.mubr.f32.mxu0 0.0
    %1166 = vmatmul.mubr.f32.gmra.mrb[0].mxu0 %v781
    %v1167 = vpop.f32.mrb[0].mxu0
    %v1168 = vadd.f32 %v476, %v1167
    %v1169 = vpop.f32.mrb[0].mxu0
    %v1170 = vadd.f32 %v478, %v1169
    %1171 = vdwg.mxu0
    %1172 = vmatprep.subr.mxu0 %v805
    %1173 = vmatpush1.msra.mxu0 %v803
    %1174 = vmatprep.subr.mxu0 0.0
    %1175 = vmatpush1.msra.mxu0 0.0
    %1176 = vmatprep.subr.mxu0 0.0
    %1177 = vmatpush1.msra.mxu0 0.0
    %1178 = vmatprep.subr.mxu0 0.0
    %1179 = vmatpush1.msra.mxu0 0.0
    %1180 = vmatprep.subr.mxu0 0.0
    %1181 = vmatpush1.msra.mxu0 0.0
    %1182 = vmatprep.subr.mxu0 0.0
    %1183 = vmatpush1.msra.mxu0 0.0
    %1184 = vmatprep.subr.mxu0 0.0
    %1185 = vmatpush1.msra.mxu0 0.0
    %1186 = vmatprep.subr.mxu0 0.0
    %1187 = vmatpush1.msra.mxu0 0.0
    %1188 = vmatprep.subr.mxu0 0.0
    %1189 = vmatpush1.msra.mxu0 0.0
    %1190 = vmatprep.subr.mxu0 0.0
    %1191 = vmatpush1.msra.mxu0 0.0
    %1192 = vmatprep.subr.mxu0 0.0
    %1193 = vmatpush1.msra.mxu0 0.0
    %1194 = vmatprep.subr.mxu0 0.0
    %1195 = vmatpush1.msra.mxu0 0.0
    %1196 = vmatprep.subr.mxu0 0.0
    %1197 = vmatpush1.msra.mxu0 0.0
    %1198 = vmatprep.subr.mxu0 0.0
    %1199 = vmatpush1.msra.mxu0 0.0
    %1200 = vmatprep.subr.mxu0 0.0
    %1201 = vmatpush1.msra.mxu0 0.0
    %1202 = vmatprep.subr.mxu0 0.0
    %1203 = vmatpush1.msra.mxu0 0.0
    %1204 = vmatprep.subr.mxu0 0.0
    %1205 = vmatpush1.msra.mxu0 0.0
    %1206 = vmatprep.subr.mxu0 0.0
    %1207 = vmatpush1.msra.mxu0 0.0
    %1208 = vmatprep.subr.mxu0 0.0
    %1209 = vmatpush1.msra.mxu0 0.0
    %1210 = vmatprep.subr.mxu0 0.0
    %1211 = vmatpush1.msra.mxu0 0.0
    %1212 = vmatprep.subr.mxu0 0.0
    %1213 = vmatpush1.msra.mxu0 0.0
    %1214 = vmatprep.subr.mxu0 0.0
    %1215 = vmatpush1.msra.mxu0 0.0
    %1216 = vmatprep.subr.mxu0 0.0
    %1217 = vmatpush1.msra.mxu0 0.0
    %1218 = vmatprep.subr.mxu0 0.0
    %1219 = vmatpush1.msra.mxu0 0.0
    %1220 = vmatprep.subr.mxu0 0.0
    %1221 = vmatpush1.msra.mxu0 0.0
    %1222 = vmatprep.subr.mxu0 0.0
    %1223 = vmatpush1.msra.mxu0 0.0
    %1224 = vmatprep.subr.mxu0 0.0
    %1225 = vmatpush1.msra.mxu0 0.0
    %1226 = vmatprep.subr.mxu0 0.0
    %1227 = vmatpush1.msra.mxu0 0.0
    %1228 = vmatprep.subr.mxu0 0.0
    %1229 = vmatpush1.msra.mxu0 0.0
    %1230 = vmatprep.subr.mxu0 0.0
    %1231 = vmatpush1.msra.mxu0 0.0
    %1232 = vmatprep.subr.mxu0 0.0
    %1233 = vmatpush1.msra.mxu0 0.0
    %1234 = vmatprep.subr.mxu0 0.0
    %1235 = vmatpush1.msra.mxu0 0.0
    %1236 = vmatprep.mubr.f32.mxu0 0.0
    %1237 = vmatmul.mubr.f32.gmra.mrb[0].mxu0 %v781
    %v1238 = vpop.f32.mrb[0].mxu0
    %v1239 = vadd.f32 %v547, %v1238
    %v1240 = vpop.f32.mrb[0].mxu0
    %v1241 = vadd.f32 %v549, %v1240
    %1242 = vdwg.mxu0
    %1243 = vmatprep.subr.mxu0 %v809
    %1244 = vmatpush1.msra.mxu0 %v807
    %1245 = vmatprep.subr.mxu0 0.0
    %1246 = vmatpush1.msra.mxu0 0.0
    %1247 = vmatprep.subr.mxu0 0.0
    %1248 = vmatpush1.msra.mxu0 0.0
    %1249 = vmatprep.subr.mxu0 0.0
    %1250 = vmatpush1.msra.mxu0 0.0
    %1251 = vmatprep.subr.mxu0 0.0
    %1252 = vmatpush1.msra.mxu0 0.0
    %1253 = vmatprep.subr.mxu0 0.0
    %1254 = vmatpush1.msra.mxu0 0.0
    %1255 = vmatprep.subr.mxu0 0.0
    %1256 = vmatpush1.msra.mxu0 0.0
    %1257 = vmatprep.subr.mxu0 0.0
    %1258 = vmatpush1.msra.mxu0 0.0
    %1259 = vmatprep.subr.mxu0 0.0
    %1260 = vmatpush1.msra.mxu0 0.0
    %1261 = vmatprep.subr.mxu0 0.0
    %1262 = vmatpush1.msra.mxu0 0.0
    %1263 = vmatprep.subr.mxu0 0.0
    %1264 = vmatpush1.msra.mxu0 0.0
    %1265 = vmatprep.subr.mxu0 0.0
    %1266 = vmatpush1.msra.mxu0 0.0
    %1267 = vmatprep.subr.mxu0 0.0
    %1268 = vmatpush1.msra.mxu0 0.0
    %1269 = vmatprep.subr.mxu0 0.0
    %1270 = vmatpush1.msra.mxu0 0.0
    %1271 = vmatprep.subr.mxu0 0.0
    %1272 = vmatpush1.msra.mxu0 0.0
    %1273 = vmatprep.subr.mxu0 0.0
    %1274 = vmatpush1.msra.mxu0 0.0
    %1275 = vmatprep.subr.mxu0 0.0
    %1276 = vmatpush1.msra.mxu0 0.0
    %1277 = vmatprep.subr.mxu0 0.0
    %1278 = vmatpush1.msra.mxu0 0.0
    %1279 = vmatprep.subr.mxu0 0.0
    %1280 = vmatpush1.msra.mxu0 0.0
    %1281 = vmatprep.subr.mxu0 0.0
    %1282 = vmatpush1.msra.mxu0 0.0
    %1283 = vmatprep.subr.mxu0 0.0
    %1284 = vmatpush1.msra.mxu0 0.0
    %1285 = vmatprep.subr.mxu0 0.0
    %1286 = vmatpush1.msra.mxu0 0.0
    %1287 = vmatprep.subr.mxu0 0.0
    %1288 = vmatpush1.msra.mxu0 0.0
    %1289 = vmatprep.subr.mxu0 0.0
    %1290 = vmatpush1.msra.mxu0 0.0
    %1291 = vmatprep.subr.mxu0 0.0
    %1292 = vmatpush1.msra.mxu0 0.0
    %1293 = vmatprep.subr.mxu0 0.0
    %1294 = vmatpush1.msra.mxu0 0.0
    %1295 = vmatprep.subr.mxu0 0.0
    %1296 = vmatpush1.msra.mxu0 0.0
    %1297 = vmatprep.subr.mxu0 0.0
    %1298 = vmatpush1.msra.mxu0 0.0
    %1299 = vmatprep.subr.mxu0 0.0
    %1300 = vmatpush1.msra.mxu0 0.0
    %1301 = vmatprep.subr.mxu0 0.0
    %1302 = vmatpush1.msra.mxu0 0.0
    %1303 = vmatprep.subr.mxu0 0.0
    %1304 = vmatpush1.msra.mxu0 0.0
    %1305 = vmatprep.subr.mxu0 0.0
    %1306 = vmatpush1.msra.mxu0 0.0
    %1307 = vmatprep.mubr.f32.mxu0 0.0
    %1308 = vmatmul.mubr.f32.gmra.mrb[0].mxu0 %v781
    %v1309 = vpop.f32.mrb[0].mxu0
    %v1310 = vadd.f32 %v618, %v1309
    %v1311 = vpop.f32.mrb[0].mxu0
    %v1312 = vadd.f32 %v620, %v1311
    %1313 = vdwg.mxu0
    %1314 = vmatprep.subr.mxu0 %v813
    %1315 = vmatpush1.msra.mxu0 %v811
    %1316 = vmatprep.subr.mxu0 0.0
    %1317 = vmatpush1.msra.mxu0 0.0
    %1318 = vmatprep.subr.mxu0 0.0
    %1319 = vmatpush1.msra.mxu0 0.0
    %1320 = vmatprep.subr.mxu0 0.0
    %1321 = vmatpush1.msra.mxu0 0.0
    %1322 = vmatprep.subr.mxu0 0.0
    %1323 = vmatpush1.msra.mxu0 0.0
    %1324 = vmatprep.subr.mxu0 0.0
    %1325 = vmatpush1.msra.mxu0 0.0
    %1326 = vmatprep.subr.mxu0 0.0
    %1327 = vmatpush1.msra.mxu0 0.0
    %1328 = vmatprep.subr.mxu0 0.0
    %1329 = vmatpush1.msra.mxu0 0.0
    %1330 = vmatprep.subr.mxu0 0.0
    %1331 = vmatpush1.msra.mxu0 0.0
    %1332 = vmatprep.subr.mxu0 0.0
    %1333 = vmatpush1.msra.mxu0 0.0
    %1334 = vmatprep.subr.mxu0 0.0
    %1335 = vmatpush1.msra.mxu0 0.0
    %1336 = vmatprep.subr.mxu0 0.0
    %1337 = vmatpush1.msra.mxu0 0.0
    %1338 = vmatprep.subr.mxu0 0.0
    %1339 = vmatpush1.msra.mxu0 0.0
    %1340 = vmatprep.subr.mxu0 0.0
    %1341 = vmatpush1.msra.mxu0 0.0
    %1342 = vmatprep.subr.mxu0 0.0
    %1343 = vmatpush1.msra.mxu0 0.0
    %1344 = vmatprep.subr.mxu0 0.0
    %1345 = vmatpush1.msra.mxu0 0.0
    %1346 = vmatprep.subr.mxu0 0.0
    %1347 = vmatpush1.msra.mxu0 0.0
    %1348 = vmatprep.subr.mxu0 0.0
    %1349 = vmatpush1.msra.mxu0 0.0
    %1350 = vmatprep.subr.mxu0 0.0
    %1351 = vmatpush1.msra.mxu0 0.0
    %1352 = vmatprep.subr.mxu0 0.0
    %1353 = vmatpush1.msra.mxu0 0.0
    %1354 = vmatprep.subr.mxu0 0.0
    %1355 = vmatpush1.msra.mxu0 0.0
    %1356 = vmatprep.subr.mxu0 0.0
    %1357 = vmatpush1.msra.mxu0 0.0
    %1358 = vmatprep.subr.mxu0 0.0
    %1359 = vmatpush1.msra.mxu0 0.0
    %1360 = vmatprep.subr.mxu0 0.0
    %1361 = vmatpush1.msra.mxu0 0.0
    %1362 = vmatprep.subr.mxu0 0.0
    %1363 = vmatpush1.msra.mxu0 0.0
    %1364 = vmatprep.subr.mxu0 0.0
    %1365 = vmatpush1.msra.mxu0 0.0
    %1366 = vmatprep.subr.mxu0 0.0
    %1367 = vmatpush1.msra.mxu0 0.0
    %1368 = vmatprep.subr.mxu0 0.0
    %1369 = vmatpush1.msra.mxu0 0.0
    %1370 = vmatprep.subr.mxu0 0.0
    %1371 = vmatpush1.msra.mxu0 0.0
    %1372 = vmatprep.subr.mxu0 0.0
    %1373 = vmatpush1.msra.mxu0 0.0
    %1374 = vmatprep.subr.mxu0 0.0
    %1375 = vmatpush1.msra.mxu0 0.0
    %1376 = vmatprep.subr.mxu0 0.0
    %1377 = vmatpush1.msra.mxu0 0.0
    %1378 = vmatprep.mubr.f32.mxu0 0.0
    %1379 = vmatmul.mubr.f32.gmra.mrb[0].mxu0 %v781
    %v1380 = vpop.f32.mrb[0].mxu0
    %v1381 = vadd.f32 %v689, %v1380
    %v1382 = vpop.f32.mrb[0].mxu0
    %v1383 = vadd.f32 %v691, %v1382
    %1384 = vdwg.mxu0
    %1385 = vmatprep.subr.mxu0 0.0
    %1386 = vmatpush1.msra.mxu0 %v815
    %1387 = vmatprep.subr.mxu0 0.0
    %1388 = vmatpush1.msra.mxu0 0.0
    %1389 = vmatprep.subr.mxu0 0.0
    %1390 = vmatpush1.msra.mxu0 0.0
    %1391 = vmatprep.subr.mxu0 0.0
    %1392 = vmatpush1.msra.mxu0 0.0
    %1393 = vmatprep.subr.mxu0 0.0
    %1394 = vmatpush1.msra.mxu0 0.0
    %1395 = vmatprep.subr.mxu0 0.0
    %1396 = vmatpush1.msra.mxu0 0.0
    %1397 = vmatprep.subr.mxu0 0.0
    %1398 = vmatpush1.msra.mxu0 0.0
    %1399 = vmatprep.subr.mxu0 0.0
    %1400 = vmatpush1.msra.mxu0 0.0
    %1401 = vmatprep.subr.mxu0 0.0
    %1402 = vmatpush1.msra.mxu0 0.0
    %1403 = vmatprep.subr.mxu0 0.0
    %1404 = vmatpush1.msra.mxu0 0.0
    %1405 = vmatprep.subr.mxu0 0.0
    %1406 = vmatpush1.msra.mxu0 0.0
    %1407 = vmatprep.subr.mxu0 0.0
    %1408 = vmatpush1.msra.mxu0 0.0
    %1409 = vmatprep.subr.mxu0 0.0
    %1410 = vmatpush1.msra.mxu0 0.0
    %1411 = vmatprep.subr.mxu0 0.0
    %1412 = vmatpush1.msra.mxu0 0.0
    %1413 = vmatprep.subr.mxu0 0.0
    %1414 = vmatpush1.msra.mxu0 0.0
    %1415 = vmatprep.subr.mxu0 0.0
    %1416 = vmatpush1.msra.mxu0 0.0
    %1417 = vmatprep.subr.mxu0 0.0
    %1418 = vmatpush1.msra.mxu0 0.0
    %1419 = vmatprep.subr.mxu0 0.0
    %1420 = vmatpush1.msra.mxu0 0.0
    %1421 = vmatprep.subr.mxu0 0.0
    %1422 = vmatpush1.msra.mxu0 0.0
    %1423 = vmatprep.subr.mxu0 0.0
    %1424 = vmatpush1.msra.mxu0 0.0
    %1425 = vmatprep.subr.mxu0 0.0
    %1426 = vmatpush1.msra.mxu0 0.0
    %1427 = vmatprep.subr.mxu0 0.0
    %1428 = vmatpush1.msra.mxu0 0.0
    %1429 = vmatprep.subr.mxu0 0.0
    %1430 = vmatpush1.msra.mxu0 0.0
    %1431 = vmatprep.subr.mxu0 0.0
    %1432 = vmatpush1.msra.mxu0 0.0
    %1433 = vmatprep.subr.mxu0 0.0
    %1434 = vmatpush1.msra.mxu0 0.0
    %1435 = vmatprep.subr.mxu0 0.0
    %1436 = vmatpush1.msra.mxu0 0.0
    %1437 = vmatprep.subr.mxu0 0.0
    %1438 = vmatpush1.msra.mxu0 0.0
    %1439 = vmatprep.subr.mxu0 0.0
    %1440 = vmatpush1.msra.mxu0 0.0
    %1441 = vmatprep.subr.mxu0 0.0
    %1442 = vmatpush1.msra.mxu0 0.0
    %1443 = vmatprep.subr.mxu0 0.0
    %1444 = vmatpush1.msra.mxu0 0.0
    %1445 = vmatprep.subr.mxu0 0.0
    %1446 = vmatpush1.msra.mxu0 0.0
    %1447 = vmatprep.subr.mxu0 0.0
    %1448 = vmatpush1.msra.mxu0 0.0
    %1449 = vmatprep.mubr.f32.mxu0 0.0
    %1450 = vmatmul.mubr.f32.gmra.mrb[0].mxu0 %v781
    %v1451 = vpop.f32.mrb[0].mxu0
    %v1452 = vadd.f32 %v760, %v1451
    %v1453 = vpop.f32.mrb[0].mxu0
    %1454 = vdwg.mxu0
    %v1455 = vld [vmem:[#allocation2] sm:$0xff]
    %v1456 = vld [vmem:[#allocation2 + $0x8] sm:$0xff]
    %v1457 = vld [vmem:[#allocation2 + $0x10] sm:$0xff]
    %v1458 = vld [vmem:[#allocation2 + $0x18] sm:$0xff]
    %v1459 = vld [vmem:[#allocation2 + $0x20] sm:$0xff]
    %v1460 = vld [vmem:[#allocation2 + $0x28] sm:$0xff]
    %v1461 = vld [vmem:[#allocation2 + $0x30] sm:$0xff]
    %v1462 = vld [vmem:[#allocation2 + $0x38] sm:$0xff]
    %v1463 = vld [vmem:[#allocation2 + $0x40] sm:$0xf]
    %s1464 = scalar_lea.vmem %s1, 16
    %v1465 = vld [vmem:[%s1464] sm:$0xff]
    %v1475 = vcombine.high %v1455, %v1455
    %v1476 = vcombine.high %v1456, %v1456
    %v1477 = vcombine.high %v1457, %v1457
    %v1478 = vcombine.high %v1458, %v1458
    %v1479 = vcombine.high %v1459, %v1459
    %v1480 = vcombine.high %v1460, %v1460
    %v1481 = vcombine.high %v1461, %v1461
    %v1482 = vcombine.high %v1462, %v1462
    %1483 = vrot.lane.b32.xlu0 %v1455, 127
    %v1484 = vpop.permute.xlu0 %1483
    %1485 = vrot.lane.b32.xlu0 %v1475, 127
    %v1486 = vpop.permute.xlu0 %1485
    %1487 = vrot.lane.b32.xlu0 %v1456, 127
    %v1488 = vpop.permute.xlu0 %1487
    %1489 = vrot.lane.b32.xlu0 %v1476, 127
    %v1490 = vpop.permute.xlu0 %1489
    %1491 = vrot.lane.b32.xlu0 %v1457, 127
    %v1492 = vpop.permute.xlu0 %1491
    %1493 = vrot.lane.b32.xlu0 %v1477, 127
    %v1494 = vpop.permute.xlu0 %1493
    %1495 = vrot.lane.b32.xlu0 %v1458, 127
    %v1496 = vpop.permute.xlu0 %1495
    %1497 = vrot.lane.b32.xlu0 %v1478, 127
    %v1498 = vpop.permute.xlu0 %1497
    %1499 = vrot.lane.b32.xlu0 %v1459, 127
    %v1500 = vpop.permute.xlu0 %1499
    %1501 = vrot.lane.b32.xlu0 %v1479, 127
    %v1502 = vpop.permute.xlu0 %1501
    %1503 = vrot.lane.b32.xlu0 %v1460, 127
    %v1504 = vpop.permute.xlu0 %1503
    %1505 = vrot.lane.b32.xlu0 %v1480, 127
    %v1506 = vpop.permute.xlu0 %1505
    %1507 = vrot.lane.b32.xlu0 %v1461, 127
    %v1508 = vpop.permute.xlu0 %1507
    %1509 = vrot.lane.b32.xlu0 %v1481, 127
    %v1510 = vpop.permute.xlu0 %1509
    %1511 = vrot.lane.b32.xlu0 %v1462, 127
    %v1512 = vpop.permute.xlu0 %1511
    %1513 = vrot.lane.b32.xlu0 %v1482, 127
    %v1514 = vpop.permute.xlu0 %1513
    %1515 = vrot.lane.b32.xlu0 %v1463, 127
    %v1516 = vpop.permute.xlu0 %1515
    %vm1517 = vcmask 1039360
    %v1518 = vsel %vm1517, %v1484, %v1486
    %v1519 = vsel %vm1517, %v1486, %v1488
    %v1520 = vsel %vm1517, %v1488, %v1490
    %v1521 = vsel %vm1517, %v1490, %v1492
    %v1522 = vsel %vm1517, %v1492, %v1494
    %v1523 = vsel %vm1517, %v1494, %v1496
    %v1524 = vsel %vm1517, %v1496, %v1498
    %v1525 = vsel %vm1517, %v1498, %v1500
    %v1526 = vsel %vm1517, %v1500, %v1502
    %v1527 = vsel %vm1517, %v1502, %v1504
    %v1528 = vsel %vm1517, %v1504, %v1506
    %v1529 = vsel %vm1517, %v1506, %v1508
    %v1530 = vsel %vm1517, %v1508, %v1510
    %v1531 = vsel %vm1517, %v1510, %v1512
    %v1532 = vsel %vm1517, %v1512, %v1514
    %v1533 = vsel %vm1517, %v1514, %v1516
    %v1535 = vsel %vm86, %v1465, 0
    %v1537 = vsel %vm90, %v1518, 0
    %v1539 = vsel %vm90, %v1519, 0
    %v1541 = vsel %vm90, %v1520, 0
    %v1543 = vsel %vm90, %v1521, 0
    %v1545 = vsel %vm90, %v1522, 0
    %v1547 = vsel %vm90, %v1523, 0
    %v1549 = vsel %vm90, %v1524, 0
    %v1551 = vsel %vm90, %v1525, 0
    %v1553 = vsel %vm90, %v1526, 0
    %v1555 = vsel %vm90, %v1527, 0
    %v1557 = vsel %vm90, %v1528, 0
    %v1559 = vsel %vm90, %v1529, 0
    %v1561 = vsel %vm90, %v1530, 0
    %v1563 = vsel %vm90, %v1531, 0
    %v1565 = vsel %vm90, %v1532, 0
    %v1567 = vsel %vm90, %v1533, 0
    %v1569 = vsel %vm90, %v1516, 0
    %1571 = vmatprep.subr.mxu0 %v1539
    %1572 = vmatpush1.msra.mxu0 %v1537
    %1573 = vmatprep.subr.mxu0 0.0
    %1574 = vmatpush1.msra.mxu0 0.0
    %1575 = vmatprep.subr.mxu0 0.0
    %1576 = vmatpush1.msra.mxu0 0.0
    %1577 = vmatprep.subr.mxu0 0.0
    %1578 = vmatpush1.msra.mxu0 0.0
    %1579 = vmatprep.subr.mxu0 0.0
    %1580 = vmatpush1.msra.mxu0 0.0
    %1581 = vmatprep.subr.mxu0 0.0
    %1582 = vmatpush1.msra.mxu0 0.0
    %1583 = vmatprep.subr.mxu0 0.0
    %1584 = vmatpush1.msra.mxu0 0.0
    %1585 = vmatprep.subr.mxu0 0.0
    %1586 = vmatpush1.msra.mxu0 0.0
    %1587 = vmatprep.subr.mxu0 0.0
    %1588 = vmatpush1.msra.mxu0 0.0
    %1589 = vmatprep.subr.mxu0 0.0
    %1590 = vmatpush1.msra.mxu0 0.0
    %1591 = vmatprep.subr.mxu0 0.0
    %1592 = vmatpush1.msra.mxu0 0.0
    %1593 = vmatprep.subr.mxu0 0.0
    %1594 = vmatpush1.msra.mxu0 0.0
    %1595 = vmatprep.subr.mxu0 0.0
    %1596 = vmatpush1.msra.mxu0 0.0
    %1597 = vmatprep.subr.mxu0 0.0
    %1598 = vmatpush1.msra.mxu0 0.0
    %1599 = vmatprep.subr.mxu0 0.0
    %1600 = vmatpush1.msra.mxu0 0.0
    %1601 = vmatprep.subr.mxu0 0.0
    %1602 = vmatpush1.msra.mxu0 0.0
    %1603 = vmatprep.subr.mxu0 0.0
    %1604 = vmatpush1.msra.mxu0 0.0
    %1605 = vmatprep.subr.mxu0 0.0
    %1606 = vmatpush1.msra.mxu0 0.0
    %1607 = vmatprep.subr.mxu0 0.0
    %1608 = vmatpush1.msra.mxu0 0.0
    %1609 = vmatprep.subr.mxu0 0.0
    %1610 = vmatpush1.msra.mxu0 0.0
    %1611 = vmatprep.subr.mxu0 0.0
    %1612 = vmatpush1.msra.mxu0 0.0
    %1613 = vmatprep.subr.mxu0 0.0
    %1614 = vmatpush1.msra.mxu0 0.0
    %1615 = vmatprep.subr.mxu0 0.0
    %1616 = vmatpush1.msra.mxu0 0.0
    %1617 = vmatprep.subr.mxu0 0.0
    %1618 = vmatpush1.msra.mxu0 0.0
    %1619 = vmatprep.subr.mxu0 0.0
    %1620 = vmatpush1.msra.mxu0 0.0
    %1621 = vmatprep.subr.mxu0 0.0
    %1622 = vmatpush1.msra.mxu0 0.0
    %1623 = vmatprep.subr.mxu0 0.0
    %1624 = vmatpush1.msra.mxu0 0.0
    %1625 = vmatprep.subr.mxu0 0.0
    %1626 = vmatpush1.msra.mxu0 0.0
    %1627 = vmatprep.subr.mxu0 0.0
    %1628 = vmatpush1.msra.mxu0 0.0
    %1629 = vmatprep.subr.mxu0 0.0
    %1630 = vmatpush1.msra.mxu0 0.0
    %1631 = vmatprep.subr.mxu0 0.0
    %1632 = vmatpush1.msra.mxu0 0.0
    %1633 = vmatprep.subr.mxu0 0.0
    %1634 = vmatpush1.msra.mxu0 0.0
    %1635 = vmatprep.mubr.f32.mxu0 0.0
    %1636 = vmatmul.mubr.f32.gmra.mrb[0].mxu0 %v1535
    %v1637 = vpop.f32.mrb[0].mxu0
    %v1638 = vadd.f32 0.0, %v1637
    %v1639 = vpop.f32.mrb[0].mxu0
    %v1640 = vadd.f32 0.0, %v1639
    %1641 = vdwg.mxu0
    %1642 = vmatprep.subr.mxu0 %v1543
    %1643 = vmatpush1.msra.mxu0 %v1541
    %1644 = vmatprep.subr.mxu0 0.0
    %1645 = vmatpush1.msra.mxu0 0.0
    %1646 = vmatprep.subr.mxu0 0.0
    %1647 = vmatpush1.msra.mxu0 0.0
    %1648 = vmatprep.subr.mxu0 0.0
    %1649 = vmatpush1.msra.mxu0 0.0
    %1650 = vmatprep.subr.mxu0 0.0
    %1651 = vmatpush1.msra.mxu0 0.0
    %1652 = vmatprep.subr.mxu0 0.0
    %1653 = vmatpush1.msra.mxu0 0.0
    %1654 = vmatprep.subr.mxu0 0.0
    %1655 = vmatpush1.msra.mxu0 0.0
    %1656 = vmatprep.subr.mxu0 0.0
    %1657 = vmatpush1.msra.mxu0 0.0
    %1658 = vmatprep.subr.mxu0 0.0
    %1659 = vmatpush1.msra.mxu0 0.0
    %1660 = vmatprep.subr.mxu0 0.0
    %1661 = vmatpush1.msra.mxu0 0.0
    %1662 = vmatprep.subr.mxu0 0.0
    %1663 = vmatpush1.msra.mxu0 0.0
    %1664 = vmatprep.subr.mxu0 0.0
    %1665 = vmatpush1.msra.mxu0 0.0
    %1666 = vmatprep.subr.mxu0 0.0
    %1667 = vmatpush1.msra.mxu0 0.0
    %1668 = vmatprep.subr.mxu0 0.0
    %1669 = vmatpush1.msra.mxu0 0.0
    %1670 = vmatprep.subr.mxu0 0.0
    %1671 = vmatpush1.msra.mxu0 0.0
    %1672 = vmatprep.subr.mxu0 0.0
    %1673 = vmatpush1.msra.mxu0 0.0
    %1674 = vmatprep.subr.mxu0 0.0
    %1675 = vmatpush1.msra.mxu0 0.0
    %1676 = vmatprep.subr.mxu0 0.0
    %1677 = vmatpush1.msra.mxu0 0.0
    %1678 = vmatprep.subr.mxu0 0.0
    %1679 = vmatpush1.msra.mxu0 0.0
    %1680 = vmatprep.subr.mxu0 0.0
    %1681 = vmatpush1.msra.mxu0 0.0
    %1682 = vmatprep.subr.mxu0 0.0
    %1683 = vmatpush1.msra.mxu0 0.0
    %1684 = vmatprep.subr.mxu0 0.0
    %1685 = vmatpush1.msra.mxu0 0.0
    %1686 = vmatprep.subr.mxu0 0.0
    %1687 = vmatpush1.msra.mxu0 0.0
    %1688 = vmatprep.subr.mxu0 0.0
    %1689 = vmatpush1.msra.mxu0 0.0
    %1690 = vmatprep.subr.mxu0 0.0
    %1691 = vmatpush1.msra.mxu0 0.0
    %1692 = vmatprep.subr.mxu0 0.0
    %1693 = vmatpush1.msra.mxu0 0.0
    %1694 = vmatprep.subr.mxu0 0.0
    %1695 = vmatpush1.msra.mxu0 0.0
    %1696 = vmatprep.subr.mxu0 0.0
    %1697 = vmatpush1.msra.mxu0 0.0
    %1698 = vmatprep.subr.mxu0 0.0
    %1699 = vmatpush1.msra.mxu0 0.0
    %1700 = vmatprep.subr.mxu0 0.0
    %1701 = vmatpush1.msra.mxu0 0.0
    %1702 = vmatprep.subr.mxu0 0.0
    %1703 = vmatpush1.msra.mxu0 0.0
    %1704 = vmatprep.subr.mxu0 0.0
    %1705 = vmatpush1.msra.mxu0 0.0
    %1706 = vmatprep.mubr.f32.mxu0 0.0
    %1707 = vmatmul.mubr.f32.gmra.mrb[0].mxu0 %v1535
    %v1708 = vpop.f32.mrb[0].mxu0
    %v1709 = vadd.f32 0.0, %v1708
    %v1710 = vpop.f32.mrb[0].mxu0
    %v1711 = vadd.f32 0.0, %v1710
    %1712 = vdwg.mxu0
    %1713 = vmatprep.subr.mxu0 %v1547
    %1714 = vmatpush1.msra.mxu0 %v1545
    %1715 = vmatprep.subr.mxu0 0.0
    %1716 = vmatpush1.msra.mxu0 0.0
    %1717 = vmatprep.subr.mxu0 0.0
    %1718 = vmatpush1.msra.mxu0 0.0
    %1719 = vmatprep.subr.mxu0 0.0
    %1720 = vmatpush1.msra.mxu0 0.0
    %1721 = vmatprep.subr.mxu0 0.0
    %1722 = vmatpush1.msra.mxu0 0.0
    %1723 = vmatprep.subr.mxu0 0.0
    %1724 = vmatpush1.msra.mxu0 0.0
    %1725 = vmatprep.subr.mxu0 0.0
    %1726 = vmatpush1.msra.mxu0 0.0
    %1727 = vmatprep.subr.mxu0 0.0
    %1728 = vmatpush1.msra.mxu0 0.0
    %1729 = vmatprep.subr.mxu0 0.0
    %1730 = vmatpush1.msra.mxu0 0.0
    %1731 = vmatprep.subr.mxu0 0.0
    %1732 = vmatpush1.msra.mxu0 0.0
    %1733 = vmatprep.subr.mxu0 0.0
    %1734 = vmatpush1.msra.mxu0 0.0
    %1735 = vmatprep.subr.mxu0 0.0
    %1736 = vmatpush1.msra.mxu0 0.0
    %1737 = vmatprep.subr.mxu0 0.0
    %1738 = vmatpush1.msra.mxu0 0.0
    %1739 = vmatprep.subr.mxu0 0.0
    %1740 = vmatpush1.msra.mxu0 0.0
    %1741 = vmatprep.subr.mxu0 0.0
    %1742 = vmatpush1.msra.mxu0 0.0
    %1743 = vmatprep.subr.mxu0 0.0
    %1744 = vmatpush1.msra.mxu0 0.0
    %1745 = vmatprep.subr.mxu0 0.0
    %1746 = vmatpush1.msra.mxu0 0.0
    %1747 = vmatprep.subr.mxu0 0.0
    %1748 = vmatpush1.msra.mxu0 0.0
    %1749 = vmatprep.subr.mxu0 0.0
    %1750 = vmatpush1.msra.mxu0 0.0
    %1751 = vmatprep.subr.mxu0 0.0
    %1752 = vmatpush1.msra.mxu0 0.0
    %1753 = vmatprep.subr.mxu0 0.0
    %1754 = vmatpush1.msra.mxu0 0.0
    %1755 = vmatprep.subr.mxu0 0.0
    %1756 = vmatpush1.msra.mxu0 0.0
    %1757 = vmatprep.subr.mxu0 0.0
    %1758 = vmatpush1.msra.mxu0 0.0
    %1759 = vmatprep.subr.mxu0 0.0
    %1760 = vmatpush1.msra.mxu0 0.0
    %1761 = vmatprep.subr.mxu0 0.0
    %1762 = vmatpush1.msra.mxu0 0.0
    %1763 = vmatprep.subr.mxu0 0.0
    %1764 = vmatpush1.msra.mxu0 0.0
    %1765 = vmatprep.subr.mxu0 0.0
    %1766 = vmatpush1.msra.mxu0 0.0
    %1767 = vmatprep.subr.mxu0 0.0
    %1768 = vmatpush1.msra.mxu0 0.0
    %1769 = vmatprep.subr.mxu0 0.0
    %1770 = vmatpush1.msra.mxu0 0.0
    %1771 = vmatprep.subr.mxu0 0.0
    %1772 = vmatpush1.msra.mxu0 0.0
    %1773 = vmatprep.subr.mxu0 0.0
    %1774 = vmatpush1.msra.mxu0 0.0
    %1775 = vmatprep.subr.mxu0 0.0
    %1776 = vmatpush1.msra.mxu0 0.0
    %1777 = vmatprep.mubr.f32.mxu0 0.0
    %1778 = vmatmul.mubr.f32.gmra.mrb[0].mxu0 %v1535
    %v1779 = vpop.f32.mrb[0].mxu0
    %v1780 = vadd.f32 0.0, %v1779
    %v1781 = vpop.f32.mrb[0].mxu0
    %v1782 = vadd.f32 0.0, %v1781
    %1783 = vdwg.mxu0
    %1784 = vmatprep.subr.mxu0 %v1551
    %1785 = vmatpush1.msra.mxu0 %v1549
    %1786 = vmatprep.subr.mxu0 0.0
    %1787 = vmatpush1.msra.mxu0 0.0
    %1788 = vmatprep.subr.mxu0 0.0
    %1789 = vmatpush1.msra.mxu0 0.0
    %1790 = vmatprep.subr.mxu0 0.0
    %1791 = vmatpush1.msra.mxu0 0.0
    %1792 = vmatprep.subr.mxu0 0.0
    %1793 = vmatpush1.msra.mxu0 0.0
    %1794 = vmatprep.subr.mxu0 0.0
    %1795 = vmatpush1.msra.mxu0 0.0
    %1796 = vmatprep.subr.mxu0 0.0
    %1797 = vmatpush1.msra.mxu0 0.0
    %1798 = vmatprep.subr.mxu0 0.0
    %1799 = vmatpush1.msra.mxu0 0.0
    %1800 = vmatprep.subr.mxu0 0.0
    %1801 = vmatpush1.msra.mxu0 0.0
    %1802 = vmatprep.subr.mxu0 0.0
    %1803 = vmatpush1.msra.mxu0 0.0
    %1804 = vmatprep.subr.mxu0 0.0
    %1805 = vmatpush1.msra.mxu0 0.0
    %1806 = vmatprep.subr.mxu0 0.0
    %1807 = vmatpush1.msra.mxu0 0.0
    %1808 = vmatprep.subr.mxu0 0.0
    %1809 = vmatpush1.msra.mxu0 0.0
    %1810 = vmatprep.subr.mxu0 0.0
    %1811 = vmatpush1.msra.mxu0 0.0
    %1812 = vmatprep.subr.mxu0 0.0
    %1813 = vmatpush1.msra.mxu0 0.0
    %1814 = vmatprep.subr.mxu0 0.0
    %1815 = vmatpush1.msra.mxu0 0.0
    %1816 = vmatprep.subr.mxu0 0.0
    %1817 = vmatpush1.msra.mxu0 0.0
    %1818 = vmatprep.subr.mxu0 0.0
    %1819 = vmatpush1.msra.mxu0 0.0
    %1820 = vmatprep.subr.mxu0 0.0
    %1821 = vmatpush1.msra.mxu0 0.0
    %1822 = vmatprep.subr.mxu0 0.0
    %1823 = vmatpush1.msra.mxu0 0.0
    %1824 = vmatprep.subr.mxu0 0.0
    %1825 = vmatpush1.msra.mxu0 0.0
    %1826 = vmatprep.subr.mxu0 0.0
    %1827 = vmatpush1.msra.mxu0 0.0
    %1828 = vmatprep.subr.mxu0 0.0
    %1829 = vmatpush1.msra.mxu0 0.0
    %1830 = vmatprep.subr.mxu0 0.0
    %1831 = vmatpush1.msra.mxu0 0.0
    %1832 = vmatprep.subr.mxu0 0.0
    %1833 = vmatpush1.msra.mxu0 0.0
    %1834 = vmatprep.subr.mxu0 0.0
    %1835 = vmatpush1.msra.mxu0 0.0
    %1836 = vmatprep.subr.mxu0 0.0
    %1837 = vmatpush1.msra.mxu0 0.0
    %1838 = vmatprep.subr.mxu0 0.0
    %1839 = vmatpush1.msra.mxu0 0.0
    %1840 = vmatprep.subr.mxu0 0.0
    %1841 = vmatpush1.msra.mxu0 0.0
    %1842 = vmatprep.subr.mxu0 0.0
    %1843 = vmatpush1.msra.mxu0 0.0
    %1844 = vmatprep.subr.mxu0 0.0
    %1845 = vmatpush1.msra.mxu0 0.0
    %1846 = vmatprep.subr.mxu0 0.0
    %1847 = vmatpush1.msra.mxu0 0.0
    %1848 = vmatprep.mubr.f32.mxu0 0.0
    %1849 = vmatmul.mubr.f32.gmra.mrb[0].mxu0 %v1535
    %v1850 = vpop.f32.mrb[0].mxu0
    %v1851 = vadd.f32 0.0, %v1850
    %v1852 = vpop.f32.mrb[0].mxu0
    %v1853 = vadd.f32 0.0, %v1852
    %1854 = vdwg.mxu0
    %1855 = vmatprep.subr.mxu0 %v1555
    %1856 = vmatpush1.msra.mxu0 %v1553
    %1857 = vmatprep.subr.mxu0 0.0
    %1858 = vmatpush1.msra.mxu0 0.0
    %1859 = vmatprep.subr.mxu0 0.0
    %1860 = vmatpush1.msra.mxu0 0.0
    %1861 = vmatprep.subr.mxu0 0.0
    %1862 = vmatpush1.msra.mxu0 0.0
    %1863 = vmatprep.subr.mxu0 0.0
    %1864 = vmatpush1.msra.mxu0 0.0
    %1865 = vmatprep.subr.mxu0 0.0
    %1866 = vmatpush1.msra.mxu0 0.0
    %1867 = vmatprep.subr.mxu0 0.0
    %1868 = vmatpush1.msra.mxu0 0.0
    %1869 = vmatprep.subr.mxu0 0.0
    %1870 = vmatpush1.msra.mxu0 0.0
    %1871 = vmatprep.subr.mxu0 0.0
    %1872 = vmatpush1.msra.mxu0 0.0
    %1873 = vmatprep.subr.mxu0 0.0
    %1874 = vmatpush1.msra.mxu0 0.0
    %1875 = vmatprep.subr.mxu0 0.0
    %1876 = vmatpush1.msra.mxu0 0.0
    %1877 = vmatprep.subr.mxu0 0.0
    %1878 = vmatpush1.msra.mxu0 0.0
    %1879 = vmatprep.subr.mxu0 0.0
    %1880 = vmatpush1.msra.mxu0 0.0
    %1881 = vmatprep.subr.mxu0 0.0
    %1882 = vmatpush1.msra.mxu0 0.0
    %1883 = vmatprep.subr.mxu0 0.0
    %1884 = vmatpush1.msra.mxu0 0.0
    %1885 = vmatprep.subr.mxu0 0.0
    %1886 = vmatpush1.msra.mxu0 0.0
    %1887 = vmatprep.subr.mxu0 0.0
    %1888 = vmatpush1.msra.mxu0 0.0
    %1889 = vmatprep.subr.mxu0 0.0
    %1890 = vmatpush1.msra.mxu0 0.0
    %1891 = vmatprep.subr.mxu0 0.0
    %1892 = vmatpush1.msra.mxu0 0.0
    %1893 = vmatprep.subr.mxu0 0.0
    %1894 = vmatpush1.msra.mxu0 0.0
    %1895 = vmatprep.subr.mxu0 0.0
    %1896 = vmatpush1.msra.mxu0 0.0
    %1897 = vmatprep.subr.mxu0 0.0
    %1898 = vmatpush1.msra.mxu0 0.0
    %1899 = vmatprep.subr.mxu0 0.0
    %1900 = vmatpush1.msra.mxu0 0.0
    %1901 = vmatprep.subr.mxu0 0.0
    %1902 = vmatpush1.msra.mxu0 0.0
    %1903 = vmatprep.subr.mxu0 0.0
    %1904 = vmatpush1.msra.mxu0 0.0
    %1905 = vmatprep.subr.mxu0 0.0
    %1906 = vmatpush1.msra.mxu0 0.0
    %1907 = vmatprep.subr.mxu0 0.0
    %1908 = vmatpush1.msra.mxu0 0.0
    %1909 = vmatprep.subr.mxu0 0.0
    %1910 = vmatpush1.msra.mxu0 0.0
    %1911 = vmatprep.subr.mxu0 0.0
    %1912 = vmatpush1.msra.mxu0 0.0
    %1913 = vmatprep.subr.mxu0 0.0
    %1914 = vmatpush1.msra.mxu0 0.0
    %1915 = vmatprep.subr.mxu0 0.0
    %1916 = vmatpush1.msra.mxu0 0.0
    %1917 = vmatprep.subr.mxu0 0.0
    %1918 = vmatpush1.msra.mxu0 0.0
    %1919 = vmatprep.mubr.f32.mxu0 0.0
    %1920 = vmatmul.mubr.f32.gmra.mrb[0].mxu0 %v1535
    %v1921 = vpop.f32.mrb[0].mxu0
    %v1922 = vadd.f32 0.0, %v1921
    %v1923 = vpop.f32.mrb[0].mxu0
    %v1924 = vadd.f32 0.0, %v1923
    %1925 = vdwg.mxu0
    %1926 = vmatprep.subr.mxu0 %v1559
    %1927 = vmatpush1.msra.mxu0 %v1557
    %1928 = vmatprep.subr.mxu0 0.0
    %1929 = vmatpush1.msra.mxu0 0.0
    %1930 = vmatprep.subr.mxu0 0.0
    %1931 = vmatpush1.msra.mxu0 0.0
    %1932 = vmatprep.subr.mxu0 0.0
    %1933 = vmatpush1.msra.mxu0 0.0
    %1934 = vmatprep.subr.mxu0 0.0
    %1935 = vmatpush1.msra.mxu0 0.0
    %1936 = vmatprep.subr.mxu0 0.0
    %1937 = vmatpush1.msra.mxu0 0.0
    %1938 = vmatprep.subr.mxu0 0.0
    %1939 = vmatpush1.msra.mxu0 0.0
    %1940 = vmatprep.subr.mxu0 0.0
    %1941 = vmatpush1.msra.mxu0 0.0
    %1942 = vmatprep.subr.mxu0 0.0
    %1943 = vmatpush1.msra.mxu0 0.0
    %1944 = vmatprep.subr.mxu0 0.0
    %1945 = vmatpush1.msra.mxu0 0.0
    %1946 = vmatprep.subr.mxu0 0.0
    %1947 = vmatpush1.msra.mxu0 0.0
    %1948 = vmatprep.subr.mxu0 0.0
    %1949 = vmatpush1.msra.mxu0 0.0
    %1950 = vmatprep.subr.mxu0 0.0
    %1951 = vmatpush1.msra.mxu0 0.0
    %1952 = vmatprep.subr.mxu0 0.0
    %1953 = vmatpush1.msra.mxu0 0.0
    %1954 = vmatprep.subr.mxu0 0.0
    %1955 = vmatpush1.msra.mxu0 0.0
    %1956 = vmatprep.subr.mxu0 0.0
    %1957 = vmatpush1.msra.mxu0 0.0
    %1958 = vmatprep.subr.mxu0 0.0
    %1959 = vmatpush1.msra.mxu0 0.0
    %1960 = vmatprep.subr.mxu0 0.0
    %1961 = vmatpush1.msra.mxu0 0.0
    %1962 = vmatprep.subr.mxu0 0.0
    %1963 = vmatpush1.msra.mxu0 0.0
    %1964 = vmatprep.subr.mxu0 0.0
    %1965 = vmatpush1.msra.mxu0 0.0
    %1966 = vmatprep.subr.mxu0 0.0
    %1967 = vmatpush1.msra.mxu0 0.0
    %1968 = vmatprep.subr.mxu0 0.0
    %1969 = vmatpush1.msra.mxu0 0.0
    %1970 = vmatprep.subr.mxu0 0.0
    %1971 = vmatpush1.msra.mxu0 0.0
    %1972 = vmatprep.subr.mxu0 0.0
    %1973 = vmatpush1.msra.mxu0 0.0
    %1974 = vmatprep.subr.mxu0 0.0
    %1975 = vmatpush1.msra.mxu0 0.0
    %1976 = vmatprep.subr.mxu0 0.0
    %1977 = vmatpush1.msra.mxu0 0.0
    %1978 = vmatprep.subr.mxu0 0.0
    %1979 = vmatpush1.msra.mxu0 0.0
    %1980 = vmatprep.subr.mxu0 0.0
    %1981 = vmatpush1.msra.mxu0 0.0
    %1982 = vmatprep.subr.mxu0 0.0
    %1983 = vmatpush1.msra.mxu0 0.0
    %1984 = vmatprep.subr.mxu0 0.0
    %1985 = vmatpush1.msra.mxu0 0.0
    %1986 = vmatprep.subr.mxu0 0.0
    %1987 = vmatpush1.msra.mxu0 0.0
    %1988 = vmatprep.subr.mxu0 0.0
    %1989 = vmatpush1.msra.mxu0 0.0
    %1990 = vmatprep.mubr.f32.mxu0 0.0
    %1991 = vmatmul.mubr.f32.gmra.mrb[0].mxu0 %v1535
    %v1992 = vpop.f32.mrb[0].mxu0
    %v1993 = vadd.f32 0.0, %v1992
    %v1994 = vpop.f32.mrb[0].mxu0
    %v1995 = vadd.f32 0.0, %v1994
    %1996 = vdwg.mxu0
    %1997 = vmatprep.subr.mxu0 %v1563
    %1998 = vmatpush1.msra.mxu0 %v1561
    %1999 = vmatprep.subr.mxu0 0.0
    %2000 = vmatpush1.msra.mxu0 0.0
    %2001 = vmatprep.subr.mxu0 0.0
    %2002 = vmatpush1.msra.mxu0 0.0
    %2003 = vmatprep.subr.mxu0 0.0
    %2004 = vmatpush1.msra.mxu0 0.0
    %2005 = vmatprep.subr.mxu0 0.0
    %2006 = vmatpush1.msra.mxu0 0.0
    %2007 = vmatprep.subr.mxu0 0.0
    %2008 = vmatpush1.msra.mxu0 0.0
    %2009 = vmatprep.subr.mxu0 0.0
    %2010 = vmatpush1.msra.mxu0 0.0
    %2011 = vmatprep.subr.mxu0 0.0
    %2012 = vmatpush1.msra.mxu0 0.0
    %2013 = vmatprep.subr.mxu0 0.0
    %2014 = vmatpush1.msra.mxu0 0.0
    %2015 = vmatprep.subr.mxu0 0.0
    %2016 = vmatpush1.msra.mxu0 0.0
    %2017 = vmatprep.subr.mxu0 0.0
    %2018 = vmatpush1.msra.mxu0 0.0
    %2019 = vmatprep.subr.mxu0 0.0
    %2020 = vmatpush1.msra.mxu0 0.0
    %2021 = vmatprep.subr.mxu0 0.0
    %2022 = vmatpush1.msra.mxu0 0.0
    %2023 = vmatprep.subr.mxu0 0.0
    %2024 = vmatpush1.msra.mxu0 0.0
    %2025 = vmatprep.subr.mxu0 0.0
    %2026 = vmatpush1.msra.mxu0 0.0
    %2027 = vmatprep.subr.mxu0 0.0
    %2028 = vmatpush1.msra.mxu0 0.0
    %2029 = vmatprep.subr.mxu0 0.0
    %2030 = vmatpush1.msra.mxu0 0.0
    %2031 = vmatprep.subr.mxu0 0.0
    %2032 = vmatpush1.msra.mxu0 0.0
    %2033 = vmatprep.subr.mxu0 0.0
    %2034 = vmatpush1.msra.mxu0 0.0
    %2035 = vmatprep.subr.mxu0 0.0
    %2036 = vmatpush1.msra.mxu0 0.0
    %2037 = vmatprep.subr.mxu0 0.0
    %2038 = vmatpush1.msra.mxu0 0.0
    %2039 = vmatprep.subr.mxu0 0.0
    %2040 = vmatpush1.msra.mxu0 0.0
    %2041 = vmatprep.subr.mxu0 0.0
    %2042 = vmatpush1.msra.mxu0 0.0
    %2043 = vmatprep.subr.mxu0 0.0
    %2044 = vmatpush1.msra.mxu0 0.0
    %2045 = vmatprep.subr.mxu0 0.0
    %2046 = vmatpush1.msra.mxu0 0.0
    %2047 = vmatprep.subr.mxu0 0.0
    %2048 = vmatpush1.msra.mxu0 0.0
    %2049 = vmatprep.subr.mxu0 0.0
    %2050 = vmatpush1.msra.mxu0 0.0
    %2051 = vmatprep.subr.mxu0 0.0
    %2052 = vmatpush1.msra.mxu0 0.0
    %2053 = vmatprep.subr.mxu0 0.0
    %2054 = vmatpush1.msra.mxu0 0.0
    %2055 = vmatprep.subr.mxu0 0.0
    %2056 = vmatpush1.msra.mxu0 0.0
    %2057 = vmatprep.subr.mxu0 0.0
    %2058 = vmatpush1.msra.mxu0 0.0
    %2059 = vmatprep.subr.mxu0 0.0
    %2060 = vmatpush1.msra.mxu0 0.0
    %2061 = vmatprep.mubr.f32.mxu0 0.0
    %2062 = vmatmul.mubr.f32.gmra.mrb[0].mxu0 %v1535
    %v2063 = vpop.f32.mrb[0].mxu0
    %v2064 = vadd.f32 0.0, %v2063
    %v2065 = vpop.f32.mrb[0].mxu0
    %v2066 = vadd.f32 0.0, %v2065
    %2067 = vdwg.mxu0
    %2068 = vmatprep.subr.mxu0 %v1567
    %2069 = vmatpush1.msra.mxu0 %v1565
    %2070 = vmatprep.subr.mxu0 0.0
    %2071 = vmatpush1.msra.mxu0 0.0
    %2072 = vmatprep.subr.mxu0 0.0
    %2073 = vmatpush1.msra.mxu0 0.0
    %2074 = vmatprep.subr.mxu0 0.0
    %2075 = vmatpush1.msra.mxu0 0.0
    %2076 = vmatprep.subr.mxu0 0.0
    %2077 = vmatpush1.msra.mxu0 0.0
    %2078 = vmatprep.subr.mxu0 0.0
    %2079 = vmatpush1.msra.mxu0 0.0
    %2080 = vmatprep.subr.mxu0 0.0
    %2081 = vmatpush1.msra.mxu0 0.0
    %2082 = vmatprep.subr.mxu0 0.0
    %2083 = vmatpush1.msra.mxu0 0.0
    %2084 = vmatprep.subr.mxu0 0.0
    %2085 = vmatpush1.msra.mxu0 0.0
    %2086 = vmatprep.subr.mxu0 0.0
    %2087 = vmatpush1.msra.mxu0 0.0
    %2088 = vmatprep.subr.mxu0 0.0
    %2089 = vmatpush1.msra.mxu0 0.0
    %2090 = vmatprep.subr.mxu0 0.0
    %2091 = vmatpush1.msra.mxu0 0.0
    %2092 = vmatprep.subr.mxu0 0.0
    %2093 = vmatpush1.msra.mxu0 0.0
    %2094 = vmatprep.subr.mxu0 0.0
    %2095 = vmatpush1.msra.mxu0 0.0
    %2096 = vmatprep.subr.mxu0 0.0
    %2097 = vmatpush1.msra.mxu0 0.0
    %2098 = vmatprep.subr.mxu0 0.0
    %2099 = vmatpush1.msra.mxu0 0.0
    %2100 = vmatprep.subr.mxu0 0.0
    %2101 = vmatpush1.msra.mxu0 0.0
    %2102 = vmatprep.subr.mxu0 0.0
    %2103 = vmatpush1.msra.mxu0 0.0
    %2104 = vmatprep.subr.mxu0 0.0
    %2105 = vmatpush1.msra.mxu0 0.0
    %2106 = vmatprep.subr.mxu0 0.0
    %2107 = vmatpush1.msra.mxu0 0.0
    %2108 = vmatprep.subr.mxu0 0.0
    %2109 = vmatpush1.msra.mxu0 0.0
    %2110 = vmatprep.subr.mxu0 0.0
    %2111 = vmatpush1.msra.mxu0 0.0
    %2112 = vmatprep.subr.mxu0 0.0
    %2113 = vmatpush1.msra.mxu0 0.0
    %2114 = vmatprep.subr.mxu0 0.0
    %2115 = vmatpush1.msra.mxu0 0.0
    %2116 = vmatprep.subr.mxu0 0.0
    %2117 = vmatpush1.msra.mxu0 0.0
    %2118 = vmatprep.subr.mxu0 0.0
    %2119 = vmatpush1.msra.mxu0 0.0
    %2120 = vmatprep.subr.mxu0 0.0
    %2121 = vmatpush1.msra.mxu0 0.0
    %2122 = vmatprep.subr.mxu0 0.0
    %2123 = vmatpush1.msra.mxu0 0.0
    %2124 = vmatprep.subr.mxu0 0.0
    %2125 = vmatpush1.msra.mxu0 0.0
    %2126 = vmatprep.subr.mxu0 0.0
    %2127 = vmatpush1.msra.mxu0 0.0
    %2128 = vmatprep.subr.mxu0 0.0
    %2129 = vmatpush1.msra.mxu0 0.0
    %2130 = vmatprep.subr.mxu0 0.0
    %2131 = vmatpush1.msra.mxu0 0.0
    %2132 = vmatprep.mubr.f32.mxu0 0.0
    %2133 = vmatmul.mubr.f32.gmra.mrb[0].mxu0 %v1535
    %v2134 = vpop.f32.mrb[0].mxu0
    %v2135 = vadd.f32 0.0, %v2134
    %v2136 = vpop.f32.mrb[0].mxu0
    %v2137 = vadd.f32 0.0, %v2136
    %2138 = vdwg.mxu0
    %2139 = vmatprep.subr.mxu0 0.0
    %2140 = vmatpush1.msra.mxu0 %v1569
    %2141 = vmatprep.subr.mxu0 0.0
    %2142 = vmatpush1.msra.mxu0 0.0
    %2143 = vmatprep.subr.mxu0 0.0
    %2144 = vmatpush1.msra.mxu0 0.0
    %2145 = vmatprep.subr.mxu0 0.0
    %2146 = vmatpush1.msra.mxu0 0.0
    %2147 = vmatprep.subr.mxu0 0.0
    %2148 = vmatpush1.msra.mxu0 0.0
    %2149 = vmatprep.subr.mxu0 0.0
    %2150 = vmatpush1.msra.mxu0 0.0
    %2151 = vmatprep.subr.mxu0 0.0
    %2152 = vmatpush1.msra.mxu0 0.0
    %2153 = vmatprep.subr.mxu0 0.0
    %2154 = vmatpush1.msra.mxu0 0.0
    %2155 = vmatprep.subr.mxu0 0.0
    %2156 = vmatpush1.msra.mxu0 0.0
    %2157 = vmatprep.subr.mxu0 0.0
    %2158 = vmatpush1.msra.mxu0 0.0
    %2159 = vmatprep.subr.mxu0 0.0
    %2160 = vmatpush1.msra.mxu0 0.0
    %2161 = vmatprep.subr.mxu0 0.0
    %2162 = vmatpush1.msra.mxu0 0.0
    %2163 = vmatprep.subr.mxu0 0.0
    %2164 = vmatpush1.msra.mxu0 0.0
    %2165 = vmatprep.subr.mxu0 0.0
    %2166 = vmatpush1.msra.mxu0 0.0
    %2167 = vmatprep.subr.mxu0 0.0
    %2168 = vmatpush1.msra.mxu0 0.0
    %2169 = vmatprep.subr.mxu0 0.0
    %2170 = vmatpush1.msra.mxu0 0.0
    %2171 = vmatprep.subr.mxu0 0.0
    %2172 = vmatpush1.msra.mxu0 0.0
    %2173 = vmatprep.subr.mxu0 0.0
    %2174 = vmatpush1.msra.mxu0 0.0
    %2175 = vmatprep.subr.mxu0 0.0
    %2176 = vmatpush1.msra.mxu0 0.0
    %2177 = vmatprep.subr.mxu0 0.0
    %2178 = vmatpush1.msra.mxu0 0.0
    %2179 = vmatprep.subr.mxu0 0.0
    %2180 = vmatpush1.msra.mxu0 0.0
    %2181 = vmatprep.subr.mxu0 0.0
    %2182 = vmatpush1.msra.mxu0 0.0
    %2183 = vmatprep.subr.mxu0 0.0
    %2184 = vmatpush1.msra.mxu0 0.0
    %2185 = vmatprep.subr.mxu0 0.0
    %2186 = vmatpush1.msra.mxu0 0.0
    %2187 = vmatprep.subr.mxu0 0.0
    %2188 = vmatpush1.msra.mxu0 0.0
    %2189 = vmatprep.subr.mxu0 0.0
    %2190 = vmatpush1.msra.mxu0 0.0
    %2191 = vmatprep.subr.mxu0 0.0
    %2192 = vmatpush1.msra.mxu0 0.0
    %2193 = vmatprep.subr.mxu0 0.0
    %2194 = vmatpush1.msra.mxu0 0.0
    %2195 = vmatprep.subr.mxu0 0.0
    %2196 = vmatpush1.msra.mxu0 0.0
    %2197 = vmatprep.subr.mxu0 0.0
    %2198 = vmatpush1.msra.mxu0 0.0
    %2199 = vmatprep.subr.mxu0 0.0
    %2200 = vmatpush1.msra.mxu0 0.0
    %2201 = vmatprep.subr.mxu0 0.0
    %2202 = vmatpush1.msra.mxu0 0.0
    %2203 = vmatprep.mubr.f32.mxu0 0.0
    %2204 = vmatmul.mubr.f32.gmra.mrb[0].mxu0 %v1535
    %v2205 = vpop.f32.mrb[0].mxu0
    %v2206 = vadd.f32 0.0, %v2205
    %v2207 = vpop.f32.mrb[0].mxu0
    %2208 = vdwg.mxu0
    %v2209 = vadd.f32 %v884, %v1638
    %v2210 = vadd.f32 %v886, %v1640
    %v2211 = vadd.f32 %v955, %v1709
    %v2212 = vadd.f32 %v957, %v1711
    %v2213 = vadd.f32 %v1026, %v1780
    %v2214 = vadd.f32 %v1028, %v1782
    %v2215 = vadd.f32 %v1097, %v1851
    %v2216 = vadd.f32 %v1099, %v1853
    %v2217 = vadd.f32 %v1168, %v1922
    %v2218 = vadd.f32 %v1170, %v1924
    %v2219 = vadd.f32 %v1239, %v1993
    %v2220 = vadd.f32 %v1241, %v1995
    %v2221 = vadd.f32 %v1310, %v2064
    %v2222 = vadd.f32 %v1312, %v2066
    %v2223 = vadd.f32 %v1381, %v2135
    %v2224 = vadd.f32 %v1383, %v2137
    %v2225 = vadd.f32 %v1452, %v2206
    %s2226 = scalar_lea.vmem [#allocation2], 136
    %v2227 = vld [vmem:[%s2226] sm:$0xff]
    %v2228 = vld [vmem:[%s2226 + $0x8] sm:$0xff]
    %v2229 = vld [vmem:[%s2226 + $0x10] sm:$0xff]
    %v2230 = vld [vmem:[%s2226 + $0x18] sm:$0xff]
    %v2231 = vld [vmem:[%s2226 + $0x20] sm:$0xff]
    %v2232 = vld [vmem:[%s2226 + $0x28] sm:$0xff]
    %v2233 = vld [vmem:[%s2226 + $0x30] sm:$0xff]
    %v2234 = vld [vmem:[%s2226 + $0x38] sm:$0xff]
    %v2235 = vld [vmem:[%s2226 + $0x40] sm:$0xf]
    %s2236 = scalar_lea.vmem %s1, 24
    %v2237 = vld [vmem:[%s2236] sm:$0xff]
    %v2247 = vcombine.high %v2227, %v2227
    %v2248 = vcombine.high %v2228, %v2228
    %v2249 = vcombine.high %v2229, %v2229
    %v2250 = vcombine.high %v2230, %v2230
    %v2251 = vcombine.high %v2231, %v2231
    %v2252 = vcombine.high %v2232, %v2232
    %v2253 = vcombine.high %v2233, %v2233
    %v2254 = vcombine.high %v2234, %v2234
    %v2256 = vsel %vm86, %v2237, 0
    %v2258 = vsel %vm90, %v2227, 0
    %v2260 = vsel %vm90, %v2247, 0
    %v2262 = vsel %vm90, %v2228, 0
    %v2264 = vsel %vm90, %v2248, 0
    %v2266 = vsel %vm90, %v2229, 0
    %v2268 = vsel %vm90, %v2249, 0
    %v2270 = vsel %vm90, %v2230, 0
    %v2272 = vsel %vm90, %v2250, 0
    %v2274 = vsel %vm90, %v2231, 0
    %v2276 = vsel %vm90, %v2251, 0
    %v2278 = vsel %vm90, %v2232, 0
    %v2280 = vsel %vm90, %v2252, 0
    %v2282 = vsel %vm90, %v2233, 0
    %v2284 = vsel %vm90, %v2253, 0
    %v2286 = vsel %vm90, %v2234, 0
    %v2288 = vsel %vm90, %v2254, 0
    %v2290 = vsel %vm90, %v2235, 0
    %2292 = vmatprep.subr.mxu0 %v2260
    %2293 = vmatpush1.msra.mxu0 %v2258
    %2294 = vmatprep.subr.mxu0 0.0
    %2295 = vmatpush1.msra.mxu0 0.0
    %2296 = vmatprep.subr.mxu0 0.0
    %2297 = vmatpush1.msra.mxu0 0.0
    %2298 = vmatprep.subr.mxu0 0.0
    %2299 = vmatpush1.msra.mxu0 0.0
    %2300 = vmatprep.subr.mxu0 0.0
    %2301 = vmatpush1.msra.mxu0 0.0
    %2302 = vmatprep.subr.mxu0 0.0
    %2303 = vmatpush1.msra.mxu0 0.0
    %2304 = vmatprep.subr.mxu0 0.0
    %2305 = vmatpush1.msra.mxu0 0.0
    %2306 = vmatprep.subr.mxu0 0.0
    %2307 = vmatpush1.msra.mxu0 0.0
    %2308 = vmatprep.subr.mxu0 0.0
    %2309 = vmatpush1.msra.mxu0 0.0
    %2310 = vmatprep.subr.mxu0 0.0
    %2311 = vmatpush1.msra.mxu0 0.0
    %2312 = vmatprep.subr.mxu0 0.0
    %2313 = vmatpush1.msra.mxu0 0.0
    %2314 = vmatprep.subr.mxu0 0.0
    %2315 = vmatpush1.msra.mxu0 0.0
    %2316 = vmatprep.subr.mxu0 0.0
    %2317 = vmatpush1.msra.mxu0 0.0
    %2318 = vmatprep.subr.mxu0 0.0
    %2319 = vmatpush1.msra.mxu0 0.0
    %2320 = vmatprep.subr.mxu0 0.0
    %2321 = vmatpush1.msra.mxu0 0.0
    %2322 = vmatprep.subr.mxu0 0.0
    %2323 = vmatpush1.msra.mxu0 0.0
    %2324 = vmatprep.subr.mxu0 0.0
    %2325 = vmatpush1.msra.mxu0 0.0
    %2326 = vmatprep.subr.mxu0 0.0
    %2327 = vmatpush1.msra.mxu0 0.0
    %2328 = vmatprep.subr.mxu0 0.0
    %2329 = vmatpush1.msra.mxu0 0.0
    %2330 = vmatprep.subr.mxu0 0.0
    %2331 = vmatpush1.msra.mxu0 0.0
    %2332 = vmatprep.subr.mxu0 0.0
    %2333 = vmatpush1.msra.mxu0 0.0
    %2334 = vmatprep.subr.mxu0 0.0
    %2335 = vmatpush1.msra.mxu0 0.0
    %2336 = vmatprep.subr.mxu0 0.0
    %2337 = vmatpush1.msra.mxu0 0.0
    %2338 = vmatprep.subr.mxu0 0.0
    %2339 = vmatpush1.msra.mxu0 0.0
    %2340 = vmatprep.subr.mxu0 0.0
    %2341 = vmatpush1.msra.mxu0 0.0
    %2342 = vmatprep.subr.mxu0 0.0
    %2343 = vmatpush1.msra.mxu0 0.0
    %2344 = vmatprep.subr.mxu0 0.0
    %2345 = vmatpush1.msra.mxu0 0.0
    %2346 = vmatprep.subr.mxu0 0.0
    %2347 = vmatpush1.msra.mxu0 0.0
    %2348 = vmatprep.subr.mxu0 0.0
    %2349 = vmatpush1.msra.mxu0 0.0
    %2350 = vmatprep.subr.mxu0 0.0
    %2351 = vmatpush1.msra.mxu0 0.0
    %2352 = vmatprep.subr.mxu0 0.0
    %2353 = vmatpush1.msra.mxu0 0.0
    %2354 = vmatprep.subr.mxu0 0.0
    %2355 = vmatpush1.msra.mxu0 0.0
    %2356 = vmatprep.mubr.f32.mxu0 0.0
    %2357 = vmatmul.mubr.f32.gmra.mrb[0].mxu0 %v2256
    %v2358 = vpop.f32.mrb[0].mxu0
    %v2359 = vadd.f32 0.0, %v2358
    %v2360 = vpop.f32.mrb[0].mxu0
    %v2361 = vadd.f32 0.0, %v2360
    %2362 = vdwg.mxu0
    %2363 = vmatprep.subr.mxu0 %v2264
    %2364 = vmatpush1.msra.mxu0 %v2262
    %2365 = vmatprep.subr.mxu0 0.0
    %2366 = vmatpush1.msra.mxu0 0.0
    %2367 = vmatprep.subr.mxu0 0.0
    %2368 = vmatpush1.msra.mxu0 0.0
    %2369 = vmatprep.subr.mxu0 0.0
    %2370 = vmatpush1.msra.mxu0 0.0
    %2371 = vmatprep.subr.mxu0 0.0
    %2372 = vmatpush1.msra.mxu0 0.0
    %2373 = vmatprep.subr.mxu0 0.0
    %2374 = vmatpush1.msra.mxu0 0.0
    %2375 = vmatprep.subr.mxu0 0.0
    %2376 = vmatpush1.msra.mxu0 0.0
    %2377 = vmatprep.subr.mxu0 0.0
    %2378 = vmatpush1.msra.mxu0 0.0
    %2379 = vmatprep.subr.mxu0 0.0
    %2380 = vmatpush1.msra.mxu0 0.0
    %2381 = vmatprep.subr.mxu0 0.0
    %2382 = vmatpush1.msra.mxu0 0.0
    %2383 = vmatprep.subr.mxu0 0.0
    %2384 = vmatpush1.msra.mxu0 0.0
    %2385 = vmatprep.subr.mxu0 0.0
    %2386 = vmatpush1.msra.mxu0 0.0
    %2387 = vmatprep.subr.mxu0 0.0
    %2388 = vmatpush1.msra.mxu0 0.0
    %2389 = vmatprep.subr.mxu0 0.0
    %2390 = vmatpush1.msra.mxu0 0.0
    %2391 = vmatprep.subr.mxu0 0.0
    %2392 = vmatpush1.msra.mxu0 0.0
    %2393 = vmatprep.subr.mxu0 0.0
    %2394 = vmatpush1.msra.mxu0 0.0
    %2395 = vmatprep.subr.mxu0 0.0
    %2396 = vmatpush1.msra.mxu0 0.0
    %2397 = vmatprep.subr.mxu0 0.0
    %2398 = vmatpush1.msra.mxu0 0.0
    %2399 = vmatprep.subr.mxu0 0.0
    %2400 = vmatpush1.msra.mxu0 0.0
    %2401 = vmatprep.subr.mxu0 0.0
    %2402 = vmatpush1.msra.mxu0 0.0
    %2403 = vmatprep.subr.mxu0 0.0
    %2404 = vmatpush1.msra.mxu0 0.0
    %2405 = vmatprep.subr.mxu0 0.0
    %2406 = vmatpush1.msra.mxu0 0.0
    %2407 = vmatprep.subr.mxu0 0.0
    %2408 = vmatpush1.msra.mxu0 0.0
    %2409 = vmatprep.subr.mxu0 0.0
    %2410 = vmatpush1.msra.mxu0 0.0
    %2411 = vmatprep.subr.mxu0 0.0
    %2412 = vmatpush1.msra.mxu0 0.0
    %2413 = vmatprep.subr.mxu0 0.0
    %2414 = vmatpush1.msra.mxu0 0.0
    %2415 = vmatprep.subr.mxu0 0.0
    %2416 = vmatpush1.msra.mxu0 0.0
    %2417 = vmatprep.subr.mxu0 0.0
    %2418 = vmatpush1.msra.mxu0 0.0
    %2419 = vmatprep.subr.mxu0 0.0
    %2420 = vmatpush1.msra.mxu0 0.0
    %2421 = vmatprep.subr.mxu0 0.0
    %2422 = vmatpush1.msra.mxu0 0.0
    %2423 = vmatprep.subr.mxu0 0.0
    %2424 = vmatpush1.msra.mxu0 0.0
    %2425 = vmatprep.subr.mxu0 0.0
    %2426 = vmatpush1.msra.mxu0 0.0
    %2427 = vmatprep.mubr.f32.mxu0 0.0
    %2428 = vmatmul.mubr.f32.gmra.mrb[0].mxu0 %v2256
    %v2429 = vpop.f32.mrb[0].mxu0
    %v2430 = vadd.f32 0.0, %v2429
    %v2431 = vpop.f32.mrb[0].mxu0
    %v2432 = vadd.f32 0.0, %v2431
    %2433 = vdwg.mxu0
    %2434 = vmatprep.subr.mxu0 %v2268
    %2435 = vmatpush1.msra.mxu0 %v2266
    %2436 = vmatprep.subr.mxu0 0.0
    %2437 = vmatpush1.msra.mxu0 0.0
    %2438 = vmatprep.subr.mxu0 0.0
    %2439 = vmatpush1.msra.mxu0 0.0
    %2440 = vmatprep.subr.mxu0 0.0
    %2441 = vmatpush1.msra.mxu0 0.0
    %2442 = vmatprep.subr.mxu0 0.0
    %2443 = vmatpush1.msra.mxu0 0.0
    %2444 = vmatprep.subr.mxu0 0.0
    %2445 = vmatpush1.msra.mxu0 0.0
    %2446 = vmatprep.subr.mxu0 0.0
    %2447 = vmatpush1.msra.mxu0 0.0
    %2448 = vmatprep.subr.mxu0 0.0
    %2449 = vmatpush1.msra.mxu0 0.0
    %2450 = vmatprep.subr.mxu0 0.0
    %2451 = vmatpush1.msra.mxu0 0.0
    %2452 = vmatprep.subr.mxu0 0.0
    %2453 = vmatpush1.msra.mxu0 0.0
    %2454 = vmatprep.subr.mxu0 0.0
    %2455 = vmatpush1.msra.mxu0 0.0
    %2456 = vmatprep.subr.mxu0 0.0
    %2457 = vmatpush1.msra.mxu0 0.0
    %2458 = vmatprep.subr.mxu0 0.0
    %2459 = vmatpush1.msra.mxu0 0.0
    %2460 = vmatprep.subr.mxu0 0.0
    %2461 = vmatpush1.msra.mxu0 0.0
    %2462 = vmatprep.subr.mxu0 0.0
    %2463 = vmatpush1.msra.mxu0 0.0
    %2464 = vmatprep.subr.mxu0 0.0
    %2465 = vmatpush1.msra.mxu0 0.0
    %2466 = vmatprep.subr.mxu0 0.0
    %2467 = vmatpush1.msra.mxu0 0.0
    %2468 = vmatprep.subr.mxu0 0.0
    %2469 = vmatpush1.msra.mxu0 0.0
    %2470 = vmatprep.subr.mxu0 0.0
    %2471 = vmatpush1.msra.mxu0 0.0
    %2472 = vmatprep.subr.mxu0 0.0
    %2473 = vmatpush1.msra.mxu0 0.0
    %2474 = vmatprep.subr.mxu0 0.0
    %2475 = vmatpush1.msra.mxu0 0.0
    %2476 = vmatprep.subr.mxu0 0.0
    %2477 = vmatpush1.msra.mxu0 0.0
    %2478 = vmatprep.subr.mxu0 0.0
    %2479 = vmatpush1.msra.mxu0 0.0
    %2480 = vmatprep.subr.mxu0 0.0
    %2481 = vmatpush1.msra.mxu0 0.0
    %2482 = vmatprep.subr.mxu0 0.0
    %2483 = vmatpush1.msra.mxu0 0.0
    %2484 = vmatprep.subr.mxu0 0.0
    %2485 = vmatpush1.msra.mxu0 0.0
    %2486 = vmatprep.subr.mxu0 0.0
    %2487 = vmatpush1.msra.mxu0 0.0
    %2488 = vmatprep.subr.mxu0 0.0
    %2489 = vmatpush1.msra.mxu0 0.0
    %2490 = vmatprep.subr.mxu0 0.0
    %2491 = vmatpush1.msra.mxu0 0.0
    %2492 = vmatprep.subr.mxu0 0.0
    %2493 = vmatpush1.msra.mxu0 0.0
    %2494 = vmatprep.subr.mxu0 0.0
    %2495 = vmatpush1.msra.mxu0 0.0
    %2496 = vmatprep.subr.mxu0 0.0
    %2497 = vmatpush1.msra.mxu0 0.0
    %2498 = vmatprep.mubr.f32.mxu0 0.0
    %2499 = vmatmul.mubr.f32.gmra.mrb[0].mxu0 %v2256
    %v2500 = vpop.f32.mrb[0].mxu0
    %v2501 = vadd.f32 0.0, %v2500
    %v2502 = vpop.f32.mrb[0].mxu0
    %v2503 = vadd.f32 0.0, %v2502
    %2504 = vdwg.mxu0
    %2505 = vmatprep.subr.mxu0 %v2272
    %2506 = vmatpush1.msra.mxu0 %v2270
    %2507 = vmatprep.subr.mxu0 0.0
    %2508 = vmatpush1.msra.mxu0 0.0
    %2509 = vmatprep.subr.mxu0 0.0
    %2510 = vmatpush1.msra.mxu0 0.0
    %2511 = vmatprep.subr.mxu0 0.0
    %2512 = vmatpush1.msra.mxu0 0.0
    %2513 = vmatprep.subr.mxu0 0.0
    %2514 = vmatpush1.msra.mxu0 0.0
    %2515 = vmatprep.subr.mxu0 0.0
    %2516 = vmatpush1.msra.mxu0 0.0
    %2517 = vmatprep.subr.mxu0 0.0
    %2518 = vmatpush1.msra.mxu0 0.0
    %2519 = vmatprep.subr.mxu0 0.0
    %2520 = vmatpush1.msra.mxu0 0.0
    %2521 = vmatprep.subr.mxu0 0.0
    %2522 = vmatpush1.msra.mxu0 0.0
    %2523 = vmatprep.subr.mxu0 0.0
    %2524 = vmatpush1.msra.mxu0 0.0
    %2525 = vmatprep.subr.mxu0 0.0
    %2526 = vmatpush1.msra.mxu0 0.0
    %2527 = vmatprep.subr.mxu0 0.0
    %2528 = vmatpush1.msra.mxu0 0.0
    %2529 = vmatprep.subr.mxu0 0.0
    %2530 = vmatpush1.msra.mxu0 0.0
    %2531 = vmatprep.subr.mxu0 0.0
    %2532 = vmatpush1.msra.mxu0 0.0
    %2533 = vmatprep.subr.mxu0 0.0
    %2534 = vmatpush1.msra.mxu0 0.0
    %2535 = vmatprep.subr.mxu0 0.0
    %2536 = vmatpush1.msra.mxu0 0.0
    %2537 = vmatprep.subr.mxu0 0.0
    %2538 = vmatpush1.msra.mxu0 0.0
    %2539 = vmatprep.subr.mxu0 0.0
    %2540 = vmatpush1.msra.mxu0 0.0
    %2541 = vmatprep.subr.mxu0 0.0
    %2542 = vmatpush1.msra.mxu0 0.0
    %2543 = vmatprep.subr.mxu0 0.0
    %2544 = vmatpush1.msra.mxu0 0.0
    %2545 = vmatprep.subr.mxu0 0.0
    %2546 = vmatpush1.msra.mxu0 0.0
    %2547 = vmatprep.subr.mxu0 0.0
    %2548 = vmatpush1.msra.mxu0 0.0
    %2549 = vmatprep.subr.mxu0 0.0
    %2550 = vmatpush1.msra.mxu0 0.0
    %2551 = vmatprep.subr.mxu0 0.0
    %2552 = vmatpush1.msra.mxu0 0.0
    %2553 = vmatprep.subr.mxu0 0.0
    %2554 = vmatpush1.msra.mxu0 0.0
    %2555 = vmatprep.subr.mxu0 0.0
    %2556 = vmatpush1.msra.mxu0 0.0
    %2557 = vmatprep.subr.mxu0 0.0
    %2558 = vmatpush1.msra.mxu0 0.0
    %2559 = vmatprep.subr.mxu0 0.0
    %2560 = vmatpush1.msra.mxu0 0.0
    %2561 = vmatprep.subr.mxu0 0.0
    %2562 = vmatpush1.msra.mxu0 0.0
    %2563 = vmatprep.subr.mxu0 0.0
    %2564 = vmatpush1.msra.mxu0 0.0
    %2565 = vmatprep.subr.mxu0 0.0
    %2566 = vmatpush1.msra.mxu0 0.0
    %2567 = vmatprep.subr.mxu0 0.0
    %2568 = vmatpush1.msra.mxu0 0.0
    %2569 = vmatprep.mubr.f32.mxu0 0.0
    %2570 = vmatmul.mubr.f32.gmra.mrb[0].mxu0 %v2256
    %v2571 = vpop.f32.mrb[0].mxu0
    %v2572 = vadd.f32 0.0, %v2571
    %v2573 = vpop.f32.mrb[0].mxu0
    %v2574 = vadd.f32 0.0, %v2573
    %2575 = vdwg.mxu0
    %2576 = vmatprep.subr.mxu0 %v2276
    %2577 = vmatpush1.msra.mxu0 %v2274
    %2578 = vmatprep.subr.mxu0 0.0
    %2579 = vmatpush1.msra.mxu0 0.0
    %2580 = vmatprep.subr.mxu0 0.0
    %2581 = vmatpush1.msra.mxu0 0.0
    %2582 = vmatprep.subr.mxu0 0.0
    %2583 = vmatpush1.msra.mxu0 0.0
    %2584 = vmatprep.subr.mxu0 0.0
    %2585 = vmatpush1.msra.mxu0 0.0
    %2586 = vmatprep.subr.mxu0 0.0
    %2587 = vmatpush1.msra.mxu0 0.0
    %2588 = vmatprep.subr.mxu0 0.0
    %2589 = vmatpush1.msra.mxu0 0.0
    %2590 = vmatprep.subr.mxu0 0.0
    %2591 = vmatpush1.msra.mxu0 0.0
    %2592 = vmatprep.subr.mxu0 0.0
    %2593 = vmatpush1.msra.mxu0 0.0
    %2594 = vmatprep.subr.mxu0 0.0
    %2595 = vmatpush1.msra.mxu0 0.0
    %2596 = vmatprep.subr.mxu0 0.0
    %2597 = vmatpush1.msra.mxu0 0.0
    %2598 = vmatprep.subr.mxu0 0.0
    %2599 = vmatpush1.msra.mxu0 0.0
    %2600 = vmatprep.subr.mxu0 0.0
    %2601 = vmatpush1.msra.mxu0 0.0
    %2602 = vmatprep.subr.mxu0 0.0
    %2603 = vmatpush1.msra.mxu0 0.0
    %2604 = vmatprep.subr.mxu0 0.0
    %2605 = vmatpush1.msra.mxu0 0.0
    %2606 = vmatprep.subr.mxu0 0.0
    %2607 = vmatpush1.msra.mxu0 0.0
    %2608 = vmatprep.subr.mxu0 0.0
    %2609 = vmatpush1.msra.mxu0 0.0
    %2610 = vmatprep.subr.mxu0 0.0
    %2611 = vmatpush1.msra.mxu0 0.0
    %2612 = vmatprep.subr.mxu0 0.0
    %2613 = vmatpush1.msra.mxu0 0.0
    %2614 = vmatprep.subr.mxu0 0.0
    %2615 = vmatpush1.msra.mxu0 0.0
    %2616 = vmatprep.subr.mxu0 0.0
    %2617 = vmatpush1.msra.mxu0 0.0
    %2618 = vmatprep.subr.mxu0 0.0
    %2619 = vmatpush1.msra.mxu0 0.0
    %2620 = vmatprep.subr.mxu0 0.0
    %2621 = vmatpush1.msra.mxu0 0.0
    %2622 = vmatprep.subr.mxu0 0.0
    %2623 = vmatpush1.msra.mxu0 0.0
    %2624 = vmatprep.subr.mxu0 0.0
    %2625 = vmatpush1.msra.mxu0 0.0
    %2626 = vmatprep.subr.mxu0 0.0
    %2627 = vmatpush1.msra.mxu0 0.0
    %2628 = vmatprep.subr.mxu0 0.0
    %2629 = vmatpush1.msra.mxu0 0.0
    %2630 = vmatprep.subr.mxu0 0.0
    %2631 = vmatpush1.msra.mxu0 0.0
    %2632 = vmatprep.subr.mxu0 0.0
    %2633 = vmatpush1.msra.mxu0 0.0
    %2634 = vmatprep.subr.mxu0 0.0
    %2635 = vmatpush1.msra.mxu0 0.0
    %2636 = vmatprep.subr.mxu0 0.0
    %2637 = vmatpush1.msra.mxu0 0.0
    %2638 = vmatprep.subr.mxu0 0.0
    %2639 = vmatpush1.msra.mxu0 0.0
    %2640 = vmatprep.mubr.f32.mxu0 0.0
    %2641 = vmatmul.mubr.f32.gmra.mrb[0].mxu0 %v2256
    %v2642 = vpop.f32.mrb[0].mxu0
    %v2643 = vadd.f32 0.0, %v2642
    %v2644 = vpop.f32.mrb[0].mxu0
    %v2645 = vadd.f32 0.0, %v2644
    %2646 = vdwg.mxu0
    %2647 = vmatprep.subr.mxu0 %v2280
    %2648 = vmatpush1.msra.mxu0 %v2278
    %2649 = vmatprep.subr.mxu0 0.0
    %2650 = vmatpush1.msra.mxu0 0.0
    %2651 = vmatprep.subr.mxu0 0.0
    %2652 = vmatpush1.msra.mxu0 0.0
    %2653 = vmatprep.subr.mxu0 0.0
    %2654 = vmatpush1.msra.mxu0 0.0
    %2655 = vmatprep.subr.mxu0 0.0
    %2656 = vmatpush1.msra.mxu0 0.0
    %2657 = vmatprep.subr.mxu0 0.0
    %2658 = vmatpush1.msra.mxu0 0.0
    %2659 = vmatprep.subr.mxu0 0.0
    %2660 = vmatpush1.msra.mxu0 0.0
    %2661 = vmatprep.subr.mxu0 0.0
    %2662 = vmatpush1.msra.mxu0 0.0
    %2663 = vmatprep.subr.mxu0 0.0
    %2664 = vmatpush1.msra.mxu0 0.0
    %2665 = vmatprep.subr.mxu0 0.0
    %2666 = vmatpush1.msra.mxu0 0.0
    %2667 = vmatprep.subr.mxu0 0.0
    %2668 = vmatpush1.msra.mxu0 0.0
    %2669 = vmatprep.subr.mxu0 0.0
    %2670 = vmatpush1.msra.mxu0 0.0
    %2671 = vmatprep.subr.mxu0 0.0
    %2672 = vmatpush1.msra.mxu0 0.0
    %2673 = vmatprep.subr.mxu0 0.0
    %2674 = vmatpush1.msra.mxu0 0.0
    %2675 = vmatprep.subr.mxu0 0.0
    %2676 = vmatpush1.msra.mxu0 0.0
    %2677 = vmatprep.subr.mxu0 0.0
    %2678 = vmatpush1.msra.mxu0 0.0
    %2679 = vmatprep.subr.mxu0 0.0
    %2680 = vmatpush1.msra.mxu0 0.0
    %2681 = vmatprep.subr.mxu0 0.0
    %2682 = vmatpush1.msra.mxu0 0.0
    %2683 = vmatprep.subr.mxu0 0.0
    %2684 = vmatpush1.msra.mxu0 0.0
    %2685 = vmatprep.subr.mxu0 0.0
    %2686 = vmatpush1.msra.mxu0 0.0
    %2687 = vmatprep.subr.mxu0 0.0
    %2688 = vmatpush1.msra.mxu0 0.0
    %2689 = vmatprep.subr.mxu0 0.0
    %2690 = vmatpush1.msra.mxu0 0.0
    %2691 = vmatprep.subr.mxu0 0.0
    %2692 = vmatpush1.msra.mxu0 0.0
    %2693 = vmatprep.subr.mxu0 0.0
    %2694 = vmatpush1.msra.mxu0 0.0
    %2695 = vmatprep.subr.mxu0 0.0
    %2696 = vmatpush1.msra.mxu0 0.0
    %2697 = vmatprep.subr.mxu0 0.0
    %2698 = vmatpush1.msra.mxu0 0.0
    %2699 = vmatprep.subr.mxu0 0.0
    %2700 = vmatpush1.msra.mxu0 0.0
    %2701 = vmatprep.subr.mxu0 0.0
    %2702 = vmatpush1.msra.mxu0 0.0
    %2703 = vmatprep.subr.mxu0 0.0
    %2704 = vmatpush1.msra.mxu0 0.0
    %2705 = vmatprep.subr.mxu0 0.0
    %2706 = vmatpush1.msra.mxu0 0.0
    %2707 = vmatprep.subr.mxu0 0.0
    %2708 = vmatpush1.msra.mxu0 0.0
    %2709 = vmatprep.subr.mxu0 0.0
    %2710 = vmatpush1.msra.mxu0 0.0
    %2711 = vmatprep.mubr.f32.mxu0 0.0
    %2712 = vmatmul.mubr.f32.gmra.mrb[0].mxu0 %v2256
    %v2713 = vpop.f32.mrb[0].mxu0
    %v2714 = vadd.f32 0.0, %v2713
    %v2715 = vpop.f32.mrb[0].mxu0
    %v2716 = vadd.f32 0.0, %v2715
    %2717 = vdwg.mxu0
    %2718 = vmatprep.subr.mxu0 %v2284
    %2719 = vmatpush1.msra.mxu0 %v2282
    %2720 = vmatprep.subr.mxu0 0.0
    %2721 = vmatpush1.msra.mxu0 0.0
    %2722 = vmatprep.subr.mxu0 0.0
    %2723 = vmatpush1.msra.mxu0 0.0
    %2724 = vmatprep.subr.mxu0 0.0
    %2725 = vmatpush1.msra.mxu0 0.0
    %2726 = vmatprep.subr.mxu0 0.0
    %2727 = vmatpush1.msra.mxu0 0.0
    %2728 = vmatprep.subr.mxu0 0.0
    %2729 = vmatpush1.msra.mxu0 0.0
    %2730 = vmatprep.subr.mxu0 0.0
    %2731 = vmatpush1.msra.mxu0 0.0
    %2732 = vmatprep.subr.mxu0 0.0
    %2733 = vmatpush1.msra.mxu0 0.0
    %2734 = vmatprep.subr.mxu0 0.0
    %2735 = vmatpush1.msra.mxu0 0.0
    %2736 = vmatprep.subr.mxu0 0.0
    %2737 = vmatpush1.msra.mxu0 0.0
    %2738 = vmatprep.subr.mxu0 0.0
    %2739 = vmatpush1.msra.mxu0 0.0
    %2740 = vmatprep.subr.mxu0 0.0
    %2741 = vmatpush1.msra.mxu0 0.0
    %2742 = vmatprep.subr.mxu0 0.0
    %2743 = vmatpush1.msra.mxu0 0.0
    %2744 = vmatprep.subr.mxu0 0.0
    %2745 = vmatpush1.msra.mxu0 0.0
    %2746 = vmatprep.subr.mxu0 0.0
    %2747 = vmatpush1.msra.mxu0 0.0
    %2748 = vmatprep.subr.mxu0 0.0
    %2749 = vmatpush1.msra.mxu0 0.0
    %2750 = vmatprep.subr.mxu0 0.0
    %2751 = vmatpush1.msra.mxu0 0.0
    %2752 = vmatprep.subr.mxu0 0.0
    %2753 = vmatpush1.msra.mxu0 0.0
    %2754 = vmatprep.subr.mxu0 0.0
    %2755 = vmatpush1.msra.mxu0 0.0
    %2756 = vmatprep.subr.mxu0 0.0
    %2757 = vmatpush1.msra.mxu0 0.0
    %2758 = vmatprep.subr.mxu0 0.0
    %2759 = vmatpush1.msra.mxu0 0.0
    %2760 = vmatprep.subr.mxu0 0.0
    %2761 = vmatpush1.msra.mxu0 0.0
    %2762 = vmatprep.subr.mxu0 0.0
    %2763 = vmatpush1.msra.mxu0 0.0
    %2764 = vmatprep.subr.mxu0 0.0
    %2765 = vmatpush1.msra.mxu0 0.0
    %2766 = vmatprep.subr.mxu0 0.0
    %2767 = vmatpush1.msra.mxu0 0.0
    %2768 = vmatprep.subr.mxu0 0.0
    %2769 = vmatpush1.msra.mxu0 0.0
    %2770 = vmatprep.subr.mxu0 0.0
    %2771 = vmatpush1.msra.mxu0 0.0
    %2772 = vmatprep.subr.mxu0 0.0
    %2773 = vmatpush1.msra.mxu0 0.0
    %2774 = vmatprep.subr.mxu0 0.0
    %2775 = vmatpush1.msra.mxu0 0.0
    %2776 = vmatprep.subr.mxu0 0.0
    %2777 = vmatpush1.msra.mxu0 0.0
    %2778 = vmatprep.subr.mxu0 0.0
    %2779 = vmatpush1.msra.mxu0 0.0
    %2780 = vmatprep.subr.mxu0 0.0
    %2781 = vmatpush1.msra.mxu0 0.0
    %2782 = vmatprep.mubr.f32.mxu0 0.0
    %2783 = vmatmul.mubr.f32.gmra.mrb[0].mxu0 %v2256
    %v2784 = vpop.f32.mrb[0].mxu0
    %v2785 = vadd.f32 0.0, %v2784
    %v2786 = vpop.f32.mrb[0].mxu0
    %v2787 = vadd.f32 0.0, %v2786
    %2788 = vdwg.mxu0
    %2789 = vmatprep.subr.mxu0 %v2288
    %2790 = vmatpush1.msra.mxu0 %v2286
    %2791 = vmatprep.subr.mxu0 0.0
    %2792 = vmatpush1.msra.mxu0 0.0
    %2793 = vmatprep.subr.mxu0 0.0
    %2794 = vmatpush1.msra.mxu0 0.0
    %2795 = vmatprep.subr.mxu0 0.0
    %2796 = vmatpush1.msra.mxu0 0.0
    %2797 = vmatprep.subr.mxu0 0.0
    %2798 = vmatpush1.msra.mxu0 0.0
    %2799 = vmatprep.subr.mxu0 0.0
    %2800 = vmatpush1.msra.mxu0 0.0
    %2801 = vmatprep.subr.mxu0 0.0
    %2802 = vmatpush1.msra.mxu0 0.0
    %2803 = vmatprep.subr.mxu0 0.0
    %2804 = vmatpush1.msra.mxu0 0.0
    %2805 = vmatprep.subr.mxu0 0.0
    %2806 = vmatpush1.msra.mxu0 0.0
    %2807 = vmatprep.subr.mxu0 0.0
    %2808 = vmatpush1.msra.mxu0 0.0
    %2809 = vmatprep.subr.mxu0 0.0
    %2810 = vmatpush1.msra.mxu0 0.0
    %2811 = vmatprep.subr.mxu0 0.0
    %2812 = vmatpush1.msra.mxu0 0.0
    %2813 = vmatprep.subr.mxu0 0.0
    %2814 = vmatpush1.msra.mxu0 0.0
    %2815 = vmatprep.subr.mxu0 0.0
    %2816 = vmatpush1.msra.mxu0 0.0
    %2817 = vmatprep.subr.mxu0 0.0
    %2818 = vmatpush1.msra.mxu0 0.0
    %2819 = vmatprep.subr.mxu0 0.0
    %2820 = vmatpush1.msra.mxu0 0.0
    %2821 = vmatprep.subr.mxu0 0.0
    %2822 = vmatpush1.msra.mxu0 0.0
    %2823 = vmatprep.subr.mxu0 0.0
    %2824 = vmatpush1.msra.mxu0 0.0
    %2825 = vmatprep.subr.mxu0 0.0
    %2826 = vmatpush1.msra.mxu0 0.0
    %2827 = vmatprep.subr.mxu0 0.0
    %2828 = vmatpush1.msra.mxu0 0.0
    %2829 = vmatprep.subr.mxu0 0.0
    %2830 = vmatpush1.msra.mxu0 0.0
    %2831 = vmatprep.subr.mxu0 0.0
    %2832 = vmatpush1.msra.mxu0 0.0
    %2833 = vmatprep.subr.mxu0 0.0
    %2834 = vmatpush1.msra.mxu0 0.0
    %2835 = vmatprep.subr.mxu0 0.0
    %2836 = vmatpush1.msra.mxu0 0.0
    %2837 = vmatprep.subr.mxu0 0.0
    %2838 = vmatpush1.msra.mxu0 0.0
    %2839 = vmatprep.subr.mxu0 0.0
    %2840 = vmatpush1.msra.mxu0 0.0
    %2841 = vmatprep.subr.mxu0 0.0
    %2842 = vmatpush1.msra.mxu0 0.0
    %2843 = vmatprep.subr.mxu0 0.0
    %2844 = vmatpush1.msra.mxu0 0.0
    %2845 = vmatprep.subr.mxu0 0.0
    %2846 = vmatpush1.msra.mxu0 0.0
    %2847 = vmatprep.subr.mxu0 0.0
    %2848 = vmatpush1.msra.mxu0 0.0
    %2849 = vmatprep.subr.mxu0 0.0
    %2850 = vmatpush1.msra.mxu0 0.0
    %2851 = vmatprep.subr.mxu0 0.0
    %2852 = vmatpush1.msra.mxu0 0.0
    %2853 = vmatprep.mubr.f32.mxu0 0.0
    %2854 = vmatmul.mubr.f32.gmra.mrb[0].mxu0 %v2256
    %v2855 = vpop.f32.mrb[0].mxu0
    %v2856 = vadd.f32 0.0, %v2855
    %v2857 = vpop.f32.mrb[0].mxu0
    %v2858 = vadd.f32 0.0, %v2857
    %2859 = vdwg.mxu0
    %2860 = vmatprep.subr.mxu0 0.0
    %2861 = vmatpush1.msra.mxu0 %v2290
    %2862 = vmatprep.subr.mxu0 0.0
    %2863 = vmatpush1.msra.mxu0 0.0
    %2864 = vmatprep.subr.mxu0 0.0
    %2865 = vmatpush1.msra.mxu0 0.0
    %2866 = vmatprep.subr.mxu0 0.0
    %2867 = vmatpush1.msra.mxu0 0.0
    %2868 = vmatprep.subr.mxu0 0.0
    %2869 = vmatpush1.msra.mxu0 0.0
    %2870 = vmatprep.subr.mxu0 0.0
    %2871 = vmatpush1.msra.mxu0 0.0
    %2872 = vmatprep.subr.mxu0 0.0
    %2873 = vmatpush1.msra.mxu0 0.0
    %2874 = vmatprep.subr.mxu0 0.0
    %2875 = vmatpush1.msra.mxu0 0.0
    %2876 = vmatprep.subr.mxu0 0.0
    %2877 = vmatpush1.msra.mxu0 0.0
    %2878 = vmatprep.subr.mxu0 0.0
    %2879 = vmatpush1.msra.mxu0 0.0
    %2880 = vmatprep.subr.mxu0 0.0
    %2881 = vmatpush1.msra.mxu0 0.0
    %2882 = vmatprep.subr.mxu0 0.0
    %2883 = vmatpush1.msra.mxu0 0.0
    %2884 = vmatprep.subr.mxu0 0.0
    %2885 = vmatpush1.msra.mxu0 0.0
    %2886 = vmatprep.subr.mxu0 0.0
    %2887 = vmatpush1.msra.mxu0 0.0
    %2888 = vmatprep.subr.mxu0 0.0
    %2889 = vmatpush1.msra.mxu0 0.0
    %2890 = vmatprep.subr.mxu0 0.0
    %2891 = vmatpush1.msra.mxu0 0.0
    %2892 = vmatprep.subr.mxu0 0.0
    %2893 = vmatpush1.msra.mxu0 0.0
    %2894 = vmatprep.subr.mxu0 0.0
    %2895 = vmatpush1.msra.mxu0 0.0
    %2896 = vmatprep.subr.mxu0 0.0
    %2897 = vmatpush1.msra.mxu0 0.0
    %2898 = vmatprep.subr.mxu0 0.0
    %2899 = vmatpush1.msra.mxu0 0.0
    %2900 = vmatprep.subr.mxu0 0.0
    %2901 = vmatpush1.msra.mxu0 0.0
    %2902 = vmatprep.subr.mxu0 0.0
    %2903 = vmatpush1.msra.mxu0 0.0
    %2904 = vmatprep.subr.mxu0 0.0
    %2905 = vmatpush1.msra.mxu0 0.0
    %2906 = vmatprep.subr.mxu0 0.0
    %2907 = vmatpush1.msra.mxu0 0.0
    %2908 = vmatprep.subr.mxu0 0.0
    %2909 = vmatpush1.msra.mxu0 0.0
    %2910 = vmatprep.subr.mxu0 0.0
    %2911 = vmatpush1.msra.mxu0 0.0
    %2912 = vmatprep.subr.mxu0 0.0
    %2913 = vmatpush1.msra.mxu0 0.0
    %2914 = vmatprep.subr.mxu0 0.0
    %2915 = vmatpush1.msra.mxu0 0.0
    %2916 = vmatprep.subr.mxu0 0.0
    %2917 = vmatpush1.msra.mxu0 0.0
    %2918 = vmatprep.subr.mxu0 0.0
    %2919 = vmatpush1.msra.mxu0 0.0
    %2920 = vmatprep.subr.mxu0 0.0
    %2921 = vmatpush1.msra.mxu0 0.0
    %2922 = vmatprep.subr.mxu0 0.0
    %2923 = vmatpush1.msra.mxu0 0.0
    %2924 = vmatprep.mubr.f32.mxu0 0.0
    %2925 = vmatmul.mubr.f32.gmra.mrb[0].mxu0 %v2256
    %v2926 = vpop.f32.mrb[0].mxu0
    %v2927 = vadd.f32 0.0, %v2926
    %v2928 = vpop.f32.mrb[0].mxu0
    %2929 = vdwg.mxu0
    %v2930 = vadd.f32 %v2209, %v2359
    %v2931 = vadd.f32 %v2210, %v2361
    %v2932 = vadd.f32 %v2211, %v2430
    %v2933 = vadd.f32 %v2212, %v2432
    %v2934 = vadd.f32 %v2213, %v2501
    %v2935 = vadd.f32 %v2214, %v2503
    %v2936 = vadd.f32 %v2215, %v2572
    %v2937 = vadd.f32 %v2216, %v2574
    %v2938 = vadd.f32 %v2217, %v2643
    %v2939 = vadd.f32 %v2218, %v2645
    %v2940 = vadd.f32 %v2219, %v2714
    %v2941 = vadd.f32 %v2220, %v2716
    %v2942 = vadd.f32 %v2221, %v2785
    %v2943 = vadd.f32 %v2222, %v2787
    %v2944 = vadd.f32 %v2223, %v2856
    %v2945 = vadd.f32 %v2224, %v2858
    %v2946 = vadd.f32 %v2225, %v2927
    %s2947 = scalar_lea.vmem [#allocation2], 204
    %v2948 = vld [vmem:[%s2947] sm:$0xff]
    %v2949 = vld [vmem:[%s2947 + $0x8] sm:$0xff]
    %v2950 = vld [vmem:[%s2947 + $0x10] sm:$0xff]
    %v2951 = vld [vmem:[%s2947 + $0x18] sm:$0xff]
    %v2952 = vld [vmem:[%s2947 + $0x20] sm:$0xff]
    %v2953 = vld [vmem:[%s2947 + $0x28] sm:$0xff]
    %v2954 = vld [vmem:[%s2947 + $0x30] sm:$0xff]
    %v2955 = vld [vmem:[%s2947 + $0x38] sm:$0xff]
    %v2956 = vld [vmem:[%s2947 + $0x40] sm:$0xf]
    %s2957 = scalar_lea.vmem %s1, 32
    %v2958 = vld [vmem:[%s2957] sm:$0xff]
    %v2968 = vcombine.high %v2948, %v2948
    %v2969 = vcombine.high %v2949, %v2949
    %v2970 = vcombine.high %v2950, %v2950
    %v2971 = vcombine.high %v2951, %v2951
    %v2972 = vcombine.high %v2952, %v2952
    %v2973 = vcombine.high %v2953, %v2953
    %v2974 = vcombine.high %v2954, %v2954
    %v2975 = vcombine.high %v2955, %v2955
    %v2977 = vsel %vm86, %v2958, 0
    %v2979 = vsel %vm90, %v2948, 0
    %v2981 = vsel %vm90, %v2968, 0
    %v2983 = vsel %vm90, %v2949, 0
    %v2985 = vsel %vm90, %v2969, 0
    %v2987 = vsel %vm90, %v2950, 0
    %v2989 = vsel %vm90, %v2970, 0
    %v2991 = vsel %vm90, %v2951, 0
    %v2993 = vsel %vm90, %v2971, 0
    %v2995 = vsel %vm90, %v2952, 0
    %v2997 = vsel %vm90, %v2972, 0
    %v2999 = vsel %vm90, %v2953, 0
    %v3001 = vsel %vm90, %v2973, 0
    %v3003 = vsel %vm90, %v2954, 0
    %v3005 = vsel %vm90, %v2974, 0
    %v3007 = vsel %vm90, %v2955, 0
    %v3009 = vsel %vm90, %v2975, 0
    %v3011 = vsel %vm90, %v2956, 0
    %3013 = vmatprep.subr.mxu0 %v2981
    %3014 = vmatpush1.msra.mxu0 %v2979
    %3015 = vmatprep.subr.mxu0 0.0
    %3016 = vmatpush1.msra.mxu0 0.0
    %3017 = vmatprep.subr.mxu0 0.0
    %3018 = vmatpush1.msra.mxu0 0.0
    %3019 = vmatprep.subr.mxu0 0.0
    %3020 = vmatpush1.msra.mxu0 0.0
    %3021 = vmatprep.subr.mxu0 0.0
    %3022 = vmatpush1.msra.mxu0 0.0
    %3023 = vmatprep.subr.mxu0 0.0
    %3024 = vmatpush1.msra.mxu0 0.0
    %3025 = vmatprep.subr.mxu0 0.0
    %3026 = vmatpush1.msra.mxu0 0.0
    %3027 = vmatprep.subr.mxu0 0.0
    %3028 = vmatpush1.msra.mxu0 0.0
    %3029 = vmatprep.subr.mxu0 0.0
    %3030 = vmatpush1.msra.mxu0 0.0
    %3031 = vmatprep.subr.mxu0 0.0
    %3032 = vmatpush1.msra.mxu0 0.0
    %3033 = vmatprep.subr.mxu0 0.0
    %3034 = vmatpush1.msra.mxu0 0.0
    %3035 = vmatprep.subr.mxu0 0.0
    %3036 = vmatpush1.msra.mxu0 0.0
    %3037 = vmatprep.subr.mxu0 0.0
    %3038 = vmatpush1.msra.mxu0 0.0
    %3039 = vmatprep.subr.mxu0 0.0
    %3040 = vmatpush1.msra.mxu0 0.0
    %3041 = vmatprep.subr.mxu0 0.0
    %3042 = vmatpush1.msra.mxu0 0.0
    %3043 = vmatprep.subr.mxu0 0.0
    %3044 = vmatpush1.msra.mxu0 0.0
    %3045 = vmatprep.subr.mxu0 0.0
    %3046 = vmatpush1.msra.mxu0 0.0
    %3047 = vmatprep.subr.mxu0 0.0
    %3048 = vmatpush1.msra.mxu0 0.0
    %3049 = vmatprep.subr.mxu0 0.0
    %3050 = vmatpush1.msra.mxu0 0.0
    %3051 = vmatprep.subr.mxu0 0.0
    %3052 = vmatpush1.msra.mxu0 0.0
    %3053 = vmatprep.subr.mxu0 0.0
    %3054 = vmatpush1.msra.mxu0 0.0
    %3055 = vmatprep.subr.mxu0 0.0
    %3056 = vmatpush1.msra.mxu0 0.0
    %3057 = vmatprep.subr.mxu0 0.0
    %3058 = vmatpush1.msra.mxu0 0.0
    %3059 = vmatprep.subr.mxu0 0.0
    %3060 = vmatpush1.msra.mxu0 0.0
    %3061 = vmatprep.subr.mxu0 0.0
    %3062 = vmatpush1.msra.mxu0 0.0
    %3063 = vmatprep.subr.mxu0 0.0
    %3064 = vmatpush1.msra.mxu0 0.0
    %3065 = vmatprep.subr.mxu0 0.0
    %3066 = vmatpush1.msra.mxu0 0.0
    %3067 = vmatprep.subr.mxu0 0.0
    %3068 = vmatpush1.msra.mxu0 0.0
    %3069 = vmatprep.subr.mxu0 0.0
    %3070 = vmatpush1.msra.mxu0 0.0
    %3071 = vmatprep.subr.mxu0 0.0
    %3072 = vmatpush1.msra.mxu0 0.0
    %3073 = vmatprep.subr.mxu0 0.0
    %3074 = vmatpush1.msra.mxu0 0.0
    %3075 = vmatprep.subr.mxu0 0.0
    %3076 = vmatpush1.msra.mxu0 0.0
    %3077 = vmatprep.mubr.f32.mxu0 0.0
    %3078 = vmatmul.mubr.f32.gmra.mrb[0].mxu0 %v2977
    %v3079 = vpop.f32.mrb[0].mxu0
    %v3080 = vadd.f32 0.0, %v3079
    %v3081 = vpop.f32.mrb[0].mxu0
    %v3082 = vadd.f32 0.0, %v3081
    %3083 = vdwg.mxu0
    %3084 = vmatprep.subr.mxu0 %v2985
    %3085 = vmatpush1.msra.mxu0 %v2983
    %3086 = vmatprep.subr.mxu0 0.0
    %3087 = vmatpush1.msra.mxu0 0.0
    %3088 = vmatprep.subr.mxu0 0.0
    %3089 = vmatpush1.msra.mxu0 0.0
    %3090 = vmatprep.subr.mxu0 0.0
    %3091 = vmatpush1.msra.mxu0 0.0
    %3092 = vmatprep.subr.mxu0 0.0
    %3093 = vmatpush1.msra.mxu0 0.0
    %3094 = vmatprep.subr.mxu0 0.0
    %3095 = vmatpush1.msra.mxu0 0.0
    %3096 = vmatprep.subr.mxu0 0.0
    %3097 = vmatpush1.msra.mxu0 0.0
    %3098 = vmatprep.subr.mxu0 0.0
    %3099 = vmatpush1.msra.mxu0 0.0
    %3100 = vmatprep.subr.mxu0 0.0
    %3101 = vmatpush1.msra.mxu0 0.0
    %3102 = vmatprep.subr.mxu0 0.0
    %3103 = vmatpush1.msra.mxu0 0.0
    %3104 = vmatprep.subr.mxu0 0.0
    %3105 = vmatpush1.msra.mxu0 0.0
    %3106 = vmatprep.subr.mxu0 0.0
    %3107 = vmatpush1.msra.mxu0 0.0
    %3108 = vmatprep.subr.mxu0 0.0
    %3109 = vmatpush1.msra.mxu0 0.0
    %3110 = vmatprep.subr.mxu0 0.0
    %3111 = vmatpush1.msra.mxu0 0.0
    %3112 = vmatprep.subr.mxu0 0.0
    %3113 = vmatpush1.msra.mxu0 0.0
    %3114 = vmatprep.subr.mxu0 0.0
    %3115 = vmatpush1.msra.mxu0 0.0
    %3116 = vmatprep.subr.mxu0 0.0
    %3117 = vmatpush1.msra.mxu0 0.0
    %3118 = vmatprep.subr.mxu0 0.0
    %3119 = vmatpush1.msra.mxu0 0.0
    %3120 = vmatprep.subr.mxu0 0.0
    %3121 = vmatpush1.msra.mxu0 0.0
    %3122 = vmatprep.subr.mxu0 0.0
    %3123 = vmatpush1.msra.mxu0 0.0
    %3124 = vmatprep.subr.mxu0 0.0
    %3125 = vmatpush1.msra.mxu0 0.0
    %3126 = vmatprep.subr.mxu0 0.0
    %3127 = vmatpush1.msra.mxu0 0.0
    %3128 = vmatprep.subr.mxu0 0.0
    %3129 = vmatpush1.msra.mxu0 0.0
    %3130 = vmatprep.subr.mxu0 0.0
    %3131 = vmatpush1.msra.mxu0 0.0
    %3132 = vmatprep.subr.mxu0 0.0
    %3133 = vmatpush1.msra.mxu0 0.0
    %3134 = vmatprep.subr.mxu0 0.0
    %3135 = vmatpush1.msra.mxu0 0.0
    %3136 = vmatprep.subr.mxu0 0.0
    %3137 = vmatpush1.msra.mxu0 0.0
    %3138 = vmatprep.subr.mxu0 0.0
    %3139 = vmatpush1.msra.mxu0 0.0
    %3140 = vmatprep.subr.mxu0 0.0
    %3141 = vmatpush1.msra.mxu0 0.0
    %3142 = vmatprep.subr.mxu0 0.0
    %3143 = vmatpush1.msra.mxu0 0.0
    %3144 = vmatprep.subr.mxu0 0.0
    %3145 = vmatpush1.msra.mxu0 0.0
    %3146 = vmatprep.subr.mxu0 0.0
    %3147 = vmatpush1.msra.mxu0 0.0
    %3148 = vmatprep.mubr.f32.mxu0 0.0
    %3149 = vmatmul.mubr.f32.gmra.mrb[0].mxu0 %v2977
    %v3150 = vpop.f32.mrb[0].mxu0
    %v3151 = vadd.f32 0.0, %v3150
    %v3152 = vpop.f32.mrb[0].mxu0
    %v3153 = vadd.f32 0.0, %v3152
    %3154 = vdwg.mxu0
    %3155 = vmatprep.subr.mxu0 %v2989
    %3156 = vmatpush1.msra.mxu0 %v2987
    %3157 = vmatprep.subr.mxu0 0.0
    %3158 = vmatpush1.msra.mxu0 0.0
    %3159 = vmatprep.subr.mxu0 0.0
    %3160 = vmatpush1.msra.mxu0 0.0
    %3161 = vmatprep.subr.mxu0 0.0
    %3162 = vmatpush1.msra.mxu0 0.0
    %3163 = vmatprep.subr.mxu0 0.0
    %3164 = vmatpush1.msra.mxu0 0.0
    %3165 = vmatprep.subr.mxu0 0.0
    %3166 = vmatpush1.msra.mxu0 0.0
    %3167 = vmatprep.subr.mxu0 0.0
    %3168 = vmatpush1.msra.mxu0 0.0
    %3169 = vmatprep.subr.mxu0 0.0
    %3170 = vmatpush1.msra.mxu0 0.0
    %3171 = vmatprep.subr.mxu0 0.0
    %3172 = vmatpush1.msra.mxu0 0.0
    %3173 = vmatprep.subr.mxu0 0.0
    %3174 = vmatpush1.msra.mxu0 0.0
    %3175 = vmatprep.subr.mxu0 0.0
    %3176 = vmatpush1.msra.mxu0 0.0
    %3177 = vmatprep.subr.mxu0 0.0
    %3178 = vmatpush1.msra.mxu0 0.0
    %3179 = vmatprep.subr.mxu0 0.0
    %3180 = vmatpush1.msra.mxu0 0.0
    %3181 = vmatprep.subr.mxu0 0.0
    %3182 = vmatpush1.msra.mxu0 0.0
    %3183 = vmatprep.subr.mxu0 0.0
    %3184 = vmatpush1.msra.mxu0 0.0
    %3185 = vmatprep.subr.mxu0 0.0
    %3186 = vmatpush1.msra.mxu0 0.0
    %3187 = vmatprep.subr.mxu0 0.0
    %3188 = vmatpush1.msra.mxu0 0.0
    %3189 = vmatprep.subr.mxu0 0.0
    %3190 = vmatpush1.msra.mxu0 0.0
    %3191 = vmatprep.subr.mxu0 0.0
    %3192 = vmatpush1.msra.mxu0 0.0
    %3193 = vmatprep.subr.mxu0 0.0
    %3194 = vmatpush1.msra.mxu0 0.0
    %3195 = vmatprep.subr.mxu0 0.0
    %3196 = vmatpush1.msra.mxu0 0.0
    %3197 = vmatprep.subr.mxu0 0.0
    %3198 = vmatpush1.msra.mxu0 0.0
    %3199 = vmatprep.subr.mxu0 0.0
    %3200 = vmatpush1.msra.mxu0 0.0
    %3201 = vmatprep.subr.mxu0 0.0
    %3202 = vmatpush1.msra.mxu0 0.0
    %3203 = vmatprep.subr.mxu0 0.0
    %3204 = vmatpush1.msra.mxu0 0.0
    %3205 = vmatprep.subr.mxu0 0.0
    %3206 = vmatpush1.msra.mxu0 0.0
    %3207 = vmatprep.subr.mxu0 0.0
    %3208 = vmatpush1.msra.mxu0 0.0
    %3209 = vmatprep.subr.mxu0 0.0
    %3210 = vmatpush1.msra.mxu0 0.0
    %3211 = vmatprep.subr.mxu0 0.0
    %3212 = vmatpush1.msra.mxu0 0.0
    %3213 = vmatprep.subr.mxu0 0.0
    %3214 = vmatpush1.msra.mxu0 0.0
    %3215 = vmatprep.subr.mxu0 0.0
    %3216 = vmatpush1.msra.mxu0 0.0
    %3217 = vmatprep.subr.mxu0 0.0
    %3218 = vmatpush1.msra.mxu0 0.0
    %3219 = vmatprep.mubr.f32.mxu0 0.0
    %3220 = vmatmul.mubr.f32.gmra.mrb[0].mxu0 %v2977
    %v3221 = vpop.f32.mrb[0].mxu0
    %v3222 = vadd.f32 0.0, %v3221
    %v3223 = vpop.f32.mrb[0].mxu0
    %v3224 = vadd.f32 0.0, %v3223
    %3225 = vdwg.mxu0
    %3226 = vmatprep.subr.mxu0 %v2993
    %3227 = vmatpush1.msra.mxu0 %v2991
    %3228 = vmatprep.subr.mxu0 0.0
    %3229 = vmatpush1.msra.mxu0 0.0
    %3230 = vmatprep.subr.mxu0 0.0
    %3231 = vmatpush1.msra.mxu0 0.0
    %3232 = vmatprep.subr.mxu0 0.0
    %3233 = vmatpush1.msra.mxu0 0.0
    %3234 = vmatprep.subr.mxu0 0.0
    %3235 = vmatpush1.msra.mxu0 0.0
    %3236 = vmatprep.subr.mxu0 0.0
    %3237 = vmatpush1.msra.mxu0 0.0
    %3238 = vmatprep.subr.mxu0 0.0
    %3239 = vmatpush1.msra.mxu0 0.0
    %3240 = vmatprep.subr.mxu0 0.0
    %3241 = vmatpush1.msra.mxu0 0.0
    %3242 = vmatprep.subr.mxu0 0.0
    %3243 = vmatpush1.msra.mxu0 0.0
    %3244 = vmatprep.subr.mxu0 0.0
    %3245 = vmatpush1.msra.mxu0 0.0
    %3246 = vmatprep.subr.mxu0 0.0
    %3247 = vmatpush1.msra.mxu0 0.0
    %3248 = vmatprep.subr.mxu0 0.0
    %3249 = vmatpush1.msra.mxu0 0.0
    %3250 = vmatprep.subr.mxu0 0.0
    %3251 = vmatpush1.msra.mxu0 0.0
    %3252 = vmatprep.subr.mxu0 0.0
    %3253 = vmatpush1.msra.mxu0 0.0
    %3254 = vmatprep.subr.mxu0 0.0
    %3255 = vmatpush1.msra.mxu0 0.0
    %3256 = vmatprep.subr.mxu0 0.0
    %3257 = vmatpush1.msra.mxu0 0.0
    %3258 = vmatprep.subr.mxu0 0.0
    %3259 = vmatpush1.msra.mxu0 0.0
    %3260 = vmatprep.subr.mxu0 0.0
    %3261 = vmatpush1.msra.mxu0 0.0
    %3262 = vmatprep.subr.mxu0 0.0
    %3263 = vmatpush1.msra.mxu0 0.0
    %3264 = vmatprep.subr.mxu0 0.0
    %3265 = vmatpush1.msra.mxu0 0.0
    %3266 = vmatprep.subr.mxu0 0.0
    %3267 = vmatpush1.msra.mxu0 0.0
    %3268 = vmatprep.subr.mxu0 0.0
    %3269 = vmatpush1.msra.mxu0 0.0
    %3270 = vmatprep.subr.mxu0 0.0
    %3271 = vmatpush1.msra.mxu0 0.0
    %3272 = vmatprep.subr.mxu0 0.0
    %3273 = vmatpush1.msra.mxu0 0.0
    %3274 = vmatprep.subr.mxu0 0.0
    %3275 = vmatpush1.msra.mxu0 0.0
    %3276 = vmatprep.subr.mxu0 0.0
    %3277 = vmatpush1.msra.mxu0 0.0
    %3278 = vmatprep.subr.mxu0 0.0
    %3279 = vmatpush1.msra.mxu0 0.0
    %3280 = vmatprep.subr.mxu0 0.0
    %3281 = vmatpush1.msra.mxu0 0.0
    %3282 = vmatprep.subr.mxu0 0.0
    %3283 = vmatpush1.msra.mxu0 0.0
    %3284 = vmatprep.subr.mxu0 0.0
    %3285 = vmatpush1.msra.mxu0 0.0
    %3286 = vmatprep.subr.mxu0 0.0
    %3287 = vmatpush1.msra.mxu0 0.0
    %3288 = vmatprep.subr.mxu0 0.0
    %3289 = vmatpush1.msra.mxu0 0.0
    %3290 = vmatprep.mubr.f32.mxu0 0.0
    %3291 = vmatmul.mubr.f32.gmra.mrb[0].mxu0 %v2977
    %v3292 = vpop.f32.mrb[0].mxu0
    %v3293 = vadd.f32 0.0, %v3292
    %v3294 = vpop.f32.mrb[0].mxu0
    %v3295 = vadd.f32 0.0, %v3294
    %3296 = vdwg.mxu0
    %3297 = vmatprep.subr.mxu0 %v2997
    %3298 = vmatpush1.msra.mxu0 %v2995
    %3299 = vmatprep.subr.mxu0 0.0
    %3300 = vmatpush1.msra.mxu0 0.0
    %3301 = vmatprep.subr.mxu0 0.0
    %3302 = vmatpush1.msra.mxu0 0.0
    %3303 = vmatprep.subr.mxu0 0.0
    %3304 = vmatpush1.msra.mxu0 0.0
    %3305 = vmatprep.subr.mxu0 0.0
    %3306 = vmatpush1.msra.mxu0 0.0
    %3307 = vmatprep.subr.mxu0 0.0
    %3308 = vmatpush1.msra.mxu0 0.0
    %3309 = vmatprep.subr.mxu0 0.0
    %3310 = vmatpush1.msra.mxu0 0.0
    %3311 = vmatprep.subr.mxu0 0.0
    %3312 = vmatpush1.msra.mxu0 0.0
    %3313 = vmatprep.subr.mxu0 0.0
    %3314 = vmatpush1.msra.mxu0 0.0
    %3315 = vmatprep.subr.mxu0 0.0
    %3316 = vmatpush1.msra.mxu0 0.0
    %3317 = vmatprep.subr.mxu0 0.0
    %3318 = vmatpush1.msra.mxu0 0.0
    %3319 = vmatprep.subr.mxu0 0.0
    %3320 = vmatpush1.msra.mxu0 0.0
    %3321 = vmatprep.subr.mxu0 0.0
    %3322 = vmatpush1.msra.mxu0 0.0
    %3323 = vmatprep.subr.mxu0 0.0
    %3324 = vmatpush1.msra.mxu0 0.0
    %3325 = vmatprep.subr.mxu0 0.0
    %3326 = vmatpush1.msra.mxu0 0.0
    %3327 = vmatprep.subr.mxu0 0.0
    %3328 = vmatpush1.msra.mxu0 0.0
    %3329 = vmatprep.subr.mxu0 0.0
    %3330 = vmatpush1.msra.mxu0 0.0
    %3331 = vmatprep.subr.mxu0 0.0
    %3332 = vmatpush1.msra.mxu0 0.0
    %3333 = vmatprep.subr.mxu0 0.0
    %3334 = vmatpush1.msra.mxu0 0.0
    %3335 = vmatprep.subr.mxu0 0.0
    %3336 = vmatpush1.msra.mxu0 0.0
    %3337 = vmatprep.subr.mxu0 0.0
    %3338 = vmatpush1.msra.mxu0 0.0
    %3339 = vmatprep.subr.mxu0 0.0
    %3340 = vmatpush1.msra.mxu0 0.0
    %3341 = vmatprep.subr.mxu0 0.0
    %3342 = vmatpush1.msra.mxu0 0.0
    %3343 = vmatprep.subr.mxu0 0.0
    %3344 = vmatpush1.msra.mxu0 0.0
    %3345 = vmatprep.subr.mxu0 0.0
    %3346 = vmatpush1.msra.mxu0 0.0
    %3347 = vmatprep.subr.mxu0 0.0
    %3348 = vmatpush1.msra.mxu0 0.0
    %3349 = vmatprep.subr.mxu0 0.0
    %3350 = vmatpush1.msra.mxu0 0.0
    %3351 = vmatprep.subr.mxu0 0.0
    %3352 = vmatpush1.msra.mxu0 0.0
    %3353 = vmatprep.subr.mxu0 0.0
    %3354 = vmatpush1.msra.mxu0 0.0
    %3355 = vmatprep.subr.mxu0 0.0
    %3356 = vmatpush1.msra.mxu0 0.0
    %3357 = vmatprep.subr.mxu0 0.0
    %3358 = vmatpush1.msra.mxu0 0.0
    %3359 = vmatprep.subr.mxu0 0.0
    %3360 = vmatpush1.msra.mxu0 0.0
    %3361 = vmatprep.mubr.f32.mxu0 0.0
    %3362 = vmatmul.mubr.f32.gmra.mrb[0].mxu0 %v2977
    %v3363 = vpop.f32.mrb[0].mxu0
    %v3364 = vadd.f32 0.0, %v3363
    %v3365 = vpop.f32.mrb[0].mxu0
    %v3366 = vadd.f32 0.0, %v3365
    %3367 = vdwg.mxu0
    %3368 = vmatprep.subr.mxu0 %v3001
    %3369 = vmatpush1.msra.mxu0 %v2999
    %3370 = vmatprep.subr.mxu0 0.0
    %3371 = vmatpush1.msra.mxu0 0.0
    %3372 = vmatprep.subr.mxu0 0.0
    %3373 = vmatpush1.msra.mxu0 0.0
    %3374 = vmatprep.subr.mxu0 0.0
    %3375 = vmatpush1.msra.mxu0 0.0
    %3376 = vmatprep.subr.mxu0 0.0
    %3377 = vmatpush1.msra.mxu0 0.0
    %3378 = vmatprep.subr.mxu0 0.0
    %3379 = vmatpush1.msra.mxu0 0.0
    %3380 = vmatprep.subr.mxu0 0.0
    %3381 = vmatpush1.msra.mxu0 0.0
    %3382 = vmatprep.subr.mxu0 0.0
    %3383 = vmatpush1.msra.mxu0 0.0
    %3384 = vmatprep.subr.mxu0 0.0
    %3385 = vmatpush1.msra.mxu0 0.0
    %3386 = vmatprep.subr.mxu0 0.0
    %3387 = vmatpush1.msra.mxu0 0.0
    %3388 = vmatprep.subr.mxu0 0.0
    %3389 = vmatpush1.msra.mxu0 0.0
    %3390 = vmatprep.subr.mxu0 0.0
    %3391 = vmatpush1.msra.mxu0 0.0
    %3392 = vmatprep.subr.mxu0 0.0
    %3393 = vmatpush1.msra.mxu0 0.0
    %3394 = vmatprep.subr.mxu0 0.0
    %3395 = vmatpush1.msra.mxu0 0.0
    %3396 = vmatprep.subr.mxu0 0.0
    %3397 = vmatpush1.msra.mxu0 0.0
    %3398 = vmatprep.subr.mxu0 0.0
    %3399 = vmatpush1.msra.mxu0 0.0
    %3400 = vmatprep.subr.mxu0 0.0
    %3401 = vmatpush1.msra.mxu0 0.0
    %3402 = vmatprep.subr.mxu0 0.0
    %3403 = vmatpush1.msra.mxu0 0.0
    %3404 = vmatprep.subr.mxu0 0.0
    %3405 = vmatpush1.msra.mxu0 0.0
    %3406 = vmatprep.subr.mxu0 0.0
    %3407 = vmatpush1.msra.mxu0 0.0
    %3408 = vmatprep.subr.mxu0 0.0
    %3409 = vmatpush1.msra.mxu0 0.0
    %3410 = vmatprep.subr.mxu0 0.0
    %3411 = vmatpush1.msra.mxu0 0.0
    %3412 = vmatprep.subr.mxu0 0.0
    %3413 = vmatpush1.msra.mxu0 0.0
    %3414 = vmatprep.subr.mxu0 0.0
    %3415 = vmatpush1.msra.mxu0 0.0
    %3416 = vmatprep.subr.mxu0 0.0
    %3417 = vmatpush1.msra.mxu0 0.0
    %3418 = vmatprep.subr.mxu0 0.0
    %3419 = vmatpush1.msra.mxu0 0.0
    %3420 = vmatprep.subr.mxu0 0.0
    %3421 = vmatpush1.msra.mxu0 0.0
    %3422 = vmatprep.subr.mxu0 0.0
    %3423 = vmatpush1.msra.mxu0 0.0
    %3424 = vmatprep.subr.mxu0 0.0
    %3425 = vmatpush1.msra.mxu0 0.0
    %3426 = vmatprep.subr.mxu0 0.0
    %3427 = vmatpush1.msra.mxu0 0.0
    %3428 = vmatprep.subr.mxu0 0.0
    %3429 = vmatpush1.msra.mxu0 0.0
    %3430 = vmatprep.subr.mxu0 0.0
    %3431 = vmatpush1.msra.mxu0 0.0
    %3432 = vmatprep.mubr.f32.mxu0 0.0
    %3433 = vmatmul.mubr.f32.gmra.mrb[0].mxu0 %v2977
    %v3434 = vpop.f32.mrb[0].mxu0
    %v3435 = vadd.f32 0.0, %v3434
    %v3436 = vpop.f32.mrb[0].mxu0
    %v3437 = vadd.f32 0.0, %v3436
    %3438 = vdwg.mxu0
    %3439 = vmatprep.subr.mxu0 %v3005
    %3440 = vmatpush1.msra.mxu0 %v3003
    %3441 = vmatprep.subr.mxu0 0.0
    %3442 = vmatpush1.msra.mxu0 0.0
    %3443 = vmatprep.subr.mxu0 0.0
    %3444 = vmatpush1.msra.mxu0 0.0
    %3445 = vmatprep.subr.mxu0 0.0
    %3446 = vmatpush1.msra.mxu0 0.0
    %3447 = vmatprep.subr.mxu0 0.0
    %3448 = vmatpush1.msra.mxu0 0.0
    %3449 = vmatprep.subr.mxu0 0.0
    %3450 = vmatpush1.msra.mxu0 0.0
    %3451 = vmatprep.subr.mxu0 0.0
    %3452 = vmatpush1.msra.mxu0 0.0
    %3453 = vmatprep.subr.mxu0 0.0
    %3454 = vmatpush1.msra.mxu0 0.0
    %3455 = vmatprep.subr.mxu0 0.0
    %3456 = vmatpush1.msra.mxu0 0.0
    %3457 = vmatprep.subr.mxu0 0.0
    %3458 = vmatpush1.msra.mxu0 0.0
    %3459 = vmatprep.subr.mxu0 0.0
    %3460 = vmatpush1.msra.mxu0 0.0
    %3461 = vmatprep.subr.mxu0 0.0
    %3462 = vmatpush1.msra.mxu0 0.0
    %3463 = vmatprep.subr.mxu0 0.0
    %3464 = vmatpush1.msra.mxu0 0.0
    %3465 = vmatprep.subr.mxu0 0.0
    %3466 = vmatpush1.msra.mxu0 0.0
    %3467 = vmatprep.subr.mxu0 0.0
    %3468 = vmatpush1.msra.mxu0 0.0
    %3469 = vmatprep.subr.mxu0 0.0
    %3470 = vmatpush1.msra.mxu0 0.0
    %3471 = vmatprep.subr.mxu0 0.0
    %3472 = vmatpush1.msra.mxu0 0.0
    %3473 = vmatprep.subr.mxu0 0.0
    %3474 = vmatpush1.msra.mxu0 0.0
    %3475 = vmatprep.subr.mxu0 0.0
    %3476 = vmatpush1.msra.mxu0 0.0
    %3477 = vmatprep.subr.mxu0 0.0
    %3478 = vmatpush1.msra.mxu0 0.0
    %3479 = vmatprep.subr.mxu0 0.0
    %3480 = vmatpush1.msra.mxu0 0.0
    %3481 = vmatprep.subr.mxu0 0.0
    %3482 = vmatpush1.msra.mxu0 0.0
    %3483 = vmatprep.subr.mxu0 0.0
    %3484 = vmatpush1.msra.mxu0 0.0
    %3485 = vmatprep.subr.mxu0 0.0
    %3486 = vmatpush1.msra.mxu0 0.0
    %3487 = vmatprep.subr.mxu0 0.0
    %3488 = vmatpush1.msra.mxu0 0.0
    %3489 = vmatprep.subr.mxu0 0.0
    %3490 = vmatpush1.msra.mxu0 0.0
    %3491 = vmatprep.subr.mxu0 0.0
    %3492 = vmatpush1.msra.mxu0 0.0
    %3493 = vmatprep.subr.mxu0 0.0
    %3494 = vmatpush1.msra.mxu0 0.0
    %3495 = vmatprep.subr.mxu0 0.0
    %3496 = vmatpush1.msra.mxu0 0.0
    %3497 = vmatprep.subr.mxu0 0.0
    %3498 = vmatpush1.msra.mxu0 0.0
    %3499 = vmatprep.subr.mxu0 0.0
    %3500 = vmatpush1.msra.mxu0 0.0
    %3501 = vmatprep.subr.mxu0 0.0
    %3502 = vmatpush1.msra.mxu0 0.0
    %3503 = vmatprep.mubr.f32.mxu0 0.0
    %3504 = vmatmul.mubr.f32.gmra.mrb[0].mxu0 %v2977
    %v3505 = vpop.f32.mrb[0].mxu0
    %v3506 = vadd.f32 0.0, %v3505
    %v3507 = vpop.f32.mrb[0].mxu0
    %v3508 = vadd.f32 0.0, %v3507
    %3509 = vdwg.mxu0
    %3510 = vmatprep.subr.mxu0 %v3009
    %3511 = vmatpush1.msra.mxu0 %v3007
    %3512 = vmatprep.subr.mxu0 0.0
    %3513 = vmatpush1.msra.mxu0 0.0
    %3514 = vmatprep.subr.mxu0 0.0
    %3515 = vmatpush1.msra.mxu0 0.0
    %3516 = vmatprep.subr.mxu0 0.0
    %3517 = vmatpush1.msra.mxu0 0.0
    %3518 = vmatprep.subr.mxu0 0.0
    %3519 = vmatpush1.msra.mxu0 0.0
    %3520 = vmatprep.subr.mxu0 0.0
    %3521 = vmatpush1.msra.mxu0 0.0
    %3522 = vmatprep.subr.mxu0 0.0
    %3523 = vmatpush1.msra.mxu0 0.0
    %3524 = vmatprep.subr.mxu0 0.0
    %3525 = vmatpush1.msra.mxu0 0.0
    %3526 = vmatprep.subr.mxu0 0.0
    %3527 = vmatpush1.msra.mxu0 0.0
    %3528 = vmatprep.subr.mxu0 0.0
    %3529 = vmatpush1.msra.mxu0 0.0
    %3530 = vmatprep.subr.mxu0 0.0
    %3531 = vmatpush1.msra.mxu0 0.0
    %3532 = vmatprep.subr.mxu0 0.0
    %3533 = vmatpush1.msra.mxu0 0.0
    %3534 = vmatprep.subr.mxu0 0.0
    %3535 = vmatpush1.msra.mxu0 0.0
    %3536 = vmatprep.subr.mxu0 0.0
    %3537 = vmatpush1.msra.mxu0 0.0
    %3538 = vmatprep.subr.mxu0 0.0
    %3539 = vmatpush1.msra.mxu0 0.0
    %3540 = vmatprep.subr.mxu0 0.0
    %3541 = vmatpush1.msra.mxu0 0.0
    %3542 = vmatprep.subr.mxu0 0.0
    %3543 = vmatpush1.msra.mxu0 0.0
    %3544 = vmatprep.subr.mxu0 0.0
    %3545 = vmatpush1.msra.mxu0 0.0
    %3546 = vmatprep.subr.mxu0 0.0
    %3547 = vmatpush1.msra.mxu0 0.0
    %3548 = vmatprep.subr.mxu0 0.0
    %3549 = vmatpush1.msra.mxu0 0.0
    %3550 = vmatprep.subr.mxu0 0.0
    %3551 = vmatpush1.msra.mxu0 0.0
    %3552 = vmatprep.subr.mxu0 0.0
    %3553 = vmatpush1.msra.mxu0 0.0
    %3554 = vmatprep.subr.mxu0 0.0
    %3555 = vmatpush1.msra.mxu0 0.0
    %3556 = vmatprep.subr.mxu0 0.0
    %3557 = vmatpush1.msra.mxu0 0.0
    %3558 = vmatprep.subr.mxu0 0.0
    %3559 = vmatpush1.msra.mxu0 0.0
    %3560 = vmatprep.subr.mxu0 0.0
    %3561 = vmatpush1.msra.mxu0 0.0
    %3562 = vmatprep.subr.mxu0 0.0
    %3563 = vmatpush1.msra.mxu0 0.0
    %3564 = vmatprep.subr.mxu0 0.0
    %3565 = vmatpush1.msra.mxu0 0.0
    %3566 = vmatprep.subr.mxu0 0.0
    %3567 = vmatpush1.msra.mxu0 0.0
    %3568 = vmatprep.subr.mxu0 0.0
    %3569 = vmatpush1.msra.mxu0 0.0
    %3570 = vmatprep.subr.mxu0 0.0
    %3571 = vmatpush1.msra.mxu0 0.0
    %3572 = vmatprep.subr.mxu0 0.0
    %3573 = vmatpush1.msra.mxu0 0.0
    %3574 = vmatprep.mubr.f32.mxu0 0.0
    %3575 = vmatmul.mubr.f32.gmra.mrb[0].mxu0 %v2977
    %v3576 = vpop.f32.mrb[0].mxu0
    %v3577 = vadd.f32 0.0, %v3576
    %v3578 = vpop.f32.mrb[0].mxu0
    %v3579 = vadd.f32 0.0, %v3578
    %3580 = vdwg.mxu0
    %3581 = vmatprep.subr.mxu0 0.0
    %3582 = vmatpush1.msra.mxu0 %v3011
    %3583 = vmatprep.subr.mxu0 0.0
    %3584 = vmatpush1.msra.mxu0 0.0
    %3585 = vmatprep.subr.mxu0 0.0
    %3586 = vmatpush1.msra.mxu0 0.0
    %3587 = vmatprep.subr.mxu0 0.0
    %3588 = vmatpush1.msra.mxu0 0.0
    %3589 = vmatprep.subr.mxu0 0.0
    %3590 = vmatpush1.msra.mxu0 0.0
    %3591 = vmatprep.subr.mxu0 0.0
    %3592 = vmatpush1.msra.mxu0 0.0
    %3593 = vmatprep.subr.mxu0 0.0
    %3594 = vmatpush1.msra.mxu0 0.0
    %3595 = vmatprep.subr.mxu0 0.0
    %3596 = vmatpush1.msra.mxu0 0.0
    %3597 = vmatprep.subr.mxu0 0.0
    %3598 = vmatpush1.msra.mxu0 0.0
    %3599 = vmatprep.subr.mxu0 0.0
    %3600 = vmatpush1.msra.mxu0 0.0
    %3601 = vmatprep.subr.mxu0 0.0
    %3602 = vmatpush1.msra.mxu0 0.0
    %3603 = vmatprep.subr.mxu0 0.0
    %3604 = vmatpush1.msra.mxu0 0.0
    %3605 = vmatprep.subr.mxu0 0.0
    %3606 = vmatpush1.msra.mxu0 0.0
    %3607 = vmatprep.subr.mxu0 0.0
    %3608 = vmatpush1.msra.mxu0 0.0
    %3609 = vmatprep.subr.mxu0 0.0
    %3610 = vmatpush1.msra.mxu0 0.0
    %3611 = vmatprep.subr.mxu0 0.0
    %3612 = vmatpush1.msra.mxu0 0.0
    %3613 = vmatprep.subr.mxu0 0.0
    %3614 = vmatpush1.msra.mxu0 0.0
    %3615 = vmatprep.subr.mxu0 0.0
    %3616 = vmatpush1.msra.mxu0 0.0
    %3617 = vmatprep.subr.mxu0 0.0
    %3618 = vmatpush1.msra.mxu0 0.0
    %3619 = vmatprep.subr.mxu0 0.0
    %3620 = vmatpush1.msra.mxu0 0.0
    %3621 = vmatprep.subr.mxu0 0.0
    %3622 = vmatpush1.msra.mxu0 0.0
    %3623 = vmatprep.subr.mxu0 0.0
    %3624 = vmatpush1.msra.mxu0 0.0
    %3625 = vmatprep.subr.mxu0 0.0
    %3626 = vmatpush1.msra.mxu0 0.0
    %3627 = vmatprep.subr.mxu0 0.0
    %3628 = vmatpush1.msra.mxu0 0.0
    %3629 = vmatprep.subr.mxu0 0.0
    %3630 = vmatpush1.msra.mxu0 0.0
    %3631 = vmatprep.subr.mxu0 0.0
    %3632 = vmatpush1.msra.mxu0 0.0
    %3633 = vmatprep.subr.mxu0 0.0
    %3634 = vmatpush1.msra.mxu0 0.0
    %3635 = vmatprep.subr.mxu0 0.0
    %3636 = vmatpush1.msra.mxu0 0.0
    %3637 = vmatprep.subr.mxu0 0.0
    %3638 = vmatpush1.msra.mxu0 0.0
    %3639 = vmatprep.subr.mxu0 0.0
    %3640 = vmatpush1.msra.mxu0 0.0
    %3641 = vmatprep.subr.mxu0 0.0
    %3642 = vmatpush1.msra.mxu0 0.0
    %3643 = vmatprep.subr.mxu0 0.0
    %3644 = vmatpush1.msra.mxu0 0.0
    %3645 = vmatprep.mubr.f32.mxu0 0.0
    %3646 = vmatmul.mubr.f32.gmra.mrb[0].mxu0 %v2977
    %v3647 = vpop.f32.mrb[0].mxu0
    %v3648 = vadd.f32 0.0, %v3647
    %v3649 = vpop.f32.mrb[0].mxu0
    %3650 = vdwg.mxu0
    %v3651 = vadd.f32 %v2930, %v3080
    %v3652 = vadd.f32 %v2931, %v3082
    %v3653 = vadd.f32 %v2932, %v3151
    %v3654 = vadd.f32 %v2933, %v3153
    %v3655 = vadd.f32 %v2934, %v3222
    %v3656 = vadd.f32 %v2935, %v3224
    %v3657 = vadd.f32 %v2936, %v3293
    %v3658 = vadd.f32 %v2937, %v3295
    %v3659 = vadd.f32 %v2938, %v3364
    %v3660 = vadd.f32 %v2939, %v3366
    %v3661 = vadd.f32 %v2940, %v3435
    %v3662 = vadd.f32 %v2941, %v3437
    %v3663 = vadd.f32 %v2942, %v3506
    %v3664 = vadd.f32 %v2943, %v3508
    %v3665 = vadd.f32 %v2944, %v3577
    %v3666 = vadd.f32 %v2945, %v3579
    %v3667 = vadd.f32 %v2946, %v3648
    %v3668 = vld [vmem:[%s2226] sm:$0xff]
    %v3669 = vld [vmem:[%s2226 + $0x8] sm:$0xff]
    %v3670 = vld [vmem:[%s2226 + $0x10] sm:$0xff]
    %v3671 = vld [vmem:[%s2226 + $0x18] sm:$0xff]
    %v3672 = vld [vmem:[%s2226 + $0x20] sm:$0xff]
    %v3673 = vld [vmem:[%s2226 + $0x28] sm:$0xff]
    %v3674 = vld [vmem:[%s2226 + $0x30] sm:$0xff]
    %v3675 = vld [vmem:[%s2226 + $0x38] sm:$0xff]
    %v3676 = vld [vmem:[%s2226 + $0x40] sm:$0xf]
    %s3677 = scalar_lea.vmem %s1, 40
    %v3678 = vld [vmem:[%s3677] sm:$0xff]
    %v3688 = vcombine.high %v3668, %v3668
    %v3689 = vcombine.high %v3669, %v3669
    %v3690 = vcombine.high %v3670, %v3670
    %v3691 = vcombine.high %v3671, %v3671
    %v3692 = vcombine.high %v3672, %v3672
    %v3693 = vcombine.high %v3673, %v3673
    %v3694 = vcombine.high %v3674, %v3674
    %v3695 = vcombine.high %v3675, %v3675
    %3696 = vrot.lane.b32.xlu0 %v3668, 127
    %v3697 = vpop.permute.xlu0 %3696
    %3698 = vrot.lane.b32.xlu0 %v3688, 127
    %v3699 = vpop.permute.xlu0 %3698
    %3700 = vrot.lane.b32.xlu0 %v3669, 127
    %v3701 = vpop.permute.xlu0 %3700
    %3702 = vrot.lane.b32.xlu0 %v3689, 127
    %v3703 = vpop.permute.xlu0 %3702
    %3704 = vrot.lane.b32.xlu0 %v3670, 127
    %v3705 = vpop.permute.xlu0 %3704
    %3706 = vrot.lane.b32.xlu0 %v3690, 127
    %v3707 = vpop.permute.xlu0 %3706
    %3708 = vrot.lane.b32.xlu0 %v3671, 127
    %v3709 = vpop.permute.xlu0 %3708
    %3710 = vrot.lane.b32.xlu0 %v3691, 127
    %v3711 = vpop.permute.xlu0 %3710
    %3712 = vrot.lane.b32.xlu0 %v3672, 127
    %v3713 = vpop.permute.xlu0 %3712
    %3714 = vrot.lane.b32.xlu0 %v3692, 127
    %v3715 = vpop.permute.xlu0 %3714
    %3716 = vrot.lane.b32.xlu0 %v3673, 127
    %v3717 = vpop.permute.xlu0 %3716
    %3718 = vrot.lane.b32.xlu0 %v3693, 127
    %v3719 = vpop.permute.xlu0 %3718
    %3720 = vrot.lane.b32.xlu0 %v3674, 127
    %v3721 = vpop.permute.xlu0 %3720
    %3722 = vrot.lane.b32.xlu0 %v3694, 127
    %v3723 = vpop.permute.xlu0 %3722
    %3724 = vrot.lane.b32.xlu0 %v3675, 127
    %v3725 = vpop.permute.xlu0 %3724
    %3726 = vrot.lane.b32.xlu0 %v3695, 127
    %v3727 = vpop.permute.xlu0 %3726
    %3728 = vrot.lane.b32.xlu0 %v3676, 127
    %v3729 = vpop.permute.xlu0 %3728
    %v3730 = vsel %vm1517, %v3697, %v3699
    %v3731 = vsel %vm1517, %v3699, %v3701
    %v3732 = vsel %vm1517, %v3701, %v3703
    %v3733 = vsel %vm1517, %v3703, %v3705
    %v3734 = vsel %vm1517, %v3705, %v3707
    %v3735 = vsel %vm1517, %v3707, %v3709
    %v3736 = vsel %vm1517, %v3709, %v3711
    %v3737 = vsel %vm1517, %v3711, %v3713
    %v3738 = vsel %vm1517, %v3713, %v3715
    %v3739 = vsel %vm1517, %v3715, %v3717
    %v3740 = vsel %vm1517, %v3717, %v3719
    %v3741 = vsel %vm1517, %v3719, %v3721
    %v3742 = vsel %vm1517, %v3721, %v3723
    %v3743 = vsel %vm1517, %v3723, %v3725
    %v3744 = vsel %vm1517, %v3725, %v3727
    %v3745 = vsel %vm1517, %v3727, %v3729
    %v3747 = vsel %vm86, %v3678, 0
    %v3749 = vsel %vm90, %v3730, 0
    %v3751 = vsel %vm90, %v3731, 0
    %v3753 = vsel %vm90, %v3732, 0
    %v3755 = vsel %vm90, %v3733, 0
    %v3757 = vsel %vm90, %v3734, 0
    %v3759 = vsel %vm90, %v3735, 0
    %v3761 = vsel %vm90, %v3736, 0
    %v3763 = vsel %vm90, %v3737, 0
    %v3765 = vsel %vm90, %v3738, 0
    %v3767 = vsel %vm90, %v3739, 0
    %v3769 = vsel %vm90, %v3740, 0
    %v3771 = vsel %vm90, %v3741, 0
    %v3773 = vsel %vm90, %v3742, 0
    %v3775 = vsel %vm90, %v3743, 0
    %v3777 = vsel %vm90, %v3744, 0
    %v3779 = vsel %vm90, %v3745, 0
    %v3781 = vsel %vm90, %v3729, 0
    %3783 = vmatprep.subr.mxu0 %v3751
    %3784 = vmatpush1.msra.mxu0 %v3749
    %3785 = vmatprep.subr.mxu0 0.0
    %3786 = vmatpush1.msra.mxu0 0.0
    %3787 = vmatprep.subr.mxu0 0.0
    %3788 = vmatpush1.msra.mxu0 0.0
    %3789 = vmatprep.subr.mxu0 0.0
    %3790 = vmatpush1.msra.mxu0 0.0
    %3791 = vmatprep.subr.mxu0 0.0
    %3792 = vmatpush1.msra.mxu0 0.0
    %3793 = vmatprep.subr.mxu0 0.0
    %3794 = vmatpush1.msra.mxu0 0.0
    %3795 = vmatprep.subr.mxu0 0.0
    %3796 = vmatpush1.msra.mxu0 0.0
    %3797 = vmatprep.subr.mxu0 0.0
    %3798 = vmatpush1.msra.mxu0 0.0
    %3799 = vmatprep.subr.mxu0 0.0
    %3800 = vmatpush1.msra.mxu0 0.0
    %3801 = vmatprep.subr.mxu0 0.0
    %3802 = vmatpush1.msra.mxu0 0.0
    %3803 = vmatprep.subr.mxu0 0.0
    %3804 = vmatpush1.msra.mxu0 0.0
    %3805 = vmatprep.subr.mxu0 0.0
    %3806 = vmatpush1.msra.mxu0 0.0
    %3807 = vmatprep.subr.mxu0 0.0
    %3808 = vmatpush1.msra.mxu0 0.0
    %3809 = vmatprep.subr.mxu0 0.0
    %3810 = vmatpush1.msra.mxu0 0.0
    %3811 = vmatprep.subr.mxu0 0.0
    %3812 = vmatpush1.msra.mxu0 0.0
    %3813 = vmatprep.subr.mxu0 0.0
    %3814 = vmatpush1.msra.mxu0 0.0
    %3815 = vmatprep.subr.mxu0 0.0
    %3816 = vmatpush1.msra.mxu0 0.0
    %3817 = vmatprep.subr.mxu0 0.0
    %3818 = vmatpush1.msra.mxu0 0.0
    %3819 = vmatprep.subr.mxu0 0.0
    %3820 = vmatpush1.msra.mxu0 0.0
    %3821 = vmatprep.subr.mxu0 0.0
    %3822 = vmatpush1.msra.mxu0 0.0
    %3823 = vmatprep.subr.mxu0 0.0
    %3824 = vmatpush1.msra.mxu0 0.0
    %3825 = vmatprep.subr.mxu0 0.0
    %3826 = vmatpush1.msra.mxu0 0.0
    %3827 = vmatprep.subr.mxu0 0.0
    %3828 = vmatpush1.msra.mxu0 0.0
    %3829 = vmatprep.subr.mxu0 0.0
    %3830 = vmatpush1.msra.mxu0 0.0
    %3831 = vmatprep.subr.mxu0 0.0
    %3832 = vmatpush1.msra.mxu0 0.0
    %3833 = vmatprep.subr.mxu0 0.0
    %3834 = vmatpush1.msra.mxu0 0.0
    %3835 = vmatprep.subr.mxu0 0.0
    %3836 = vmatpush1.msra.mxu0 0.0
    %3837 = vmatprep.subr.mxu0 0.0
    %3838 = vmatpush1.msra.mxu0 0.0
    %3839 = vmatprep.subr.mxu0 0.0
    %3840 = vmatpush1.msra.mxu0 0.0
    %3841 = vmatprep.subr.mxu0 0.0
    %3842 = vmatpush1.msra.mxu0 0.0
    %3843 = vmatprep.subr.mxu0 0.0
    %3844 = vmatpush1.msra.mxu0 0.0
    %3845 = vmatprep.subr.mxu0 0.0
    %3846 = vmatpush1.msra.mxu0 0.0
    %3847 = vmatprep.mubr.f32.mxu0 0.0
    %3848 = vmatmul.mubr.f32.gmra.mrb[0].mxu0 %v3747
    %v3849 = vpop.f32.mrb[0].mxu0
    %v3850 = vadd.f32 0.0, %v3849
    %v3851 = vpop.f32.mrb[0].mxu0
    %v3852 = vadd.f32 0.0, %v3851
    %3853 = vdwg.mxu0
    %3854 = vmatprep.subr.mxu0 %v3755
    %3855 = vmatpush1.msra.mxu0 %v3753
    %3856 = vmatprep.subr.mxu0 0.0
    %3857 = vmatpush1.msra.mxu0 0.0
    %3858 = vmatprep.subr.mxu0 0.0
    %3859 = vmatpush1.msra.mxu0 0.0
    %3860 = vmatprep.subr.mxu0 0.0
    %3861 = vmatpush1.msra.mxu0 0.0
    %3862 = vmatprep.subr.mxu0 0.0
    %3863 = vmatpush1.msra.mxu0 0.0
    %3864 = vmatprep.subr.mxu0 0.0
    %3865 = vmatpush1.msra.mxu0 0.0
    %3866 = vmatprep.subr.mxu0 0.0
    %3867 = vmatpush1.msra.mxu0 0.0
    %3868 = vmatprep.subr.mxu0 0.0
    %3869 = vmatpush1.msra.mxu0 0.0
    %3870 = vmatprep.subr.mxu0 0.0
    %3871 = vmatpush1.msra.mxu0 0.0
    %3872 = vmatprep.subr.mxu0 0.0
    %3873 = vmatpush1.msra.mxu0 0.0
    %3874 = vmatprep.subr.mxu0 0.0
    %3875 = vmatpush1.msra.mxu0 0.0
    %3876 = vmatprep.subr.mxu0 0.0
    %3877 = vmatpush1.msra.mxu0 0.0
    %3878 = vmatprep.subr.mxu0 0.0
    %3879 = vmatpush1.msra.mxu0 0.0
    %3880 = vmatprep.subr.mxu0 0.0
    %3881 = vmatpush1.msra.mxu0 0.0
    %3882 = vmatprep.subr.mxu0 0.0
    %3883 = vmatpush1.msra.mxu0 0.0
    %3884 = vmatprep.subr.mxu0 0.0
    %3885 = vmatpush1.msra.mxu0 0.0
    %3886 = vmatprep.subr.mxu0 0.0
    %3887 = vmatpush1.msra.mxu0 0.0
    %3888 = vmatprep.subr.mxu0 0.0
    %3889 = vmatpush1.msra.mxu0 0.0
    %3890 = vmatprep.subr.mxu0 0.0
    %3891 = vmatpush1.msra.mxu0 0.0
    %3892 = vmatprep.subr.mxu0 0.0
    %3893 = vmatpush1.msra.mxu0 0.0
    %3894 = vmatprep.subr.mxu0 0.0
    %3895 = vmatpush1.msra.mxu0 0.0
    %3896 = vmatprep.subr.mxu0 0.0
    %3897 = vmatpush1.msra.mxu0 0.0
    %3898 = vmatprep.subr.mxu0 0.0
    %3899 = vmatpush1.msra.mxu0 0.0
    %3900 = vmatprep.subr.mxu0 0.0
    %3901 = vmatpush1.msra.mxu0 0.0
    %3902 = vmatprep.subr.mxu0 0.0
    %3903 = vmatpush1.msra.mxu0 0.0
    %3904 = vmatprep.subr.mxu0 0.0
    %3905 = vmatpush1.msra.mxu0 0.0
    %3906 = vmatprep.subr.mxu0 0.0
    %3907 = vmatpush1.msra.mxu0 0.0
    %3908 = vmatprep.subr.mxu0 0.0
    %3909 = vmatpush1.msra.mxu0 0.0
    %3910 = vmatprep.subr.mxu0 0.0
    %3911 = vmatpush1.msra.mxu0 0.0
    %3912 = vmatprep.subr.mxu0 0.0
    %3913 = vmatpush1.msra.mxu0 0.0
    %3914 = vmatprep.subr.mxu0 0.0
    %3915 = vmatpush1.msra.mxu0 0.0
    %3916 = vmatprep.subr.mxu0 0.0
    %3917 = vmatpush1.msra.mxu0 0.0
    %3918 = vmatprep.mubr.f32.mxu0 0.0
    %3919 = vmatmul.mubr.f32.gmra.mrb[0].mxu0 %v3747
    %v3920 = vpop.f32.mrb[0].mxu0
    %v3921 = vadd.f32 0.0, %v3920
    %v3922 = vpop.f32.mrb[0].mxu0
    %v3923 = vadd.f32 0.0, %v3922
    %3924 = vdwg.mxu0
    %3925 = vmatprep.subr.mxu0 %v3759
    %3926 = vmatpush1.msra.mxu0 %v3757
    %3927 = vmatprep.subr.mxu0 0.0
    %3928 = vmatpush1.msra.mxu0 0.0
    %3929 = vmatprep.subr.mxu0 0.0
    %3930 = vmatpush1.msra.mxu0 0.0
    %3931 = vmatprep.subr.mxu0 0.0
    %3932 = vmatpush1.msra.mxu0 0.0
    %3933 = vmatprep.subr.mxu0 0.0
    %3934 = vmatpush1.msra.mxu0 0.0
    %3935 = vmatprep.subr.mxu0 0.0
    %3936 = vmatpush1.msra.mxu0 0.0
    %3937 = vmatprep.subr.mxu0 0.0
    %3938 = vmatpush1.msra.mxu0 0.0
    %3939 = vmatprep.subr.mxu0 0.0
    %3940 = vmatpush1.msra.mxu0 0.0
    %3941 = vmatprep.subr.mxu0 0.0
    %3942 = vmatpush1.msra.mxu0 0.0
    %3943 = vmatprep.subr.mxu0 0.0
    %3944 = vmatpush1.msra.mxu0 0.0
    %3945 = vmatprep.subr.mxu0 0.0
    %3946 = vmatpush1.msra.mxu0 0.0
    %3947 = vmatprep.subr.mxu0 0.0
    %3948 = vmatpush1.msra.mxu0 0.0
    %3949 = vmatprep.subr.mxu0 0.0
    %3950 = vmatpush1.msra.mxu0 0.0
    %3951 = vmatprep.subr.mxu0 0.0
    %3952 = vmatpush1.msra.mxu0 0.0
    %3953 = vmatprep.subr.mxu0 0.0
    %3954 = vmatpush1.msra.mxu0 0.0
    %3955 = vmatprep.subr.mxu0 0.0
    %3956 = vmatpush1.msra.mxu0 0.0
    %3957 = vmatprep.subr.mxu0 0.0
    %3958 = vmatpush1.msra.mxu0 0.0
    %3959 = vmatprep.subr.mxu0 0.0
    %3960 = vmatpush1.msra.mxu0 0.0
    %3961 = vmatprep.subr.mxu0 0.0
    %3962 = vmatpush1.msra.mxu0 0.0
    %3963 = vmatprep.subr.mxu0 0.0
    %3964 = vmatpush1.msra.mxu0 0.0
    %3965 = vmatprep.subr.mxu0 0.0
    %3966 = vmatpush1.msra.mxu0 0.0
    %3967 = vmatprep.subr.mxu0 0.0
    %3968 = vmatpush1.msra.mxu0 0.0
    %3969 = vmatprep.subr.mxu0 0.0
    %3970 = vmatpush1.msra.mxu0 0.0
    %3971 = vmatprep.subr.mxu0 0.0
    %3972 = vmatpush1.msra.mxu0 0.0
    %3973 = vmatprep.subr.mxu0 0.0
    %3974 = vmatpush1.msra.mxu0 0.0
    %3975 = vmatprep.subr.mxu0 0.0
    %3976 = vmatpush1.msra.mxu0 0.0
    %3977 = vmatprep.subr.mxu0 0.0
    %3978 = vmatpush1.msra.mxu0 0.0
    %3979 = vmatprep.subr.mxu0 0.0
    %3980 = vmatpush1.msra.mxu0 0.0
    %3981 = vmatprep.subr.mxu0 0.0
    %3982 = vmatpush1.msra.mxu0 0.0
    %3983 = vmatprep.subr.mxu0 0.0
    %3984 = vmatpush1.msra.mxu0 0.0
    %3985 = vmatprep.subr.mxu0 0.0
    %3986 = vmatpush1.msra.mxu0 0.0
    %3987 = vmatprep.subr.mxu0 0.0
    %3988 = vmatpush1.msra.mxu0 0.0
    %3989 = vmatprep.mubr.f32.mxu0 0.0
    %3990 = vmatmul.mubr.f32.gmra.mrb[0].mxu0 %v3747
    %v3991 = vpop.f32.mrb[0].mxu0
    %v3992 = vadd.f32 0.0, %v3991
    %v3993 = vpop.f32.mrb[0].mxu0
    %v3994 = vadd.f32 0.0, %v3993
    %3995 = vdwg.mxu0
    %3996 = vmatprep.subr.mxu0 %v3763
    %3997 = vmatpush1.msra.mxu0 %v3761
    %3998 = vmatprep.subr.mxu0 0.0
    %3999 = vmatpush1.msra.mxu0 0.0
    %4000 = vmatprep.subr.mxu0 0.0
    %4001 = vmatpush1.msra.mxu0 0.0
    %4002 = vmatprep.subr.mxu0 0.0
    %4003 = vmatpush1.msra.mxu0 0.0
    %4004 = vmatprep.subr.mxu0 0.0
    %4005 = vmatpush1.msra.mxu0 0.0
    %4006 = vmatprep.subr.mxu0 0.0
    %4007 = vmatpush1.msra.mxu0 0.0
    %4008 = vmatprep.subr.mxu0 0.0
    %4009 = vmatpush1.msra.mxu0 0.0
    %4010 = vmatprep.subr.mxu0 0.0
    %4011 = vmatpush1.msra.mxu0 0.0
    %4012 = vmatprep.subr.mxu0 0.0
    %4013 = vmatpush1.msra.mxu0 0.0
    %4014 = vmatprep.subr.mxu0 0.0
    %4015 = vmatpush1.msra.mxu0 0.0
    %4016 = vmatprep.subr.mxu0 0.0
    %4017 = vmatpush1.msra.mxu0 0.0
    %4018 = vmatprep.subr.mxu0 0.0
    %4019 = vmatpush1.msra.mxu0 0.0
    %4020 = vmatprep.subr.mxu0 0.0
    %4021 = vmatpush1.msra.mxu0 0.0
    %4022 = vmatprep.subr.mxu0 0.0
    %4023 = vmatpush1.msra.mxu0 0.0
    %4024 = vmatprep.subr.mxu0 0.0
    %4025 = vmatpush1.msra.mxu0 0.0
    %4026 = vmatprep.subr.mxu0 0.0
    %4027 = vmatpush1.msra.mxu0 0.0
    %4028 = vmatprep.subr.mxu0 0.0
    %4029 = vmatpush1.msra.mxu0 0.0
    %4030 = vmatprep.subr.mxu0 0.0
    %4031 = vmatpush1.msra.mxu0 0.0
    %4032 = vmatprep.subr.mxu0 0.0
    %4033 = vmatpush1.msra.mxu0 0.0
    %4034 = vmatprep.subr.mxu0 0.0
    %4035 = vmatpush1.msra.mxu0 0.0
    %4036 = vmatprep.subr.mxu0 0.0
    %4037 = vmatpush1.msra.mxu0 0.0
    %4038 = vmatprep.subr.mxu0 0.0
    %4039 = vmatpush1.msra.mxu0 0.0
    %4040 = vmatprep.subr.mxu0 0.0
    %4041 = vmatpush1.msra.mxu0 0.0
    %4042 = vmatprep.subr.mxu0 0.0
    %4043 = vmatpush1.msra.mxu0 0.0
    %4044 = vmatprep.subr.mxu0 0.0
    %4045 = vmatpush1.msra.mxu0 0.0
    %4046 = vmatprep.subr.mxu0 0.0
    %4047 = vmatpush1.msra.mxu0 0.0
    %4048 = vmatprep.subr.mxu0 0.0
    %4049 = vmatpush1.msra.mxu0 0.0
    %4050 = vmatprep.subr.mxu0 0.0
    %4051 = vmatpush1.msra.mxu0 0.0
    %4052 = vmatprep.subr.mxu0 0.0
    %4053 = vmatpush1.msra.mxu0 0.0
    %4054 = vmatprep.subr.mxu0 0.0
    %4055 = vmatpush1.msra.mxu0 0.0
    %4056 = vmatprep.subr.mxu0 0.0
    %4057 = vmatpush1.msra.mxu0 0.0
    %4058 = vmatprep.subr.mxu0 0.0
    %4059 = vmatpush1.msra.mxu0 0.0
    %4060 = vmatprep.mubr.f32.mxu0 0.0
    %4061 = vmatmul.mubr.f32.gmra.mrb[0].mxu0 %v3747
    %v4062 = vpop.f32.mrb[0].mxu0
    %v4063 = vadd.f32 0.0, %v4062
    %v4064 = vpop.f32.mrb[0].mxu0
    %v4065 = vadd.f32 0.0, %v4064
    %4066 = vdwg.mxu0
    %4067 = vmatprep.subr.mxu0 %v3767
    %4068 = vmatpush1.msra.mxu0 %v3765
    %4069 = vmatprep.subr.mxu0 0.0
    %4070 = vmatpush1.msra.mxu0 0.0
    %4071 = vmatprep.subr.mxu0 0.0
    %4072 = vmatpush1.msra.mxu0 0.0
    %4073 = vmatprep.subr.mxu0 0.0
    %4074 = vmatpush1.msra.mxu0 0.0
    %4075 = vmatprep.subr.mxu0 0.0
    %4076 = vmatpush1.msra.mxu0 0.0
    %4077 = vmatprep.subr.mxu0 0.0
    %4078 = vmatpush1.msra.mxu0 0.0
    %4079 = vmatprep.subr.mxu0 0.0
    %4080 = vmatpush1.msra.mxu0 0.0
    %4081 = vmatprep.subr.mxu0 0.0
    %4082 = vmatpush1.msra.mxu0 0.0
    %4083 = vmatprep.subr.mxu0 0.0
    %4084 = vmatpush1.msra.mxu0 0.0
    %4085 = vmatprep.subr.mxu0 0.0
    %4086 = vmatpush1.msra.mxu0 0.0
    %4087 = vmatprep.subr.mxu0 0.0
    %4088 = vmatpush1.msra.mxu0 0.0
    %4089 = vmatprep.subr.mxu0 0.0
    %4090 = vmatpush1.msra.mxu0 0.0
    %4091 = vmatprep.subr.mxu0 0.0
    %4092 = vmatpush1.msra.mxu0 0.0
    %4093 = vmatprep.subr.mxu0 0.0
    %4094 = vmatpush1.msra.mxu0 0.0
    %4095 = vmatprep.subr.mxu0 0.0
    %4096 = vmatpush1.msra.mxu0 0.0
    %4097 = vmatprep.subr.mxu0 0.0
    %4098 = vmatpush1.msra.mxu0 0.0
    %4099 = vmatprep.subr.mxu0 0.0
    %4100 = vmatpush1.msra.mxu0 0.0
    %4101 = vmatprep.subr.mxu0 0.0
    %4102 = vmatpush1.msra.mxu0 0.0
    %4103 = vmatprep.subr.mxu0 0.0
    %4104 = vmatpush1.msra.mxu0 0.0
    %4105 = vmatprep.subr.mxu0 0.0
    %4106 = vmatpush1.msra.mxu0 0.0
    %4107 = vmatprep.subr.mxu0 0.0
    %4108 = vmatpush1.msra.mxu0 0.0
    %4109 = vmatprep.subr.mxu0 0.0
    %4110 = vmatpush1.msra.mxu0 0.0
    %4111 = vmatprep.subr.mxu0 0.0
    %4112 = vmatpush1.msra.mxu0 0.0
    %4113 = vmatprep.subr.mxu0 0.0
    %4114 = vmatpush1.msra.mxu0 0.0
    %4115 = vmatprep.subr.mxu0 0.0
    %4116 = vmatpush1.msra.mxu0 0.0
    %4117 = vmatprep.subr.mxu0 0.0
    %4118 = vmatpush1.msra.mxu0 0.0
    %4119 = vmatprep.subr.mxu0 0.0
    %4120 = vmatpush1.msra.mxu0 0.0
    %4121 = vmatprep.subr.mxu0 0.0
    %4122 = vmatpush1.msra.mxu0 0.0
    %4123 = vmatprep.subr.mxu0 0.0
    %4124 = vmatpush1.msra.mxu0 0.0
    %4125 = vmatprep.subr.mxu0 0.0
    %4126 = vmatpush1.msra.mxu0 0.0
    %4127 = vmatprep.subr.mxu0 0.0
    %4128 = vmatpush1.msra.mxu0 0.0
    %4129 = vmatprep.subr.mxu0 0.0
    %4130 = vmatpush1.msra.mxu0 0.0
    %4131 = vmatprep.mubr.f32.mxu0 0.0
    %4132 = vmatmul.mubr.f32.gmra.mrb[0].mxu0 %v3747
    %v4133 = vpop.f32.mrb[0].mxu0
    %v4134 = vadd.f32 0.0, %v4133
    %v4135 = vpop.f32.mrb[0].mxu0
    %v4136 = vadd.f32 0.0, %v4135
    %4137 = vdwg.mxu0
    %4138 = vmatprep.subr.mxu0 %v3771
    %4139 = vmatpush1.msra.mxu0 %v3769
    %4140 = vmatprep.subr.mxu0 0.0
    %4141 = vmatpush1.msra.mxu0 0.0
    %4142 = vmatprep.subr.mxu0 0.0
    %4143 = vmatpush1.msra.mxu0 0.0
    %4144 = vmatprep.subr.mxu0 0.0
    %4145 = vmatpush1.msra.mxu0 0.0
    %4146 = vmatprep.subr.mxu0 0.0
    %4147 = vmatpush1.msra.mxu0 0.0
    %4148 = vmatprep.subr.mxu0 0.0
    %4149 = vmatpush1.msra.mxu0 0.0
    %4150 = vmatprep.subr.mxu0 0.0
    %4151 = vmatpush1.msra.mxu0 0.0
    %4152 = vmatprep.subr.mxu0 0.0
    %4153 = vmatpush1.msra.mxu0 0.0
    %4154 = vmatprep.subr.mxu0 0.0
    %4155 = vmatpush1.msra.mxu0 0.0
    %4156 = vmatprep.subr.mxu0 0.0
    %4157 = vmatpush1.msra.mxu0 0.0
    %4158 = vmatprep.subr.mxu0 0.0
    %4159 = vmatpush1.msra.mxu0 0.0
    %4160 = vmatprep.subr.mxu0 0.0
    %4161 = vmatpush1.msra.mxu0 0.0
    %4162 = vmatprep.subr.mxu0 0.0
    %4163 = vmatpush1.msra.mxu0 0.0
    %4164 = vmatprep.subr.mxu0 0.0
    %4165 = vmatpush1.msra.mxu0 0.0
    %4166 = vmatprep.subr.mxu0 0.0
    %4167 = vmatpush1.msra.mxu0 0.0
    %4168 = vmatprep.subr.mxu0 0.0
    %4169 = vmatpush1.msra.mxu0 0.0
    %4170 = vmatprep.subr.mxu0 0.0
    %4171 = vmatpush1.msra.mxu0 0.0
    %4172 = vmatprep.subr.mxu0 0.0
    %4173 = vmatpush1.msra.mxu0 0.0
    %4174 = vmatprep.subr.mxu0 0.0
    %4175 = vmatpush1.msra.mxu0 0.0
    %4176 = vmatprep.subr.mxu0 0.0
    %4177 = vmatpush1.msra.mxu0 0.0
    %4178 = vmatprep.subr.mxu0 0.0
    %4179 = vmatpush1.msra.mxu0 0.0
    %4180 = vmatprep.subr.mxu0 0.0
    %4181 = vmatpush1.msra.mxu0 0.0
    %4182 = vmatprep.subr.mxu0 0.0
    %4183 = vmatpush1.msra.mxu0 0.0
    %4184 = vmatprep.subr.mxu0 0.0
    %4185 = vmatpush1.msra.mxu0 0.0
    %4186 = vmatprep.subr.mxu0 0.0
    %4187 = vmatpush1.msra.mxu0 0.0
    %4188 = vmatprep.subr.mxu0 0.0
    %4189 = vmatpush1.msra.mxu0 0.0
    %4190 = vmatprep.subr.mxu0 0.0
    %4191 = vmatpush1.msra.mxu0 0.0
    %4192 = vmatprep.subr.mxu0 0.0
    %4193 = vmatpush1.msra.mxu0 0.0
    %4194 = vmatprep.subr.mxu0 0.0
    %4195 = vmatpush1.msra.mxu0 0.0
    %4196 = vmatprep.subr.mxu0 0.0
    %4197 = vmatpush1.msra.mxu0 0.0
    %4198 = vmatprep.subr.mxu0 0.0
    %4199 = vmatpush1.msra.mxu0 0.0
    %4200 = vmatprep.subr.mxu0 0.0
    %4201 = vmatpush1.msra.mxu0 0.0
    %4202 = vmatprep.mubr.f32.mxu0 0.0
    %4203 = vmatmul.mubr.f32.gmra.mrb[0].mxu0 %v3747
    %v4204 = vpop.f32.mrb[0].mxu0
    %v4205 = vadd.f32 0.0, %v4204
    %v4206 = vpop.f32.mrb[0].mxu0
    %v4207 = vadd.f32 0.0, %v4206
    %4208 = vdwg.mxu0
    %4209 = vmatprep.subr.mxu0 %v3775
    %4210 = vmatpush1.msra.mxu0 %v3773
    %4211 = vmatprep.subr.mxu0 0.0
    %4212 = vmatpush1.msra.mxu0 0.0
    %4213 = vmatprep.subr.mxu0 0.0
    %4214 = vmatpush1.msra.mxu0 0.0
    %4215 = vmatprep.subr.mxu0 0.0
    %4216 = vmatpush1.msra.mxu0 0.0
    %4217 = vmatprep.subr.mxu0 0.0
    %4218 = vmatpush1.msra.mxu0 0.0
    %4219 = vmatprep.subr.mxu0 0.0
    %4220 = vmatpush1.msra.mxu0 0.0
    %4221 = vmatprep.subr.mxu0 0.0
    %4222 = vmatpush1.msra.mxu0 0.0
    %4223 = vmatprep.subr.mxu0 0.0
    %4224 = vmatpush1.msra.mxu0 0.0
    %4225 = vmatprep.subr.mxu0 0.0
    %4226 = vmatpush1.msra.mxu0 0.0
    %4227 = vmatprep.subr.mxu0 0.0
    %4228 = vmatpush1.msra.mxu0 0.0
    %4229 = vmatprep.subr.mxu0 0.0
    %4230 = vmatpush1.msra.mxu0 0.0
    %4231 = vmatprep.subr.mxu0 0.0
    %4232 = vmatpush1.msra.mxu0 0.0
    %4233 = vmatprep.subr.mxu0 0.0
    %4234 = vmatpush1.msra.mxu0 0.0
    %4235 = vmatprep.subr.mxu0 0.0
    %4236 = vmatpush1.msra.mxu0 0.0
    %4237 = vmatprep.subr.mxu0 0.0
    %4238 = vmatpush1.msra.mxu0 0.0
    %4239 = vmatprep.subr.mxu0 0.0
    %4240 = vmatpush1.msra.mxu0 0.0
    %4241 = vmatprep.subr.mxu0 0.0
    %4242 = vmatpush1.msra.mxu0 0.0
    %4243 = vmatprep.subr.mxu0 0.0
    %4244 = vmatpush1.msra.mxu0 0.0
    %4245 = vmatprep.subr.mxu0 0.0
    %4246 = vmatpush1.msra.mxu0 0.0
    %4247 = vmatprep.subr.mxu0 0.0
    %4248 = vmatpush1.msra.mxu0 0.0
    %4249 = vmatprep.subr.mxu0 0.0
    %4250 = vmatpush1.msra.mxu0 0.0
    %4251 = vmatprep.subr.mxu0 0.0
    %4252 = vmatpush1.msra.mxu0 0.0
    %4253 = vmatprep.subr.mxu0 0.0
    %4254 = vmatpush1.msra.mxu0 0.0
    %4255 = vmatprep.subr.mxu0 0.0
    %4256 = vmatpush1.msra.mxu0 0.0
    %4257 = vmatprep.subr.mxu0 0.0
    %4258 = vmatpush1.msra.mxu0 0.0
    %4259 = vmatprep.subr.mxu0 0.0
    %4260 = vmatpush1.msra.mxu0 0.0
    %4261 = vmatprep.subr.mxu0 0.0
    %4262 = vmatpush1.msra.mxu0 0.0
    %4263 = vmatprep.subr.mxu0 0.0
    %4264 = vmatpush1.msra.mxu0 0.0
    %4265 = vmatprep.subr.mxu0 0.0
    %4266 = vmatpush1.msra.mxu0 0.0
    %4267 = vmatprep.subr.mxu0 0.0
    %4268 = vmatpush1.msra.mxu0 0.0
    %4269 = vmatprep.subr.mxu0 0.0
    %4270 = vmatpush1.msra.mxu0 0.0
    %4271 = vmatprep.subr.mxu0 0.0
    %4272 = vmatpush1.msra.mxu0 0.0
    %4273 = vmatprep.mubr.f32.mxu0 0.0
    %4274 = vmatmul.mubr.f32.gmra.mrb[0].mxu0 %v3747
    %v4275 = vpop.f32.mrb[0].mxu0
    %v4276 = vadd.f32 0.0, %v4275
    %v4277 = vpop.f32.mrb[0].mxu0
    %v4278 = vadd.f32 0.0, %v4277
    %4279 = vdwg.mxu0
    %4280 = vmatprep.subr.mxu0 %v3779
    %4281 = vmatpush1.msra.mxu0 %v3777
    %4282 = vmatprep.subr.mxu0 0.0
    %4283 = vmatpush1.msra.mxu0 0.0
    %4284 = vmatprep.subr.mxu0 0.0
    %4285 = vmatpush1.msra.mxu0 0.0
    %4286 = vmatprep.subr.mxu0 0.0
    %4287 = vmatpush1.msra.mxu0 0.0
    %4288 = vmatprep.subr.mxu0 0.0
    %4289 = vmatpush1.msra.mxu0 0.0
    %4290 = vmatprep.subr.mxu0 0.0
    %4291 = vmatpush1.msra.mxu0 0.0
    %4292 = vmatprep.subr.mxu0 0.0
    %4293 = vmatpush1.msra.mxu0 0.0
    %4294 = vmatprep.subr.mxu0 0.0
    %4295 = vmatpush1.msra.mxu0 0.0
    %4296 = vmatprep.subr.mxu0 0.0
    %4297 = vmatpush1.msra.mxu0 0.0
    %4298 = vmatprep.subr.mxu0 0.0
    %4299 = vmatpush1.msra.mxu0 0.0
    %4300 = vmatprep.subr.mxu0 0.0
    %4301 = vmatpush1.msra.mxu0 0.0
    %4302 = vmatprep.subr.mxu0 0.0
    %4303 = vmatpush1.msra.mxu0 0.0
    %4304 = vmatprep.subr.mxu0 0.0
    %4305 = vmatpush1.msra.mxu0 0.0
    %4306 = vmatprep.subr.mxu0 0.0
    %4307 = vmatpush1.msra.mxu0 0.0
    %4308 = vmatprep.subr.mxu0 0.0
    %4309 = vmatpush1.msra.mxu0 0.0
    %4310 = vmatprep.subr.mxu0 0.0
    %4311 = vmatpush1.msra.mxu0 0.0
    %4312 = vmatprep.subr.mxu0 0.0
    %4313 = vmatpush1.msra.mxu0 0.0
    %4314 = vmatprep.subr.mxu0 0.0
    %4315 = vmatpush1.msra.mxu0 0.0
    %4316 = vmatprep.subr.mxu0 0.0
    %4317 = vmatpush1.msra.mxu0 0.0
    %4318 = vmatprep.subr.mxu0 0.0
    %4319 = vmatpush1.msra.mxu0 0.0
    %4320 = vmatprep.subr.mxu0 0.0
    %4321 = vmatpush1.msra.mxu0 0.0
    %4322 = vmatprep.subr.mxu0 0.0
    %4323 = vmatpush1.msra.mxu0 0.0
    %4324 = vmatprep.subr.mxu0 0.0
    %4325 = vmatpush1.msra.mxu0 0.0
    %4326 = vmatprep.subr.mxu0 0.0
    %4327 = vmatpush1.msra.mxu0 0.0
    %4328 = vmatprep.subr.mxu0 0.0
    %4329 = vmatpush1.msra.mxu0 0.0
    %4330 = vmatprep.subr.mxu0 0.0
    %4331 = vmatpush1.msra.mxu0 0.0
    %4332 = vmatprep.subr.mxu0 0.0
    %4333 = vmatpush1.msra.mxu0 0.0
    %4334 = vmatprep.subr.mxu0 0.0
    %4335 = vmatpush1.msra.mxu0 0.0
    %4336 = vmatprep.subr.mxu0 0.0
    %4337 = vmatpush1.msra.mxu0 0.0
    %4338 = vmatprep.subr.mxu0 0.0
    %4339 = vmatpush1.msra.mxu0 0.0
    %4340 = vmatprep.subr.mxu0 0.0
    %4341 = vmatpush1.msra.mxu0 0.0
    %4342 = vmatprep.subr.mxu0 0.0
    %4343 = vmatpush1.msra.mxu0 0.0
    %4344 = vmatprep.mubr.f32.mxu0 0.0
    %4345 = vmatmul.mubr.f32.gmra.mrb[0].mxu0 %v3747
    %v4346 = vpop.f32.mrb[0].mxu0
    %v4347 = vadd.f32 0.0, %v4346
    %v4348 = vpop.f32.mrb[0].mxu0
    %v4349 = vadd.f32 0.0, %v4348
    %4350 = vdwg.mxu0
    %4351 = vmatprep.subr.mxu0 0.0
    %4352 = vmatpush1.msra.mxu0 %v3781
    %4353 = vmatprep.subr.mxu0 0.0
    %4354 = vmatpush1.msra.mxu0 0.0
    %4355 = vmatprep.subr.mxu0 0.0
    %4356 = vmatpush1.msra.mxu0 0.0
    %4357 = vmatprep.subr.mxu0 0.0
    %4358 = vmatpush1.msra.mxu0 0.0
    %4359 = vmatprep.subr.mxu0 0.0
    %4360 = vmatpush1.msra.mxu0 0.0
    %4361 = vmatprep.subr.mxu0 0.0
    %4362 = vmatpush1.msra.mxu0 0.0
    %4363 = vmatprep.subr.mxu0 0.0
    %4364 = vmatpush1.msra.mxu0 0.0
    %4365 = vmatprep.subr.mxu0 0.0
    %4366 = vmatpush1.msra.mxu0 0.0
    %4367 = vmatprep.subr.mxu0 0.0
    %4368 = vmatpush1.msra.mxu0 0.0
    %4369 = vmatprep.subr.mxu0 0.0
    %4370 = vmatpush1.msra.mxu0 0.0
    %4371 = vmatprep.subr.mxu0 0.0
    %4372 = vmatpush1.msra.mxu0 0.0
    %4373 = vmatprep.subr.mxu0 0.0
    %4374 = vmatpush1.msra.mxu0 0.0
    %4375 = vmatprep.subr.mxu0 0.0
    %4376 = vmatpush1.msra.mxu0 0.0
    %4377 = vmatprep.subr.mxu0 0.0
    %4378 = vmatpush1.msra.mxu0 0.0
    %4379 = vmatprep.subr.mxu0 0.0
    %4380 = vmatpush1.msra.mxu0 0.0
    %4381 = vmatprep.subr.mxu0 0.0
    %4382 = vmatpush1.msra.mxu0 0.0
    %4383 = vmatprep.subr.mxu0 0.0
    %4384 = vmatpush1.msra.mxu0 0.0
    %4385 = vmatprep.subr.mxu0 0.0
    %4386 = vmatpush1.msra.mxu0 0.0
    %4387 = vmatprep.subr.mxu0 0.0
    %4388 = vmatpush1.msra.mxu0 0.0
    %4389 = vmatprep.subr.mxu0 0.0
    %4390 = vmatpush1.msra.mxu0 0.0
    %4391 = vmatprep.subr.mxu0 0.0
    %4392 = vmatpush1.msra.mxu0 0.0
    %4393 = vmatprep.subr.mxu0 0.0
    %4394 = vmatpush1.msra.mxu0 0.0
    %4395 = vmatprep.subr.mxu0 0.0
    %4396 = vmatpush1.msra.mxu0 0.0
    %4397 = vmatprep.subr.mxu0 0.0
    %4398 = vmatpush1.msra.mxu0 0.0
    %4399 = vmatprep.subr.mxu0 0.0
    %4400 = vmatpush1.msra.mxu0 0.0
    %4401 = vmatprep.subr.mxu0 0.0
    %4402 = vmatpush1.msra.mxu0 0.0
    %4403 = vmatprep.subr.mxu0 0.0
    %4404 = vmatpush1.msra.mxu0 0.0
    %4405 = vmatprep.subr.mxu0 0.0
    %4406 = vmatpush1.msra.mxu0 0.0
    %4407 = vmatprep.subr.mxu0 0.0
    %4408 = vmatpush1.msra.mxu0 0.0
    %4409 = vmatprep.subr.mxu0 0.0
    %4410 = vmatpush1.msra.mxu0 0.0
    %4411 = vmatprep.subr.mxu0 0.0
    %4412 = vmatpush1.msra.mxu0 0.0
    %4413 = vmatprep.subr.mxu0 0.0
    %4414 = vmatpush1.msra.mxu0 0.0
    %4415 = vmatprep.mubr.f32.mxu0 0.0
    %4416 = vmatmul.mubr.f32.gmra.mrb[0].mxu0 %v3747
    %v4417 = vpop.f32.mrb[0].mxu0
    %v4418 = vadd.f32 0.0, %v4417
    %v4419 = vpop.f32.mrb[0].mxu0
    %4420 = vdwg.mxu0
    %v4421 = vadd.f32 %v3651, %v3850
    %v4422 = vadd.f32 %v3652, %v3852
    %v4423 = vadd.f32 %v3653, %v3921
    %v4424 = vadd.f32 %v3654, %v3923
    %v4425 = vadd.f32 %v3655, %v3992
    %v4426 = vadd.f32 %v3656, %v3994
    %v4427 = vadd.f32 %v3657, %v4063
    %v4428 = vadd.f32 %v3658, %v4065
    %v4429 = vadd.f32 %v3659, %v4134
    %v4430 = vadd.f32 %v3660, %v4136
    %v4431 = vadd.f32 %v3661, %v4205
    %v4432 = vadd.f32 %v3662, %v4207
    %v4433 = vadd.f32 %v3663, %v4276
    %v4434 = vadd.f32 %v3664, %v4278
    %v4435 = vadd.f32 %v3665, %v4347
    %v4436 = vadd.f32 %v3666, %v4349
    %v4437 = vadd.f32 %v3667, %v4418
    %v4438 = vld [vmem:[#allocation2] sm:$0xff]
    %v4439 = vld [vmem:[#allocation2 + $0x8] sm:$0xff]
    %v4440 = vld [vmem:[#allocation2 + $0x10] sm:$0xff]
    %v4441 = vld [vmem:[#allocation2 + $0x18] sm:$0xff]
    %v4442 = vld [vmem:[#allocation2 + $0x20] sm:$0xff]
    %v4443 = vld [vmem:[#allocation2 + $0x28] sm:$0xff]
    %v4444 = vld [vmem:[#allocation2 + $0x30] sm:$0xff]
    %v4445 = vld [vmem:[#allocation2 + $0x38] sm:$0xff]
    %v4446 = vld [vmem:[#allocation2 + $0x40] sm:$0xf]
    %s4447 = scalar_lea.vmem %s1, 48
    %v4448 = vld [vmem:[%s4447] sm:$0xff]
    %v4458 = vcombine.high %v4438, %v4438
    %v4459 = vcombine.high %v4439, %v4439
    %v4460 = vcombine.high %v4440, %v4440
    %v4461 = vcombine.high %v4441, %v4441
    %v4462 = vcombine.high %v4442, %v4442
    %v4463 = vcombine.high %v4443, %v4443
    %v4464 = vcombine.high %v4444, %v4444
    %v4465 = vcombine.high %v4445, %v4445
    %4466 = vrot.lane.b32.xlu0 %v4438, 96
    %v4467 = vpop.permute.xlu0 %4466
    %4468 = vrot.lane.b32.xlu0 %v4458, 96
    %v4469 = vpop.permute.xlu0 %4468
    %4470 = vrot.lane.b32.xlu0 %v4439, 96
    %v4471 = vpop.permute.xlu0 %4470
    %4472 = vrot.lane.b32.xlu0 %v4459, 96
    %v4473 = vpop.permute.xlu0 %4472
    %4474 = vrot.lane.b32.xlu0 %v4440, 96
    %v4475 = vpop.permute.xlu0 %4474
    %4476 = vrot.lane.b32.xlu0 %v4460, 96
    %v4477 = vpop.permute.xlu0 %4476
    %4478 = vrot.lane.b32.xlu0 %v4441, 96
    %v4479 = vpop.permute.xlu0 %4478
    %4480 = vrot.lane.b32.xlu0 %v4461, 96
    %v4481 = vpop.permute.xlu0 %4480
    %4482 = vrot.lane.b32.xlu0 %v4442, 96
    %v4483 = vpop.permute.xlu0 %4482
    %4484 = vrot.lane.b32.xlu0 %v4462, 96
    %v4485 = vpop.permute.xlu0 %4484
    %4486 = vrot.lane.b32.xlu0 %v4443, 96
    %v4487 = vpop.permute.xlu0 %4486
    %4488 = vrot.lane.b32.xlu0 %v4463, 96
    %v4489 = vpop.permute.xlu0 %4488
    %4490 = vrot.lane.b32.xlu0 %v4444, 96
    %v4491 = vpop.permute.xlu0 %4490
    %4492 = vrot.lane.b32.xlu0 %v4464, 96
    %v4493 = vpop.permute.xlu0 %4492
    %4494 = vrot.lane.b32.xlu0 %v4445, 96
    %v4495 = vpop.permute.xlu0 %4494
    %4496 = vrot.lane.b32.xlu0 %v4465, 96
    %v4497 = vpop.permute.xlu0 %4496
    %4498 = vrot.lane.b32.xlu0 %v4446, 96
    %v4499 = vpop.permute.xlu0 %4498
    %vm4500 = vcmask 785408
    %v4501 = vsel %vm4500, %v4467, %v4469
    %v4502 = vsel %vm4500, %v4469, %v4471
    %v4503 = vsel %vm4500, %v4471, %v4473
    %v4504 = vsel %vm4500, %v4473, %v4475
    %v4505 = vsel %vm4500, %v4475, %v4477
    %v4506 = vsel %vm4500, %v4477, %v4479
    %v4507 = vsel %vm4500, %v4479, %v4481
    %v4508 = vsel %vm4500, %v4481, %v4483
    %v4509 = vsel %vm4500, %v4483, %v4485
    %v4510 = vsel %vm4500, %v4485, %v4487
    %v4511 = vsel %vm4500, %v4487, %v4489
    %v4512 = vsel %vm4500, %v4489, %v4491
    %v4513 = vsel %vm4500, %v4491, %v4493
    %v4514 = vsel %vm4500, %v4493, %v4495
    %v4515 = vsel %vm4500, %v4495, %v4497
    %v4516 = vsel %vm4500, %v4497, %v4499
    %v4518 = vsel %vm86, %v4448, 0
    %v4520 = vsel %vm90, %v4501, 0
    %v4522 = vsel %vm90, %v4502, 0
    %v4524 = vsel %vm90, %v4503, 0
    %v4526 = vsel %vm90, %v4504, 0
    %v4528 = vsel %vm90, %v4505, 0
    %v4530 = vsel %vm90, %v4506, 0
    %v4532 = vsel %vm90, %v4507, 0
    %v4534 = vsel %vm90, %v4508, 0
    %v4536 = vsel %vm90, %v4509, 0
    %v4538 = vsel %vm90, %v4510, 0
    %v4540 = vsel %vm90, %v4511, 0
    %v4542 = vsel %vm90, %v4512, 0
    %v4544 = vsel %vm90, %v4513, 0
    %v4546 = vsel %vm90, %v4514, 0
    %v4548 = vsel %vm90, %v4515, 0
    %v4550 = vsel %vm90, %v4516, 0
    %v4552 = vsel %vm90, %v4499, 0
    %4554 = vmatprep.subr.mxu0 %v4522
    %4555 = vmatpush1.msra.mxu0 %v4520
    %4556 = vmatprep.subr.mxu0 0.0
    %4557 = vmatpush1.msra.mxu0 0.0
    %4558 = vmatprep.subr.mxu0 0.0
    %4559 = vmatpush1.msra.mxu0 0.0
    %4560 = vmatprep.subr.mxu0 0.0
    %4561 = vmatpush1.msra.mxu0 0.0
    %4562 = vmatprep.subr.mxu0 0.0
    %4563 = vmatpush1.msra.mxu0 0.0
    %4564 = vmatprep.subr.mxu0 0.0
    %4565 = vmatpush1.msra.mxu0 0.0
    %4566 = vmatprep.subr.mxu0 0.0
    %4567 = vmatpush1.msra.mxu0 0.0
    %4568 = vmatprep.subr.mxu0 0.0
    %4569 = vmatpush1.msra.mxu0 0.0
    %4570 = vmatprep.subr.mxu0 0.0
    %4571 = vmatpush1.msra.mxu0 0.0
    %4572 = vmatprep.subr.mxu0 0.0
    %4573 = vmatpush1.msra.mxu0 0.0
    %4574 = vmatprep.subr.mxu0 0.0
    %4575 = vmatpush1.msra.mxu0 0.0
    %4576 = vmatprep.subr.mxu0 0.0
    %4577 = vmatpush1.msra.mxu0 0.0
    %4578 = vmatprep.subr.mxu0 0.0
    %4579 = vmatpush1.msra.mxu0 0.0
    %4580 = vmatprep.subr.mxu0 0.0
    %4581 = vmatpush1.msra.mxu0 0.0
    %4582 = vmatprep.subr.mxu0 0.0
    %4583 = vmatpush1.msra.mxu0 0.0
    %4584 = vmatprep.subr.mxu0 0.0
    %4585 = vmatpush1.msra.mxu0 0.0
    %4586 = vmatprep.subr.mxu0 0.0
    %4587 = vmatpush1.msra.mxu0 0.0
    %4588 = vmatprep.subr.mxu0 0.0
    %4589 = vmatpush1.msra.mxu0 0.0
    %4590 = vmatprep.subr.mxu0 0.0
    %4591 = vmatpush1.msra.mxu0 0.0
    %4592 = vmatprep.subr.mxu0 0.0
    %4593 = vmatpush1.msra.mxu0 0.0
    %4594 = vmatprep.subr.mxu0 0.0
    %4595 = vmatpush1.msra.mxu0 0.0
    %4596 = vmatprep.subr.mxu0 0.0
    %4597 = vmatpush1.msra.mxu0 0.0
    %4598 = vmatprep.subr.mxu0 0.0
    %4599 = vmatpush1.msra.mxu0 0.0
    %4600 = vmatprep.subr.mxu0 0.0
    %4601 = vmatpush1.msra.mxu0 0.0
    %4602 = vmatprep.subr.mxu0 0.0
    %4603 = vmatpush1.msra.mxu0 0.0
    %4604 = vmatprep.subr.mxu0 0.0
    %4605 = vmatpush1.msra.mxu0 0.0
    %4606 = vmatprep.subr.mxu0 0.0
    %4607 = vmatpush1.msra.mxu0 0.0
    %4608 = vmatprep.subr.mxu0 0.0
    %4609 = vmatpush1.msra.mxu0 0.0
    %4610 = vmatprep.subr.mxu0 0.0
    %4611 = vmatpush1.msra.mxu0 0.0
    %4612 = vmatprep.subr.mxu0 0.0
    %4613 = vmatpush1.msra.mxu0 0.0
    %4614 = vmatprep.subr.mxu0 0.0
    %4615 = vmatpush1.msra.mxu0 0.0
    %4616 = vmatprep.subr.mxu0 0.0
    %4617 = vmatpush1.msra.mxu0 0.0
    %4618 = vmatprep.mubr.f32.mxu0 0.0
    %4619 = vmatmul.mubr.f32.gmra.mrb[0].mxu0 %v4518
    %v4620 = vpop.f32.mrb[0].mxu0
    %v4621 = vadd.f32 0.0, %v4620
    %v4622 = vpop.f32.mrb[0].mxu0
    %v4623 = vadd.f32 0.0, %v4622
    %4624 = vdwg.mxu0
    %4625 = vmatprep.subr.mxu0 %v4526
    %4626 = vmatpush1.msra.mxu0 %v4524
    %4627 = vmatprep.subr.mxu0 0.0
    %4628 = vmatpush1.msra.mxu0 0.0
    %4629 = vmatprep.subr.mxu0 0.0
    %4630 = vmatpush1.msra.mxu0 0.0
    %4631 = vmatprep.subr.mxu0 0.0
    %4632 = vmatpush1.msra.mxu0 0.0
    %4633 = vmatprep.subr.mxu0 0.0
    %4634 = vmatpush1.msra.mxu0 0.0
    %4635 = vmatprep.subr.mxu0 0.0
    %4636 = vmatpush1.msra.mxu0 0.0
    %4637 = vmatprep.subr.mxu0 0.0
    %4638 = vmatpush1.msra.mxu0 0.0
    %4639 = vmatprep.subr.mxu0 0.0
    %4640 = vmatpush1.msra.mxu0 0.0
    %4641 = vmatprep.subr.mxu0 0.0
    %4642 = vmatpush1.msra.mxu0 0.0
    %4643 = vmatprep.subr.mxu0 0.0
    %4644 = vmatpush1.msra.mxu0 0.0
    %4645 = vmatprep.subr.mxu0 0.0
    %4646 = vmatpush1.msra.mxu0 0.0
    %4647 = vmatprep.subr.mxu0 0.0
    %4648 = vmatpush1.msra.mxu0 0.0
    %4649 = vmatprep.subr.mxu0 0.0
    %4650 = vmatpush1.msra.mxu0 0.0
    %4651 = vmatprep.subr.mxu0 0.0
    %4652 = vmatpush1.msra.mxu0 0.0
    %4653 = vmatprep.subr.mxu0 0.0
    %4654 = vmatpush1.msra.mxu0 0.0
    %4655 = vmatprep.subr.mxu0 0.0
    %4656 = vmatpush1.msra.mxu0 0.0
    %4657 = vmatprep.subr.mxu0 0.0
    %4658 = vmatpush1.msra.mxu0 0.0
    %4659 = vmatprep.subr.mxu0 0.0
    %4660 = vmatpush1.msra.mxu0 0.0
    %4661 = vmatprep.subr.mxu0 0.0
    %4662 = vmatpush1.msra.mxu0 0.0
    %4663 = vmatprep.subr.mxu0 0.0
    %4664 = vmatpush1.msra.mxu0 0.0
    %4665 = vmatprep.subr.mxu0 0.0
    %4666 = vmatpush1.msra.mxu0 0.0
    %4667 = vmatprep.subr.mxu0 0.0
    %4668 = vmatpush1.msra.mxu0 0.0
    %4669 = vmatprep.subr.mxu0 0.0
    %4670 = vmatpush1.msra.mxu0 0.0
    %4671 = vmatprep.subr.mxu0 0.0
    %4672 = vmatpush1.msra.mxu0 0.0
    %4673 = vmatprep.subr.mxu0 0.0
    %4674 = vmatpush1.msra.mxu0 0.0
    %4675 = vmatprep.subr.mxu0 0.0
    %4676 = vmatpush1.msra.mxu0 0.0
    %4677 = vmatprep.subr.mxu0 0.0
    %4678 = vmatpush1.msra.mxu0 0.0
    %4679 = vmatprep.subr.mxu0 0.0
    %4680 = vmatpush1.msra.mxu0 0.0
    %4681 = vmatprep.subr.mxu0 0.0
    %4682 = vmatpush1.msra.mxu0 0.0
    %4683 = vmatprep.subr.mxu0 0.0
    %4684 = vmatpush1.msra.mxu0 0.0
    %4685 = vmatprep.subr.mxu0 0.0
    %4686 = vmatpush1.msra.mxu0 0.0
    %4687 = vmatprep.subr.mxu0 0.0
    %4688 = vmatpush1.msra.mxu0 0.0
    %4689 = vmatprep.mubr.f32.mxu0 0.0
    %4690 = vmatmul.mubr.f32.gmra.mrb[0].mxu0 %v4518
    %v4691 = vpop.f32.mrb[0].mxu0
    %v4692 = vadd.f32 0.0, %v4691
    %v4693 = vpop.f32.mrb[0].mxu0
    %v4694 = vadd.f32 0.0, %v4693
    %4695 = vdwg.mxu0
    %4696 = vmatprep.subr.mxu0 %v4530
    %4697 = vmatpush1.msra.mxu0 %v4528
    %4698 = vmatprep.subr.mxu0 0.0
    %4699 = vmatpush1.msra.mxu0 0.0
    %4700 = vmatprep.subr.mxu0 0.0
    %4701 = vmatpush1.msra.mxu0 0.0
    %4702 = vmatprep.subr.mxu0 0.0
    %4703 = vmatpush1.msra.mxu0 0.0
    %4704 = vmatprep.subr.mxu0 0.0
    %4705 = vmatpush1.msra.mxu0 0.0
    %4706 = vmatprep.subr.mxu0 0.0
    %4707 = vmatpush1.msra.mxu0 0.0
    %4708 = vmatprep.subr.mxu0 0.0
    %4709 = vmatpush1.msra.mxu0 0.0
    %4710 = vmatprep.subr.mxu0 0.0
    %4711 = vmatpush1.msra.mxu0 0.0
    %4712 = vmatprep.subr.mxu0 0.0
    %4713 = vmatpush1.msra.mxu0 0.0
    %4714 = vmatprep.subr.mxu0 0.0
    %4715 = vmatpush1.msra.mxu0 0.0
    %4716 = vmatprep.subr.mxu0 0.0
    %4717 = vmatpush1.msra.mxu0 0.0
    %4718 = vmatprep.subr.mxu0 0.0
    %4719 = vmatpush1.msra.mxu0 0.0
    %4720 = vmatprep.subr.mxu0 0.0
    %4721 = vmatpush1.msra.mxu0 0.0
    %4722 = vmatprep.subr.mxu0 0.0
    %4723 = vmatpush1.msra.mxu0 0.0
    %4724 = vmatprep.subr.mxu0 0.0
    %4725 = vmatpush1.msra.mxu0 0.0
    %4726 = vmatprep.subr.mxu0 0.0
    %4727 = vmatpush1.msra.mxu0 0.0
    %4728 = vmatprep.subr.mxu0 0.0
    %4729 = vmatpush1.msra.mxu0 0.0
    %4730 = vmatprep.subr.mxu0 0.0
    %4731 = vmatpush1.msra.mxu0 0.0
    %4732 = vmatprep.subr.mxu0 0.0
    %4733 = vmatpush1.msra.mxu0 0.0
    %4734 = vmatprep.subr.mxu0 0.0
    %4735 = vmatpush1.msra.mxu0 0.0
    %4736 = vmatprep.subr.mxu0 0.0
    %4737 = vmatpush1.msra.mxu0 0.0
    %4738 = vmatprep.subr.mxu0 0.0
    %4739 = vmatpush1.msra.mxu0 0.0
    %4740 = vmatprep.subr.mxu0 0.0
    %4741 = vmatpush1.msra.mxu0 0.0
    %4742 = vmatprep.subr.mxu0 0.0
    %4743 = vmatpush1.msra.mxu0 0.0
    %4744 = vmatprep.subr.mxu0 0.0
    %4745 = vmatpush1.msra.mxu0 0.0
    %4746 = vmatprep.subr.mxu0 0.0
    %4747 = vmatpush1.msra.mxu0 0.0
    %4748 = vmatprep.subr.mxu0 0.0
    %4749 = vmatpush1.msra.mxu0 0.0
    %4750 = vmatprep.subr.mxu0 0.0
    %4751 = vmatpush1.msra.mxu0 0.0
    %4752 = vmatprep.subr.mxu0 0.0
    %4753 = vmatpush1.msra.mxu0 0.0
    %4754 = vmatprep.subr.mxu0 0.0
    %4755 = vmatpush1.msra.mxu0 0.0
    %4756 = vmatprep.subr.mxu0 0.0
    %4757 = vmatpush1.msra.mxu0 0.0
    %4758 = vmatprep.subr.mxu0 0.0
    %4759 = vmatpush1.msra.mxu0 0.0
    %4760 = vmatprep.mubr.f32.mxu0 0.0
    %4761 = vmatmul.mubr.f32.gmra.mrb[0].mxu0 %v4518
    %v4762 = vpop.f32.mrb[0].mxu0
    %v4763 = vadd.f32 0.0, %v4762
    %v4764 = vpop.f32.mrb[0].mxu0
    %v4765 = vadd.f32 0.0, %v4764
    %4766 = vdwg.mxu0
    %4767 = vmatprep.subr.mxu0 %v4534
    %4768 = vmatpush1.msra.mxu0 %v4532
    %4769 = vmatprep.subr.mxu0 0.0
    %4770 = vmatpush1.msra.mxu0 0.0
    %4771 = vmatprep.subr.mxu0 0.0
    %4772 = vmatpush1.msra.mxu0 0.0
    %4773 = vmatprep.subr.mxu0 0.0
    %4774 = vmatpush1.msra.mxu0 0.0
    %4775 = vmatprep.subr.mxu0 0.0
    %4776 = vmatpush1.msra.mxu0 0.0
    %4777 = vmatprep.subr.mxu0 0.0
    %4778 = vmatpush1.msra.mxu0 0.0
    %4779 = vmatprep.subr.mxu0 0.0
    %4780 = vmatpush1.msra.mxu0 0.0
    %4781 = vmatprep.subr.mxu0 0.0
    %4782 = vmatpush1.msra.mxu0 0.0
    %4783 = vmatprep.subr.mxu0 0.0
    %4784 = vmatpush1.msra.mxu0 0.0
    %4785 = vmatprep.subr.mxu0 0.0
    %4786 = vmatpush1.msra.mxu0 0.0
    %4787 = vmatprep.subr.mxu0 0.0
    %4788 = vmatpush1.msra.mxu0 0.0
    %4789 = vmatprep.subr.mxu0 0.0
    %4790 = vmatpush1.msra.mxu0 0.0
    %4791 = vmatprep.subr.mxu0 0.0
    %4792 = vmatpush1.msra.mxu0 0.0
    %4793 = vmatprep.subr.mxu0 0.0
    %4794 = vmatpush1.msra.mxu0 0.0
    %4795 = vmatprep.subr.mxu0 0.0
    %4796 = vmatpush1.msra.mxu0 0.0
    %4797 = vmatprep.subr.mxu0 0.0
    %4798 = vmatpush1.msra.mxu0 0.0
    %4799 = vmatprep.subr.mxu0 0.0
    %4800 = vmatpush1.msra.mxu0 0.0
    %4801 = vmatprep.subr.mxu0 0.0
    %4802 = vmatpush1.msra.mxu0 0.0
    %4803 = vmatprep.subr.mxu0 0.0
    %4804 = vmatpush1.msra.mxu0 0.0
    %4805 = vmatprep.subr.mxu0 0.0
    %4806 = vmatpush1.msra.mxu0 0.0
    %4807 = vmatprep.subr.mxu0 0.0
    %4808 = vmatpush1.msra.mxu0 0.0
    %4809 = vmatprep.subr.mxu0 0.0
    %4810 = vmatpush1.msra.mxu0 0.0
    %4811 = vmatprep.subr.mxu0 0.0
    %4812 = vmatpush1.msra.mxu0 0.0
    %4813 = vmatprep.subr.mxu0 0.0
    %4814 = vmatpush1.msra.mxu0 0.0
    %4815 = vmatprep.subr.mxu0 0.0
    %4816 = vmatpush1.msra.mxu0 0.0
    %4817 = vmatprep.subr.mxu0 0.0
    %4818 = vmatpush1.msra.mxu0 0.0
    %4819 = vmatprep.subr.mxu0 0.0
    %4820 = vmatpush1.msra.mxu0 0.0
    %4821 = vmatprep.subr.mxu0 0.0
    %4822 = vmatpush1.msra.mxu0 0.0
    %4823 = vmatprep.subr.mxu0 0.0
    %4824 = vmatpush1.msra.mxu0 0.0
    %4825 = vmatprep.subr.mxu0 0.0
    %4826 = vmatpush1.msra.mxu0 0.0
    %4827 = vmatprep.subr.mxu0 0.0
    %4828 = vmatpush1.msra.mxu0 0.0
    %4829 = vmatprep.subr.mxu0 0.0
    %4830 = vmatpush1.msra.mxu0 0.0
    %4831 = vmatprep.mubr.f32.mxu0 0.0
    %4832 = vmatmul.mubr.f32.gmra.mrb[0].mxu0 %v4518
    %v4833 = vpop.f32.mrb[0].mxu0
    %v4834 = vadd.f32 0.0, %v4833
    %v4835 = vpop.f32.mrb[0].mxu0
    %v4836 = vadd.f32 0.0, %v4835
    %4837 = vdwg.mxu0
    %4838 = vmatprep.subr.mxu0 %v4538
    %4839 = vmatpush1.msra.mxu0 %v4536
    %4840 = vmatprep.subr.mxu0 0.0
    %4841 = vmatpush1.msra.mxu0 0.0
    %4842 = vmatprep.subr.mxu0 0.0
    %4843 = vmatpush1.msra.mxu0 0.0
    %4844 = vmatprep.subr.mxu0 0.0
    %4845 = vmatpush1.msra.mxu0 0.0
    %4846 = vmatprep.subr.mxu0 0.0
    %4847 = vmatpush1.msra.mxu0 0.0
    %4848 = vmatprep.subr.mxu0 0.0
    %4849 = vmatpush1.msra.mxu0 0.0
    %4850 = vmatprep.subr.mxu0 0.0
    %4851 = vmatpush1.msra.mxu0 0.0
    %4852 = vmatprep.subr.mxu0 0.0
    %4853 = vmatpush1.msra.mxu0 0.0
    %4854 = vmatprep.subr.mxu0 0.0
    %4855 = vmatpush1.msra.mxu0 0.0
    %4856 = vmatprep.subr.mxu0 0.0
    %4857 = vmatpush1.msra.mxu0 0.0
    %4858 = vmatprep.subr.mxu0 0.0
    %4859 = vmatpush1.msra.mxu0 0.0
    %4860 = vmatprep.subr.mxu0 0.0
    %4861 = vmatpush1.msra.mxu0 0.0
    %4862 = vmatprep.subr.mxu0 0.0
    %4863 = vmatpush1.msra.mxu0 0.0
    %4864 = vmatprep.subr.mxu0 0.0
    %4865 = vmatpush1.msra.mxu0 0.0
    %4866 = vmatprep.subr.mxu0 0.0
    %4867 = vmatpush1.msra.mxu0 0.0
    %4868 = vmatprep.subr.mxu0 0.0
    %4869 = vmatpush1.msra.mxu0 0.0
    %4870 = vmatprep.subr.mxu0 0.0
    %4871 = vmatpush1.msra.mxu0 0.0
    %4872 = vmatprep.subr.mxu0 0.0
    %4873 = vmatpush1.msra.mxu0 0.0
    %4874 = vmatprep.subr.mxu0 0.0
    %4875 = vmatpush1.msra.mxu0 0.0
    %4876 = vmatprep.subr.mxu0 0.0
    %4877 = vmatpush1.msra.mxu0 0.0
    %4878 = vmatprep.subr.mxu0 0.0
    %4879 = vmatpush1.msra.mxu0 0.0
    %4880 = vmatprep.subr.mxu0 0.0
    %4881 = vmatpush1.msra.mxu0 0.0
    %4882 = vmatprep.subr.mxu0 0.0
    %4883 = vmatpush1.msra.mxu0 0.0
    %4884 = vmatprep.subr.mxu0 0.0
    %4885 = vmatpush1.msra.mxu0 0.0
    %4886 = vmatprep.subr.mxu0 0.0
    %4887 = vmatpush1.msra.mxu0 0.0
    %4888 = vmatprep.subr.mxu0 0.0
    %4889 = vmatpush1.msra.mxu0 0.0
    %4890 = vmatprep.subr.mxu0 0.0
    %4891 = vmatpush1.msra.mxu0 0.0
    %4892 = vmatprep.subr.mxu0 0.0
    %4893 = vmatpush1.msra.mxu0 0.0
    %4894 = vmatprep.subr.mxu0 0.0
    %4895 = vmatpush1.msra.mxu0 0.0
    %4896 = vmatprep.subr.mxu0 0.0
    %4897 = vmatpush1.msra.mxu0 0.0
    %4898 = vmatprep.subr.mxu0 0.0
    %4899 = vmatpush1.msra.mxu0 0.0
    %4900 = vmatprep.subr.mxu0 0.0
    %4901 = vmatpush1.msra.mxu0 0.0
    %4902 = vmatprep.mubr.f32.mxu0 0.0
    %4903 = vmatmul.mubr.f32.gmra.mrb[0].mxu0 %v4518
    %v4904 = vpop.f32.mrb[0].mxu0
    %v4905 = vadd.f32 0.0, %v4904
    %v4906 = vpop.f32.mrb[0].mxu0
    %v4907 = vadd.f32 0.0, %v4906
    %4908 = vdwg.mxu0
    %4909 = vmatprep.subr.mxu0 %v4542
    %4910 = vmatpush1.msra.mxu0 %v4540
    %4911 = vmatprep.subr.mxu0 0.0
    %4912 = vmatpush1.msra.mxu0 0.0
    %4913 = vmatprep.subr.mxu0 0.0
    %4914 = vmatpush1.msra.mxu0 0.0
    %4915 = vmatprep.subr.mxu0 0.0
    %4916 = vmatpush1.msra.mxu0 0.0
    %4917 = vmatprep.subr.mxu0 0.0
    %4918 = vmatpush1.msra.mxu0 0.0
    %4919 = vmatprep.subr.mxu0 0.0
    %4920 = vmatpush1.msra.mxu0 0.0
    %4921 = vmatprep.subr.mxu0 0.0
    %4922 = vmatpush1.msra.mxu0 0.0
    %4923 = vmatprep.subr.mxu0 0.0
    %4924 = vmatpush1.msra.mxu0 0.0
    %4925 = vmatprep.subr.mxu0 0.0
    %4926 = vmatpush1.msra.mxu0 0.0
    %4927 = vmatprep.subr.mxu0 0.0
    %4928 = vmatpush1.msra.mxu0 0.0
    %4929 = vmatprep.subr.mxu0 0.0
    %4930 = vmatpush1.msra.mxu0 0.0
    %4931 = vmatprep.subr.mxu0 0.0
    %4932 = vmatpush1.msra.mxu0 0.0
    %4933 = vmatprep.subr.mxu0 0.0
    %4934 = vmatpush1.msra.mxu0 0.0
    %4935 = vmatprep.subr.mxu0 0.0
    %4936 = vmatpush1.msra.mxu0 0.0
    %4937 = vmatprep.subr.mxu0 0.0
    %4938 = vmatpush1.msra.mxu0 0.0
    %4939 = vmatprep.subr.mxu0 0.0
    %4940 = vmatpush1.msra.mxu0 0.0
    %4941 = vmatprep.subr.mxu0 0.0
    %4942 = vmatpush1.msra.mxu0 0.0
    %4943 = vmatprep.subr.mxu0 0.0
    %4944 = vmatpush1.msra.mxu0 0.0
    %4945 = vmatprep.subr.mxu0 0.0
    %4946 = vmatpush1.msra.mxu0 0.0
    %4947 = vmatprep.subr.mxu0 0.0
    %4948 = vmatpush1.msra.mxu0 0.0
    %4949 = vmatprep.subr.mxu0 0.0
    %4950 = vmatpush1.msra.mxu0 0.0
    %4951 = vmatprep.subr.mxu0 0.0
    %4952 = vmatpush1.msra.mxu0 0.0
    %4953 = vmatprep.subr.mxu0 0.0
    %4954 = vmatpush1.msra.mxu0 0.0
    %4955 = vmatprep.subr.mxu0 0.0
    %4956 = vmatpush1.msra.mxu0 0.0
    %4957 = vmatprep.subr.mxu0 0.0
    %4958 = vmatpush1.msra.mxu0 0.0
    %4959 = vmatprep.subr.mxu0 0.0
    %4960 = vmatpush1.msra.mxu0 0.0
    %4961 = vmatprep.subr.mxu0 0.0
    %4962 = vmatpush1.msra.mxu0 0.0
    %4963 = vmatprep.subr.mxu0 0.0
    %4964 = vmatpush1.msra.mxu0 0.0
    %4965 = vmatprep.subr.mxu0 0.0
    %4966 = vmatpush1.msra.mxu0 0.0
    %4967 = vmatprep.subr.mxu0 0.0
    %4968 = vmatpush1.msra.mxu0 0.0
    %4969 = vmatprep.subr.mxu0 0.0
    %4970 = vmatpush1.msra.mxu0 0.0
    %4971 = vmatprep.subr.mxu0 0.0
    %4972 = vmatpush1.msra.mxu0 0.0
    %4973 = vmatprep.mubr.f32.mxu0 0.0
    %4974 = vmatmul.mubr.f32.gmra.mrb[0].mxu0 %v4518
    %v4975 = vpop.f32.mrb[0].mxu0
    %v4976 = vadd.f32 0.0, %v4975
    %v4977 = vpop.f32.mrb[0].mxu0
    %v4978 = vadd.f32 0.0, %v4977
    %4979 = vdwg.mxu0
    %4980 = vmatprep.subr.mxu0 %v4546
    %4981 = vmatpush1.msra.mxu0 %v4544
    %4982 = vmatprep.subr.mxu0 0.0
    %4983 = vmatpush1.msra.mxu0 0.0
    %4984 = vmatprep.subr.mxu0 0.0
    %4985 = vmatpush1.msra.mxu0 0.0
    %4986 = vmatprep.subr.mxu0 0.0
    %4987 = vmatpush1.msra.mxu0 0.0
    %4988 = vmatprep.subr.mxu0 0.0
    %4989 = vmatpush1.msra.mxu0 0.0
    %4990 = vmatprep.subr.mxu0 0.0
    %4991 = vmatpush1.msra.mxu0 0.0
    %4992 = vmatprep.subr.mxu0 0.0
    %4993 = vmatpush1.msra.mxu0 0.0
    %4994 = vmatprep.subr.mxu0 0.0
    %4995 = vmatpush1.msra.mxu0 0.0
    %4996 = vmatprep.subr.mxu0 0.0
    %4997 = vmatpush1.msra.mxu0 0.0
    %4998 = vmatprep.subr.mxu0 0.0
    %4999 = vmatpush1.msra.mxu0 0.0
    %5000 = vmatprep.subr.mxu0 0.0
    %5001 = vmatpush1.msra.mxu0 0.0
    %5002 = vmatprep.subr.mxu0 0.0
    %5003 = vmatpush1.msra.mxu0 0.0
    %5004 = vmatprep.subr.mxu0 0.0
    %5005 = vmatpush1.msra.mxu0 0.0
    %5006 = vmatprep.subr.mxu0 0.0
    %5007 = vmatpush1.msra.mxu0 0.0
    %5008 = vmatprep.subr.mxu0 0.0
    %5009 = vmatpush1.msra.mxu0 0.0
    %5010 = vmatprep.subr.mxu0 0.0
    %5011 = vmatpush1.msra.mxu0 0.0
    %5012 = vmatprep.subr.mxu0 0.0
    %5013 = vmatpush1.msra.mxu0 0.0
    %5014 = vmatprep.subr.mxu0 0.0
    %5015 = vmatpush1.msra.mxu0 0.0
    %5016 = vmatprep.subr.mxu0 0.0
    %5017 = vmatpush1.msra.mxu0 0.0
    %5018 = vmatprep.subr.mxu0 0.0
    %5019 = vmatpush1.msra.mxu0 0.0
    %5020 = vmatprep.subr.mxu0 0.0
    %5021 = vmatpush1.msra.mxu0 0.0
    %5022 = vmatprep.subr.mxu0 0.0
    %5023 = vmatpush1.msra.mxu0 0.0
    %5024 = vmatprep.subr.mxu0 0.0
    %5025 = vmatpush1.msra.mxu0 0.0
    %5026 = vmatprep.subr.mxu0 0.0
    %5027 = vmatpush1.msra.mxu0 0.0
    %5028 = vmatprep.subr.mxu0 0.0
    %5029 = vmatpush1.msra.mxu0 0.0
    %5030 = vmatprep.subr.mxu0 0.0
    %5031 = vmatpush1.msra.mxu0 0.0
    %5032 = vmatprep.subr.mxu0 0.0
    %5033 = vmatpush1.msra.mxu0 0.0
    %5034 = vmatprep.subr.mxu0 0.0
    %5035 = vmatpush1.msra.mxu0 0.0
    %5036 = vmatprep.subr.mxu0 0.0
    %5037 = vmatpush1.msra.mxu0 0.0
    %5038 = vmatprep.subr.mxu0 0.0
    %5039 = vmatpush1.msra.mxu0 0.0
    %5040 = vmatprep.subr.mxu0 0.0
    %5041 = vmatpush1.msra.mxu0 0.0
    %5042 = vmatprep.subr.mxu0 0.0
    %5043 = vmatpush1.msra.mxu0 0.0
    %5044 = vmatprep.mubr.f32.mxu0 0.0
    %5045 = vmatmul.mubr.f32.gmra.mrb[0].mxu0 %v4518
    %v5046 = vpop.f32.mrb[0].mxu0
    %v5047 = vadd.f32 0.0, %v5046
    %v5048 = vpop.f32.mrb[0].mxu0
    %v5049 = vadd.f32 0.0, %v5048
    %5050 = vdwg.mxu0
    %5051 = vmatprep.subr.mxu0 %v4550
    %5052 = vmatpush1.msra.mxu0 %v4548
    %5053 = vmatprep.subr.mxu0 0.0
    %5054 = vmatpush1.msra.mxu0 0.0
    %5055 = vmatprep.subr.mxu0 0.0
    %5056 = vmatpush1.msra.mxu0 0.0
    %5057 = vmatprep.subr.mxu0 0.0
    %5058 = vmatpush1.msra.mxu0 0.0
    %5059 = vmatprep.subr.mxu0 0.0
    %5060 = vmatpush1.msra.mxu0 0.0
    %5061 = vmatprep.subr.mxu0 0.0
    %5062 = vmatpush1.msra.mxu0 0.0
    %5063 = vmatprep.subr.mxu0 0.0
    %5064 = vmatpush1.msra.mxu0 0.0
    %5065 = vmatprep.subr.mxu0 0.0
    %5066 = vmatpush1.msra.mxu0 0.0
    %5067 = vmatprep.subr.mxu0 0.0
    %5068 = vmatpush1.msra.mxu0 0.0
    %5069 = vmatprep.subr.mxu0 0.0
    %5070 = vmatpush1.msra.mxu0 0.0
    %5071 = vmatprep.subr.mxu0 0.0
    %5072 = vmatpush1.msra.mxu0 0.0
    %5073 = vmatprep.subr.mxu0 0.0
    %5074 = vmatpush1.msra.mxu0 0.0
    %5075 = vmatprep.subr.mxu0 0.0
    %5076 = vmatpush1.msra.mxu0 0.0
    %5077 = vmatprep.subr.mxu0 0.0
    %5078 = vmatpush1.msra.mxu0 0.0
    %5079 = vmatprep.subr.mxu0 0.0
    %5080 = vmatpush1.msra.mxu0 0.0
    %5081 = vmatprep.subr.mxu0 0.0
    %5082 = vmatpush1.msra.mxu0 0.0
    %5083 = vmatprep.subr.mxu0 0.0
    %5084 = vmatpush1.msra.mxu0 0.0
    %5085 = vmatprep.subr.mxu0 0.0
    %5086 = vmatpush1.msra.mxu0 0.0
    %5087 = vmatprep.subr.mxu0 0.0
    %5088 = vmatpush1.msra.mxu0 0.0
    %5089 = vmatprep.subr.mxu0 0.0
    %5090 = vmatpush1.msra.mxu0 0.0
    %5091 = vmatprep.subr.mxu0 0.0
    %5092 = vmatpush1.msra.mxu0 0.0
    %5093 = vmatprep.subr.mxu0 0.0
    %5094 = vmatpush1.msra.mxu0 0.0
    %5095 = vmatprep.subr.mxu0 0.0
    %5096 = vmatpush1.msra.mxu0 0.0
    %5097 = vmatprep.subr.mxu0 0.0
    %5098 = vmatpush1.msra.mxu0 0.0
    %5099 = vmatprep.subr.mxu0 0.0
    %5100 = vmatpush1.msra.mxu0 0.0
    %5101 = vmatprep.subr.mxu0 0.0
    %5102 = vmatpush1.msra.mxu0 0.0
    %5103 = vmatprep.subr.mxu0 0.0
    %5104 = vmatpush1.msra.mxu0 0.0
    %5105 = vmatprep.subr.mxu0 0.0
    %5106 = vmatpush1.msra.mxu0 0.0
    %5107 = vmatprep.subr.mxu0 0.0
    %5108 = vmatpush1.msra.mxu0 0.0
    %5109 = vmatprep.subr.mxu0 0.0
    %5110 = vmatpush1.msra.mxu0 0.0
    %5111 = vmatprep.subr.mxu0 0.0
    %5112 = vmatpush1.msra.mxu0 0.0
    %5113 = vmatprep.subr.mxu0 0.0
    %5114 = vmatpush1.msra.mxu0 0.0
    %5115 = vmatprep.mubr.f32.mxu0 0.0
    %5116 = vmatmul.mubr.f32.gmra.mrb[0].mxu0 %v4518
    %v5117 = vpop.f32.mrb[0].mxu0
    %v5118 = vadd.f32 0.0, %v5117
    %v5119 = vpop.f32.mrb[0].mxu0
    %v5120 = vadd.f32 0.0, %v5119
    %5121 = vdwg.mxu0
    %5122 = vmatprep.subr.mxu0 0.0
    %5123 = vmatpush1.msra.mxu0 %v4552
    %5124 = vmatprep.subr.mxu0 0.0
    %5125 = vmatpush1.msra.mxu0 0.0
    %5126 = vmatprep.subr.mxu0 0.0
    %5127 = vmatpush1.msra.mxu0 0.0
    %5128 = vmatprep.subr.mxu0 0.0
    %5129 = vmatpush1.msra.mxu0 0.0
    %5130 = vmatprep.subr.mxu0 0.0
    %5131 = vmatpush1.msra.mxu0 0.0
    %5132 = vmatprep.subr.mxu0 0.0
    %5133 = vmatpush1.msra.mxu0 0.0
    %5134 = vmatprep.subr.mxu0 0.0
    %5135 = vmatpush1.msra.mxu0 0.0
    %5136 = vmatprep.subr.mxu0 0.0
    %5137 = vmatpush1.msra.mxu0 0.0
    %5138 = vmatprep.subr.mxu0 0.0
    %5139 = vmatpush1.msra.mxu0 0.0
    %5140 = vmatprep.subr.mxu0 0.0
    %5141 = vmatpush1.msra.mxu0 0.0
    %5142 = vmatprep.subr.mxu0 0.0
    %5143 = vmatpush1.msra.mxu0 0.0
    %5144 = vmatprep.subr.mxu0 0.0
    %5145 = vmatpush1.msra.mxu0 0.0
    %5146 = vmatprep.subr.mxu0 0.0
    %5147 = vmatpush1.msra.mxu0 0.0
    %5148 = vmatprep.subr.mxu0 0.0
    %5149 = vmatpush1.msra.mxu0 0.0
    %5150 = vmatprep.subr.mxu0 0.0
    %5151 = vmatpush1.msra.mxu0 0.0
    %5152 = vmatprep.subr.mxu0 0.0
    %5153 = vmatpush1.msra.mxu0 0.0
    %5154 = vmatprep.subr.mxu0 0.0
    %5155 = vmatpush1.msra.mxu0 0.0
    %5156 = vmatprep.subr.mxu0 0.0
    %5157 = vmatpush1.msra.mxu0 0.0
    %5158 = vmatprep.subr.mxu0 0.0
    %5159 = vmatpush1.msra.mxu0 0.0
    %5160 = vmatprep.subr.mxu0 0.0
    %5161 = vmatpush1.msra.mxu0 0.0
    %5162 = vmatprep.subr.mxu0 0.0
    %5163 = vmatpush1.msra.mxu0 0.0
    %5164 = vmatprep.subr.mxu0 0.0
    %5165 = vmatpush1.msra.mxu0 0.0
    %5166 = vmatprep.subr.mxu0 0.0
    %5167 = vmatpush1.msra.mxu0 0.0
    %5168 = vmatprep.subr.mxu0 0.0
    %5169 = vmatpush1.msra.mxu0 0.0
    %5170 = vmatprep.subr.mxu0 0.0
    %5171 = vmatpush1.msra.mxu0 0.0
    %5172 = vmatprep.subr.mxu0 0.0
    %5173 = vmatpush1.msra.mxu0 0.0
    %5174 = vmatprep.subr.mxu0 0.0
    %5175 = vmatpush1.msra.mxu0 0.0
    %5176 = vmatprep.subr.mxu0 0.0
    %5177 = vmatpush1.msra.mxu0 0.0
    %5178 = vmatprep.subr.mxu0 0.0
    %5179 = vmatpush1.msra.mxu0 0.0
    %5180 = vmatprep.subr.mxu0 0.0
    %5181 = vmatpush1.msra.mxu0 0.0
    %5182 = vmatprep.subr.mxu0 0.0
    %5183 = vmatpush1.msra.mxu0 0.0
    %5184 = vmatprep.subr.mxu0 0.0
    %5185 = vmatpush1.msra.mxu0 0.0
    %5186 = vmatprep.mubr.f32.mxu0 0.0
    %5187 = vmatmul.mubr.f32.gmra.mrb[0].mxu0 %v4518
    %v5188 = vpop.f32.mrb[0].mxu0
    %v5189 = vadd.f32 0.0, %v5188
    %v5190 = vpop.f32.mrb[0].mxu0
    %5191 = vdwg.mxu0
    %v5192 = vadd.f32 %v4421, %v4621
    %v5193 = vadd.f32 %v4422, %v4623
    %v5194 = vadd.f32 %v4423, %v4692
    %v5195 = vadd.f32 %v4424, %v4694
    %v5196 = vadd.f32 %v4425, %v4763
    %v5197 = vadd.f32 %v4426, %v4765
    %v5198 = vadd.f32 %v4427, %v4834
    %v5199 = vadd.f32 %v4428, %v4836
    %v5200 = vadd.f32 %v4429, %v4905
    %v5201 = vadd.f32 %v4430, %v4907
    %v5202 = vadd.f32 %v4431, %v4976
    %v5203 = vadd.f32 %v4432, %v4978
    %v5204 = vadd.f32 %v4433, %v5047
    %v5205 = vadd.f32 %v4434, %v5049
    %v5206 = vadd.f32 %v4435, %v5118
    %v5207 = vadd.f32 %v4436, %v5120
    %v5208 = vadd.f32 %v4437, %v5189
    %v5209 = vld [vmem:[%s57] sm:$0xff]
    %v5210 = vld [vmem:[%s57 + $0x8] sm:$0xff]
    %v5211 = vld [vmem:[%s57 + $0x10] sm:$0xff]
    %v5212 = vld [vmem:[%s57 + $0x18] sm:$0xff]
    %v5213 = vld [vmem:[%s57 + $0x20] sm:$0xff]
    %v5214 = vld [vmem:[%s57 + $0x28] sm:$0xff]
    %v5215 = vld [vmem:[%s57 + $0x30] sm:$0xff]
    %v5216 = vld [vmem:[%s57 + $0x38] sm:$0xff]
    %v5217 = vld [vmem:[%s57 + $0x40] sm:$0xf]
    %s5218 = scalar_lea.vmem %s1, 56
    %v5219 = vld [vmem:[%s5218] sm:$0xff]
    %v5229 = vcombine.high %v5209, %v5209
    %v5230 = vcombine.high %v5210, %v5210
    %v5231 = vcombine.high %v5211, %v5211
    %v5232 = vcombine.high %v5212, %v5212
    %v5233 = vcombine.high %v5213, %v5213
    %v5234 = vcombine.high %v5214, %v5214
    %v5235 = vcombine.high %v5215, %v5215
    %v5236 = vcombine.high %v5216, %v5216
    %5237 = vrot.lane.b32.xlu0 %v5209, 96
    %v5238 = vpop.permute.xlu0 %5237
    %5239 = vrot.lane.b32.xlu0 %v5229, 96
    %v5240 = vpop.permute.xlu0 %5239
    %5241 = vrot.lane.b32.xlu0 %v5210, 96
    %v5242 = vpop.permute.xlu0 %5241
    %5243 = vrot.lane.b32.xlu0 %v5230, 96
    %v5244 = vpop.permute.xlu0 %5243
    %5245 = vrot.lane.b32.xlu0 %v5211, 96
    %v5246 = vpop.permute.xlu0 %5245
    %5247 = vrot.lane.b32.xlu0 %v5231, 96
    %v5248 = vpop.permute.xlu0 %5247
    %5249 = vrot.lane.b32.xlu0 %v5212, 96
    %v5250 = vpop.permute.xlu0 %5249
    %5251 = vrot.lane.b32.xlu0 %v5232, 96
    %v5252 = vpop.permute.xlu0 %5251
    %5253 = vrot.lane.b32.xlu0 %v5213, 96
    %v5254 = vpop.permute.xlu0 %5253
    %5255 = vrot.lane.b32.xlu0 %v5233, 96
    %v5256 = vpop.permute.xlu0 %5255
    %5257 = vrot.lane.b32.xlu0 %v5214, 96
    %v5258 = vpop.permute.xlu0 %5257
    %5259 = vrot.lane.b32.xlu0 %v5234, 96
    %v5260 = vpop.permute.xlu0 %5259
    %5261 = vrot.lane.b32.xlu0 %v5215, 96
    %v5262 = vpop.permute.xlu0 %5261
    %5263 = vrot.lane.b32.xlu0 %v5235, 96
    %v5264 = vpop.permute.xlu0 %5263
    %5265 = vrot.lane.b32.xlu0 %v5216, 96
    %v5266 = vpop.permute.xlu0 %5265
    %5267 = vrot.lane.b32.xlu0 %v5236, 96
    %v5268 = vpop.permute.xlu0 %5267
    %5269 = vrot.lane.b32.xlu0 %v5217, 96
    %v5270 = vpop.permute.xlu0 %5269
    %v5271 = vsel %vm4500, %v5238, %v5240
    %v5272 = vsel %vm4500, %v5240, %v5242
    %v5273 = vsel %vm4500, %v5242, %v5244
    %v5274 = vsel %vm4500, %v5244, %v5246
    %v5275 = vsel %vm4500, %v5246, %v5248
    %v5276 = vsel %vm4500, %v5248, %v5250
    %v5277 = vsel %vm4500, %v5250, %v5252
    %v5278 = vsel %vm4500, %v5252, %v5254
    %v5279 = vsel %vm4500, %v5254, %v5256
    %v5280 = vsel %vm4500, %v5256, %v5258
    %v5281 = vsel %vm4500, %v5258, %v5260
    %v5282 = vsel %vm4500, %v5260, %v5262
    %v5283 = vsel %vm4500, %v5262, %v5264
    %v5284 = vsel %vm4500, %v5264, %v5266
    %v5285 = vsel %vm4500, %v5266, %v5268
    %v5286 = vsel %vm4500, %v5268, %v5270
    %v5288 = vsel %vm86, %v5219, 0
    %v5290 = vsel %vm90, %v5271, 0
    %v5292 = vsel %vm90, %v5272, 0
    %v5294 = vsel %vm90, %v5273, 0
    %v5296 = vsel %vm90, %v5274, 0
    %v5298 = vsel %vm90, %v5275, 0
    %v5300 = vsel %vm90, %v5276, 0
    %v5302 = vsel %vm90, %v5277, 0
    %v5304 = vsel %vm90, %v5278, 0
    %v5306 = vsel %vm90, %v5279, 0
    %v5308 = vsel %vm90, %v5280, 0
    %v5310 = vsel %vm90, %v5281, 0
    %v5312 = vsel %vm90, %v5282, 0
    %v5314 = vsel %vm90, %v5283, 0
    %v5316 = vsel %vm90, %v5284, 0
    %v5318 = vsel %vm90, %v5285, 0
    %v5320 = vsel %vm90, %v5286, 0
    %v5322 = vsel %vm90, %v5270, 0
    %5324 = vmatprep.subr.mxu0 %v5292
    %5325 = vmatpush1.msra.mxu0 %v5290
    %5326 = vmatprep.subr.mxu0 0.0
    %5327 = vmatpush1.msra.mxu0 0.0
    %5328 = vmatprep.subr.mxu0 0.0
    %5329 = vmatpush1.msra.mxu0 0.0
    %5330 = vmatprep.subr.mxu0 0.0
    %5331 = vmatpush1.msra.mxu0 0.0
    %5332 = vmatprep.subr.mxu0 0.0
    %5333 = vmatpush1.msra.mxu0 0.0
    %5334 = vmatprep.subr.mxu0 0.0
    %5335 = vmatpush1.msra.mxu0 0.0
    %5336 = vmatprep.subr.mxu0 0.0
    %5337 = vmatpush1.msra.mxu0 0.0
    %5338 = vmatprep.subr.mxu0 0.0
    %5339 = vmatpush1.msra.mxu0 0.0
    %5340 = vmatprep.subr.mxu0 0.0
    %5341 = vmatpush1.msra.mxu0 0.0
    %5342 = vmatprep.subr.mxu0 0.0
    %5343 = vmatpush1.msra.mxu0 0.0
    %5344 = vmatprep.subr.mxu0 0.0
    %5345 = vmatpush1.msra.mxu0 0.0
    %5346 = vmatprep.subr.mxu0 0.0
    %5347 = vmatpush1.msra.mxu0 0.0
    %5348 = vmatprep.subr.mxu0 0.0
    %5349 = vmatpush1.msra.mxu0 0.0
    %5350 = vmatprep.subr.mxu0 0.0
    %5351 = vmatpush1.msra.mxu0 0.0
    %5352 = vmatprep.subr.mxu0 0.0
    %5353 = vmatpush1.msra.mxu0 0.0
    %5354 = vmatprep.subr.mxu0 0.0
    %5355 = vmatpush1.msra.mxu0 0.0
    %5356 = vmatprep.subr.mxu0 0.0
    %5357 = vmatpush1.msra.mxu0 0.0
    %5358 = vmatprep.subr.mxu0 0.0
    %5359 = vmatpush1.msra.mxu0 0.0
    %5360 = vmatprep.subr.mxu0 0.0
    %5361 = vmatpush1.msra.mxu0 0.0
    %5362 = vmatprep.subr.mxu0 0.0
    %5363 = vmatpush1.msra.mxu0 0.0
    %5364 = vmatprep.subr.mxu0 0.0
    %5365 = vmatpush1.msra.mxu0 0.0
    %5366 = vmatprep.subr.mxu0 0.0
    %5367 = vmatpush1.msra.mxu0 0.0
    %5368 = vmatprep.subr.mxu0 0.0
    %5369 = vmatpush1.msra.mxu0 0.0
    %5370 = vmatprep.subr.mxu0 0.0
    %5371 = vmatpush1.msra.mxu0 0.0
    %5372 = vmatprep.subr.mxu0 0.0
    %5373 = vmatpush1.msra.mxu0 0.0
    %5374 = vmatprep.subr.mxu0 0.0
    %5375 = vmatpush1.msra.mxu0 0.0
    %5376 = vmatprep.subr.mxu0 0.0
    %5377 = vmatpush1.msra.mxu0 0.0
    %5378 = vmatprep.subr.mxu0 0.0
    %5379 = vmatpush1.msra.mxu0 0.0
    %5380 = vmatprep.subr.mxu0 0.0
    %5381 = vmatpush1.msra.mxu0 0.0
    %5382 = vmatprep.subr.mxu0 0.0
    %5383 = vmatpush1.msra.mxu0 0.0
    %5384 = vmatprep.subr.mxu0 0.0
    %5385 = vmatpush1.msra.mxu0 0.0
    %5386 = vmatprep.subr.mxu0 0.0
    %5387 = vmatpush1.msra.mxu0 0.0
    %5388 = vmatprep.mubr.f32.mxu0 0.0
    %5389 = vmatmul.mubr.f32.gmra.mrb[0].mxu0 %v5288
    %v5390 = vpop.f32.mrb[0].mxu0
    %v5391 = vadd.f32 0.0, %v5390
    %v5392 = vpop.f32.mrb[0].mxu0
    %v5393 = vadd.f32 0.0, %v5392
    %5394 = vdwg.mxu0
    %5395 = vmatprep.subr.mxu0 %v5296
    %5396 = vmatpush1.msra.mxu0 %v5294
    %5397 = vmatprep.subr.mxu0 0.0
    %5398 = vmatpush1.msra.mxu0 0.0
    %5399 = vmatprep.subr.mxu0 0.0
    %5400 = vmatpush1.msra.mxu0 0.0
    %5401 = vmatprep.subr.mxu0 0.0
    %5402 = vmatpush1.msra.mxu0 0.0
    %5403 = vmatprep.subr.mxu0 0.0
    %5404 = vmatpush1.msra.mxu0 0.0
    %5405 = vmatprep.subr.mxu0 0.0
    %5406 = vmatpush1.msra.mxu0 0.0
    %5407 = vmatprep.subr.mxu0 0.0
    %5408 = vmatpush1.msra.mxu0 0.0
    %5409 = vmatprep.subr.mxu0 0.0
    %5410 = vmatpush1.msra.mxu0 0.0
    %5411 = vmatprep.subr.mxu0 0.0
    %5412 = vmatpush1.msra.mxu0 0.0
    %5413 = vmatprep.subr.mxu0 0.0
    %5414 = vmatpush1.msra.mxu0 0.0
    %5415 = vmatprep.subr.mxu0 0.0
    %5416 = vmatpush1.msra.mxu0 0.0
    %5417 = vmatprep.subr.mxu0 0.0
    %5418 = vmatpush1.msra.mxu0 0.0
    %5419 = vmatprep.subr.mxu0 0.0
    %5420 = vmatpush1.msra.mxu0 0.0
    %5421 = vmatprep.subr.mxu0 0.0
    %5422 = vmatpush1.msra.mxu0 0.0
    %5423 = vmatprep.subr.mxu0 0.0
    %5424 = vmatpush1.msra.mxu0 0.0
    %5425 = vmatprep.subr.mxu0 0.0
    %5426 = vmatpush1.msra.mxu0 0.0
    %5427 = vmatprep.subr.mxu0 0.0
    %5428 = vmatpush1.msra.mxu0 0.0
    %5429 = vmatprep.subr.mxu0 0.0
    %5430 = vmatpush1.msra.mxu0 0.0
    %5431 = vmatprep.subr.mxu0 0.0
    %5432 = vmatpush1.msra.mxu0 0.0
    %5433 = vmatprep.subr.mxu0 0.0
    %5434 = vmatpush1.msra.mxu0 0.0
    %5435 = vmatprep.subr.mxu0 0.0
    %5436 = vmatpush1.msra.mxu0 0.0
    %5437 = vmatprep.subr.mxu0 0.0
    %5438 = vmatpush1.msra.mxu0 0.0
    %5439 = vmatprep.subr.mxu0 0.0
    %5440 = vmatpush1.msra.mxu0 0.0
    %5441 = vmatprep.subr.mxu0 0.0
    %5442 = vmatpush1.msra.mxu0 0.0
    %5443 = vmatprep.subr.mxu0 0.0
    %5444 = vmatpush1.msra.mxu0 0.0
    %5445 = vmatprep.subr.mxu0 0.0
    %5446 = vmatpush1.msra.mxu0 0.0
    %5447 = vmatprep.subr.mxu0 0.0
    %5448 = vmatpush1.msra.mxu0 0.0
    %5449 = vmatprep.subr.mxu0 0.0
    %5450 = vmatpush1.msra.mxu0 0.0
    %5451 = vmatprep.subr.mxu0 0.0
    %5452 = vmatpush1.msra.mxu0 0.0
    %5453 = vmatprep.subr.mxu0 0.0
    %5454 = vmatpush1.msra.mxu0 0.0
    %5455 = vmatprep.subr.mxu0 0.0
    %5456 = vmatpush1.msra.mxu0 0.0
    %5457 = vmatprep.subr.mxu0 0.0
    %5458 = vmatpush1.msra.mxu0 0.0
    %5459 = vmatprep.mubr.f32.mxu0 0.0
    %5460 = vmatmul.mubr.f32.gmra.mrb[0].mxu0 %v5288
    %v5461 = vpop.f32.mrb[0].mxu0
    %v5462 = vadd.f32 0.0, %v5461
    %v5463 = vpop.f32.mrb[0].mxu0
    %v5464 = vadd.f32 0.0, %v5463
    %5465 = vdwg.mxu0
    %5466 = vmatprep.subr.mxu0 %v5300
    %5467 = vmatpush1.msra.mxu0 %v5298
    %5468 = vmatprep.subr.mxu0 0.0
    %5469 = vmatpush1.msra.mxu0 0.0
    %5470 = vmatprep.subr.mxu0 0.0
    %5471 = vmatpush1.msra.mxu0 0.0
    %5472 = vmatprep.subr.mxu0 0.0
    %5473 = vmatpush1.msra.mxu0 0.0
    %5474 = vmatprep.subr.mxu0 0.0
    %5475 = vmatpush1.msra.mxu0 0.0
    %5476 = vmatprep.subr.mxu0 0.0
    %5477 = vmatpush1.msra.mxu0 0.0
    %5478 = vmatprep.subr.mxu0 0.0
    %5479 = vmatpush1.msra.mxu0 0.0
    %5480 = vmatprep.subr.mxu0 0.0
    %5481 = vmatpush1.msra.mxu0 0.0
    %5482 = vmatprep.subr.mxu0 0.0
    %5483 = vmatpush1.msra.mxu0 0.0
    %5484 = vmatprep.subr.mxu0 0.0
    %5485 = vmatpush1.msra.mxu0 0.0
    %5486 = vmatprep.subr.mxu0 0.0
    %5487 = vmatpush1.msra.mxu0 0.0
    %5488 = vmatprep.subr.mxu0 0.0
    %5489 = vmatpush1.msra.mxu0 0.0
    %5490 = vmatprep.subr.mxu0 0.0
    %5491 = vmatpush1.msra.mxu0 0.0
    %5492 = vmatprep.subr.mxu0 0.0
    %5493 = vmatpush1.msra.mxu0 0.0
    %5494 = vmatprep.subr.mxu0 0.0
    %5495 = vmatpush1.msra.mxu0 0.0
    %5496 = vmatprep.subr.mxu0 0.0
    %5497 = vmatpush1.msra.mxu0 0.0
    %5498 = vmatprep.subr.mxu0 0.0
    %5499 = vmatpush1.msra.mxu0 0.0
    %5500 = vmatprep.subr.mxu0 0.0
    %5501 = vmatpush1.msra.mxu0 0.0
    %5502 = vmatprep.subr.mxu0 0.0
    %5503 = vmatpush1.msra.mxu0 0.0
    %5504 = vmatprep.subr.mxu0 0.0
    %5505 = vmatpush1.msra.mxu0 0.0
    %5506 = vmatprep.subr.mxu0 0.0
    %5507 = vmatpush1.msra.mxu0 0.0
    %5508 = vmatprep.subr.mxu0 0.0
    %5509 = vmatpush1.msra.mxu0 0.0
    %5510 = vmatprep.subr.mxu0 0.0
    %5511 = vmatpush1.msra.mxu0 0.0
    %5512 = vmatprep.subr.mxu0 0.0
    %5513 = vmatpush1.msra.mxu0 0.0
    %5514 = vmatprep.subr.mxu0 0.0
    %5515 = vmatpush1.msra.mxu0 0.0
    %5516 = vmatprep.subr.mxu0 0.0
    %5517 = vmatpush1.msra.mxu0 0.0
    %5518 = vmatprep.subr.mxu0 0.0
    %5519 = vmatpush1.msra.mxu0 0.0
    %5520 = vmatprep.subr.mxu0 0.0
    %5521 = vmatpush1.msra.mxu0 0.0
    %5522 = vmatprep.subr.mxu0 0.0
    %5523 = vmatpush1.msra.mxu0 0.0
    %5524 = vmatprep.subr.mxu0 0.0
    %5525 = vmatpush1.msra.mxu0 0.0
    %5526 = vmatprep.subr.mxu0 0.0
    %5527 = vmatpush1.msra.mxu0 0.0
    %5528 = vmatprep.subr.mxu0 0.0
    %5529 = vmatpush1.msra.mxu0 0.0
    %5530 = vmatprep.mubr.f32.mxu0 0.0
    %5531 = vmatmul.mubr.f32.gmra.mrb[0].mxu0 %v5288
    %v5532 = vpop.f32.mrb[0].mxu0
    %v5533 = vadd.f32 0.0, %v5532
    %v5534 = vpop.f32.mrb[0].mxu0
    %v5535 = vadd.f32 0.0, %v5534
    %5536 = vdwg.mxu0
    %5537 = vmatprep.subr.mxu0 %v5304
    %5538 = vmatpush1.msra.mxu0 %v5302
    %5539 = vmatprep.subr.mxu0 0.0
    %5540 = vmatpush1.msra.mxu0 0.0
    %5541 = vmatprep.subr.mxu0 0.0
    %5542 = vmatpush1.msra.mxu0 0.0
    %5543 = vmatprep.subr.mxu0 0.0
    %5544 = vmatpush1.msra.mxu0 0.0
    %5545 = vmatprep.subr.mxu0 0.0
    %5546 = vmatpush1.msra.mxu0 0.0
    %5547 = vmatprep.subr.mxu0 0.0
    %5548 = vmatpush1.msra.mxu0 0.0
    %5549 = vmatprep.subr.mxu0 0.0
    %5550 = vmatpush1.msra.mxu0 0.0
    %5551 = vmatprep.subr.mxu0 0.0
    %5552 = vmatpush1.msra.mxu0 0.0
    %5553 = vmatprep.subr.mxu0 0.0
    %5554 = vmatpush1.msra.mxu0 0.0
    %5555 = vmatprep.subr.mxu0 0.0
    %5556 = vmatpush1.msra.mxu0 0.0
    %5557 = vmatprep.subr.mxu0 0.0
    %5558 = vmatpush1.msra.mxu0 0.0
    %5559 = vmatprep.subr.mxu0 0.0
    %5560 = vmatpush1.msra.mxu0 0.0
    %5561 = vmatprep.subr.mxu0 0.0
    %5562 = vmatpush1.msra.mxu0 0.0
    %5563 = vmatprep.subr.mxu0 0.0
    %5564 = vmatpush1.msra.mxu0 0.0
    %5565 = vmatprep.subr.mxu0 0.0
    %5566 = vmatpush1.msra.mxu0 0.0
    %5567 = vmatprep.subr.mxu0 0.0
    %5568 = vmatpush1.msra.mxu0 0.0
    %5569 = vmatprep.subr.mxu0 0.0
    %5570 = vmatpush1.msra.mxu0 0.0
    %5571 = vmatprep.subr.mxu0 0.0
    %5572 = vmatpush1.msra.mxu0 0.0
    %5573 = vmatprep.subr.mxu0 0.0
    %5574 = vmatpush1.msra.mxu0 0.0
    %5575 = vmatprep.subr.mxu0 0.0
    %5576 = vmatpush1.msra.mxu0 0.0
    %5577 = vmatprep.subr.mxu0 0.0
    %5578 = vmatpush1.msra.mxu0 0.0
    %5579 = vmatprep.subr.mxu0 0.0
    %5580 = vmatpush1.msra.mxu0 0.0
    %5581 = vmatprep.subr.mxu0 0.0
    %5582 = vmatpush1.msra.mxu0 0.0
    %5583 = vmatprep.subr.mxu0 0.0
    %5584 = vmatpush1.msra.mxu0 0.0
    %5585 = vmatprep.subr.mxu0 0.0
    %5586 = vmatpush1.msra.mxu0 0.0
    %5587 = vmatprep.subr.mxu0 0.0
    %5588 = vmatpush1.msra.mxu0 0.0
    %5589 = vmatprep.subr.mxu0 0.0
    %5590 = vmatpush1.msra.mxu0 0.0
    %5591 = vmatprep.subr.mxu0 0.0
    %5592 = vmatpush1.msra.mxu0 0.0
    %5593 = vmatprep.subr.mxu0 0.0
    %5594 = vmatpush1.msra.mxu0 0.0
    %5595 = vmatprep.subr.mxu0 0.0
    %5596 = vmatpush1.msra.mxu0 0.0
    %5597 = vmatprep.subr.mxu0 0.0
    %5598 = vmatpush1.msra.mxu0 0.0
    %5599 = vmatprep.subr.mxu0 0.0
    %5600 = vmatpush1.msra.mxu0 0.0
    %5601 = vmatprep.mubr.f32.mxu0 0.0
    %5602 = vmatmul.mubr.f32.gmra.mrb[0].mxu0 %v5288
    %v5603 = vpop.f32.mrb[0].mxu0
    %v5604 = vadd.f32 0.0, %v5603
    %v5605 = vpop.f32.mrb[0].mxu0
    %v5606 = vadd.f32 0.0, %v5605
    %5607 = vdwg.mxu0
    %5608 = vmatprep.subr.mxu0 %v5308
    %5609 = vmatpush1.msra.mxu0 %v5306
    %5610 = vmatprep.subr.mxu0 0.0
    %5611 = vmatpush1.msra.mxu0 0.0
    %5612 = vmatprep.subr.mxu0 0.0
    %5613 = vmatpush1.msra.mxu0 0.0
    %5614 = vmatprep.subr.mxu0 0.0
    %5615 = vmatpush1.msra.mxu0 0.0
    %5616 = vmatprep.subr.mxu0 0.0
    %5617 = vmatpush1.msra.mxu0 0.0
    %5618 = vmatprep.subr.mxu0 0.0
    %5619 = vmatpush1.msra.mxu0 0.0
    %5620 = vmatprep.subr.mxu0 0.0
    %5621 = vmatpush1.msra.mxu0 0.0
    %5622 = vmatprep.subr.mxu0 0.0
    %5623 = vmatpush1.msra.mxu0 0.0
    %5624 = vmatprep.subr.mxu0 0.0
    %5625 = vmatpush1.msra.mxu0 0.0
    %5626 = vmatprep.subr.mxu0 0.0
    %5627 = vmatpush1.msra.mxu0 0.0
    %5628 = vmatprep.subr.mxu0 0.0
    %5629 = vmatpush1.msra.mxu0 0.0
    %5630 = vmatprep.subr.mxu0 0.0
    %5631 = vmatpush1.msra.mxu0 0.0
    %5632 = vmatprep.subr.mxu0 0.0
    %5633 = vmatpush1.msra.mxu0 0.0
    %5634 = vmatprep.subr.mxu0 0.0
    %5635 = vmatpush1.msra.mxu0 0.0
    %5636 = vmatprep.subr.mxu0 0.0
    %5637 = vmatpush1.msra.mxu0 0.0
    %5638 = vmatprep.subr.mxu0 0.0
    %5639 = vmatpush1.msra.mxu0 0.0
    %5640 = vmatprep.subr.mxu0 0.0
    %5641 = vmatpush1.msra.mxu0 0.0
    %5642 = vmatprep.subr.mxu0 0.0
    %5643 = vmatpush1.msra.mxu0 0.0
    %5644 = vmatprep.subr.mxu0 0.0
    %5645 = vmatpush1.msra.mxu0 0.0
    %5646 = vmatprep.subr.mxu0 0.0
    %5647 = vmatpush1.msra.mxu0 0.0
    %5648 = vmatprep.subr.mxu0 0.0
    %5649 = vmatpush1.msra.mxu0 0.0
    %5650 = vmatprep.subr.mxu0 0.0
    %5651 = vmatpush1.msra.mxu0 0.0
    %5652 = vmatprep.subr.mxu0 0.0
    %5653 = vmatpush1.msra.mxu0 0.0
    %5654 = vmatprep.subr.mxu0 0.0
    %5655 = vmatpush1.msra.mxu0 0.0
    %5656 = vmatprep.subr.mxu0 0.0
    %5657 = vmatpush1.msra.mxu0 0.0
    %5658 = vmatprep.subr.mxu0 0.0
    %5659 = vmatpush1.msra.mxu0 0.0
    %5660 = vmatprep.subr.mxu0 0.0
    %5661 = vmatpush1.msra.mxu0 0.0
    %5662 = vmatprep.subr.mxu0 0.0
    %5663 = vmatpush1.msra.mxu0 0.0
    %5664 = vmatprep.subr.mxu0 0.0
    %5665 = vmatpush1.msra.mxu0 0.0
    %5666 = vmatprep.subr.mxu0 0.0
    %5667 = vmatpush1.msra.mxu0 0.0
    %5668 = vmatprep.subr.mxu0 0.0
    %5669 = vmatpush1.msra.mxu0 0.0
    %5670 = vmatprep.subr.mxu0 0.0
    %5671 = vmatpush1.msra.mxu0 0.0
    %5672 = vmatprep.mubr.f32.mxu0 0.0
    %5673 = vmatmul.mubr.f32.gmra.mrb[0].mxu0 %v5288
    %v5674 = vpop.f32.mrb[0].mxu0
    %v5675 = vadd.f32 0.0, %v5674
    %v5676 = vpop.f32.mrb[0].mxu0
    %v5677 = vadd.f32 0.0, %v5676
    %5678 = vdwg.mxu0
    %5679 = vmatprep.subr.mxu0 %v5312
    %5680 = vmatpush1.msra.mxu0 %v5310
    %5681 = vmatprep.subr.mxu0 0.0
    %5682 = vmatpush1.msra.mxu0 0.0
    %5683 = vmatprep.subr.mxu0 0.0
    %5684 = vmatpush1.msra.mxu0 0.0
    %5685 = vmatprep.subr.mxu0 0.0
    %5686 = vmatpush1.msra.mxu0 0.0
    %5687 = vmatprep.subr.mxu0 0.0
    %5688 = vmatpush1.msra.mxu0 0.0
    %5689 = vmatprep.subr.mxu0 0.0
    %5690 = vmatpush1.msra.mxu0 0.0
    %5691 = vmatprep.subr.mxu0 0.0
    %5692 = vmatpush1.msra.mxu0 0.0
    %5693 = vmatprep.subr.mxu0 0.0
    %5694 = vmatpush1.msra.mxu0 0.0
    %5695 = vmatprep.subr.mxu0 0.0
    %5696 = vmatpush1.msra.mxu0 0.0
    %5697 = vmatprep.subr.mxu0 0.0
    %5698 = vmatpush1.msra.mxu0 0.0
    %5699 = vmatprep.subr.mxu0 0.0
    %5700 = vmatpush1.msra.mxu0 0.0
    %5701 = vmatprep.subr.mxu0 0.0
    %5702 = vmatpush1.msra.mxu0 0.0
    %5703 = vmatprep.subr.mxu0 0.0
    %5704 = vmatpush1.msra.mxu0 0.0
    %5705 = vmatprep.subr.mxu0 0.0
    %5706 = vmatpush1.msra.mxu0 0.0
    %5707 = vmatprep.subr.mxu0 0.0
    %5708 = vmatpush1.msra.mxu0 0.0
    %5709 = vmatprep.subr.mxu0 0.0
    %5710 = vmatpush1.msra.mxu0 0.0
    %5711 = vmatprep.subr.mxu0 0.0
    %5712 = vmatpush1.msra.mxu0 0.0
    %5713 = vmatprep.subr.mxu0 0.0
    %5714 = vmatpush1.msra.mxu0 0.0
    %5715 = vmatprep.subr.mxu0 0.0
    %5716 = vmatpush1.msra.mxu0 0.0
    %5717 = vmatprep.subr.mxu0 0.0
    %5718 = vmatpush1.msra.mxu0 0.0
    %5719 = vmatprep.subr.mxu0 0.0
    %5720 = vmatpush1.msra.mxu0 0.0
    %5721 = vmatprep.subr.mxu0 0.0
    %5722 = vmatpush1.msra.mxu0 0.0
    %5723 = vmatprep.subr.mxu0 0.0
    %5724 = vmatpush1.msra.mxu0 0.0
    %5725 = vmatprep.subr.mxu0 0.0
    %5726 = vmatpush1.msra.mxu0 0.0
    %5727 = vmatprep.subr.mxu0 0.0
    %5728 = vmatpush1.msra.mxu0 0.0
    %5729 = vmatprep.subr.mxu0 0.0
    %5730 = vmatpush1.msra.mxu0 0.0
    %5731 = vmatprep.subr.mxu0 0.0
    %5732 = vmatpush1.msra.mxu0 0.0
    %5733 = vmatprep.subr.mxu0 0.0
    %5734 = vmatpush1.msra.mxu0 0.0
    %5735 = vmatprep.subr.mxu0 0.0
    %5736 = vmatpush1.msra.mxu0 0.0
    %5737 = vmatprep.subr.mxu0 0.0
    %5738 = vmatpush1.msra.mxu0 0.0
    %5739 = vmatprep.subr.mxu0 0.0
    %5740 = vmatpush1.msra.mxu0 0.0
    %5741 = vmatprep.subr.mxu0 0.0
    %5742 = vmatpush1.msra.mxu0 0.0
    %5743 = vmatprep.mubr.f32.mxu0 0.0
    %5744 = vmatmul.mubr.f32.gmra.mrb[0].mxu0 %v5288
    %v5745 = vpop.f32.mrb[0].mxu0
    %v5746 = vadd.f32 0.0, %v5745
    %v5747 = vpop.f32.mrb[0].mxu0
    %v5748 = vadd.f32 0.0, %v5747
    %5749 = vdwg.mxu0
    %5750 = vmatprep.subr.mxu0 %v5316
    %5751 = vmatpush1.msra.mxu0 %v5314
    %5752 = vmatprep.subr.mxu0 0.0
    %5753 = vmatpush1.msra.mxu0 0.0
    %5754 = vmatprep.subr.mxu0 0.0
    %5755 = vmatpush1.msra.mxu0 0.0
    %5756 = vmatprep.subr.mxu0 0.0
    %5757 = vmatpush1.msra.mxu0 0.0
    %5758 = vmatprep.subr.mxu0 0.0
    %5759 = vmatpush1.msra.mxu0 0.0
    %5760 = vmatprep.subr.mxu0 0.0
    %5761 = vmatpush1.msra.mxu0 0.0
    %5762 = vmatprep.subr.mxu0 0.0
    %5763 = vmatpush1.msra.mxu0 0.0
    %5764 = vmatprep.subr.mxu0 0.0
    %5765 = vmatpush1.msra.mxu0 0.0
    %5766 = vmatprep.subr.mxu0 0.0
    %5767 = vmatpush1.msra.mxu0 0.0
    %5768 = vmatprep.subr.mxu0 0.0
    %5769 = vmatpush1.msra.mxu0 0.0
    %5770 = vmatprep.subr.mxu0 0.0
    %5771 = vmatpush1.msra.mxu0 0.0
    %5772 = vmatprep.subr.mxu0 0.0
    %5773 = vmatpush1.msra.mxu0 0.0
    %5774 = vmatprep.subr.mxu0 0.0
    %5775 = vmatpush1.msra.mxu0 0.0
    %5776 = vmatprep.subr.mxu0 0.0
    %5777 = vmatpush1.msra.mxu0 0.0
    %5778 = vmatprep.subr.mxu0 0.0
    %5779 = vmatpush1.msra.mxu0 0.0
    %5780 = vmatprep.subr.mxu0 0.0
    %5781 = vmatpush1.msra.mxu0 0.0
    %5782 = vmatprep.subr.mxu0 0.0
    %5783 = vmatpush1.msra.mxu0 0.0
    %5784 = vmatprep.subr.mxu0 0.0
    %5785 = vmatpush1.msra.mxu0 0.0
    %5786 = vmatprep.subr.mxu0 0.0
    %5787 = vmatpush1.msra.mxu0 0.0
    %5788 = vmatprep.subr.mxu0 0.0
    %5789 = vmatpush1.msra.mxu0 0.0
    %5790 = vmatprep.subr.mxu0 0.0
    %5791 = vmatpush1.msra.mxu0 0.0
    %5792 = vmatprep.subr.mxu0 0.0
    %5793 = vmatpush1.msra.mxu0 0.0
    %5794 = vmatprep.subr.mxu0 0.0
    %5795 = vmatpush1.msra.mxu0 0.0
    %5796 = vmatprep.subr.mxu0 0.0
    %5797 = vmatpush1.msra.mxu0 0.0
    %5798 = vmatprep.subr.mxu0 0.0
    %5799 = vmatpush1.msra.mxu0 0.0
    %5800 = vmatprep.subr.mxu0 0.0
    %5801 = vmatpush1.msra.mxu0 0.0
    %5802 = vmatprep.subr.mxu0 0.0
    %5803 = vmatpush1.msra.mxu0 0.0
    %5804 = vmatprep.subr.mxu0 0.0
    %5805 = vmatpush1.msra.mxu0 0.0
    %5806 = vmatprep.subr.mxu0 0.0
    %5807 = vmatpush1.msra.mxu0 0.0
    %5808 = vmatprep.subr.mxu0 0.0
    %5809 = vmatpush1.msra.mxu0 0.0
    %5810 = vmatprep.subr.mxu0 0.0
    %5811 = vmatpush1.msra.mxu0 0.0
    %5812 = vmatprep.subr.mxu0 0.0
    %5813 = vmatpush1.msra.mxu0 0.0
    %5814 = vmatprep.mubr.f32.mxu0 0.0
    %5815 = vmatmul.mubr.f32.gmra.mrb[0].mxu0 %v5288
    %v5816 = vpop.f32.mrb[0].mxu0
    %v5817 = vadd.f32 0.0, %v5816
    %v5818 = vpop.f32.mrb[0].mxu0
    %v5819 = vadd.f32 0.0, %v5818
    %5820 = vdwg.mxu0
    %5821 = vmatprep.subr.mxu0 %v5320
    %5822 = vmatpush1.msra.mxu0 %v5318
    %5823 = vmatprep.subr.mxu0 0.0
    %5824 = vmatpush1.msra.mxu0 0.0
    %5825 = vmatprep.subr.mxu0 0.0
    %5826 = vmatpush1.msra.mxu0 0.0
    %5827 = vmatprep.subr.mxu0 0.0
    %5828 = vmatpush1.msra.mxu0 0.0
    %5829 = vmatprep.subr.mxu0 0.0
    %5830 = vmatpush1.msra.mxu0 0.0
    %5831 = vmatprep.subr.mxu0 0.0
    %5832 = vmatpush1.msra.mxu0 0.0
    %5833 = vmatprep.subr.mxu0 0.0
    %5834 = vmatpush1.msra.mxu0 0.0
    %5835 = vmatprep.subr.mxu0 0.0
    %5836 = vmatpush1.msra.mxu0 0.0
    %5837 = vmatprep.subr.mxu0 0.0
    %5838 = vmatpush1.msra.mxu0 0.0
    %5839 = vmatprep.subr.mxu0 0.0
    %5840 = vmatpush1.msra.mxu0 0.0
    %5841 = vmatprep.subr.mxu0 0.0
    %5842 = vmatpush1.msra.mxu0 0.0
    %5843 = vmatprep.subr.mxu0 0.0
    %5844 = vmatpush1.msra.mxu0 0.0
    %5845 = vmatprep.subr.mxu0 0.0
    %5846 = vmatpush1.msra.mxu0 0.0
    %5847 = vmatprep.subr.mxu0 0.0
    %5848 = vmatpush1.msra.mxu0 0.0
    %5849 = vmatprep.subr.mxu0 0.0
    %5850 = vmatpush1.msra.mxu0 0.0
    %5851 = vmatprep.subr.mxu0 0.0
    %5852 = vmatpush1.msra.mxu0 0.0
    %5853 = vmatprep.subr.mxu0 0.0
    %5854 = vmatpush1.msra.mxu0 0.0
    %5855 = vmatprep.subr.mxu0 0.0
    %5856 = vmatpush1.msra.mxu0 0.0
    %5857 = vmatprep.subr.mxu0 0.0
    %5858 = vmatpush1.msra.mxu0 0.0
    %5859 = vmatprep.subr.mxu0 0.0
    %5860 = vmatpush1.msra.mxu0 0.0
    %5861 = vmatprep.subr.mxu0 0.0
    %5862 = vmatpush1.msra.mxu0 0.0
    %5863 = vmatprep.subr.mxu0 0.0
    %5864 = vmatpush1.msra.mxu0 0.0
    %5865 = vmatprep.subr.mxu0 0.0
    %5866 = vmatpush1.msra.mxu0 0.0
    %5867 = vmatprep.subr.mxu0 0.0
    %5868 = vmatpush1.msra.mxu0 0.0
    %5869 = vmatprep.subr.mxu0 0.0
    %5870 = vmatpush1.msra.mxu0 0.0
    %5871 = vmatprep.subr.mxu0 0.0
    %5872 = vmatpush1.msra.mxu0 0.0
    %5873 = vmatprep.subr.mxu0 0.0
    %5874 = vmatpush1.msra.mxu0 0.0
    %5875 = vmatprep.subr.mxu0 0.0
    %5876 = vmatpush1.msra.mxu0 0.0
    %5877 = vmatprep.subr.mxu0 0.0
    %5878 = vmatpush1.msra.mxu0 0.0
    %5879 = vmatprep.subr.mxu0 0.0
    %5880 = vmatpush1.msra.mxu0 0.0
    %5881 = vmatprep.subr.mxu0 0.0
    %5882 = vmatpush1.msra.mxu0 0.0
    %5883 = vmatprep.subr.mxu0 0.0
    %5884 = vmatpush1.msra.mxu0 0.0
    %5885 = vmatprep.mubr.f32.mxu0 0.0
    %5886 = vmatmul.mubr.f32.gmra.mrb[0].mxu0 %v5288
    %v5887 = vpop.f32.mrb[0].mxu0
    %v5888 = vadd.f32 0.0, %v5887
    %v5889 = vpop.f32.mrb[0].mxu0
    %v5890 = vadd.f32 0.0, %v5889
    %5891 = vdwg.mxu0
    %5892 = vmatprep.subr.mxu0 0.0
    %5893 = vmatpush1.msra.mxu0 %v5322
    %5894 = vmatprep.subr.mxu0 0.0
    %5895 = vmatpush1.msra.mxu0 0.0
    %5896 = vmatprep.subr.mxu0 0.0
    %5897 = vmatpush1.msra.mxu0 0.0
    %5898 = vmatprep.subr.mxu0 0.0
    %5899 = vmatpush1.msra.mxu0 0.0
    %5900 = vmatprep.subr.mxu0 0.0
    %5901 = vmatpush1.msra.mxu0 0.0
    %5902 = vmatprep.subr.mxu0 0.0
    %5903 = vmatpush1.msra.mxu0 0.0
    %5904 = vmatprep.subr.mxu0 0.0
    %5905 = vmatpush1.msra.mxu0 0.0
    %5906 = vmatprep.subr.mxu0 0.0
    %5907 = vmatpush1.msra.mxu0 0.0
    %5908 = vmatprep.subr.mxu0 0.0
    %5909 = vmatpush1.msra.mxu0 0.0
    %5910 = vmatprep.subr.mxu0 0.0
    %5911 = vmatpush1.msra.mxu0 0.0
    %5912 = vmatprep.subr.mxu0 0.0
    %5913 = vmatpush1.msra.mxu0 0.0
    %5914 = vmatprep.subr.mxu0 0.0
    %5915 = vmatpush1.msra.mxu0 0.0
    %5916 = vmatprep.subr.mxu0 0.0
    %5917 = vmatpush1.msra.mxu0 0.0
    %5918 = vmatprep.subr.mxu0 0.0
    %5919 = vmatpush1.msra.mxu0 0.0
    %5920 = vmatprep.subr.mxu0 0.0
    %5921 = vmatpush1.msra.mxu0 0.0
    %5922 = vmatprep.subr.mxu0 0.0
    %5923 = vmatpush1.msra.mxu0 0.0
    %5924 = vmatprep.subr.mxu0 0.0
    %5925 = vmatpush1.msra.mxu0 0.0
    %5926 = vmatprep.subr.mxu0 0.0
    %5927 = vmatpush1.msra.mxu0 0.0
    %5928 = vmatprep.subr.mxu0 0.0
    %5929 = vmatpush1.msra.mxu0 0.0
    %5930 = vmatprep.subr.mxu0 0.0
    %5931 = vmatpush1.msra.mxu0 0.0
    %5932 = vmatprep.subr.mxu0 0.0
    %5933 = vmatpush1.msra.mxu0 0.0
    %5934 = vmatprep.subr.mxu0 0.0
    %5935 = vmatpush1.msra.mxu0 0.0
    %5936 = vmatprep.subr.mxu0 0.0
    %5937 = vmatpush1.msra.mxu0 0.0
    %5938 = vmatprep.subr.mxu0 0.0
    %5939 = vmatpush1.msra.mxu0 0.0
    %5940 = vmatprep.subr.mxu0 0.0
    %5941 = vmatpush1.msra.mxu0 0.0
    %5942 = vmatprep.subr.mxu0 0.0
    %5943 = vmatpush1.msra.mxu0 0.0
    %5944 = vmatprep.subr.mxu0 0.0
    %5945 = vmatpush1.msra.mxu0 0.0
    %5946 = vmatprep.subr.mxu0 0.0
    %5947 = vmatpush1.msra.mxu0 0.0
    %5948 = vmatprep.subr.mxu0 0.0
    %5949 = vmatpush1.msra.mxu0 0.0
    %5950 = vmatprep.subr.mxu0 0.0
    %5951 = vmatpush1.msra.mxu0 0.0
    %5952 = vmatprep.subr.mxu0 0.0
    %5953 = vmatpush1.msra.mxu0 0.0
    %5954 = vmatprep.subr.mxu0 0.0
    %5955 = vmatpush1.msra.mxu0 0.0
    %5956 = vmatprep.mubr.f32.mxu0 0.0
    %5957 = vmatmul.mubr.f32.gmra.mrb[0].mxu0 %v5288
    %v5958 = vpop.f32.mrb[0].mxu0
    %v5959 = vadd.f32 0.0, %v5958
    %v5960 = vpop.f32.mrb[0].mxu0
    %5961 = vdwg.mxu0
    %v5962 = vadd.f32 %v5192, %v5391
    %v5963 = vadd.f32 %v5193, %v5393
    %v5964 = vadd.f32 %v5194, %v5462
    %v5965 = vadd.f32 %v5195, %v5464
    %v5966 = vadd.f32 %v5196, %v5533
    %v5967 = vadd.f32 %v5197, %v5535
    %v5968 = vadd.f32 %v5198, %v5604
    %v5969 = vadd.f32 %v5199, %v5606
    %v5970 = vadd.f32 %v5200, %v5675
    %v5971 = vadd.f32 %v5201, %v5677
    %v5972 = vadd.f32 %v5202, %v5746
    %v5973 = vadd.f32 %v5203, %v5748
    %v5974 = vadd.f32 %v5204, %v5817
    %v5975 = vadd.f32 %v5205, %v5819
    %v5976 = vadd.f32 %v5206, %v5888
    %v5977 = vadd.f32 %v5207, %v5890
    %v5978 = vadd.f32 %v5208, %v5959
    %v5979 = vld [vmem:[#allocation2] sm:$0xff]
    %v5980 = vld [vmem:[#allocation2 + $0x8] sm:$0xff]
    %v5981 = vld [vmem:[#allocation2 + $0x10] sm:$0xff]
    %v5982 = vld [vmem:[#allocation2 + $0x18] sm:$0xff]
    %v5983 = vld [vmem:[#allocation2 + $0x20] sm:$0xff]
    %v5984 = vld [vmem:[#allocation2 + $0x28] sm:$0xff]
    %v5985 = vld [vmem:[#allocation2 + $0x30] sm:$0xff]
    %v5986 = vld [vmem:[#allocation2 + $0x38] sm:$0xff]
    %v5987 = vld [vmem:[#allocation2 + $0x40] sm:$0xf]
    %s5988 = scalar_lea.vmem %s1, 64
    %v5989 = vld [vmem:[%s5988] sm:$0xff]
    %v5999 = vcombine.high %v5979, %v5979
    %v6000 = vcombine.high %v5980, %v5980
    %v6001 = vcombine.high %v5981, %v5981
    %v6002 = vcombine.high %v5982, %v5982
    %v6003 = vcombine.high %v5983, %v5983
    %v6004 = vcombine.high %v5984, %v5984
    %v6005 = vcombine.high %v5985, %v5985
    %v6006 = vcombine.high %v5986, %v5986
    %6007 = vrot.lane.b32.xlu0 %v5979, 95
    %v6008 = vpop.permute.xlu0 %6007
    %6009 = vrot.lane.b32.xlu0 %v5999, 95
    %v6010 = vpop.permute.xlu0 %6009
    %6011 = vrot.lane.b32.xlu0 %v5980, 95
    %v6012 = vpop.permute.xlu0 %6011
    %6013 = vrot.lane.b32.xlu0 %v6000, 95
    %v6014 = vpop.permute.xlu0 %6013
    %6015 = vrot.lane.b32.xlu0 %v5981, 95
    %v6016 = vpop.permute.xlu0 %6015
    %6017 = vrot.lane.b32.xlu0 %v6001, 95
    %v6018 = vpop.permute.xlu0 %6017
    %6019 = vrot.lane.b32.xlu0 %v5982, 95
    %v6020 = vpop.permute.xlu0 %6019
    %6021 = vrot.lane.b32.xlu0 %v6002, 95
    %v6022 = vpop.permute.xlu0 %6021
    %6023 = vrot.lane.b32.xlu0 %v5983, 95
    %v6024 = vpop.permute.xlu0 %6023
    %6025 = vrot.lane.b32.xlu0 %v6003, 95
    %v6026 = vpop.permute.xlu0 %6025
    %6027 = vrot.lane.b32.xlu0 %v5984, 95
    %v6028 = vpop.permute.xlu0 %6027
    %6029 = vrot.lane.b32.xlu0 %v6004, 95
    %v6030 = vpop.permute.xlu0 %6029
    %6031 = vrot.lane.b32.xlu0 %v5985, 95
    %v6032 = vpop.permute.xlu0 %6031
    %6033 = vrot.lane.b32.xlu0 %v6005, 95
    %v6034 = vpop.permute.xlu0 %6033
    %6035 = vrot.lane.b32.xlu0 %v5986, 95
    %v6036 = vpop.permute.xlu0 %6035
    %6037 = vrot.lane.b32.xlu0 %v6006, 95
    %v6038 = vpop.permute.xlu0 %6037
    %6039 = vrot.lane.b32.xlu0 %v5987, 95
    %v6040 = vpop.permute.xlu0 %6039
    %vm6041 = vcmask 777216
    %v6042 = vsel %vm6041, %v6008, %v6010
    %v6043 = vsel %vm6041, %v6010, %v6012
    %v6044 = vsel %vm6041, %v6012, %v6014
    %v6045 = vsel %vm6041, %v6014, %v6016
    %v6046 = vsel %vm6041, %v6016, %v6018
    %v6047 = vsel %vm6041, %v6018, %v6020
    %v6048 = vsel %vm6041, %v6020, %v6022
    %v6049 = vsel %vm6041, %v6022, %v6024
    %v6050 = vsel %vm6041, %v6024, %v6026
    %v6051 = vsel %vm6041, %v6026, %v6028
    %v6052 = vsel %vm6041, %v6028, %v6030
    %v6053 = vsel %vm6041, %v6030, %v6032
    %v6054 = vsel %vm6041, %v6032, %v6034
    %v6055 = vsel %vm6041, %v6034, %v6036
    %v6056 = vsel %vm6041, %v6036, %v6038
    %v6057 = vsel %vm6041, %v6038, %v6040
    %v6059 = vsel %vm86, %v5989, 0
    %v6061 = vsel %vm90, %v6042, 0
    %v6063 = vsel %vm90, %v6043, 0
    %v6065 = vsel %vm90, %v6044, 0
    %v6067 = vsel %vm90, %v6045, 0
    %v6069 = vsel %vm90, %v6046, 0
    %v6071 = vsel %vm90, %v6047, 0
    %v6073 = vsel %vm90, %v6048, 0
    %v6075 = vsel %vm90, %v6049, 0
    %v6077 = vsel %vm90, %v6050, 0
    %v6079 = vsel %vm90, %v6051, 0
    %v6081 = vsel %vm90, %v6052, 0
    %v6083 = vsel %vm90, %v6053, 0
    %v6085 = vsel %vm90, %v6054, 0
    %v6087 = vsel %vm90, %v6055, 0
    %v6089 = vsel %vm90, %v6056, 0
    %v6091 = vsel %vm90, %v6057, 0
    %v6093 = vsel %vm90, %v6040, 0
    %6095 = vmatprep.subr.mxu0 %v6063
    %6096 = vmatpush1.msra.mxu0 %v6061
    %6097 = vmatprep.subr.mxu0 0.0
    %6098 = vmatpush1.msra.mxu0 0.0
    %6099 = vmatprep.subr.mxu0 0.0
    %6100 = vmatpush1.msra.mxu0 0.0
    %6101 = vmatprep.subr.mxu0 0.0
    %6102 = vmatpush1.msra.mxu0 0.0
    %6103 = vmatprep.subr.mxu0 0.0
    %6104 = vmatpush1.msra.mxu0 0.0
    %6105 = vmatprep.subr.mxu0 0.0
    %6106 = vmatpush1.msra.mxu0 0.0
    %6107 = vmatprep.subr.mxu0 0.0
    %6108 = vmatpush1.msra.mxu0 0.0
    %6109 = vmatprep.subr.mxu0 0.0
    %6110 = vmatpush1.msra.mxu0 0.0
    %6111 = vmatprep.subr.mxu0 0.0
    %6112 = vmatpush1.msra.mxu0 0.0
    %6113 = vmatprep.subr.mxu0 0.0
    %6114 = vmatpush1.msra.mxu0 0.0
    %6115 = vmatprep.subr.mxu0 0.0
    %6116 = vmatpush1.msra.mxu0 0.0
    %6117 = vmatprep.subr.mxu0 0.0
    %6118 = vmatpush1.msra.mxu0 0.0
    %6119 = vmatprep.subr.mxu0 0.0
    %6120 = vmatpush1.msra.mxu0 0.0
    %6121 = vmatprep.subr.mxu0 0.0
    %6122 = vmatpush1.msra.mxu0 0.0
    %6123 = vmatprep.subr.mxu0 0.0
    %6124 = vmatpush1.msra.mxu0 0.0
    %6125 = vmatprep.subr.mxu0 0.0
    %6126 = vmatpush1.msra.mxu0 0.0
    %6127 = vmatprep.subr.mxu0 0.0
    %6128 = vmatpush1.msra.mxu0 0.0
    %6129 = vmatprep.subr.mxu0 0.0
    %6130 = vmatpush1.msra.mxu0 0.0
    %6131 = vmatprep.subr.mxu0 0.0
    %6132 = vmatpush1.msra.mxu0 0.0
    %6133 = vmatprep.subr.mxu0 0.0
    %6134 = vmatpush1.msra.mxu0 0.0
    %6135 = vmatprep.subr.mxu0 0.0
    %6136 = vmatpush1.msra.mxu0 0.0
    %6137 = vmatprep.subr.mxu0 0.0
    %6138 = vmatpush1.msra.mxu0 0.0
    %6139 = vmatprep.subr.mxu0 0.0
    %6140 = vmatpush1.msra.mxu0 0.0
    %6141 = vmatprep.subr.mxu0 0.0
    %6142 = vmatpush1.msra.mxu0 0.0
    %6143 = vmatprep.subr.mxu0 0.0
    %6144 = vmatpush1.msra.mxu0 0.0
    %6145 = vmatprep.subr.mxu0 0.0
    %6146 = vmatpush1.msra.mxu0 0.0
    %6147 = vmatprep.subr.mxu0 0.0
    %6148 = vmatpush1.msra.mxu0 0.0
    %6149 = vmatprep.subr.mxu0 0.0
    %6150 = vmatpush1.msra.mxu0 0.0
    %6151 = vmatprep.subr.mxu0 0.0
    %6152 = vmatpush1.msra.mxu0 0.0
    %6153 = vmatprep.subr.mxu0 0.0
    %6154 = vmatpush1.msra.mxu0 0.0
    %6155 = vmatprep.subr.mxu0 0.0
    %6156 = vmatpush1.msra.mxu0 0.0
    %6157 = vmatprep.subr.mxu0 0.0
    %6158 = vmatpush1.msra.mxu0 0.0
    %6159 = vmatprep.mubr.f32.mxu0 0.0
    %6160 = vmatmul.mubr.f32.gmra.mrb[0].mxu0 %v6059
    %v6161 = vpop.f32.mrb[0].mxu0
    %v6162 = vadd.f32 0.0, %v6161
    %v6163 = vpop.f32.mrb[0].mxu0
    %v6164 = vadd.f32 0.0, %v6163
    %6165 = vdwg.mxu0
    %6166 = vmatprep.subr.mxu0 %v6067
    %6167 = vmatpush1.msra.mxu0 %v6065
    %6168 = vmatprep.subr.mxu0 0.0
    %6169 = vmatpush1.msra.mxu0 0.0
    %6170 = vmatprep.subr.mxu0 0.0
    %6171 = vmatpush1.msra.mxu0 0.0
    %6172 = vmatprep.subr.mxu0 0.0
    %6173 = vmatpush1.msra.mxu0 0.0
    %6174 = vmatprep.subr.mxu0 0.0
    %6175 = vmatpush1.msra.mxu0 0.0
    %6176 = vmatprep.subr.mxu0 0.0
    %6177 = vmatpush1.msra.mxu0 0.0
    %6178 = vmatprep.subr.mxu0 0.0
    %6179 = vmatpush1.msra.mxu0 0.0
    %6180 = vmatprep.subr.mxu0 0.0
    %6181 = vmatpush1.msra.mxu0 0.0
    %6182 = vmatprep.subr.mxu0 0.0
    %6183 = vmatpush1.msra.mxu0 0.0
    %6184 = vmatprep.subr.mxu0 0.0
    %6185 = vmatpush1.msra.mxu0 0.0
    %6186 = vmatprep.subr.mxu0 0.0
    %6187 = vmatpush1.msra.mxu0 0.0
    %6188 = vmatprep.subr.mxu0 0.0
    %6189 = vmatpush1.msra.mxu0 0.0
    %6190 = vmatprep.subr.mxu0 0.0
    %6191 = vmatpush1.msra.mxu0 0.0
    %6192 = vmatprep.subr.mxu0 0.0
    %6193 = vmatpush1.msra.mxu0 0.0
    %6194 = vmatprep.subr.mxu0 0.0
    %6195 = vmatpush1.msra.mxu0 0.0
    %6196 = vmatprep.subr.mxu0 0.0
    %6197 = vmatpush1.msra.mxu0 0.0
    %6198 = vmatprep.subr.mxu0 0.0
    %6199 = vmatpush1.msra.mxu0 0.0
    %6200 = vmatprep.subr.mxu0 0.0
    %6201 = vmatpush1.msra.mxu0 0.0
    %6202 = vmatprep.subr.mxu0 0.0
    %6203 = vmatpush1.msra.mxu0 0.0
    %6204 = vmatprep.subr.mxu0 0.0
    %6205 = vmatpush1.msra.mxu0 0.0
    %6206 = vmatprep.subr.mxu0 0.0
    %6207 = vmatpush1.msra.mxu0 0.0
    %6208 = vmatprep.subr.mxu0 0.0
    %6209 = vmatpush1.msra.mxu0 0.0
    %6210 = vmatprep.subr.mxu0 0.0
    %6211 = vmatpush1.msra.mxu0 0.0
    %6212 = vmatprep.subr.mxu0 0.0
    %6213 = vmatpush1.msra.mxu0 0.0
    %6214 = vmatprep.subr.mxu0 0.0
    %6215 = vmatpush1.msra.mxu0 0.0
    %6216 = vmatprep.subr.mxu0 0.0
    %6217 = vmatpush1.msra.mxu0 0.0
    %6218 = vmatprep.subr.mxu0 0.0
    %6219 = vmatpush1.msra.mxu0 0.0
    %6220 = vmatprep.subr.mxu0 0.0
    %6221 = vmatpush1.msra.mxu0 0.0
    %6222 = vmatprep.subr.mxu0 0.0
    %6223 = vmatpush1.msra.mxu0 0.0
    %6224 = vmatprep.subr.mxu0 0.0
    %6225 = vmatpush1.msra.mxu0 0.0
    %6226 = vmatprep.subr.mxu0 0.0
    %6227 = vmatpush1.msra.mxu0 0.0
    %6228 = vmatprep.subr.mxu0 0.0
    %6229 = vmatpush1.msra.mxu0 0.0
    %6230 = vmatprep.mubr.f32.mxu0 0.0
    %6231 = vmatmul.mubr.f32.gmra.mrb[0].mxu0 %v6059
    %v6232 = vpop.f32.mrb[0].mxu0
    %v6233 = vadd.f32 0.0, %v6232
    %v6234 = vpop.f32.mrb[0].mxu0
    %v6235 = vadd.f32 0.0, %v6234
    %6236 = vdwg.mxu0
    %6237 = vmatprep.subr.mxu0 %v6071
    %6238 = vmatpush1.msra.mxu0 %v6069
    %6239 = vmatprep.subr.mxu0 0.0
    %6240 = vmatpush1.msra.mxu0 0.0
    %6241 = vmatprep.subr.mxu0 0.0
    %6242 = vmatpush1.msra.mxu0 0.0
    %6243 = vmatprep.subr.mxu0 0.0
    %6244 = vmatpush1.msra.mxu0 0.0
    %6245 = vmatprep.subr.mxu0 0.0
    %6246 = vmatpush1.msra.mxu0 0.0
    %6247 = vmatprep.subr.mxu0 0.0
    %6248 = vmatpush1.msra.mxu0 0.0
    %6249 = vmatprep.subr.mxu0 0.0
    %6250 = vmatpush1.msra.mxu0 0.0
    %6251 = vmatprep.subr.mxu0 0.0
    %6252 = vmatpush1.msra.mxu0 0.0
    %6253 = vmatprep.subr.mxu0 0.0
    %6254 = vmatpush1.msra.mxu0 0.0
    %6255 = vmatprep.subr.mxu0 0.0
    %6256 = vmatpush1.msra.mxu0 0.0
    %6257 = vmatprep.subr.mxu0 0.0
    %6258 = vmatpush1.msra.mxu0 0.0
    %6259 = vmatprep.subr.mxu0 0.0
    %6260 = vmatpush1.msra.mxu0 0.0
    %6261 = vmatprep.subr.mxu0 0.0
    %6262 = vmatpush1.msra.mxu0 0.0
    %6263 = vmatprep.subr.mxu0 0.0
    %6264 = vmatpush1.msra.mxu0 0.0
    %6265 = vmatprep.subr.mxu0 0.0
    %6266 = vmatpush1.msra.mxu0 0.0
    %6267 = vmatprep.subr.mxu0 0.0
    %6268 = vmatpush1.msra.mxu0 0.0
    %6269 = vmatprep.subr.mxu0 0.0
    %6270 = vmatpush1.msra.mxu0 0.0
    %6271 = vmatprep.subr.mxu0 0.0
    %6272 = vmatpush1.msra.mxu0 0.0
    %6273 = vmatprep.subr.mxu0 0.0
    %6274 = vmatpush1.msra.mxu0 0.0
    %6275 = vmatprep.subr.mxu0 0.0
    %6276 = vmatpush1.msra.mxu0 0.0
    %6277 = vmatprep.subr.mxu0 0.0
    %6278 = vmatpush1.msra.mxu0 0.0
    %6279 = vmatprep.subr.mxu0 0.0
    %6280 = vmatpush1.msra.mxu0 0.0
    %6281 = vmatprep.subr.mxu0 0.0
    %6282 = vmatpush1.msra.mxu0 0.0
    %6283 = vmatprep.subr.mxu0 0.0
    %6284 = vmatpush1.msra.mxu0 0.0
    %6285 = vmatprep.subr.mxu0 0.0
    %6286 = vmatpush1.msra.mxu0 0.0
    %6287 = vmatprep.subr.mxu0 0.0
    %6288 = vmatpush1.msra.mxu0 0.0
    %6289 = vmatprep.subr.mxu0 0.0
    %6290 = vmatpush1.msra.mxu0 0.0
    %6291 = vmatprep.subr.mxu0 0.0
    %6292 = vmatpush1.msra.mxu0 0.0
    %6293 = vmatprep.subr.mxu0 0.0
    %6294 = vmatpush1.msra.mxu0 0.0
    %6295 = vmatprep.subr.mxu0 0.0
    %6296 = vmatpush1.msra.mxu0 0.0
    %6297 = vmatprep.subr.mxu0 0.0
    %6298 = vmatpush1.msra.mxu0 0.0
    %6299 = vmatprep.subr.mxu0 0.0
    %6300 = vmatpush1.msra.mxu0 0.0
    %6301 = vmatprep.mubr.f32.mxu0 0.0
    %6302 = vmatmul.mubr.f32.gmra.mrb[0].mxu0 %v6059
    %v6303 = vpop.f32.mrb[0].mxu0
    %v6304 = vadd.f32 0.0, %v6303
    %v6305 = vpop.f32.mrb[0].mxu0
    %v6306 = vadd.f32 0.0, %v6305
    %6307 = vdwg.mxu0
    %6308 = vmatprep.subr.mxu0 %v6075
    %6309 = vmatpush1.msra.mxu0 %v6073
    %6310 = vmatprep.subr.mxu0 0.0
    %6311 = vmatpush1.msra.mxu0 0.0
    %6312 = vmatprep.subr.mxu0 0.0
    %6313 = vmatpush1.msra.mxu0 0.0
    %6314 = vmatprep.subr.mxu0 0.0
    %6315 = vmatpush1.msra.mxu0 0.0
    %6316 = vmatprep.subr.mxu0 0.0
    %6317 = vmatpush1.msra.mxu0 0.0
    %6318 = vmatprep.subr.mxu0 0.0
    %6319 = vmatpush1.msra.mxu0 0.0
    %6320 = vmatprep.subr.mxu0 0.0
    %6321 = vmatpush1.msra.mxu0 0.0
    %6322 = vmatprep.subr.mxu0 0.0
    %6323 = vmatpush1.msra.mxu0 0.0
    %6324 = vmatprep.subr.mxu0 0.0
    %6325 = vmatpush1.msra.mxu0 0.0
    %6326 = vmatprep.subr.mxu0 0.0
    %6327 = vmatpush1.msra.mxu0 0.0
    %6328 = vmatprep.subr.mxu0 0.0
    %6329 = vmatpush1.msra.mxu0 0.0
    %6330 = vmatprep.subr.mxu0 0.0
    %6331 = vmatpush1.msra.mxu0 0.0
    %6332 = vmatprep.subr.mxu0 0.0
    %6333 = vmatpush1.msra.mxu0 0.0
    %6334 = vmatprep.subr.mxu0 0.0
    %6335 = vmatpush1.msra.mxu0 0.0
    %6336 = vmatprep.subr.mxu0 0.0
    %6337 = vmatpush1.msra.mxu0 0.0
    %6338 = vmatprep.subr.mxu0 0.0
    %6339 = vmatpush1.msra.mxu0 0.0
    %6340 = vmatprep.subr.mxu0 0.0
    %6341 = vmatpush1.msra.mxu0 0.0
    %6342 = vmatprep.subr.mxu0 0.0
    %6343 = vmatpush1.msra.mxu0 0.0
    %6344 = vmatprep.subr.mxu0 0.0
    %6345 = vmatpush1.msra.mxu0 0.0
    %6346 = vmatprep.subr.mxu0 0.0
    %6347 = vmatpush1.msra.mxu0 0.0
    %6348 = vmatprep.subr.mxu0 0.0
    %6349 = vmatpush1.msra.mxu0 0.0
    %6350 = vmatprep.subr.mxu0 0.0
    %6351 = vmatpush1.msra.mxu0 0.0
    %6352 = vmatprep.subr.mxu0 0.0
    %6353 = vmatpush1.msra.mxu0 0.0
    %6354 = vmatprep.subr.mxu0 0.0
    %6355 = vmatpush1.msra.mxu0 0.0
    %6356 = vmatprep.subr.mxu0 0.0
    %6357 = vmatpush1.msra.mxu0 0.0
    %6358 = vmatprep.subr.mxu0 0.0
    %6359 = vmatpush1.msra.mxu0 0.0
    %6360 = vmatprep.subr.mxu0 0.0
    %6361 = vmatpush1.msra.mxu0 0.0
    %6362 = vmatprep.subr.mxu0 0.0
    %6363 = vmatpush1.msra.mxu0 0.0
    %6364 = vmatprep.subr.mxu0 0.0
    %6365 = vmatpush1.msra.mxu0 0.0
    %6366 = vmatprep.subr.mxu0 0.0
    %6367 = vmatpush1.msra.mxu0 0.0
    %6368 = vmatprep.subr.mxu0 0.0
    %6369 = vmatpush1.msra.mxu0 0.0
    %6370 = vmatprep.subr.mxu0 0.0
    %6371 = vmatpush1.msra.mxu0 0.0
    %6372 = vmatprep.mubr.f32.mxu0 0.0
    %6373 = vmatmul.mubr.f32.gmra.mrb[0].mxu0 %v6059
    %v6374 = vpop.f32.mrb[0].mxu0
    %v6375 = vadd.f32 0.0, %v6374
    %v6376 = vpop.f32.mrb[0].mxu0
    %v6377 = vadd.f32 0.0, %v6376
    %6378 = vdwg.mxu0
    %6379 = vmatprep.subr.mxu0 %v6079
    %6380 = vmatpush1.msra.mxu0 %v6077
    %6381 = vmatprep.subr.mxu0 0.0
    %6382 = vmatpush1.msra.mxu0 0.0
    %6383 = vmatprep.subr.mxu0 0.0
    %6384 = vmatpush1.msra.mxu0 0.0
    %6385 = vmatprep.subr.mxu0 0.0
    %6386 = vmatpush1.msra.mxu0 0.0
    %6387 = vmatprep.subr.mxu0 0.0
    %6388 = vmatpush1.msra.mxu0 0.0
    %6389 = vmatprep.subr.mxu0 0.0
    %6390 = vmatpush1.msra.mxu0 0.0
    %6391 = vmatprep.subr.mxu0 0.0
    %6392 = vmatpush1.msra.mxu0 0.0
    %6393 = vmatprep.subr.mxu0 0.0
    %6394 = vmatpush1.msra.mxu0 0.0
    %6395 = vmatprep.subr.mxu0 0.0
    %6396 = vmatpush1.msra.mxu0 0.0
    %6397 = vmatprep.subr.mxu0 0.0
    %6398 = vmatpush1.msra.mxu0 0.0
    %6399 = vmatprep.subr.mxu0 0.0
    %6400 = vmatpush1.msra.mxu0 0.0
    %6401 = vmatprep.subr.mxu0 0.0
    %6402 = vmatpush1.msra.mxu0 0.0
    %6403 = vmatprep.subr.mxu0 0.0
    %6404 = vmatpush1.msra.mxu0 0.0
    %6405 = vmatprep.subr.mxu0 0.0
    %6406 = vmatpush1.msra.mxu0 0.0
    %6407 = vmatprep.subr.mxu0 0.0
    %6408 = vmatpush1.msra.mxu0 0.0
    %6409 = vmatprep.subr.mxu0 0.0
    %6410 = vmatpush1.msra.mxu0 0.0
    %6411 = vmatprep.subr.mxu0 0.0
    %6412 = vmatpush1.msra.mxu0 0.0
    %6413 = vmatprep.subr.mxu0 0.0
    %6414 = vmatpush1.msra.mxu0 0.0
    %6415 = vmatprep.subr.mxu0 0.0
    %6416 = vmatpush1.msra.mxu0 0.0
    %6417 = vmatprep.subr.mxu0 0.0
    %6418 = vmatpush1.msra.mxu0 0.0
    %6419 = vmatprep.subr.mxu0 0.0
    %6420 = vmatpush1.msra.mxu0 0.0
    %6421 = vmatprep.subr.mxu0 0.0
    %6422 = vmatpush1.msra.mxu0 0.0
    %6423 = vmatprep.subr.mxu0 0.0
    %6424 = vmatpush1.msra.mxu0 0.0
    %6425 = vmatprep.subr.mxu0 0.0
    %6426 = vmatpush1.msra.mxu0 0.0
    %6427 = vmatprep.subr.mxu0 0.0
    %6428 = vmatpush1.msra.mxu0 0.0
    %6429 = vmatprep.subr.mxu0 0.0
    %6430 = vmatpush1.msra.mxu0 0.0
    %6431 = vmatprep.subr.mxu0 0.0
    %6432 = vmatpush1.msra.mxu0 0.0
    %6433 = vmatprep.subr.mxu0 0.0
    %6434 = vmatpush1.msra.mxu0 0.0
    %6435 = vmatprep.subr.mxu0 0.0
    %6436 = vmatpush1.msra.mxu0 0.0
    %6437 = vmatprep.subr.mxu0 0.0
    %6438 = vmatpush1.msra.mxu0 0.0
    %6439 = vmatprep.subr.mxu0 0.0
    %6440 = vmatpush1.msra.mxu0 0.0
    %6441 = vmatprep.subr.mxu0 0.0
    %6442 = vmatpush1.msra.mxu0 0.0
    %6443 = vmatprep.mubr.f32.mxu0 0.0
    %6444 = vmatmul.mubr.f32.gmra.mrb[0].mxu0 %v6059
    %v6445 = vpop.f32.mrb[0].mxu0
    %v6446 = vadd.f32 0.0, %v6445
    %v6447 = vpop.f32.mrb[0].mxu0
    %v6448 = vadd.f32 0.0, %v6447
    %6449 = vdwg.mxu0
    %6450 = vmatprep.subr.mxu0 %v6083
    %6451 = vmatpush1.msra.mxu0 %v6081
    %6452 = vmatprep.subr.mxu0 0.0
    %6453 = vmatpush1.msra.mxu0 0.0
    %6454 = vmatprep.subr.mxu0 0.0
    %6455 = vmatpush1.msra.mxu0 0.0
    %6456 = vmatprep.subr.mxu0 0.0
    %6457 = vmatpush1.msra.mxu0 0.0
    %6458 = vmatprep.subr.mxu0 0.0
    %6459 = vmatpush1.msra.mxu0 0.0
    %6460 = vmatprep.subr.mxu0 0.0
    %6461 = vmatpush1.msra.mxu0 0.0
    %6462 = vmatprep.subr.mxu0 0.0
    %6463 = vmatpush1.msra.mxu0 0.0
    %6464 = vmatprep.subr.mxu0 0.0
    %6465 = vmatpush1.msra.mxu0 0.0
    %6466 = vmatprep.subr.mxu0 0.0
    %6467 = vmatpush1.msra.mxu0 0.0
    %6468 = vmatprep.subr.mxu0 0.0
    %6469 = vmatpush1.msra.mxu0 0.0
    %6470 = vmatprep.subr.mxu0 0.0
    %6471 = vmatpush1.msra.mxu0 0.0
    %6472 = vmatprep.subr.mxu0 0.0
    %6473 = vmatpush1.msra.mxu0 0.0
    %6474 = vmatprep.subr.mxu0 0.0
    %6475 = vmatpush1.msra.mxu0 0.0
    %6476 = vmatprep.subr.mxu0 0.0
    %6477 = vmatpush1.msra.mxu0 0.0
    %6478 = vmatprep.subr.mxu0 0.0
    %6479 = vmatpush1.msra.mxu0 0.0
    %6480 = vmatprep.subr.mxu0 0.0
    %6481 = vmatpush1.msra.mxu0 0.0
    %6482 = vmatprep.subr.mxu0 0.0
    %6483 = vmatpush1.msra.mxu0 0.0
    %6484 = vmatprep.subr.mxu0 0.0
    %6485 = vmatpush1.msra.mxu0 0.0
    %6486 = vmatprep.subr.mxu0 0.0
    %6487 = vmatpush1.msra.mxu0 0.0
    %6488 = vmatprep.subr.mxu0 0.0
    %6489 = vmatpush1.msra.mxu0 0.0
    %6490 = vmatprep.subr.mxu0 0.0
    %6491 = vmatpush1.msra.mxu0 0.0
    %6492 = vmatprep.subr.mxu0 0.0
    %6493 = vmatpush1.msra.mxu0 0.0
    %6494 = vmatprep.subr.mxu0 0.0
    %6495 = vmatpush1.msra.mxu0 0.0
    %6496 = vmatprep.subr.mxu0 0.0
    %6497 = vmatpush1.msra.mxu0 0.0
    %6498 = vmatprep.subr.mxu0 0.0
    %6499 = vmatpush1.msra.mxu0 0.0
    %6500 = vmatprep.subr.mxu0 0.0
    %6501 = vmatpush1.msra.mxu0 0.0
    %6502 = vmatprep.subr.mxu0 0.0
    %6503 = vmatpush1.msra.mxu0 0.0
    %6504 = vmatprep.subr.mxu0 0.0
    %6505 = vmatpush1.msra.mxu0 0.0
    %6506 = vmatprep.subr.mxu0 0.0
    %6507 = vmatpush1.msra.mxu0 0.0
    %6508 = vmatprep.subr.mxu0 0.0
    %6509 = vmatpush1.msra.mxu0 0.0
    %6510 = vmatprep.subr.mxu0 0.0
    %6511 = vmatpush1.msra.mxu0 0.0
    %6512 = vmatprep.subr.mxu0 0.0
    %6513 = vmatpush1.msra.mxu0 0.0
    %6514 = vmatprep.mubr.f32.mxu0 0.0
    %6515 = vmatmul.mubr.f32.gmra.mrb[0].mxu0 %v6059
    %v6516 = vpop.f32.mrb[0].mxu0
    %v6517 = vadd.f32 0.0, %v6516
    %v6518 = vpop.f32.mrb[0].mxu0
    %v6519 = vadd.f32 0.0, %v6518
    %6520 = vdwg.mxu0
    %6521 = vmatprep.subr.mxu0 %v6087
    %6522 = vmatpush1.msra.mxu0 %v6085
    %6523 = vmatprep.subr.mxu0 0.0
    %6524 = vmatpush1.msra.mxu0 0.0
    %6525 = vmatprep.subr.mxu0 0.0
    %6526 = vmatpush1.msra.mxu0 0.0
    %6527 = vmatprep.subr.mxu0 0.0
    %6528 = vmatpush1.msra.mxu0 0.0
    %6529 = vmatprep.subr.mxu0 0.0
    %6530 = vmatpush1.msra.mxu0 0.0
    %6531 = vmatprep.subr.mxu0 0.0
    %6532 = vmatpush1.msra.mxu0 0.0
    %6533 = vmatprep.subr.mxu0 0.0
    %6534 = vmatpush1.msra.mxu0 0.0
    %6535 = vmatprep.subr.mxu0 0.0
    %6536 = vmatpush1.msra.mxu0 0.0
    %6537 = vmatprep.subr.mxu0 0.0
    %6538 = vmatpush1.msra.mxu0 0.0
    %6539 = vmatprep.subr.mxu0 0.0
    %6540 = vmatpush1.msra.mxu0 0.0
    %6541 = vmatprep.subr.mxu0 0.0
    %6542 = vmatpush1.msra.mxu0 0.0
    %6543 = vmatprep.subr.mxu0 0.0
    %6544 = vmatpush1.msra.mxu0 0.0
    %6545 = vmatprep.subr.mxu0 0.0
    %6546 = vmatpush1.msra.mxu0 0.0
    %6547 = vmatprep.subr.mxu0 0.0
    %6548 = vmatpush1.msra.mxu0 0.0
    %6549 = vmatprep.subr.mxu0 0.0
    %6550 = vmatpush1.msra.mxu0 0.0
    %6551 = vmatprep.subr.mxu0 0.0
    %6552 = vmatpush1.msra.mxu0 0.0
    %6553 = vmatprep.subr.mxu0 0.0
    %6554 = vmatpush1.msra.mxu0 0.0
    %6555 = vmatprep.subr.mxu0 0.0
    %6556 = vmatpush1.msra.mxu0 0.0
    %6557 = vmatprep.subr.mxu0 0.0
    %6558 = vmatpush1.msra.mxu0 0.0
    %6559 = vmatprep.subr.mxu0 0.0
    %6560 = vmatpush1.msra.mxu0 0.0
    %6561 = vmatprep.subr.mxu0 0.0
    %6562 = vmatpush1.msra.mxu0 0.0
    %6563 = vmatprep.subr.mxu0 0.0
    %6564 = vmatpush1.msra.mxu0 0.0
    %6565 = vmatprep.subr.mxu0 0.0
    %6566 = vmatpush1.msra.mxu0 0.0
    %6567 = vmatprep.subr.mxu0 0.0
    %6568 = vmatpush1.msra.mxu0 0.0
    %6569 = vmatprep.subr.mxu0 0.0
    %6570 = vmatpush1.msra.mxu0 0.0
    %6571 = vmatprep.subr.mxu0 0.0
    %6572 = vmatpush1.msra.mxu0 0.0
    %6573 = vmatprep.subr.mxu0 0.0
    %6574 = vmatpush1.msra.mxu0 0.0
    %6575 = vmatprep.subr.mxu0 0.0
    %6576 = vmatpush1.msra.mxu0 0.0
    %6577 = vmatprep.subr.mxu0 0.0
    %6578 = vmatpush1.msra.mxu0 0.0
    %6579 = vmatprep.subr.mxu0 0.0
    %6580 = vmatpush1.msra.mxu0 0.0
    %6581 = vmatprep.subr.mxu0 0.0
    %6582 = vmatpush1.msra.mxu0 0.0
    %6583 = vmatprep.subr.mxu0 0.0
    %6584 = vmatpush1.msra.mxu0 0.0
    %6585 = vmatprep.mubr.f32.mxu0 0.0
    %6586 = vmatmul.mubr.f32.gmra.mrb[0].mxu0 %v6059
    %v6587 = vpop.f32.mrb[0].mxu0
    %v6588 = vadd.f32 0.0, %v6587
    %v6589 = vpop.f32.mrb[0].mxu0
    %v6590 = vadd.f32 0.0, %v6589
    %6591 = vdwg.mxu0
    %6592 = vmatprep.subr.mxu0 %v6091
    %6593 = vmatpush1.msra.mxu0 %v6089
    %6594 = vmatprep.subr.mxu0 0.0
    %6595 = vmatpush1.msra.mxu0 0.0
    %6596 = vmatprep.subr.mxu0 0.0
    %6597 = vmatpush1.msra.mxu0 0.0
    %6598 = vmatprep.subr.mxu0 0.0
    %6599 = vmatpush1.msra.mxu0 0.0
    %6600 = vmatprep.subr.mxu0 0.0
    %6601 = vmatpush1.msra.mxu0 0.0
    %6602 = vmatprep.subr.mxu0 0.0
    %6603 = vmatpush1.msra.mxu0 0.0
    %6604 = vmatprep.subr.mxu0 0.0
    %6605 = vmatpush1.msra.mxu0 0.0
    %6606 = vmatprep.subr.mxu0 0.0
    %6607 = vmatpush1.msra.mxu0 0.0
    %6608 = vmatprep.subr.mxu0 0.0
    %6609 = vmatpush1.msra.mxu0 0.0
    %6610 = vmatprep.subr.mxu0 0.0
    %6611 = vmatpush1.msra.mxu0 0.0
    %6612 = vmatprep.subr.mxu0 0.0
    %6613 = vmatpush1.msra.mxu0 0.0
    %6614 = vmatprep.subr.mxu0 0.0
    %6615 = vmatpush1.msra.mxu0 0.0
    %6616 = vmatprep.subr.mxu0 0.0
    %6617 = vmatpush1.msra.mxu0 0.0
    %6618 = vmatprep.subr.mxu0 0.0
    %6619 = vmatpush1.msra.mxu0 0.0
    %6620 = vmatprep.subr.mxu0 0.0
    %6621 = vmatpush1.msra.mxu0 0.0
    %6622 = vmatprep.subr.mxu0 0.0
    %6623 = vmatpush1.msra.mxu0 0.0
    %6624 = vmatprep.subr.mxu0 0.0
    %6625 = vmatpush1.msra.mxu0 0.0
    %6626 = vmatprep.subr.mxu0 0.0
    %6627 = vmatpush1.msra.mxu0 0.0
    %6628 = vmatprep.subr.mxu0 0.0
    %6629 = vmatpush1.msra.mxu0 0.0
    %6630 = vmatprep.subr.mxu0 0.0
    %6631 = vmatpush1.msra.mxu0 0.0
    %6632 = vmatprep.subr.mxu0 0.0
    %6633 = vmatpush1.msra.mxu0 0.0
    %6634 = vmatprep.subr.mxu0 0.0
    %6635 = vmatpush1.msra.mxu0 0.0
    %6636 = vmatprep.subr.mxu0 0.0
    %6637 = vmatpush1.msra.mxu0 0.0
    %6638 = vmatprep.subr.mxu0 0.0
    %6639 = vmatpush1.msra.mxu0 0.0
    %6640 = vmatprep.subr.mxu0 0.0
    %6641 = vmatpush1.msra.mxu0 0.0
    %6642 = vmatprep.subr.mxu0 0.0
    %6643 = vmatpush1.msra.mxu0 0.0
    %6644 = vmatprep.subr.mxu0 0.0
    %6645 = vmatpush1.msra.mxu0 0.0
    %6646 = vmatprep.subr.mxu0 0.0
    %6647 = vmatpush1.msra.mxu0 0.0
    %6648 = vmatprep.subr.mxu0 0.0
    %6649 = vmatpush1.msra.mxu0 0.0
    %6650 = vmatprep.subr.mxu0 0.0
    %6651 = vmatpush1.msra.mxu0 0.0
    %6652 = vmatprep.subr.mxu0 0.0
    %6653 = vmatpush1.msra.mxu0 0.0
    %6654 = vmatprep.subr.mxu0 0.0
    %6655 = vmatpush1.msra.mxu0 0.0
    %6656 = vmatprep.mubr.f32.mxu0 0.0
    %6657 = vmatmul.mubr.f32.gmra.mrb[0].mxu0 %v6059
    %v6658 = vpop.f32.mrb[0].mxu0
    %v6659 = vadd.f32 0.0, %v6658
    %v6660 = vpop.f32.mrb[0].mxu0
    %v6661 = vadd.f32 0.0, %v6660
    %6662 = vdwg.mxu0
    %6663 = vmatprep.subr.mxu0 0.0
    %6664 = vmatpush1.msra.mxu0 %v6093
    %6665 = vmatprep.subr.mxu0 0.0
    %6666 = vmatpush1.msra.mxu0 0.0
    %6667 = vmatprep.subr.mxu0 0.0
    %6668 = vmatpush1.msra.mxu0 0.0
    %6669 = vmatprep.subr.mxu0 0.0
    %6670 = vmatpush1.msra.mxu0 0.0
    %6671 = vmatprep.subr.mxu0 0.0
    %6672 = vmatpush1.msra.mxu0 0.0
    %6673 = vmatprep.subr.mxu0 0.0
    %6674 = vmatpush1.msra.mxu0 0.0
    %6675 = vmatprep.subr.mxu0 0.0
    %6676 = vmatpush1.msra.mxu0 0.0
    %6677 = vmatprep.subr.mxu0 0.0
    %6678 = vmatpush1.msra.mxu0 0.0
    %6679 = vmatprep.subr.mxu0 0.0
    %6680 = vmatpush1.msra.mxu0 0.0
    %6681 = vmatprep.subr.mxu0 0.0
    %6682 = vmatpush1.msra.mxu0 0.0
    %6683 = vmatprep.subr.mxu0 0.0
    %6684 = vmatpush1.msra.mxu0 0.0
    %6685 = vmatprep.subr.mxu0 0.0
    %6686 = vmatpush1.msra.mxu0 0.0
    %6687 = vmatprep.subr.mxu0 0.0
    %6688 = vmatpush1.msra.mxu0 0.0
    %6689 = vmatprep.subr.mxu0 0.0
    %6690 = vmatpush1.msra.mxu0 0.0
    %6691 = vmatprep.subr.mxu0 0.0
    %6692 = vmatpush1.msra.mxu0 0.0
    %6693 = vmatprep.subr.mxu0 0.0
    %6694 = vmatpush1.msra.mxu0 0.0
    %6695 = vmatprep.subr.mxu0 0.0
    %6696 = vmatpush1.msra.mxu0 0.0
    %6697 = vmatprep.subr.mxu0 0.0
    %6698 = vmatpush1.msra.mxu0 0.0
    %6699 = vmatprep.subr.mxu0 0.0
    %6700 = vmatpush1.msra.mxu0 0.0
    %6701 = vmatprep.subr.mxu0 0.0
    %6702 = vmatpush1.msra.mxu0 0.0
    %6703 = vmatprep.subr.mxu0 0.0
    %6704 = vmatpush1.msra.mxu0 0.0
    %6705 = vmatprep.subr.mxu0 0.0
    %6706 = vmatpush1.msra.mxu0 0.0
    %6707 = vmatprep.subr.mxu0 0.0
    %6708 = vmatpush1.msra.mxu0 0.0
    %6709 = vmatprep.subr.mxu0 0.0
    %6710 = vmatpush1.msra.mxu0 0.0
    %6711 = vmatprep.subr.mxu0 0.0
    %6712 = vmatpush1.msra.mxu0 0.0
    %6713 = vmatprep.subr.mxu0 0.0
    %6714 = vmatpush1.msra.mxu0 0.0
    %6715 = vmatprep.subr.mxu0 0.0
    %6716 = vmatpush1.msra.mxu0 0.0
    %6717 = vmatprep.subr.mxu0 0.0
    %6718 = vmatpush1.msra.mxu0 0.0
    %6719 = vmatprep.subr.mxu0 0.0
    %6720 = vmatpush1.msra.mxu0 0.0
    %6721 = vmatprep.subr.mxu0 0.0
    %6722 = vmatpush1.msra.mxu0 0.0
    %6723 = vmatprep.subr.mxu0 0.0
    %6724 = vmatpush1.msra.mxu0 0.0
    %6725 = vmatprep.subr.mxu0 0.0
    %6726 = vmatpush1.msra.mxu0 0.0
    %6727 = vmatprep.mubr.f32.mxu0 0.0
    %6728 = vmatmul.mubr.f32.gmra.mrb[0].mxu0 %v6059
    %v6729 = vpop.f32.mrb[0].mxu0
    %v6730 = vadd.f32 0.0, %v6729
    %v6731 = vpop.f32.mrb[0].mxu0
    %6732 = vdwg.mxu0
    %v6733 = vadd.f32 %v5962, %v6162
    %v6734 = vadd.f32 %v5963, %v6164
    %v6735 = vadd.f32 %v5964, %v6233
    %v6736 = vadd.f32 %v5965, %v6235
    %v6737 = vadd.f32 %v5966, %v6304
    %v6738 = vadd.f32 %v5967, %v6306
    %v6739 = vadd.f32 %v5968, %v6375
    %v6740 = vadd.f32 %v5969, %v6377
    %v6741 = vadd.f32 %v5970, %v6446
    %v6742 = vadd.f32 %v5971, %v6448
    %v6743 = vadd.f32 %v5972, %v6517
    %v6744 = vadd.f32 %v5973, %v6519
    %v6745 = vadd.f32 %v5974, %v6588
    %v6746 = vadd.f32 %v5975, %v6590
    %v6747 = vadd.f32 %v5976, %v6659
    %v6748 = vadd.f32 %v5977, %v6661
    %v6749 = vadd.f32 %v5978, %v6730
    %v6750 = vld [vmem:[%s2] sm:$0xff]
    %v6752 = vsel %vm86, %v6750, 0
    %6754 = vmatprep.subr.mxu0 %v2981
    %6755 = vmatpush1.msra.mxu0 %v2979
    %6756 = vmatprep.subr.mxu0 0.0
    %6757 = vmatpush1.msra.mxu0 0.0
    %6758 = vmatprep.subr.mxu0 0.0
    %6759 = vmatpush1.msra.mxu0 0.0
    %6760 = vmatprep.subr.mxu0 0.0
    %6761 = vmatpush1.msra.mxu0 0.0
    %6762 = vmatprep.subr.mxu0 0.0
    %6763 = vmatpush1.msra.mxu0 0.0
    %6764 = vmatprep.subr.mxu0 0.0
    %6765 = vmatpush1.msra.mxu0 0.0
    %6766 = vmatprep.subr.mxu0 0.0
    %6767 = vmatpush1.msra.mxu0 0.0
    %6768 = vmatprep.subr.mxu0 0.0
    %6769 = vmatpush1.msra.mxu0 0.0
    %6770 = vmatprep.subr.mxu0 0.0
    %6771 = vmatpush1.msra.mxu0 0.0
    %6772 = vmatprep.subr.mxu0 0.0
    %6773 = vmatpush1.msra.mxu0 0.0
    %6774 = vmatprep.subr.mxu0 0.0
    %6775 = vmatpush1.msra.mxu0 0.0
    %6776 = vmatprep.subr.mxu0 0.0
    %6777 = vmatpush1.msra.mxu0 0.0
    %6778 = vmatprep.subr.mxu0 0.0
    %6779 = vmatpush1.msra.mxu0 0.0
    %6780 = vmatprep.subr.mxu0 0.0
    %6781 = vmatpush1.msra.mxu0 0.0
    %6782 = vmatprep.subr.mxu0 0.0
    %6783 = vmatpush1.msra.mxu0 0.0
    %6784 = vmatprep.subr.mxu0 0.0
    %6785 = vmatpush1.msra.mxu0 0.0
    %6786 = vmatprep.subr.mxu0 0.0
    %6787 = vmatpush1.msra.mxu0 0.0
    %6788 = vmatprep.subr.mxu0 0.0
    %6789 = vmatpush1.msra.mxu0 0.0
    %6790 = vmatprep.subr.mxu0 0.0
    %6791 = vmatpush1.msra.mxu0 0.0
    %6792 = vmatprep.subr.mxu0 0.0
    %6793 = vmatpush1.msra.mxu0 0.0
    %6794 = vmatprep.subr.mxu0 0.0
    %6795 = vmatpush1.msra.mxu0 0.0
    %6796 = vmatprep.subr.mxu0 0.0
    %6797 = vmatpush1.msra.mxu0 0.0
    %6798 = vmatprep.subr.mxu0 0.0
    %6799 = vmatpush1.msra.mxu0 0.0
    %6800 = vmatprep.subr.mxu0 0.0
    %6801 = vmatpush1.msra.mxu0 0.0
    %6802 = vmatprep.subr.mxu0 0.0
    %6803 = vmatpush1.msra.mxu0 0.0
    %6804 = vmatprep.subr.mxu0 0.0
    %6805 = vmatpush1.msra.mxu0 0.0
    %6806 = vmatprep.subr.mxu0 0.0
    %6807 = vmatpush1.msra.mxu0 0.0
    %6808 = vmatprep.subr.mxu0 0.0
    %6809 = vmatpush1.msra.mxu0 0.0
    %6810 = vmatprep.subr.mxu0 0.0
    %6811 = vmatpush1.msra.mxu0 0.0
    %6812 = vmatprep.subr.mxu0 0.0
    %6813 = vmatpush1.msra.mxu0 0.0
    %6814 = vmatprep.subr.mxu0 0.0
    %6815 = vmatpush1.msra.mxu0 0.0
    %6816 = vmatprep.subr.mxu0 0.0
    %6817 = vmatpush1.msra.mxu0 0.0
    %6818 = vmatprep.mubr.f32.mxu0 0.0
    %6819 = vmatmul.mubr.f32.gmra.mrb[0].mxu0 %v6752
    %v6820 = vpop.f32.mrb[0].mxu0
    %v6821 = vadd.f32 0.0, %v6820
    %v6822 = vpop.f32.mrb[0].mxu0
    %v6823 = vadd.f32 0.0, %v6822
    %6824 = vdwg.mxu0
    %6825 = vmatprep.subr.mxu0 %v2985
    %6826 = vmatpush1.msra.mxu0 %v2983
    %6827 = vmatprep.subr.mxu0 0.0
    %6828 = vmatpush1.msra.mxu0 0.0
    %6829 = vmatprep.subr.mxu0 0.0
    %6830 = vmatpush1.msra.mxu0 0.0
    %6831 = vmatprep.subr.mxu0 0.0
    %6832 = vmatpush1.msra.mxu0 0.0
    %6833 = vmatprep.subr.mxu0 0.0
    %6834 = vmatpush1.msra.mxu0 0.0
    %6835 = vmatprep.subr.mxu0 0.0
    %6836 = vmatpush1.msra.mxu0 0.0
    %6837 = vmatprep.subr.mxu0 0.0
    %6838 = vmatpush1.msra.mxu0 0.0
    %6839 = vmatprep.subr.mxu0 0.0
    %6840 = vmatpush1.msra.mxu0 0.0
    %6841 = vmatprep.subr.mxu0 0.0
    %6842 = vmatpush1.msra.mxu0 0.0
    %6843 = vmatprep.subr.mxu0 0.0
    %6844 = vmatpush1.msra.mxu0 0.0
    %6845 = vmatprep.subr.mxu0 0.0
    %6846 = vmatpush1.msra.mxu0 0.0
    %6847 = vmatprep.subr.mxu0 0.0
    %6848 = vmatpush1.msra.mxu0 0.0
    %6849 = vmatprep.subr.mxu0 0.0
    %6850 = vmatpush1.msra.mxu0 0.0
    %6851 = vmatprep.subr.mxu0 0.0
    %6852 = vmatpush1.msra.mxu0 0.0
    %6853 = vmatprep.subr.mxu0 0.0
    %6854 = vmatpush1.msra.mxu0 0.0
    %6855 = vmatprep.subr.mxu0 0.0
    %6856 = vmatpush1.msra.mxu0 0.0
    %6857 = vmatprep.subr.mxu0 0.0
    %6858 = vmatpush1.msra.mxu0 0.0
    %6859 = vmatprep.subr.mxu0 0.0
    %6860 = vmatpush1.msra.mxu0 0.0
    %6861 = vmatprep.subr.mxu0 0.0
    %6862 = vmatpush1.msra.mxu0 0.0
    %6863 = vmatprep.subr.mxu0 0.0
    %6864 = vmatpush1.msra.mxu0 0.0
    %6865 = vmatprep.subr.mxu0 0.0
    %6866 = vmatpush1.msra.mxu0 0.0
    %6867 = vmatprep.subr.mxu0 0.0
    %6868 = vmatpush1.msra.mxu0 0.0
    %6869 = vmatprep.subr.mxu0 0.0
    %6870 = vmatpush1.msra.mxu0 0.0
    %6871 = vmatprep.subr.mxu0 0.0
    %6872 = vmatpush1.msra.mxu0 0.0
    %6873 = vmatprep.subr.mxu0 0.0
    %6874 = vmatpush1.msra.mxu0 0.0
    %6875 = vmatprep.subr.mxu0 0.0
    %6876 = vmatpush1.msra.mxu0 0.0
    %6877 = vmatprep.subr.mxu0 0.0
    %6878 = vmatpush1.msra.mxu0 0.0
    %6879 = vmatprep.subr.mxu0 0.0
    %6880 = vmatpush1.msra.mxu0 0.0
    %6881 = vmatprep.subr.mxu0 0.0
    %6882 = vmatpush1.msra.mxu0 0.0
    %6883 = vmatprep.subr.mxu0 0.0
    %6884 = vmatpush1.msra.mxu0 0.0
    %6885 = vmatprep.subr.mxu0 0.0
    %6886 = vmatpush1.msra.mxu0 0.0
    %6887 = vmatprep.subr.mxu0 0.0
    %6888 = vmatpush1.msra.mxu0 0.0
    %6889 = vmatprep.mubr.f32.mxu0 0.0
    %6890 = vmatmul.mubr.f32.gmra.mrb[0].mxu0 %v6752
    %v6891 = vpop.f32.mrb[0].mxu0
    %v6892 = vadd.f32 0.0, %v6891
    %v6893 = vpop.f32.mrb[0].mxu0
    %v6894 = vadd.f32 0.0, %v6893
    %6895 = vdwg.mxu0
    %6896 = vmatprep.subr.mxu0 %v2989
    %6897 = vmatpush1.msra.mxu0 %v2987
    %6898 = vmatprep.subr.mxu0 0.0
    %6899 = vmatpush1.msra.mxu0 0.0
    %6900 = vmatprep.subr.mxu0 0.0
    %6901 = vmatpush1.msra.mxu0 0.0
    %6902 = vmatprep.subr.mxu0 0.0
    %6903 = vmatpush1.msra.mxu0 0.0
    %6904 = vmatprep.subr.mxu0 0.0
    %6905 = vmatpush1.msra.mxu0 0.0
    %6906 = vmatprep.subr.mxu0 0.0
    %6907 = vmatpush1.msra.mxu0 0.0
    %6908 = vmatprep.subr.mxu0 0.0
    %6909 = vmatpush1.msra.mxu0 0.0
    %6910 = vmatprep.subr.mxu0 0.0
    %6911 = vmatpush1.msra.mxu0 0.0
    %6912 = vmatprep.subr.mxu0 0.0
    %6913 = vmatpush1.msra.mxu0 0.0
    %6914 = vmatprep.subr.mxu0 0.0
    %6915 = vmatpush1.msra.mxu0 0.0
    %6916 = vmatprep.subr.mxu0 0.0
    %6917 = vmatpush1.msra.mxu0 0.0
    %6918 = vmatprep.subr.mxu0 0.0
    %6919 = vmatpush1.msra.mxu0 0.0
    %6920 = vmatprep.subr.mxu0 0.0
    %6921 = vmatpush1.msra.mxu0 0.0
    %6922 = vmatprep.subr.mxu0 0.0
    %6923 = vmatpush1.msra.mxu0 0.0
    %6924 = vmatprep.subr.mxu0 0.0
    %6925 = vmatpush1.msra.mxu0 0.0
    %6926 = vmatprep.subr.mxu0 0.0
    %6927 = vmatpush1.msra.mxu0 0.0
    %6928 = vmatprep.subr.mxu0 0.0
    %6929 = vmatpush1.msra.mxu0 0.0
    %6930 = vmatprep.subr.mxu0 0.0
    %6931 = vmatpush1.msra.mxu0 0.0
    %6932 = vmatprep.subr.mxu0 0.0
    %6933 = vmatpush1.msra.mxu0 0.0
    %6934 = vmatprep.subr.mxu0 0.0
    %6935 = vmatpush1.msra.mxu0 0.0
    %6936 = vmatprep.subr.mxu0 0.0
    %6937 = vmatpush1.msra.mxu0 0.0
    %6938 = vmatprep.subr.mxu0 0.0
    %6939 = vmatpush1.msra.mxu0 0.0
    %6940 = vmatprep.subr.mxu0 0.0
    %6941 = vmatpush1.msra.mxu0 0.0
    %6942 = vmatprep.subr.mxu0 0.0
    %6943 = vmatpush1.msra.mxu0 0.0
    %6944 = vmatprep.subr.mxu0 0.0
    %6945 = vmatpush1.msra.mxu0 0.0
    %6946 = vmatprep.subr.mxu0 0.0
    %6947 = vmatpush1.msra.mxu0 0.0
    %6948 = vmatprep.subr.mxu0 0.0
    %6949 = vmatpush1.msra.mxu0 0.0
    %6950 = vmatprep.subr.mxu0 0.0
    %6951 = vmatpush1.msra.mxu0 0.0
    %6952 = vmatprep.subr.mxu0 0.0
    %6953 = vmatpush1.msra.mxu0 0.0
    %6954 = vmatprep.subr.mxu0 0.0
    %6955 = vmatpush1.msra.mxu0 0.0
    %6956 = vmatprep.subr.mxu0 0.0
    %6957 = vmatpush1.msra.mxu0 0.0
    %6958 = vmatprep.subr.mxu0 0.0
    %6959 = vmatpush1.msra.mxu0 0.0
    %6960 = vmatprep.mubr.f32.mxu0 0.0
    %6961 = vmatmul.mubr.f32.gmra.mrb[0].mxu0 %v6752
    %v6962 = vpop.f32.mrb[0].mxu0
    %v6963 = vadd.f32 0.0, %v6962
    %v6964 = vpop.f32.mrb[0].mxu0
    %v6965 = vadd.f32 0.0, %v6964
    %6966 = vdwg.mxu0
    %6967 = vmatprep.subr.mxu0 %v2993
    %6968 = vmatpush1.msra.mxu0 %v2991
    %6969 = vmatprep.subr.mxu0 0.0
    %6970 = vmatpush1.msra.mxu0 0.0
    %6971 = vmatprep.subr.mxu0 0.0
    %6972 = vmatpush1.msra.mxu0 0.0
    %6973 = vmatprep.subr.mxu0 0.0
    %6974 = vmatpush1.msra.mxu0 0.0
    %6975 = vmatprep.subr.mxu0 0.0
    %6976 = vmatpush1.msra.mxu0 0.0
    %6977 = vmatprep.subr.mxu0 0.0
    %6978 = vmatpush1.msra.mxu0 0.0
    %6979 = vmatprep.subr.mxu0 0.0
    %6980 = vmatpush1.msra.mxu0 0.0
    %6981 = vmatprep.subr.mxu0 0.0
    %6982 = vmatpush1.msra.mxu0 0.0
    %6983 = vmatprep.subr.mxu0 0.0
    %6984 = vmatpush1.msra.mxu0 0.0
    %6985 = vmatprep.subr.mxu0 0.0
    %6986 = vmatpush1.msra.mxu0 0.0
    %6987 = vmatprep.subr.mxu0 0.0
    %6988 = vmatpush1.msra.mxu0 0.0
    %6989 = vmatprep.subr.mxu0 0.0
    %6990 = vmatpush1.msra.mxu0 0.0
    %6991 = vmatprep.subr.mxu0 0.0
    %6992 = vmatpush1.msra.mxu0 0.0
    %6993 = vmatprep.subr.mxu0 0.0
    %6994 = vmatpush1.msra.mxu0 0.0
    %6995 = vmatprep.subr.mxu0 0.0
    %6996 = vmatpush1.msra.mxu0 0.0
    %6997 = vmatprep.subr.mxu0 0.0
    %6998 = vmatpush1.msra.mxu0 0.0
    %6999 = vmatprep.subr.mxu0 0.0
    %7000 = vmatpush1.msra.mxu0 0.0
    %7001 = vmatprep.subr.mxu0 0.0
    %7002 = vmatpush1.msra.mxu0 0.0
    %7003 = vmatprep.subr.mxu0 0.0
    %7004 = vmatpush1.msra.mxu0 0.0
    %7005 = vmatprep.subr.mxu0 0.0
    %7006 = vmatpush1.msra.mxu0 0.0
    %7007 = vmatprep.subr.mxu0 0.0
    %7008 = vmatpush1.msra.mxu0 0.0
    %7009 = vmatprep.subr.mxu0 0.0
    %7010 = vmatpush1.msra.mxu0 0.0
    %7011 = vmatprep.subr.mxu0 0.0
    %7012 = vmatpush1.msra.mxu0 0.0
    %7013 = vmatprep.subr.mxu0 0.0
    %7014 = vmatpush1.msra.mxu0 0.0
    %7015 = vmatprep.subr.mxu0 0.0
    %7016 = vmatpush1.msra.mxu0 0.0
    %7017 = vmatprep.subr.mxu0 0.0
    %7018 = vmatpush1.msra.mxu0 0.0
    %7019 = vmatprep.subr.mxu0 0.0
    %7020 = vmatpush1.msra.mxu0 0.0
    %7021 = vmatprep.subr.mxu0 0.0
    %7022 = vmatpush1.msra.mxu0 0.0
    %7023 = vmatprep.subr.mxu0 0.0
    %7024 = vmatpush1.msra.mxu0 0.0
    %7025 = vmatprep.subr.mxu0 0.0
    %7026 = vmatpush1.msra.mxu0 0.0
    %7027 = vmatprep.subr.mxu0 0.0
    %7028 = vmatpush1.msra.mxu0 0.0
    %7029 = vmatprep.subr.mxu0 0.0
    %7030 = vmatpush1.msra.mxu0 0.0
    %7031 = vmatprep.mubr.f32.mxu0 0.0
    %7032 = vmatmul.mubr.f32.gmra.mrb[0].mxu0 %v6752
    %v7033 = vpop.f32.mrb[0].mxu0
    %v7034 = vadd.f32 0.0, %v7033
    %v7035 = vpop.f32.mrb[0].mxu0
    %v7036 = vadd.f32 0.0, %v7035
    %7037 = vdwg.mxu0
    %7038 = vmatprep.subr.mxu0 %v2997
    %7039 = vmatpush1.msra.mxu0 %v2995
    %7040 = vmatprep.subr.mxu0 0.0
    %7041 = vmatpush1.msra.mxu0 0.0
    %7042 = vmatprep.subr.mxu0 0.0
    %7043 = vmatpush1.msra.mxu0 0.0
    %7044 = vmatprep.subr.mxu0 0.0
    %7045 = vmatpush1.msra.mxu0 0.0
    %7046 = vmatprep.subr.mxu0 0.0
    %7047 = vmatpush1.msra.mxu0 0.0
    %7048 = vmatprep.subr.mxu0 0.0
    %7049 = vmatpush1.msra.mxu0 0.0
    %7050 = vmatprep.subr.mxu0 0.0
    %7051 = vmatpush1.msra.mxu0 0.0
    %7052 = vmatprep.subr.mxu0 0.0
    %7053 = vmatpush1.msra.mxu0 0.0
    %7054 = vmatprep.subr.mxu0 0.0
    %7055 = vmatpush1.msra.mxu0 0.0
    %7056 = vmatprep.subr.mxu0 0.0
    %7057 = vmatpush1.msra.mxu0 0.0
    %7058 = vmatprep.subr.mxu0 0.0
    %7059 = vmatpush1.msra.mxu0 0.0
    %7060 = vmatprep.subr.mxu0 0.0
    %7061 = vmatpush1.msra.mxu0 0.0
    %7062 = vmatprep.subr.mxu0 0.0
    %7063 = vmatpush1.msra.mxu0 0.0
    %7064 = vmatprep.subr.mxu0 0.0
    %7065 = vmatpush1.msra.mxu0 0.0
    %7066 = vmatprep.subr.mxu0 0.0
    %7067 = vmatpush1.msra.mxu0 0.0
    %7068 = vmatprep.subr.mxu0 0.0
    %7069 = vmatpush1.msra.mxu0 0.0
    %7070 = vmatprep.subr.mxu0 0.0
    %7071 = vmatpush1.msra.mxu0 0.0
    %7072 = vmatprep.subr.mxu0 0.0
    %7073 = vmatpush1.msra.mxu0 0.0
    %7074 = vmatprep.subr.mxu0 0.0
    %7075 = vmatpush1.msra.mxu0 0.0
    %7076 = vmatprep.subr.mxu0 0.0
    %7077 = vmatpush1.msra.mxu0 0.0
    %7078 = vmatprep.subr.mxu0 0.0
    %7079 = vmatpush1.msra.mxu0 0.0
    %7080 = vmatprep.subr.mxu0 0.0
    %7081 = vmatpush1.msra.mxu0 0.0
    %7082 = vmatprep.subr.mxu0 0.0
    %7083 = vmatpush1.msra.mxu0 0.0
    %7084 = vmatprep.subr.mxu0 0.0
    %7085 = vmatpush1.msra.mxu0 0.0
    %7086 = vmatprep.subr.mxu0 0.0
    %7087 = vmatpush1.msra.mxu0 0.0
    %7088 = vmatprep.subr.mxu0 0.0
    %7089 = vmatpush1.msra.mxu0 0.0
    %7090 = vmatprep.subr.mxu0 0.0
    %7091 = vmatpush1.msra.mxu0 0.0
    %7092 = vmatprep.subr.mxu0 0.0
    %7093 = vmatpush1.msra.mxu0 0.0
    %7094 = vmatprep.subr.mxu0 0.0
    %7095 = vmatpush1.msra.mxu0 0.0
    %7096 = vmatprep.subr.mxu0 0.0
    %7097 = vmatpush1.msra.mxu0 0.0
    %7098 = vmatprep.subr.mxu0 0.0
    %7099 = vmatpush1.msra.mxu0 0.0
    %7100 = vmatprep.subr.mxu0 0.0
    %7101 = vmatpush1.msra.mxu0 0.0
    %7102 = vmatprep.mubr.f32.mxu0 0.0
    %7103 = vmatmul.mubr.f32.gmra.mrb[0].mxu0 %v6752
    %v7104 = vpop.f32.mrb[0].mxu0
    %v7105 = vadd.f32 0.0, %v7104
    %v7106 = vpop.f32.mrb[0].mxu0
    %v7107 = vadd.f32 0.0, %v7106
    %7108 = vdwg.mxu0
    %7109 = vmatprep.subr.mxu0 %v3001
    %7110 = vmatpush1.msra.mxu0 %v2999
    %7111 = vmatprep.subr.mxu0 0.0
    %7112 = vmatpush1.msra.mxu0 0.0
    %7113 = vmatprep.subr.mxu0 0.0
    %7114 = vmatpush1.msra.mxu0 0.0
    %7115 = vmatprep.subr.mxu0 0.0
    %7116 = vmatpush1.msra.mxu0 0.0
    %7117 = vmatprep.subr.mxu0 0.0
    %7118 = vmatpush1.msra.mxu0 0.0
    %7119 = vmatprep.subr.mxu0 0.0
    %7120 = vmatpush1.msra.mxu0 0.0
    %7121 = vmatprep.subr.mxu0 0.0
    %7122 = vmatpush1.msra.mxu0 0.0
    %7123 = vmatprep.subr.mxu0 0.0
    %7124 = vmatpush1.msra.mxu0 0.0
    %7125 = vmatprep.subr.mxu0 0.0
    %7126 = vmatpush1.msra.mxu0 0.0
    %7127 = vmatprep.subr.mxu0 0.0
    %7128 = vmatpush1.msra.mxu0 0.0
    %7129 = vmatprep.subr.mxu0 0.0
    %7130 = vmatpush1.msra.mxu0 0.0
    %7131 = vmatprep.subr.mxu0 0.0
    %7132 = vmatpush1.msra.mxu0 0.0
    %7133 = vmatprep.subr.mxu0 0.0
    %7134 = vmatpush1.msra.mxu0 0.0
    %7135 = vmatprep.subr.mxu0 0.0
    %7136 = vmatpush1.msra.mxu0 0.0
    %7137 = vmatprep.subr.mxu0 0.0
    %7138 = vmatpush1.msra.mxu0 0.0
    %7139 = vmatprep.subr.mxu0 0.0
    %7140 = vmatpush1.msra.mxu0 0.0
    %7141 = vmatprep.subr.mxu0 0.0
    %7142 = vmatpush1.msra.mxu0 0.0
    %7143 = vmatprep.subr.mxu0 0.0
    %7144 = vmatpush1.msra.mxu0 0.0
    %7145 = vmatprep.subr.mxu0 0.0
    %7146 = vmatpush1.msra.mxu0 0.0
    %7147 = vmatprep.subr.mxu0 0.0
    %7148 = vmatpush1.msra.mxu0 0.0
    %7149 = vmatprep.subr.mxu0 0.0
    %7150 = vmatpush1.msra.mxu0 0.0
    %7151 = vmatprep.subr.mxu0 0.0
    %7152 = vmatpush1.msra.mxu0 0.0
    %7153 = vmatprep.subr.mxu0 0.0
    %7154 = vmatpush1.msra.mxu0 0.0
    %7155 = vmatprep.subr.mxu0 0.0
    %7156 = vmatpush1.msra.mxu0 0.0
    %7157 = vmatprep.subr.mxu0 0.0
    %7158 = vmatpush1.msra.mxu0 0.0
    %7159 = vmatprep.subr.mxu0 0.0
    %7160 = vmatpush1.msra.mxu0 0.0
    %7161 = vmatprep.subr.mxu0 0.0
    %7162 = vmatpush1.msra.mxu0 0.0
    %7163 = vmatprep.subr.mxu0 0.0
    %7164 = vmatpush1.msra.mxu0 0.0
    %7165 = vmatprep.subr.mxu0 0.0
    %7166 = vmatpush1.msra.mxu0 0.0
    %7167 = vmatprep.subr.mxu0 0.0
    %7168 = vmatpush1.msra.mxu0 0.0
    %7169 = vmatprep.subr.mxu0 0.0
    %7170 = vmatpush1.msra.mxu0 0.0
    %7171 = vmatprep.subr.mxu0 0.0
    %7172 = vmatpush1.msra.mxu0 0.0
    %7173 = vmatprep.mubr.f32.mxu0 0.0
    %7174 = vmatmul.mubr.f32.gmra.mrb[0].mxu0 %v6752
    %v7175 = vpop.f32.mrb[0].mxu0
    %v7176 = vadd.f32 0.0, %v7175
    %v7177 = vpop.f32.mrb[0].mxu0
    %v7178 = vadd.f32 0.0, %v7177
    %7179 = vdwg.mxu0
    %7180 = vmatprep.subr.mxu0 %v3005
    %7181 = vmatpush1.msra.mxu0 %v3003
    %7182 = vmatprep.subr.mxu0 0.0
    %7183 = vmatpush1.msra.mxu0 0.0
    %7184 = vmatprep.subr.mxu0 0.0
    %7185 = vmatpush1.msra.mxu0 0.0
    %7186 = vmatprep.subr.mxu0 0.0
    %7187 = vmatpush1.msra.mxu0 0.0
    %7188 = vmatprep.subr.mxu0 0.0
    %7189 = vmatpush1.msra.mxu0 0.0
    %7190 = vmatprep.subr.mxu0 0.0
    %7191 = vmatpush1.msra.mxu0 0.0
    %7192 = vmatprep.subr.mxu0 0.0
    %7193 = vmatpush1.msra.mxu0 0.0
    %7194 = vmatprep.subr.mxu0 0.0
    %7195 = vmatpush1.msra.mxu0 0.0
    %7196 = vmatprep.subr.mxu0 0.0
    %7197 = vmatpush1.msra.mxu0 0.0
    %7198 = vmatprep.subr.mxu0 0.0
    %7199 = vmatpush1.msra.mxu0 0.0
    %7200 = vmatprep.subr.mxu0 0.0
    %7201 = vmatpush1.msra.mxu0 0.0
    %7202 = vmatprep.subr.mxu0 0.0
    %7203 = vmatpush1.msra.mxu0 0.0
    %7204 = vmatprep.subr.mxu0 0.0
    %7205 = vmatpush1.msra.mxu0 0.0
    %7206 = vmatprep.subr.mxu0 0.0
    %7207 = vmatpush1.msra.mxu0 0.0
    %7208 = vmatprep.subr.mxu0 0.0
    %7209 = vmatpush1.msra.mxu0 0.0
    %7210 = vmatprep.subr.mxu0 0.0
    %7211 = vmatpush1.msra.mxu0 0.0
    %7212 = vmatprep.subr.mxu0 0.0
    %7213 = vmatpush1.msra.mxu0 0.0
    %7214 = vmatprep.subr.mxu0 0.0
    %7215 = vmatpush1.msra.mxu0 0.0
    %7216 = vmatprep.subr.mxu0 0.0
    %7217 = vmatpush1.msra.mxu0 0.0
    %7218 = vmatprep.subr.mxu0 0.0
    %7219 = vmatpush1.msra.mxu0 0.0
    %7220 = vmatprep.subr.mxu0 0.0
    %7221 = vmatpush1.msra.mxu0 0.0
    %7222 = vmatprep.subr.mxu0 0.0
    %7223 = vmatpush1.msra.mxu0 0.0
    %7224 = vmatprep.subr.mxu0 0.0
    %7225 = vmatpush1.msra.mxu0 0.0
    %7226 = vmatprep.subr.mxu0 0.0
    %7227 = vmatpush1.msra.mxu0 0.0
    %7228 = vmatprep.subr.mxu0 0.0
    %7229 = vmatpush1.msra.mxu0 0.0
    %7230 = vmatprep.subr.mxu0 0.0
    %7231 = vmatpush1.msra.mxu0 0.0
    %7232 = vmatprep.subr.mxu0 0.0
    %7233 = vmatpush1.msra.mxu0 0.0
    %7234 = vmatprep.subr.mxu0 0.0
    %7235 = vmatpush1.msra.mxu0 0.0
    %7236 = vmatprep.subr.mxu0 0.0
    %7237 = vmatpush1.msra.mxu0 0.0
    %7238 = vmatprep.subr.mxu0 0.0
    %7239 = vmatpush1.msra.mxu0 0.0
    %7240 = vmatprep.subr.mxu0 0.0
    %7241 = vmatpush1.msra.mxu0 0.0
    %7242 = vmatprep.subr.mxu0 0.0
    %7243 = vmatpush1.msra.mxu0 0.0
    %7244 = vmatprep.mubr.f32.mxu0 0.0
    %7245 = vmatmul.mubr.f32.gmra.mrb[0].mxu0 %v6752
    %v7246 = vpop.f32.mrb[0].mxu0
    %v7247 = vadd.f32 0.0, %v7246
    %v7248 = vpop.f32.mrb[0].mxu0
    %v7249 = vadd.f32 0.0, %v7248
    %7250 = vdwg.mxu0
    %7251 = vmatprep.subr.mxu0 %v3009
    %7252 = vmatpush1.msra.mxu0 %v3007
    %7253 = vmatprep.subr.mxu0 0.0
    %7254 = vmatpush1.msra.mxu0 0.0
    %7255 = vmatprep.subr.mxu0 0.0
    %7256 = vmatpush1.msra.mxu0 0.0
    %7257 = vmatprep.subr.mxu0 0.0
    %7258 = vmatpush1.msra.mxu0 0.0
    %7259 = vmatprep.subr.mxu0 0.0
    %7260 = vmatpush1.msra.mxu0 0.0
    %7261 = vmatprep.subr.mxu0 0.0
    %7262 = vmatpush1.msra.mxu0 0.0
    %7263 = vmatprep.subr.mxu0 0.0
    %7264 = vmatpush1.msra.mxu0 0.0
    %7265 = vmatprep.subr.mxu0 0.0
    %7266 = vmatpush1.msra.mxu0 0.0
    %7267 = vmatprep.subr.mxu0 0.0
    %7268 = vmatpush1.msra.mxu0 0.0
    %7269 = vmatprep.subr.mxu0 0.0
    %7270 = vmatpush1.msra.mxu0 0.0
    %7271 = vmatprep.subr.mxu0 0.0
    %7272 = vmatpush1.msra.mxu0 0.0
    %7273 = vmatprep.subr.mxu0 0.0
    %7274 = vmatpush1.msra.mxu0 0.0
    %7275 = vmatprep.subr.mxu0 0.0
    %7276 = vmatpush1.msra.mxu0 0.0
    %7277 = vmatprep.subr.mxu0 0.0
    %7278 = vmatpush1.msra.mxu0 0.0
    %7279 = vmatprep.subr.mxu0 0.0
    %7280 = vmatpush1.msra.mxu0 0.0
    %7281 = vmatprep.subr.mxu0 0.0
    %7282 = vmatpush1.msra.mxu0 0.0
    %7283 = vmatprep.subr.mxu0 0.0
    %7284 = vmatpush1.msra.mxu0 0.0
    %7285 = vmatprep.subr.mxu0 0.0
    %7286 = vmatpush1.msra.mxu0 0.0
    %7287 = vmatprep.subr.mxu0 0.0
    %7288 = vmatpush1.msra.mxu0 0.0
    %7289 = vmatprep.subr.mxu0 0.0
    %7290 = vmatpush1.msra.mxu0 0.0
    %7291 = vmatprep.subr.mxu0 0.0
    %7292 = vmatpush1.msra.mxu0 0.0
    %7293 = vmatprep.subr.mxu0 0.0
    %7294 = vmatpush1.msra.mxu0 0.0
    %7295 = vmatprep.subr.mxu0 0.0
    %7296 = vmatpush1.msra.mxu0 0.0
    %7297 = vmatprep.subr.mxu0 0.0
    %7298 = vmatpush1.msra.mxu0 0.0
    %7299 = vmatprep.subr.mxu0 0.0
    %7300 = vmatpush1.msra.mxu0 0.0
    %7301 = vmatprep.subr.mxu0 0.0
    %7302 = vmatpush1.msra.mxu0 0.0
    %7303 = vmatprep.subr.mxu0 0.0
    %7304 = vmatpush1.msra.mxu0 0.0
    %7305 = vmatprep.subr.mxu0 0.0
    %7306 = vmatpush1.msra.mxu0 0.0
    %7307 = vmatprep.subr.mxu0 0.0
    %7308 = vmatpush1.msra.mxu0 0.0
    %7309 = vmatprep.subr.mxu0 0.0
    %7310 = vmatpush1.msra.mxu0 0.0
    %7311 = vmatprep.subr.mxu0 0.0
    %7312 = vmatpush1.msra.mxu0 0.0
    %7313 = vmatprep.subr.mxu0 0.0
    %7314 = vmatpush1.msra.mxu0 0.0
    %7315 = vmatprep.mubr.f32.mxu0 0.0
    %7316 = vmatmul.mubr.f32.gmra.mrb[0].mxu0 %v6752
    %v7317 = vpop.f32.mrb[0].mxu0
    %v7318 = vadd.f32 0.0, %v7317
    %v7319 = vpop.f32.mrb[0].mxu0
    %v7320 = vadd.f32 0.0, %v7319
    %7321 = vdwg.mxu0
    %7322 = vmatprep.subr.mxu0 0.0
    %7323 = vmatpush1.msra.mxu0 %v3011
    %7324 = vmatprep.subr.mxu0 0.0
    %7325 = vmatpush1.msra.mxu0 0.0
    %7326 = vmatprep.subr.mxu0 0.0
    %7327 = vmatpush1.msra.mxu0 0.0
    %7328 = vmatprep.subr.mxu0 0.0
    %7329 = vmatpush1.msra.mxu0 0.0
    %7330 = vmatprep.subr.mxu0 0.0
    %7331 = vmatpush1.msra.mxu0 0.0
    %7332 = vmatprep.subr.mxu0 0.0
    %7333 = vmatpush1.msra.mxu0 0.0
    %7334 = vmatprep.subr.mxu0 0.0
    %7335 = vmatpush1.msra.mxu0 0.0
    %7336 = vmatprep.subr.mxu0 0.0
    %7337 = vmatpush1.msra.mxu0 0.0
    %7338 = vmatprep.subr.mxu0 0.0
    %7339 = vmatpush1.msra.mxu0 0.0
    %7340 = vmatprep.subr.mxu0 0.0
    %7341 = vmatpush1.msra.mxu0 0.0
    %7342 = vmatprep.subr.mxu0 0.0
    %7343 = vmatpush1.msra.mxu0 0.0
    %7344 = vmatprep.subr.mxu0 0.0
    %7345 = vmatpush1.msra.mxu0 0.0
    %7346 = vmatprep.subr.mxu0 0.0
    %7347 = vmatpush1.msra.mxu0 0.0
    %7348 = vmatprep.subr.mxu0 0.0
    %7349 = vmatpush1.msra.mxu0 0.0
    %7350 = vmatprep.subr.mxu0 0.0
    %7351 = vmatpush1.msra.mxu0 0.0
    %7352 = vmatprep.subr.mxu0 0.0
    %7353 = vmatpush1.msra.mxu0 0.0
    %7354 = vmatprep.subr.mxu0 0.0
    %7355 = vmatpush1.msra.mxu0 0.0
    %7356 = vmatprep.subr.mxu0 0.0
    %7357 = vmatpush1.msra.mxu0 0.0
    %7358 = vmatprep.subr.mxu0 0.0
    %7359 = vmatpush1.msra.mxu0 0.0
    %7360 = vmatprep.subr.mxu0 0.0
    %7361 = vmatpush1.msra.mxu0 0.0
    %7362 = vmatprep.subr.mxu0 0.0
    %7363 = vmatpush1.msra.mxu0 0.0
    %7364 = vmatprep.subr.mxu0 0.0
    %7365 = vmatpush1.msra.mxu0 0.0
    %7366 = vmatprep.subr.mxu0 0.0
    %7367 = vmatpush1.msra.mxu0 0.0
    %7368 = vmatprep.subr.mxu0 0.0
    %7369 = vmatpush1.msra.mxu0 0.0
    %7370 = vmatprep.subr.mxu0 0.0
    %7371 = vmatpush1.msra.mxu0 0.0
    %7372 = vmatprep.subr.mxu0 0.0
    %7373 = vmatpush1.msra.mxu0 0.0
    %7374 = vmatprep.subr.mxu0 0.0
    %7375 = vmatpush1.msra.mxu0 0.0
    %7376 = vmatprep.subr.mxu0 0.0
    %7377 = vmatpush1.msra.mxu0 0.0
    %7378 = vmatprep.subr.mxu0 0.0
    %7379 = vmatpush1.msra.mxu0 0.0
    %7380 = vmatprep.subr.mxu0 0.0
    %7381 = vmatpush1.msra.mxu0 0.0
    %7382 = vmatprep.subr.mxu0 0.0
    %7383 = vmatpush1.msra.mxu0 0.0
    %7384 = vmatprep.subr.mxu0 0.0
    %7385 = vmatpush1.msra.mxu0 0.0
    %7386 = vmatprep.mubr.f32.mxu0 0.0
    %7387 = vmatmul.mubr.f32.gmra.mrb[0].mxu0 %v6752
    %v7388 = vpop.f32.mrb[0].mxu0
    %v7389 = vadd.f32 0.0, %v7388
    %v7390 = vpop.f32.mrb[0].mxu0
    %7391 = vdwg.mxu0
    %v7392 = vld [vmem:[%s7] sm:$0xff]
    %v7393 = vld [vmem:[%s7 + $0x8] sm:$0xff]
    %v7394 = vld [vmem:[%s7 + $0x10] sm:$0x1]
    %v7395 = vld [vmem:[%s3] sm:$0xff]
    %v7396 = vld [vmem:[%s4] sm:$0xff]
    %v7400 = vlaneseq
    %v7401 = vshrl.u32 %v7400, 7
    %v7402 = vsub.s32 0, %v7401
    %v7403 = vrot.slane %v7392, %v7402
    %v7404 = vlaneseq
    %v7405 = vshrl.u32 %v7404, 7
    %v7406 = vsub.s32 1, %v7405
    %v7407 = vrot.slane %v7392, %v7406
    %v7408 = vlaneseq
    %v7409 = vshrl.u32 %v7408, 7
    %v7410 = vsub.s32 2, %v7409
    %v7411 = vrot.slane %v7392, %v7410
    %v7412 = vlaneseq
    %v7413 = vshrl.u32 %v7412, 7
    %v7414 = vsub.s32 3, %v7413
    %v7415 = vrot.slane %v7392, %v7414
    %v7416 = vlaneseq
    %v7417 = vshrl.u32 %v7416, 7
    %v7418 = vsub.s32 4, %v7417
    %v7419 = vrot.slane %v7392, %v7418
    %v7420 = vlaneseq
    %v7421 = vshrl.u32 %v7420, 7
    %v7422 = vsub.s32 5, %v7421
    %v7423 = vrot.slane %v7392, %v7422
    %v7424 = vlaneseq
    %v7425 = vshrl.u32 %v7424, 7
    %v7426 = vsub.s32 6, %v7425
    %v7427 = vrot.slane %v7392, %v7426
    %v7428 = vlaneseq
    %v7429 = vshrl.u32 %v7428, 7
    %v7430 = vsub.s32 7, %v7429
    %v7431 = vrot.slane %v7392, %v7430
    %v7432 = vlaneseq
    %v7433 = vshrl.u32 %v7432, 7
    %v7434 = vsub.s32 0, %v7433
    %v7435 = vrot.slane %v7393, %v7434
    %v7436 = vlaneseq
    %v7437 = vshrl.u32 %v7436, 7
    %v7438 = vsub.s32 1, %v7437
    %v7439 = vrot.slane %v7393, %v7438
    %v7440 = vlaneseq
    %v7441 = vshrl.u32 %v7440, 7
    %v7442 = vsub.s32 2, %v7441
    %v7443 = vrot.slane %v7393, %v7442
    %v7444 = vlaneseq
    %v7445 = vshrl.u32 %v7444, 7
    %v7446 = vsub.s32 3, %v7445
    %v7447 = vrot.slane %v7393, %v7446
    %v7448 = vlaneseq
    %v7449 = vshrl.u32 %v7448, 7
    %v7450 = vsub.s32 4, %v7449
    %v7451 = vrot.slane %v7393, %v7450
    %v7452 = vlaneseq
    %v7453 = vshrl.u32 %v7452, 7
    %v7454 = vsub.s32 5, %v7453
    %v7455 = vrot.slane %v7393, %v7454
    %v7456 = vlaneseq
    %v7457 = vshrl.u32 %v7456, 7
    %v7458 = vsub.s32 6, %v7457
    %v7459 = vrot.slane %v7393, %v7458
    %v7460 = vlaneseq
    %v7461 = vshrl.u32 %v7460, 7
    %v7462 = vsub.s32 7, %v7461
    %v7463 = vrot.slane %v7393, %v7462
    %v7464 = vlaneseq
    %v7465 = vshrl.u32 %v7464, 7
    %v7466 = vsub.s32 0, %v7465
    %v7467 = vrot.slane %v7394, %v7466
    %v7485 = vmul.f32 %v6733, %v7403
    %v7486 = vmul.f32 %v6734, %v7407
    %v7487 = vmul.f32 %v6735, %v7411
    %v7488 = vmul.f32 %v6736, %v7415
    %v7489 = vmul.f32 %v6737, %v7419
    %v7490 = vmul.f32 %v6738, %v7423
    %v7491 = vmul.f32 %v6739, %v7427
    %v7492 = vmul.f32 %v6740, %v7431
    %v7493 = vmul.f32 %v6741, %v7435
    %v7494 = vmul.f32 %v6742, %v7439
    %v7495 = vmul.f32 %v6743, %v7443
    %v7496 = vmul.f32 %v6744, %v7447
    %v7497 = vmul.f32 %v6745, %v7451
    %v7498 = vmul.f32 %v6746, %v7455
    %v7499 = vmul.f32 %v6747, %v7459
    %v7500 = vmul.f32 %v6748, %v7463
    %v7501 = vmul.f32 %v6749, %v7467
    %v7502 = vadd.f32 %v7485, %v7486
    %v7503 = vadd.f32 %v7502, %v7487
    %v7504 = vadd.f32 %v7503, %v7488
    %v7505 = vadd.f32 %v7504, %v7489
    %v7506 = vadd.f32 %v7505, %v7490
    %v7507 = vadd.f32 %v7506, %v7491
    %v7508 = vadd.f32 %v7507, %v7492
    %v7509 = vadd.f32 %v7508, %v7493
    %v7510 = vadd.f32 %v7509, %v7494
    %v7511 = vadd.f32 %v7510, %v7495
    %v7512 = vadd.f32 %v7511, %v7496
    %v7513 = vadd.f32 %v7512, %v7497
    %v7514 = vadd.f32 %v7513, %v7498
    %v7515 = vadd.f32 %v7514, %v7499
    %v7516 = vadd.f32 %v7515, %v7500
    %vm7517 = vcmask 252928
    %v7518 = vsel %vm7517, %v7501, 0.0
    %v7519 = vadd.f32 %v7516, %v7518
    %7520 = vadd.xlane.f32.xlu0 %v7519
    %v7521 = vpop.xlane.xlu0 %7520
    %v7522 = vmul.f32 %v7521, 0.00050403224
    %v7523 = vsub.f32 %v6733, %v7522
    %v7524 = vsub.f32 %v6734, %v7522
    %v7525 = vsub.f32 %v6735, %v7522
    %v7526 = vsub.f32 %v6736, %v7522
    %v7527 = vsub.f32 %v6737, %v7522
    %v7528 = vsub.f32 %v6738, %v7522
    %v7529 = vsub.f32 %v6739, %v7522
    %v7530 = vsub.f32 %v6740, %v7522
    %v7531 = vsub.f32 %v6741, %v7522
    %v7532 = vsub.f32 %v6742, %v7522
    %v7533 = vsub.f32 %v6743, %v7522
    %v7534 = vsub.f32 %v6744, %v7522
    %v7535 = vsub.f32 %v6745, %v7522
    %v7536 = vsub.f32 %v6746, %v7522
    %v7537 = vsub.f32 %v6747, %v7522
    %v7538 = vsub.f32 %v6748, %v7522
    %v7539 = vsub.f32 %v6749, %v7522
    %v7540 = vmul.f32 %v7523, %v7403
    %v7541 = vmul.f32 %v7524, %v7407
    %v7542 = vmul.f32 %v7525, %v7411
    %v7543 = vmul.f32 %v7526, %v7415
    %v7544 = vmul.f32 %v7527, %v7419
    %v7545 = vmul.f32 %v7528, %v7423
    %v7546 = vmul.f32 %v7529, %v7427
    %v7547 = vmul.f32 %v7530, %v7431
    %v7548 = vmul.f32 %v7531, %v7435
    %v7549 = vmul.f32 %v7532, %v7439
    %v7550 = vmul.f32 %v7533, %v7443
    %v7551 = vmul.f32 %v7534, %v7447
    %v7552 = vmul.f32 %v7535, %v7451
    %v7553 = vmul.f32 %v7536, %v7455
    %v7554 = vmul.f32 %v7537, %v7459
    %v7555 = vmul.f32 %v7538, %v7463
    %v7556 = vmul.f32 %v7539, %v7467
    %v7557 = vmul.f32 %v7540, %v7540
    %v7558 = vmul.f32 %v7541, %v7541
    %v7559 = vmul.f32 %v7542, %v7542
    %v7560 = vmul.f32 %v7543, %v7543
    %v7561 = vmul.f32 %v7544, %v7544
    %v7562 = vmul.f32 %v7545, %v7545
    %v7563 = vmul.f32 %v7546, %v7546
    %v7564 = vmul.f32 %v7547, %v7547
    %v7565 = vmul.f32 %v7548, %v7548
    %v7566 = vmul.f32 %v7549, %v7549
    %v7567 = vmul.f32 %v7550, %v7550
    %v7568 = vmul.f32 %v7551, %v7551
    %v7569 = vmul.f32 %v7552, %v7552
    %v7570 = vmul.f32 %v7553, %v7553
    %v7571 = vmul.f32 %v7554, %v7554
    %v7572 = vmul.f32 %v7555, %v7555
    %v7573 = vmul.f32 %v7556, %v7556
    %v7574 = vadd.f32 %v7557, %v7558
    %v7575 = vadd.f32 %v7574, %v7559
    %v7576 = vadd.f32 %v7575, %v7560
    %v7577 = vadd.f32 %v7576, %v7561
    %v7578 = vadd.f32 %v7577, %v7562
    %v7579 = vadd.f32 %v7578, %v7563
    %v7580 = vadd.f32 %v7579, %v7564
    %v7581 = vadd.f32 %v7580, %v7565
    %v7582 = vadd.f32 %v7581, %v7566
    %v7583 = vadd.f32 %v7582, %v7567
    %v7584 = vadd.f32 %v7583, %v7568
    %v7585 = vadd.f32 %v7584, %v7569
    %v7586 = vadd.f32 %v7585, %v7570
    %v7587 = vadd.f32 %v7586, %v7571
    %v7588 = vadd.f32 %v7587, %v7572
    %v7589 = vsel %vm7517, %v7573, 0.0
    %v7590 = vadd.f32 %v7588, %v7589
    %7591 = vadd.xlane.f32.xlu0 %v7590
    %v7592 = vpop.xlane.xlu0 %7591
    %v7593 = vmul.f32 %v7592, 0.00050403224
    %v7594 = vadd.f32 %v7593, 1e-05
    %v7595 = vrsqrt.pop %v7594
    %v7596 = vmul.f32 %v7395, %v7595
    %v7597 = vmul.f32 %v7522, %v7596
    %v7598 = vsub.f32 %v7396, %v7597
    %7600 = vset.pattern.permute.xlu0 0
    %7601 = vperm.xlu0 %7600, %v7596
    %v7602 = vpop.permute.xlu0 %7601
    %v7604 = vmul.f32 %v6733, %v7602
    %v7605 = vmul.f32 %v6734, %v7602
    %v7606 = vmul.f32 %v6735, %v7602
    %v7607 = vmul.f32 %v6736, %v7602
    %v7608 = vmul.f32 %v6737, %v7602
    %v7609 = vmul.f32 %v6738, %v7602
    %v7610 = vmul.f32 %v6739, %v7602
    %v7611 = vmul.f32 %v6740, %v7602
    %v7612 = vmul.f32 %v6741, %v7602
    %v7613 = vmul.f32 %v6742, %v7602
    %v7614 = vmul.f32 %v6743, %v7602
    %v7615 = vmul.f32 %v6744, %v7602
    %v7616 = vmul.f32 %v6745, %v7602
    %v7617 = vmul.f32 %v6746, %v7602
    %v7618 = vmul.f32 %v6747, %v7602
    %v7619 = vmul.f32 %v6748, %v7602
    %v7620 = vmul.f32 %v6749, %v7602
    %7622 = vset.pattern.permute.xlu0 0
    %7623 = vperm.xlu0 %7622, %v7598
    %v7624 = vpop.permute.xlu0 %7623
    %v7626 = vadd.f32 %v7604, %v7624
    %v7627 = vadd.f32 %v7605, %v7624
    %v7628 = vadd.f32 %v7606, %v7624
    %v7629 = vadd.f32 %v7607, %v7624
    %v7630 = vadd.f32 %v7608, %v7624
    %v7631 = vadd.f32 %v7609, %v7624
    %v7632 = vadd.f32 %v7610, %v7624
    %v7633 = vadd.f32 %v7611, %v7624
    %v7634 = vadd.f32 %v7612, %v7624
    %v7635 = vadd.f32 %v7613, %v7624
    %v7636 = vadd.f32 %v7614, %v7624
    %v7637 = vadd.f32 %v7615, %v7624
    %v7638 = vadd.f32 %v7616, %v7624
    %v7639 = vadd.f32 %v7617, %v7624
    %v7640 = vadd.f32 %v7618, %v7624
    %v7641 = vadd.f32 %v7619, %v7624
    %v7642 = vadd.f32 %v7620, %v7624
    %v7643 = vmax.f32 %v7626, 0.0
    %v7644 = vmax.f32 %v7627, 0.0
    %v7645 = vmax.f32 %v7628, 0.0
    %v7646 = vmax.f32 %v7629, 0.0
    %v7647 = vmax.f32 %v7630, 0.0
    %v7648 = vmax.f32 %v7631, 0.0
    %v7649 = vmax.f32 %v7632, 0.0
    %v7650 = vmax.f32 %v7633, 0.0
    %v7651 = vmax.f32 %v7634, 0.0
    %v7652 = vmax.f32 %v7635, 0.0
    %v7653 = vmax.f32 %v7636, 0.0
    %v7654 = vmax.f32 %v7637, 0.0
    %v7655 = vmax.f32 %v7638, 0.0
    %v7656 = vmax.f32 %v7639, 0.0
    %v7657 = vmax.f32 %v7640, 0.0
    %v7658 = vmax.f32 %v7641, 0.0
    %v7659 = vmax.f32 %v7642, 0.0
    %7660 = vst [vmem:[#allocation5] sm:$0xff] %v7643
    %7661 = vst [vmem:[#allocation5 + $0x8] sm:$0xff] %v7644
    %7662 = vst [vmem:[#allocation5 + $0x10] sm:$0xff] %v7645
    %7663 = vst [vmem:[#allocation5 + $0x18] sm:$0xff] %v7646
    %7664 = vst [vmem:[#allocation5 + $0x20] sm:$0xff] %v7647
    %7665 = vst [vmem:[#allocation5 + $0x28] sm:$0xff] %v7648
    %7666 = vst [vmem:[#allocation5 + $0x30] sm:$0xff] %v7649
    %7667 = vst [vmem:[#allocation5 + $0x38] sm:$0xff] %v7650
    %7668 = vst [vmem:[#allocation5 + $0x40] sm:$0xff] %v7651
    %7669 = vst [vmem:[#allocation5 + $0x48] sm:$0xff] %v7652
    %7670 = vst [vmem:[#allocation5 + $0x50] sm:$0xff] %v7653
    %7671 = vst [vmem:[#allocation5 + $0x58] sm:$0xff] %v7654
    %7672 = vst [vmem:[#allocation5 + $0x60] sm:$0xff] %v7655
    %7673 = vst [vmem:[#allocation5 + $0x68] sm:$0xff] %v7656
    %7674 = vst [vmem:[#allocation5 + $0x70] sm:$0xff] %v7657
    %7675 = vst [vmem:[#allocation5 + $0x78] sm:$0xff] %v7658
    %7676 = vst.msk [vmem:[#allocation5 + $0x80] sm:$0xff] %vm7517, %v7659
    %v7677 = vld [vmem:[%s5] sm:$0xff]
    %v7678 = vld [vmem:[%s6] sm:$0xff]
    %v7679 = vmul.f32 %v6821, %v7403
    %v7680 = vmul.f32 %v6823, %v7407
    %v7681 = vmul.f32 %v6892, %v7411
    %v7682 = vmul.f32 %v6894, %v7415
    %v7683 = vmul.f32 %v6963, %v7419
    %v7684 = vmul.f32 %v6965, %v7423
    %v7685 = vmul.f32 %v7034, %v7427
    %v7686 = vmul.f32 %v7036, %v7431
    %v7687 = vmul.f32 %v7105, %v7435
    %v7688 = vmul.f32 %v7107, %v7439
    %v7689 = vmul.f32 %v7176, %v7443
    %v7690 = vmul.f32 %v7178, %v7447
    %v7691 = vmul.f32 %v7247, %v7451
    %v7692 = vmul.f32 %v7249, %v7455
    %v7693 = vmul.f32 %v7318, %v7459
    %v7694 = vmul.f32 %v7320, %v7463
    %v7695 = vmul.f32 %v7389, %v7467
    %v7696 = vadd.f32 %v7679, %v7680
    %v7697 = vadd.f32 %v7696, %v7681
    %v7698 = vadd.f32 %v7697, %v7682
    %v7699 = vadd.f32 %v7698, %v7683
    %v7700 = vadd.f32 %v7699, %v7684
    %v7701 = vadd.f32 %v7700, %v7685
    %v7702 = vadd.f32 %v7701, %v7686
    %v7703 = vadd.f32 %v7702, %v7687
    %v7704 = vadd.f32 %v7703, %v7688
    %v7705 = vadd.f32 %v7704, %v7689
    %v7706 = vadd.f32 %v7705, %v7690
    %v7707 = vadd.f32 %v7706, %v7691
    %v7708 = vadd.f32 %v7707, %v7692
    %v7709 = vadd.f32 %v7708, %v7693
    %v7710 = vadd.f32 %v7709, %v7694
    %v7711 = vsel %vm7517, %v7695, 0.0
    %v7712 = vadd.f32 %v7710, %v7711
    %7713 = vadd.xlane.f32.xlu0 %v7712
    %v7714 = vpop.xlane.xlu0 %7713
    %v7715 = vmul.f32 %v7714, 0.00050403224
    %v7716 = vsub.f32 %v6821, %v7715
    %v7717 = vsub.f32 %v6823, %v7715
    %v7718 = vsub.f32 %v6892, %v7715
    %v7719 = vsub.f32 %v6894, %v7715
    %v7720 = vsub.f32 %v6963, %v7715
    %v7721 = vsub.f32 %v6965, %v7715
    %v7722 = vsub.f32 %v7034, %v7715
    %v7723 = vsub.f32 %v7036, %v7715
    %v7724 = vsub.f32 %v7105, %v7715
    %v7725 = vsub.f32 %v7107, %v7715
    %v7726 = vsub.f32 %v7176, %v7715
    %v7727 = vsub.f32 %v7178, %v7715
    %v7728 = vsub.f32 %v7247, %v7715
    %v7729 = vsub.f32 %v7249, %v7715
    %v7730 = vsub.f32 %v7318, %v7715
    %v7731 = vsub.f32 %v7320, %v7715
    %v7732 = vsub.f32 %v7389, %v7715
    %v7733 = vmul.f32 %v7716, %v7403
    %v7734 = vmul.f32 %v7717, %v7407
    %v7735 = vmul.f32 %v7718, %v7411
    %v7736 = vmul.f32 %v7719, %v7415
    %v7737 = vmul.f32 %v7720, %v7419
    %v7738 = vmul.f32 %v7721, %v7423
    %v7739 = vmul.f32 %v7722, %v7427
    %v7740 = vmul.f32 %v7723, %v7431
    %v7741 = vmul.f32 %v7724, %v7435
    %v7742 = vmul.f32 %v7725, %v7439
    %v7743 = vmul.f32 %v7726, %v7443
    %v7744 = vmul.f32 %v7727, %v7447
    %v7745 = vmul.f32 %v7728, %v7451
    %v7746 = vmul.f32 %v7729, %v7455
    %v7747 = vmul.f32 %v7730, %v7459
    %v7748 = vmul.f32 %v7731, %v7463
    %v7749 = vmul.f32 %v7732, %v7467
    %v7750 = vmul.f32 %v7733, %v7733
    %v7751 = vmul.f32 %v7734, %v7734
    %v7752 = vmul.f32 %v7735, %v7735
    %v7753 = vmul.f32 %v7736, %v7736
    %v7754 = vmul.f32 %v7737, %v7737
    %v7755 = vmul.f32 %v7738, %v7738
    %v7756 = vmul.f32 %v7739, %v7739
    %v7757 = vmul.f32 %v7740, %v7740
    %v7758 = vmul.f32 %v7741, %v7741
    %v7759 = vmul.f32 %v7742, %v7742
    %v7760 = vmul.f32 %v7743, %v7743
    %v7761 = vmul.f32 %v7744, %v7744
    %v7762 = vmul.f32 %v7745, %v7745
    %v7763 = vmul.f32 %v7746, %v7746
    %v7764 = vmul.f32 %v7747, %v7747
    %v7765 = vmul.f32 %v7748, %v7748
    %v7766 = vmul.f32 %v7749, %v7749
    %v7767 = vadd.f32 %v7750, %v7751
    %v7768 = vadd.f32 %v7767, %v7752
    %v7769 = vadd.f32 %v7768, %v7753
    %v7770 = vadd.f32 %v7769, %v7754
    %v7771 = vadd.f32 %v7770, %v7755
    %v7772 = vadd.f32 %v7771, %v7756
    %v7773 = vadd.f32 %v7772, %v7757
    %v7774 = vadd.f32 %v7773, %v7758
    %v7775 = vadd.f32 %v7774, %v7759
    %v7776 = vadd.f32 %v7775, %v7760
    %v7777 = vadd.f32 %v7776, %v7761
    %v7778 = vadd.f32 %v7777, %v7762
    %v7779 = vadd.f32 %v7778, %v7763
    %v7780 = vadd.f32 %v7779, %v7764
    %v7781 = vadd.f32 %v7780, %v7765
    %v7782 = vsel %vm7517, %v7766, 0.0
    %v7783 = vadd.f32 %v7781, %v7782
    %7784 = vadd.xlane.f32.xlu0 %v7783
    %v7785 = vpop.xlane.xlu0 %7784
    %v7786 = vmul.f32 %v7785, 0.00050403224
    %v7787 = vadd.f32 %v7786, 1e-05
    %v7788 = vrsqrt.pop %v7787
    %v7789 = vmul.f32 %v7677, %v7788
    %v7790 = vmul.f32 %v7715, %v7789
    %v7791 = vsub.f32 %v7678, %v7790
    %7793 = vset.pattern.permute.xlu0 0
    %7794 = vperm.xlu0 %7793, %v7789
    %v7795 = vpop.permute.xlu0 %7794
    %v7797 = vmul.f32 %v6821, %v7795
    %v7798 = vmul.f32 %v6823, %v7795
    %v7799 = vmul.f32 %v6892, %v7795
    %v7800 = vmul.f32 %v6894, %v7795
    %v7801 = vmul.f32 %v6963, %v7795
    %v7802 = vmul.f32 %v6965, %v7795
    %v7803 = vmul.f32 %v7034, %v7795
    %v7804 = vmul.f32 %v7036, %v7795
    %v7805 = vmul.f32 %v7105, %v7795
    %v7806 = vmul.f32 %v7107, %v7795
    %v7807 = vmul.f32 %v7176, %v7795
    %v7808 = vmul.f32 %v7178, %v7795
    %v7809 = vmul.f32 %v7247, %v7795
    %v7810 = vmul.f32 %v7249, %v7795
    %v7811 = vmul.f32 %v7318, %v7795
    %v7812 = vmul.f32 %v7320, %v7795
    %v7813 = vmul.f32 %v7389, %v7795
    %7815 = vset.pattern.permute.xlu0 0
    %7816 = vperm.xlu0 %7815, %v7791
    %v7817 = vpop.permute.xlu0 %7816
    %v7819 = vadd.f32 %v7797, %v7817
    %v7820 = vadd.f32 %v7798, %v7817
    %v7821 = vadd.f32 %v7799, %v7817
    %v7822 = vadd.f32 %v7800, %v7817
    %v7823 = vadd.f32 %v7801, %v7817
    %v7824 = vadd.f32 %v7802, %v7817
    %v7825 = vadd.f32 %v7803, %v7817
    %v7826 = vadd.f32 %v7804, %v7817
    %v7827 = vadd.f32 %v7805, %v7817
    %v7828 = vadd.f32 %v7806, %v7817
    %v7829 = vadd.f32 %v7807, %v7817
    %v7830 = vadd.f32 %v7808, %v7817
    %v7831 = vadd.f32 %v7809, %v7817
    %v7832 = vadd.f32 %v7810, %v7817
    %v7833 = vadd.f32 %v7811, %v7817
    %v7834 = vadd.f32 %v7812, %v7817
    %v7835 = vadd.f32 %v7813, %v7817
    %7836 = vst [vmem:[#allocation6] sm:$0xff] %v7819
    %7837 = vst [vmem:[#allocation6 + $0x8] sm:$0xff] %v7820
    %7838 = vst [vmem:[#allocation6 + $0x10] sm:$0xff] %v7821
    %7839 = vst [vmem:[#allocation6 + $0x18] sm:$0xff] %v7822
    %7840 = vst [vmem:[#allocation6 + $0x20] sm:$0xff] %v7823
    %7841 = vst [vmem:[#allocation6 + $0x28] sm:$0xff] %v7824
    %7842 = vst [vmem:[#allocation6 + $0x30] sm:$0xff] %v7825
    %7843 = vst [vmem:[#allocation6 + $0x38] sm:$0xff] %v7826
    %7844 = vst [vmem:[#allocation6 + $0x40] sm:$0xff] %v7827
    %7845 = vst [vmem:[#allocation6 + $0x48] sm:$0xff] %v7828
    %7846 = vst [vmem:[#allocation6 + $0x50] sm:$0xff] %v7829
    %7847 = vst [vmem:[#allocation6 + $0x58] sm:$0xff] %v7830
    %7848 = vst [vmem:[#allocation6 + $0x60] sm:$0xff] %v7831
    %7849 = vst [vmem:[#allocation6 + $0x68] sm:$0xff] %v7832
    %7850 = vst [vmem:[#allocation6 + $0x70] sm:$0xff] %v7833
    %7851 = vst [vmem:[#allocation6 + $0x78] sm:$0xff] %v7834
    %7852 = vst.msk [vmem:[#allocation6 + $0x80] sm:$0xff] %vm7517, %v7835
    // Predicated region
    $region38: #{tpu_custom_call.1} parent=1 // pred_check
      _
    $region39: #{tpu_custom_call.1} parent=1 // pred_check_branch
      %7854 = sbr.rel (0) target = $region41
    $region40: #{tpu_custom_call.1} parent=1 // pred_region
      %s7856 = ssub.s32 2176, 2176
      %7857 = vsyncadd [#allocation4], %s7856
      %s7859 = sshll.u32 [#allocation5], 4
      %s7860 = int_to_ptr.vmem [resolvable:$true] %s7859
      %7862 = dma.vmem_to_hbm [thread:$0]  %s7860, 2176, %s8, [#allocation4]
    $region41: #{tpu_custom_call.1} parent=1 // pred_fallthru
      _
    // Predicated region
    $region42: #{tpu_custom_call.1} parent=1 // pred_check
      _
    $region43: #{tpu_custom_call.1} parent=1 // pred_check_branch
      %7864 = sbr.rel (0) target = $region45
    $region44: #{tpu_custom_call.1} parent=1 // pred_region
      %s7866 = ssub.s32 2176, 2176
      %7867 = vsyncadd [#allocation7], %s7866
      %s7869 = sshll.u32 [#allocation6], 4
      %s7870 = int_to_ptr.vmem [resolvable:$true] %s7869
      %7872 = dma.vmem_to_hbm [thread:$0]  %s7870, 2176, %s9, [#allocation7]
    $region45: #{tpu_custom_call.1} parent=1 // pred_fallthru
      _
    // Predicated region
    $region46: #{tpu_custom_call.1} parent=1 // pred_check
      _
    $region47: #{tpu_custom_call.1} parent=1 // pred_check_branch
      %7874 = sbr.rel (0) target = $region49
    $region48: #{tpu_custom_call.1} parent=1 // pred_region
      %7875 = dma.done [#allocation4], 2176
    $region49: #{tpu_custom_call.1} parent=1 // pred_fallthru
      _
    // Predicated region
    $region50: #{tpu_custom_call.1} parent=1 // pred_check
      _
    $region51: #{tpu_custom_call.1} parent=1 // pred_check_branch
      %7877 = sbr.rel (0) target = $region53
    $region52: #{tpu_custom_call.1} parent=1 // pred_region
      %7878 = dma.done [#allocation7], 2176
    $region53: #{tpu_custom_call.1} parent=1 // pred_fallthru
      _
    %7879 = vsyncpa [#allocation3], 1
    %7880 = vsyncpa [#allocation4], 1
    %7881 = vsyncpa [#allocation7], 1

</llo_original>
